<compile_context>
chip_gen: v5e
topology: v5e:2x2
jax: 0.10.0
libtpu: 0.0.40
codegen_flags: <defaults>
</compile_context>

<pallas_src>
import functools
import itertools

import jax
import jax.numpy as jnp
from jax.experimental import pallas as pl
from jax.experimental.pallas import tpu as pltpu

# ----------------------- model configuration (small, consistent shapes) ---------------
INPUT_RES = 16      # input_resolution
PATCH = 8           # patch_size  -> 2x2 patch grid, L = 5 tokens
WIDTH = 32          # width == n_dim
LAYERS = 2          # backbone layers
HEADS = 4           # backbone heads
T_SIZE = 2          # t_size (temporal frames)
N_LAYERS = 2        # decoder layers; return_list = [0, 1]
N_DIM = WIDTH
N_HEAD = 4
MLP_FACTOR = 4.0

_LN_EPS = 1e-5


# ----------------------------------- in-kernel helpers ---------------------------------
def _ln(x, g, b):
    """fp32 LayerNorm over the last dim (matches the fp16-safe LayerNorm subclass)."""
    xf = x.astype(jnp.float32)
    mu = jnp.mean(xf, axis=-1, keepdims=True)
    d = xf - mu
    var = jnp.mean(d * d, axis=-1, keepdims=True)
    return d * jax.lax.rsqrt(var + _LN_EPS) * g + b


def _quick_gelu(x):
    """x * sigmoid(1.702 x) with an exact sigmoid (f32)."""
    return x * (1.0 / (1.0 + jnp.exp(-1.702 * x)))


# ----------------------------------- Pallas kernels -------------------------------------
def _stem_kernel(p_ref, wt_ref, pos_ref, g_ref, b_ref, o_ref, *, NT, L):
    """patch-embed matmul + cls row + positional embedding + ln_pre.

    p_ref:  (NT*(L-1), 3*ps*ps) patch pixels (f32)
    wt_ref: (3*ps*ps, C) bf16 pre-transposed conv1 weight (conv1 has no bias)
    pos_ref:(L, C) f32 -- row 0 already holds class_embedding + pos[0]
    o_ref:  (NT*L, C) bf16 token stream (frame-major, token-minor)
    """
    g = g_ref[...]
    b = b_ref[...]
    emb = jnp.dot(p_ref[...].astype(jnp.bfloat16), wt_ref[...],
                  preferred_element_type=jnp.float32)                # (NT*(L-1), C)
    cls_row = _ln(pos_ref[0:1, :], g, b)                             # shared by all frames
    pos_patch = pos_ref[1:, :]                                       # (L-1, C)
    Lp = L - 1
    rows = []
    for nt in range(NT):
        rows.append(cls_row)
        rows.append(_ln(emb[nt * Lp:(nt + 1) * Lp, :] + pos_patch, g, b))
    o_ref[...] = jnp.concatenate(rows, axis=0).astype(o_ref.dtype)


def _self_block_kernel(x_ref, ln1g, ln1b, wqkv, bqkv, wout, bout,
                       ln2g, ln2b, wfc, bfc, wpr, bpr, o_ref, *, NB, L, nh):
    """Fused backbone ResidualAttentionBlock (pre-LN self-attention + MLP).

    x_ref / o_ref: (NB*L, C) bf16 token stream.  All weight matmuls are plain 2-D dots.
    """
    _, C = x_ref.shape
    dh = C // nh
    scale = 1.0 / float(dh) ** 0.5

    x = x_ref[...].astype(jnp.float32)
    hx = _ln(x, ln1g[...], ln1b[...]).astype(jnp.bfloat16)
    qkv = jnp.dot(hx, wqkv[...], preferred_element_type=jnp.float32) + bqkv[...]  # (M, 3C)
    q = qkv[:, :C]
    k = qkv[:, C:2 * C]
    v = qkv[:, 2 * C:]

    ctx_rows = []
    for bi in range(NB):                                             # static unroll (frames)
        r0 = bi * L
        qb = q[r0:r0 + L, :].astype(jnp.bfloat16)
        kb = k[r0:r0 + L, :].astype(jnp.bfloat16)
        vb = v[r0:r0 + L, :].astype(jnp.bfloat16)
        heads = []
        for h in range(nh):                                          # static unroll (heads)
            c0 = h * dh
            s = jax.lax.dot_general(qb[:, c0:c0 + dh], kb[:, c0:c0 + dh],
                                    (((1,), (1,)), ((), ())),
                                    preferred_element_type=jnp.float32) * scale   # (L, L)
            m = jnp.max(s, axis=-1, keepdims=True)
            e = jnp.exp(s - m)
            p = e * pl.reciprocal(jnp.sum(e, axis=-1, keepdims=True), approx=True)
            heads.append(jnp.dot(p.astype(jnp.bfloat16), vb[:, c0:c0 + dh],
                                 preferred_element_type=jnp.float32))              # (L, dh)
        ctx_rows.append(jnp.concatenate(heads, axis=-1))                           # (L, C)
    ctx = jnp.concatenate(ctx_rows, axis=0).astype(jnp.bfloat16)                   # (M, C)

    attn = jnp.dot(ctx, wout[...], preferred_element_type=jnp.float32) + bout[...]
    x1 = x + attn
    h2 = _ln(x1, ln2g[...], ln2b[...]).astype(jnp.bfloat16)
    f = jnp.dot(h2, wfc[...], preferred_element_type=jnp.float32) + bfc[...]       # (M, 4C)
    f = _quick_gelu(f)
    mlp = jnp.dot(f.astype(jnp.bfloat16), wpr[...],
                  preferred_element_type=jnp.float32) + bpr[...]
    o_ref[...] = (x1 + mlp).astype(o_ref.dtype)


def _dec_block_kernel(x_ref, cls_ref, wconv, bconv, ln1g, ln1b, ln3g, ln3b,
                      wq, bq, wkv, bkv, wout, bout, ln2g, ln2b, wfc, bfc, wpr, bpr,
                      o_ref, *, N, T, H, W, nh):
    """Fused: depthwise 3x3x3 dpe conv (+bias+residual) -> k/v source assembly ->
    Extractor cross-attention block (q from cls token).  No HBM round trips.

    x_ref: (N*T*L, C) bf16 backbone tokens.   cls_ref / o_ref: (N, C) f32 temporal cls token.
    wconv: (27, C) depthwise taps (dt-major).  bconv: (1, C).
    """
    C = cls_ref.shape[-1]
    dh = C // nh
    L = H * W + 1
    Ty = T * L
    scale = 1.0 / float(dh) ** 0.5

    xf = x_ref[...].astype(jnp.float32)
    wc = wconv[...]
    bc = bconv[...]

    # ---- dpe conv per output position (static unroll; toy T/H/W) + per-frame row assembly
    y_blocks = []
    for n in range(N):
        for t in range(T):
            base = (n * T + t) * L
            rows = [xf[base:base + 1, :]]                            # frame cls row unchanged
            for hp in range(H):
                for wp in range(W):
                    acc = bc
                    for dt in range(3):
                        tt = t + dt - 1
                        if tt < 0 or tt >= T:
                            continue
                        for dhh in range(3):
                            hh = hp + dhh - 1
                            if hh < 0 or hh >= H:
                                continue
                            for dww in range(3):
                                ww = wp + dww - 1
                                if ww < 0 or ww >= W:
                                    continue
                                src = (n * T + tt) * L + 1 + hh * W + ww
                                tap = dt * 9 + dhh * 3 + dww
                                acc = acc + wc[tap:tap + 1, :] * xf[src:src + 1, :]
                    row = base + 1 + hp * W + wp
                    rows.append(xf[row:row + 1, :] + acc)            # patch + dwconv(patch)
            y_blocks.append(jnp.concatenate(rows, axis=0))           # (L, C)
    y = jnp.concatenate(y_blocks, axis=0)                            # (N*Ty, C)

    # ---- cross-attention: q from ln_1(cls), k/v from ln_3(y); fused KV matmul
    hy = _ln(y, ln3g[...], ln3b[...]).astype(jnp.bfloat16)
    kv = jnp.dot(hy, wkv[...], preferred_element_type=jnp.float32) + bkv[...]     # (N*Ty, 2C)
    kmat = kv[:, :C]
    vmat = kv[:, C:]

    clsf = cls_ref[...].astype(jnp.float32)                          # (N, C)
    hq = _ln(clsf, ln1g[...], ln1b[...]).astype(jnp.bfloat16)
    qrow = jnp.dot(hq, wq[...], preferred_element_type=jnp.float32) + bq[...]     # (N, C)

    ctx_rows = []
    for n in range(N):
        kb = kmat[n * Ty:(n + 1) * Ty, :]
        vb = vmat[n * Ty:(n + 1) * Ty, :]
        heads = []
        for h in range(nh):
            c0 = h * dh
            qh = qrow[n:n + 1, c0:c0 + dh]                           # (1, dh) single query
            kh = kb[:, c0:c0 + dh]                                   # (Ty, dh)
            vh = vb[:, c0:c0 + dh]
            s = jnp.sum(qh * kh, axis=-1, keepdims=True) * scale     # (Ty, 1)
            m = jnp.max(s, axis=0, keepdims=True)
            e = jnp.exp(s - m)
            p = e * pl.reciprocal(jnp.sum(e, axis=0, keepdims=True), approx=True)
            heads.append(jnp.sum(p * vh, axis=0, keepdims=True))     # (1, dh)
        ctx_rows.append(jnp.concatenate(heads, axis=-1))             # (1, C)
    ctx = jnp.concatenate(ctx_rows, axis=0).astype(jnp.bfloat16)     # (N, C)

    attn = jnp.dot(ctx, wout[...], preferred_element_type=jnp.float32) + bout[...]
    x1 = clsf + attn
    h2 = _ln(x1, ln2g[...], ln2b[...]).astype(jnp.bfloat16)
    f = jnp.dot(h2, wfc[...], preferred_element_type=jnp.float32) + bfc[...]
    f = _quick_gelu(f)
    mlp = jnp.dot(f.astype(jnp.bfloat16), wpr[...],
                  preferred_element_type=jnp.float32) + bpr[...]
    o_ref[...] = (x1 + mlp).astype(o_ref.dtype)


# ------------------------------ pallas_call wrapper --------------------------------------
def _vmem_call(kernel, out_shape, *args):
    # toy shapes -> every operand is one whole-array VMEM block (see TODO re: production tiling)
    return pl.pallas_call(
        kernel,
        out_shape=out_shape,
        in_specs=[pl.BlockSpec(memory_space=pltpu.MemorySpace.VMEM) for _ in args],
        out_specs=pl.BlockSpec(memory_space=pltpu.MemorySpace.VMEM),
    )(*args)


# --------------------------------- module forward ----------------------------------------
def vision_transformer_forward(pp, x, mode='video', return_all_feats=True):
    # x: (N, 3, T, H, W) float32, NCTHW
    N, Cin, T, Him, Wim = x.shape
    ps, C = PATCH, WIDTH
    Hp, Wp = Him // ps, Wim // ps
    L = Hp * Wp + 1
    NT = N * T
    M = NT * L

    # ---- stem: patchify (layout only) -> fused [matmul + cls row + pos + ln_pre] kernel
    patches = x.reshape(N, Cin, T, Hp, ps, Wp, ps)
    patches = patches.transpose(0, 2, 3, 5, 1, 4, 6).reshape(NT * Hp * Wp, Cin * ps * ps)
    st = pp['stem']
    xb = _vmem_call(functools.partial(_stem_kernel, NT=NT, L=L),
                    jax.ShapeDtypeStruct((M, C), jnp.bfloat16),
                    patches, st['wt'], st['pos'], st['g'], st['b'])   # (NT*L, C) bf16

    T_down = T if mode == 'video' else 1
    Nb = NT // T_down
    cls = jnp.broadcast_to(pp['cls_token'], (Nb, C)).astype(jnp.float32)

    for i in range(LAYERS):
        bp = pp['resblocks'][i]
        xb = _vmem_call(functools.partial(_self_block_kernel, NB=NT, L=L, nh=HEADS),
                        jax.ShapeDtypeStruct((M, C), jnp.bfloat16),
                        xb, bp['ln1_g'], bp['ln1_b'], bp['wqkv'], bp['bqkv'],
                        bp['wout'], bp['bout'], bp['ln2_g'], bp['ln2_b'],
                        bp['wfc'], bp['bfc'], bp['wpr'], bp['bpr'])

        dp = pp['dpe'][i]
        dc = pp['dec'][i]
        cls = _vmem_call(functools.partial(_dec_block_kernel,
                                           N=Nb, T=T_down, H=Hp, W=Wp, nh=N_HEAD),
                         jax.ShapeDtypeStruct((Nb, C), jnp.float32),
                         xb, cls, dp['w'], dp['b'],
                         dc['ln1_g'], dc['ln1_b'], dc['ln3_g'], dc['ln3_b'],
                         dc['wq'], dc['bq'], dc['wkv'], dc['bkv'],
                         dc['wout'], dc['bout'], dc['ln2_g'], dc['ln2_b'],
                         dc['wfc'], dc['bfc'], dc['wpr'], dc['bpr'])

    weight = jax.nn.sigmoid(pp['balance'])                            # (C,)
    x4 = xb.reshape(Nb, T_down, L, C).astype(jnp.float32)
    residual = jnp.mean(x4[:, :, 0, :], axis=1)                       # (N, C)
    feats = (1.0 - weight) * cls + weight * residual                  # (N, C)
    x_lntc = x4.transpose(2, 0, 1, 3)                                 # (L, N, T, C)
    final = (1.0 - weight) * cls[None, :, None, :] + weight * x_lntc
    if return_all_feats:
        return feats, final
    return None   # matches the PyTorch forward (returns None when return_all_feats=False)


# ------------------------------- parameter initialization --------------------------------
def init_params():
    key = jax.random.PRNGKey(0)
    cnt = itertools.count()

    def rand(shape, scale=0.02):
        return (scale * jax.random.normal(jax.random.fold_in(key, next(cnt)),
                                          shape)).astype(jnp.float32)

    C = WIDTH
    L = (INPUT_RES // PATCH) ** 2 + 1
    ones = lambda s: jnp.ones(s, jnp.float32)
    zeros = lambda s: jnp.zeros(s, jnp.float32)

    def block_params(d_mlp, with_ln3):
        d = {
            'ln1_w': ones((C,)), 'ln1_b': zeros((C,)),
            'ln2_w': ones((C,)), 'ln2_b': zeros((C,)),
            'in_proj_w': rand((3 * C, C)), 'in_proj_b': rand((3 * C,)),
            'out_proj_w': rand((C, C)), 'out_proj_b': rand((C,)),
            'fc_w': rand((d_mlp, C)), 'fc_b': rand((d_mlp,)),
            'proj_w': rand((C, d_mlp)), 'proj_b': rand((C,)),
        }
        if with_ln3:
            d['ln3_w'] = ones((C,))
            d['ln3_b'] = zeros((C,))
        return d

    return {
        'conv1_w': rand((C, 3, PATCH, PATCH)),   # Conv3d weight (C,3,1,ps,ps), depth-1 squeezed
        'class_embedding': rand((C,)),
        'positional_embedding': rand((L, C)),
        'ln_pre_w': ones((C,)), 'ln_pre_b': zeros((C,)),
        'temporal_cls_token': zeros((1, 1, C)),
        'balance': zeros((C,)),
        'resblocks': [block_params(4 * C, False) for _ in range(LAYERS)],
        'dec': [block_params(int(round(MLP_FACTOR * N_DIM)), True) for _ in range(N_LAYERS)],
        'dpe': [{'w': rand((3, 3, 3, C)), 'b': zeros((C,))} for _ in range(N_LAYERS)],
    }


def prepare_params(p):
    """One-time prep: pre-transpose weights (x @ W layout), bf16 MXU operands, fold cls emb."""
    C = WIDTH
    bf16, f32 = jnp.bfloat16, jnp.float32

    def prep_common(bp):
        return {
            'ln1_g': bp['ln1_w'].reshape(1, C).astype(f32),
            'ln1_b': bp['ln1_b'].reshape(1, C).astype(f32),
            'ln2_g': bp['ln2_w'].reshape(1, C).astype(f32),
            'ln2_b': bp['ln2_b'].reshape(1, C).astype(f32),
            'wout': bp['out_proj_w'].T.astype(bf16),
            'bout': bp['out_proj_b'].reshape(1, C).astype(f32),
            'wfc': bp['fc_w'].T.astype(bf16),
            'bfc': bp['fc_b'].reshape(1, -1).astype(f32),
            'wpr': bp['proj_w'].T.astype(bf16),
            'bpr': bp['proj_b'].reshape(1, C).astype(f32),
        }

    def prep_self(bp):
        d = prep_common(bp)
        d['wqkv'] = bp['in_proj_w'].T.astype(bf16)                    # (C, 3C) [q|k|v]
        d['bqkv'] = bp['in_proj_b'].reshape(1, 3 * C).astype(f32)
        return d

    def prep_cross(bp):
        d = prep_common(bp)
        d['wq'] = bp['in_proj_w'][:C].T.astype(bf16)                  # (C, C)
        d['bq'] = bp['in_proj_b'][:C].reshape(1, C).astype(f32)
        d['wkv'] = bp['in_proj_w'][C:].T.astype(bf16)                 # (C, 2C) [k|v]
        d['bkv'] = bp['in_proj_b'][C:].reshape(1, 2 * C).astype(f32)
        d['ln3_g'] = bp['ln3_w'].reshape(1, C).astype(f32)
        d['ln3_b'] = bp['ln3_b'].reshape(1, C).astype(f32)
        return d

    ps = PATCH
    pos = p['positional_embedding'].at[0].add(p['class_embedding'])   # fold cls into pos row 0
    stem = {
        'wt': p['conv1_w'].reshape(C, 3 * ps * ps).T.astype(bf16),    # (P, C), pre-transposed
        'pos': pos.astype(f32),                                       # (L, C)
        'g': p['ln_pre_w'].reshape(1, C).astype(f32),
        'b': p['ln_pre_b'].reshape(1, C).astype(f32),
    }
    dpe = [{'w': d['w'].reshape(27, C).astype(f32),                   # taps dt-major
            'b': d['b'].reshape(1, C).astype(f32)} for d in p['dpe']]
    return {
        'stem': stem,
        'resblocks': [prep_self(bp) for bp in p['resblocks']],
        'dec': [prep_cross(bp) for bp in p['dec']],
        'dpe': dpe,
        'cls_token': p['temporal_cls_token'].reshape(1, C).astype(f32),
        'balance': p['balance'].astype(f32),
    }


# --------------------------------------- main ---------------------------------------------
if __name__ == "__main__":
    raw_params = init_params()
    pp = prepare_params(raw_params)          # one-time weight layout prep (outside jit)

    key = jax.random.PRNGKey(0)
    # batch=2 videos of 3 channels, T_SIZE frames, 16x16 resolution (NCTHW)
    x = jax.random.normal(key, (2, 3, T_SIZE, INPUT_RES, INPUT_RES), dtype=jnp.float32)

    fwd = jax.jit(functools.partial(vision_transformer_forward,
                                    mode='video', return_all_feats=True))
    feats, final = fwd(pp, x)
    jax.block_until_ready((feats, final))

    L = (INPUT_RES // PATCH) ** 2 + 1
    assert feats.shape == (2, WIDTH), feats.shape
    assert final.shape == (L, 2, T_SIZE, WIDTH), final.shape
    assert jnp.all(jnp.isfinite(feats)) and jnp.all(jnp.isfinite(final))
    print("KERNEL_OK")
</pallas_src>

<mosaic_0001>
module attributes {stable_mosaic.version = 11 : i64} {
  func.func @_stem_kernel(%arg0: memref<16x192xf32, #tpu.memory_space<vmem>>, %arg1: memref<192x32xbf16, #tpu.memory_space<vmem>>, %arg2: memref<5x32xf32, #tpu.memory_space<vmem>>, %arg3: memref<1x32xf32, #tpu.memory_space<vmem>>, %arg4: memref<1x32xf32, #tpu.memory_space<vmem>>, %arg5: memref<20x32xbf16, #tpu.memory_space<vmem>>) attributes {dimension_semantics = [], scalar_prefetch = 0 : i64, scratch_operands = 0 : i64, tpu.core_type = #tpu.core_type<tc>} {
    %c0 = arith.constant 0 : index
    %c0_0 = arith.constant 0 : index
    %0 = vector.load %arg3[%c0, %c0_0] : memref<1x32xf32, #tpu.memory_space<vmem>>, vector<1x32xf32>
    %c0_1 = arith.constant 0 : index
    %c0_2 = arith.constant 0 : index
    %1 = vector.load %arg4[%c0_1, %c0_2] : memref<1x32xf32, #tpu.memory_space<vmem>>, vector<1x32xf32>
    %c0_3 = arith.constant 0 : index
    %c0_4 = arith.constant 0 : index
    %2 = vector.load %arg0[%c0_3, %c0_4] : memref<16x192xf32, #tpu.memory_space<vmem>>, vector<16x192xf32>
    %3 = arith.truncf %2 : vector<16x192xf32> to vector<16x192xbf16>
    %c0_5 = arith.constant 0 : index
    %c0_6 = arith.constant 0 : index
    %4 = vector.load %arg1[%c0_5, %c0_6] : memref<192x32xbf16, #tpu.memory_space<vmem>>, vector<192x32xbf16>
    %cst = arith.constant dense<0.000000e+00> : vector<16x32xf32>
    %5 = tpu.matmul %3, %4, %cst {dimension_numbers = #tpu.dot_dimension_numbers<[1], [0], [0], [1], [0, 0, 1, 1], [], []>} : vector<16x192xbf16>, vector<192x32xbf16>, vector<16x32xf32> -> vector<16x32xf32>
    %c0_7 = arith.constant 0 : index
    %c0_8 = arith.constant 0 : index
    %6 = vector.load %arg2[%c0_7, %c0_8] : memref<5x32xf32, #tpu.memory_space<vmem>>, vector<1x32xf32>
    %cst_9 = arith.constant dense<0.000000e+00> : vector<1xf32>
    %7 = vector.multi_reduction <add>, %6, %cst_9 [1] : vector<1x32xf32> to vector<1xf32>
    %8 = vector.shape_cast %7 : vector<1xf32> to vector<1x1xf32>
    %cst_10 = arith.constant 3.200000e+01 : f32
    %9 = vector.broadcast %cst_10 : f32 to vector<1x1xf32>
    %10 = arith.divf %8, %9 : vector<1x1xf32>
    %11 = vector.broadcast %10 : vector<1x1xf32> to vector<1x32xf32>
    %12 = arith.subf %6, %11 : vector<1x32xf32>
    %13 = arith.mulf %12, %12 : vector<1x32xf32>
    %cst_11 = arith.constant dense<0.000000e+00> : vector<1xf32>
    %14 = vector.multi_reduction <add>, %13, %cst_11 [1] : vector<1x32xf32> to vector<1xf32>
    %15 = vector.shape_cast %14 : vector<1xf32> to vector<1x1xf32>
    %cst_12 = arith.constant 3.200000e+01 : f32
    %16 = vector.broadcast %cst_12 : f32 to vector<1x1xf32>
    %17 = arith.divf %15, %16 : vector<1x1xf32>
    %cst_13 = arith.constant 9.99999974E-6 : f32
    %18 = vector.broadcast %cst_13 : f32 to vector<1x1xf32>
    %19 = arith.addf %17, %18 : vector<1x1xf32>
    %20 = math.rsqrt %19 : vector<1x1xf32>
    %21 = vector.broadcast %20 : vector<1x1xf32> to vector<1x32xf32>
    %22 = arith.mulf %12, %21 : vector<1x32xf32>
    %23 = arith.mulf %22, %0 : vector<1x32xf32>
    %24 = arith.addf %23, %1 : vector<1x32xf32>
    %c1 = arith.constant 1 : index
    %c0_14 = arith.constant 0 : index
    %25 = vector.load %arg2[%c1, %c0_14] : memref<5x32xf32, #tpu.memory_space<vmem>>, vector<4x32xf32>
    %26 = vector.extract_strided_slice %5 {offsets = [0, 0], sizes = [4, 32], strides = [1, 1]} : vector<16x32xf32> to vector<4x32xf32>
    %27 = arith.addf %26, %25 : vector<4x32xf32>
    %cst_15 = arith.constant dense<0.000000e+00> : vector<4xf32>
    %28 = vector.multi_reduction <add>, %27, %cst_15 [1] : vector<4x32xf32> to vector<4xf32>
    %29 = vector.shape_cast %28 : vector<4xf32> to vector<4x1xf32>
    %cst_16 = arith.constant 3.200000e+01 : f32
    %30 = vector.broadcast %cst_16 : f32 to vector<4x1xf32>
    %31 = arith.divf %29, %30 : vector<4x1xf32>
    %32 = vector.broadcast %31 : vector<4x1xf32> to vector<4x32xf32>
    %33 = arith.subf %27, %32 : vector<4x32xf32>
    %34 = arith.mulf %33, %33 : vector<4x32xf32>
    %cst_17 = arith.constant dense<0.000000e+00> : vector<4xf32>
    %35 = vector.multi_reduction <add>, %34, %cst_17 [1] : vector<4x32xf32> to vector<4xf32>
    %36 = vector.shape_cast %35 : vector<4xf32> to vector<4x1xf32>
    %cst_18 = arith.constant 3.200000e+01 : f32
    %37 = vector.broadcast %cst_18 : f32 to vector<4x1xf32>
    %38 = arith.divf %36, %37 : vector<4x1xf32>
    %cst_19 = arith.constant 9.99999974E-6 : f32
    %39 = vector.broadcast %cst_19 : f32 to vector<4x1xf32>
    %40 = arith.addf %38, %39 : vector<4x1xf32>
    %41 = math.rsqrt %40 : vector<4x1xf32>
    %42 = vector.broadcast %41 : vector<4x1xf32> to vector<4x32xf32>
    %43 = arith.mulf %33, %42 : vector<4x32xf32>
    %44 = vector.broadcast %0 : vector<1x32xf32> to vector<4x32xf32>
    %45 = arith.mulf %43, %44 : vector<4x32xf32>
    %46 = vector.broadcast %1 : vector<1x32xf32> to vector<4x32xf32>
    %47 = arith.addf %45, %46 : vector<4x32xf32>
    %48 = vector.extract_strided_slice %5 {offsets = [4, 0], sizes = [4, 32], strides = [1, 1]} : vector<16x32xf32> to vector<4x32xf32>
    %49 = arith.addf %48, %25 : vector<4x32xf32>
    %cst_20 = arith.constant dense<0.000000e+00> : vector<4xf32>
    %50 = vector.multi_reduction <add>, %49, %cst_20 [1] : vector<4x32xf32> to vector<4xf32>
    %51 = vector.shape_cast %50 : vector<4xf32> to vector<4x1xf32>
    %cst_21 = arith.constant 3.200000e+01 : f32
    %52 = vector.broadcast %cst_21 : f32 to vector<4x1xf32>
    %53 = arith.divf %51, %52 : vector<4x1xf32>
    %54 = vector.broadcast %53 : vector<4x1xf32> to vector<4x32xf32>
    %55 = arith.subf %49, %54 : vector<4x32xf32>
    %56 = arith.mulf %55, %55 : vector<4x32xf32>
    %cst_22 = arith.constant dense<0.000000e+00> : vector<4xf32>
    %57 = vector.multi_reduction <add>, %56, %cst_22 [1] : vector<4x32xf32> to vector<4xf32>
    %58 = vector.shape_cast %57 : vector<4xf32> to vector<4x1xf32>
    %cst_23 = arith.constant 3.200000e+01 : f32
    %59 = vector.broadcast %cst_23 : f32 to vector<4x1xf32>
    %60 = arith.divf %58, %59 : vector<4x1xf32>
    %cst_24 = arith.constant 9.99999974E-6 : f32
    %61 = vector.broadcast %cst_24 : f32 to vector<4x1xf32>
    %62 = arith.addf %60, %61 : vector<4x1xf32>
    %63 = math.rsqrt %62 : vector<4x1xf32>
    %64 = vector.broadcast %63 : vector<4x1xf32> to vector<4x32xf32>
    %65 = arith.mulf %55, %64 : vector<4x32xf32>
    %66 = vector.broadcast %0 : vector<1x32xf32> to vector<4x32xf32>
    %67 = arith.mulf %65, %66 : vector<4x32xf32>
    %68 = vector.broadcast %1 : vector<1x32xf32> to vector<4x32xf32>
    %69 = arith.addf %67, %68 : vector<4x32xf32>
    %70 = vector.extract_strided_slice %5 {offsets = [8, 0], sizes = [4, 32], strides = [1, 1]} : vector<16x32xf32> to vector<4x32xf32>
    %71 = arith.addf %70, %25 : vector<4x32xf32>
    %cst_25 = arith.constant dense<0.000000e+00> : vector<4xf32>
    %72 = vector.multi_reduction <add>, %71, %cst_25 [1] : vector<4x32xf32> to vector<4xf32>
    %73 = vector.shape_cast %72 : vector<4xf32> to vector<4x1xf32>
    %cst_26 = arith.constant 3.200000e+01 : f32
    %74 = vector.broadcast %cst_26 : f32 to vector<4x1xf32>
    %75 = arith.divf %73, %74 : vector<4x1xf32>
    %76 = vector.broadcast %75 : vector<4x1xf32> to vector<4x32xf32>
    %77 = arith.subf %71, %76 : vector<4x32xf32>
    %78 = arith.mulf %77, %77 : vector<4x32xf32>
    %cst_27 = arith.constant dense<0.000000e+00> : vector<4xf32>
    %79 = vector.multi_reduction <add>, %78, %cst_27 [1] : vector<4x32xf32> to vector<4xf32>
    %80 = vector.shape_cast %79 : vector<4xf32> to vector<4x1xf32>
    %cst_28 = arith.constant 3.200000e+01 : f32
    %81 = vector.broadcast %cst_28 : f32 to vector<4x1xf32>
    %82 = arith.divf %80, %81 : vector<4x1xf32>
    %cst_29 = arith.constant 9.99999974E-6 : f32
    %83 = vector.broadcast %cst_29 : f32 to vector<4x1xf32>
    %84 = arith.addf %82, %83 : vector<4x1xf32>
    %85 = math.rsqrt %84 : vector<4x1xf32>
    %86 = vector.broadcast %85 : vector<4x1xf32> to vector<4x32xf32>
    %87 = arith.mulf %77, %86 : vector<4x32xf32>
    %88 = vector.broadcast %0 : vector<1x32xf32> to vector<4x32xf32>
    %89 = arith.mulf %87, %88 : vector<4x32xf32>
    %90 = vector.broadcast %1 : vector<1x32xf32> to vector<4x32xf32>
    %91 = arith.addf %89, %90 : vector<4x32xf32>
    %92 = vector.extract_strided_slice %5 {offsets = [12, 0], sizes = [4, 32], strides = [1, 1]} : vector<16x32xf32> to vector<4x32xf32>
    %93 = arith.addf %92, %25 : vector<4x32xf32>
    %cst_30 = arith.constant dense<0.000000e+00> : vector<4xf32>
    %94 = vector.multi_reduction <add>, %93, %cst_30 [1] : vector<4x32xf32> to vector<4xf32>
    %95 = vector.shape_cast %94 : vector<4xf32> to vector<4x1xf32>
    %cst_31 = arith.constant 3.200000e+01 : f32
    %96 = vector.broadcast %cst_31 : f32 to vector<4x1xf32>
    %97 = arith.divf %95, %96 : vector<4x1xf32>
    %98 = vector.broadcast %97 : vector<4x1xf32> to vector<4x32xf32>
    %99 = arith.subf %93, %98 : vector<4x32xf32>
    %100 = arith.mulf %99, %99 : vector<4x32xf32>
    %cst_32 = arith.constant dense<0.000000e+00> : vector<4xf32>
    %101 = vector.multi_reduction <add>, %100, %cst_32 [1] : vector<4x32xf32> to vector<4xf32>
    %102 = vector.shape_cast %101 : vector<4xf32> to vector<4x1xf32>
    %cst_33 = arith.constant 3.200000e+01 : f32
    %103 = vector.broadcast %cst_33 : f32 to vector<4x1xf32>
    %104 = arith.divf %102, %103 : vector<4x1xf32>
    %cst_34 = arith.constant 9.99999974E-6 : f32
    %105 = vector.broadcast %cst_34 : f32 to vector<4x1xf32>
    %106 = arith.addf %104, %105 : vector<4x1xf32>
    %107 = math.rsqrt %106 : vector<4x1xf32>
    %108 = vector.broadcast %107 : vector<4x1xf32> to vector<4x32xf32>
    %109 = arith.mulf %99, %108 : vector<4x32xf32>
    %110 = vector.broadcast %0 : vector<1x32xf32> to vector<4x32xf32>
    %111 = arith.mulf %109, %110 : vector<4x32xf32>
    %112 = vector.broadcast %1 : vector<1x32xf32> to vector<4x32xf32>
    %113 = arith.addf %111, %112 : vector<4x32xf32>
    %114 = tpu.concatenate %24, %47, %24, %69, %24, %91, %24, %113 in 0 : vector<1x32xf32>, vector<4x32xf32>, vector<1x32xf32>, vector<4x32xf32>, vector<1x32xf32>, vector<4x32xf32>, vector<1x32xf32>, vector<4x32xf32> -> vector<20x32xf32>
    %115 = arith.truncf %114 : vector<20x32xf32> to vector<20x32xbf16>
    %c0_35 = arith.constant 0 : index
    %c0_36 = arith.constant 0 : index
    %116 = vector.load %arg5[%c0_35, %c0_36] : memref<20x32xbf16, #tpu.memory_space<vmem>>, vector<20x32xbf16>
    tpu.vector_store %arg5[%c0_35, %c0_36], %115 {strides = array<i32>} : memref<20x32xbf16, #tpu.memory_space<vmem>>, vector<20x32xbf16>,
    return
  }
}

module attributes {stable_mosaic.version = 11 : i64} {
  func.func @_self_block_kernel(%arg0: memref<20x32xbf16, #tpu.memory_space<vmem>>, %arg1: memref<1x32xf32, #tpu.memory_space<vmem>>, %arg2: memref<1x32xf32, #tpu.memory_space<vmem>>, %arg3: memref<32x96xbf16, #tpu.memory_space<vmem>>, %arg4: memref<1x96xf32, #tpu.memory_space<vmem>>, %arg5: memref<32x32xbf16, #tpu.memory_space<vmem>>, %arg6: memref<1x32xf32, #tpu.memory_space<vmem>>, %arg7: memref<1x32xf32, #tpu.memory_space<vmem>>, %arg8: memref<1x32xf32, #tpu.memory_space<vmem>>, %arg9: memref<32x128xbf16, #tpu.memory_space<vmem>>, %arg10: memref<1x128xf32, #tpu.memory_space<vmem>>, %arg11: memref<128x32xbf16, #tpu.memory_space<vmem>>, %arg12: memref<1x32xf32, #tpu.memory_space<vmem>>, %arg13: memref<20x32xbf16, #tpu.memory_space<vmem>>) attributes {dimension_semantics = [], scalar_prefetch = 0 : i64, scratch_operands = 0 : i64, tpu.core_type = #tpu.core_type<tc>} {
    %c0 = arith.constant 0 : index
    %c0_0 = arith.constant 0 : index
    %0 = vector.load %arg0[%c0, %c0_0] : memref<20x32xbf16, #tpu.memory_space<vmem>>, vector<20x32xbf16>
    %1 = arith.extf %0 : vector<20x32xbf16> to vector<20x32xf32>
    %c0_1 = arith.constant 0 : index
    %c0_2 = arith.constant 0 : index
    %2 = vector.load %arg1[%c0_1, %c0_2] : memref<1x32xf32, #tpu.memory_space<vmem>>, vector<1x32xf32>
    %c0_3 = arith.constant 0 : index
    %c0_4 = arith.constant 0 : index
    %3 = vector.load %arg2[%c0_3, %c0_4] : memref<1x32xf32, #tpu.memory_space<vmem>>, vector<1x32xf32>
    %cst = arith.constant dense<0.000000e+00> : vector<20xf32>
    %4 = vector.multi_reduction <add>, %1, %cst [1] : vector<20x32xf32> to vector<20xf32>
    %5 = vector.shape_cast %4 : vector<20xf32> to vector<20x1xf32>
    %cst_5 = arith.constant 3.200000e+01 : f32
    %6 = vector.broadcast %cst_5 : f32 to vector<20x1xf32>
    %7 = arith.divf %5, %6 : vector<20x1xf32>
    %8 = vector.broadcast %7 : vector<20x1xf32> to vector<20x32xf32>
    %9 = arith.subf %1, %8 : vector<20x32xf32>
    %10 = arith.mulf %9, %9 : vector<20x32xf32>
    %cst_6 = arith.constant dense<0.000000e+00> : vector<20xf32>
    %11 = vector.multi_reduction <add>, %10, %cst_6 [1] : vector<20x32xf32> to vector<20xf32>
    %12 = vector.shape_cast %11 : vector<20xf32> to vector<20x1xf32>
    %cst_7 = arith.constant 3.200000e+01 : f32
    %13 = vector.broadcast %cst_7 : f32 to vector<20x1xf32>
    %14 = arith.divf %12, %13 : vector<20x1xf32>
    %cst_8 = arith.constant 9.99999974E-6 : f32
    %15 = vector.broadcast %cst_8 : f32 to vector<20x1xf32>
    %16 = arith.addf %14, %15 : vector<20x1xf32>
    %17 = math.rsqrt %16 : vector<20x1xf32>
    %18 = vector.broadcast %17 : vector<20x1xf32> to vector<20x32xf32>
    %19 = arith.mulf %9, %18 : vector<20x32xf32>
    %20 = vector.broadcast %2 : vector<1x32xf32> to vector<20x32xf32>
    %21 = arith.mulf %19, %20 : vector<20x32xf32>
    %22 = vector.broadcast %3 : vector<1x32xf32> to vector<20x32xf32>
    %23 = arith.addf %21, %22 : vector<20x32xf32>
    %24 = arith.truncf %23 : vector<20x32xf32> to vector<20x32xbf16>
    %c0_9 = arith.constant 0 : index
    %c0_10 = arith.constant 0 : index
    %25 = vector.load %arg3[%c0_9, %c0_10] : memref<32x96xbf16, #tpu.memory_space<vmem>>, vector<32x96xbf16>
    %cst_11 = arith.constant dense<0.000000e+00> : vector<20x96xf32>
    %26 = tpu.matmul %24, %25, %cst_11 {dimension_numbers = #tpu.dot_dimension_numbers<[1], [0], [0], [1], [0, 0, 1, 1], [], []>} : vector<20x32xbf16>, vector<32x96xbf16>, vector<20x96xf32> -> vector<20x96xf32>
    %c0_12 = arith.constant 0 : index
    %c0_13 = arith.constant 0 : index
    %27 = vector.load %arg4[%c0_12, %c0_13] : memref<1x96xf32, #tpu.memory_space<vmem>>, vector<1x96xf32>
    %28 = vector.broadcast %27 : vector<1x96xf32> to vector<20x96xf32>
    %29 = arith.addf %26, %28 : vector<20x96xf32>
    %30 = vector.extract_strided_slice %29 {offsets = [0, 0], sizes = [20, 32], strides = [1, 1]} : vector<20x96xf32> to vector<20x32xf32>
    %31 = vector.extract_strided_slice %29 {offsets = [0, 32], sizes = [20, 32], strides = [1, 1]} : vector<20x96xf32> to vector<20x32xf32>
    %32 = vector.extract_strided_slice %29 {offsets = [0, 64], sizes = [20, 32], strides = [1, 1]} : vector<20x96xf32> to vector<20x32xf32>
    %33 = vector.extract_strided_slice %30 {offsets = [0, 0], sizes = [5, 32], strides = [1, 1]} : vector<20x32xf32> to vector<5x32xf32>
    %34 = arith.truncf %33 : vector<5x32xf32> to vector<5x32xbf16>
    %35 = vector.extract_strided_slice %31 {offsets = [0, 0], sizes = [5, 32], strides = [1, 1]} : vector<20x32xf32> to vector<5x32xf32>
    %36 = arith.truncf %35 : vector<5x32xf32> to vector<5x32xbf16>
    %37 = vector.extract_strided_slice %32 {offsets = [0, 0], sizes = [5, 32], strides = [1, 1]} : vector<20x32xf32> to vector<5x32xf32>
    %38 = arith.truncf %37 : vector<5x32xf32> to vector<5x32xbf16>
    %39 = vector.extract_strided_slice %34 {offsets = [0, 0], sizes = [5, 8], strides = [1, 1]} : vector<5x32xbf16> to vector<5x8xbf16>
    %40 = vector.extract_strided_slice %36 {offsets = [0, 0], sizes = [5, 8], strides = [1, 1]} : vector<5x32xbf16> to vector<5x8xbf16>
    %cst_14 = arith.constant dense<0.000000e+00> : vector<5x5xf32>
    %41 = tpu.matmul %39, %40, %cst_14 {dimension_numbers = #tpu.dot_dimension_numbers<[1], [1], [0], [0], [0, 0, 1, 0], [], []>} : vector<5x8xbf16>, vector<5x8xbf16>, vector<5x5xf32> -> vector<5x5xf32>
    %cst_15 = arith.constant 0.353553385 : f32
    %42 = vector.broadcast %cst_15 : f32 to vector<5x5xf32>
    %43 = arith.mulf %41, %42 : vector<5x5xf32>
    %cst_16 = arith.constant dense<0xFF800000> : vector<5xf32>
    %44 = vector.multi_reduction <maximumf>, %43, %cst_16 [1] : vector<5x5xf32> to vector<5xf32>
    %45 = vector.shape_cast %44 : vector<5xf32> to vector<5x1xf32>
    %46 = vector.broadcast %45 : vector<5x1xf32> to vector<5x5xf32>
    %47 = arith.subf %43, %46 : vector<5x5xf32>
    %48 = math.exp %47 : vector<5x5xf32>
    %cst_17 = arith.constant dense<0.000000e+00> : vector<5xf32>
    %49 = vector.multi_reduction <add>, %48, %cst_17 [1] : vector<5x5xf32> to vector<5xf32>
    %50 = vector.shape_cast %49 : vector<5xf32> to vector<5x1xf32>
    %51 = tpu.reciprocal %50 {approx = true} : vector<5x1xf32> -> vector<5x1xf32>
    %52 = vector.broadcast %51 : vector<5x1xf32> to vector<5x5xf32>
    %53 = arith.mulf %48, %52 : vector<5x5xf32>
    %54 = arith.truncf %53 : vector<5x5xf32> to vector<5x5xbf16>
    %55 = vector.extract_strided_slice %38 {offsets = [0, 0], sizes = [5, 8], strides = [1, 1]} : vector<5x32xbf16> to vector<5x8xbf16>
    %cst_18 = arith.constant dense<0.000000e+00> : vector<5x8xf32>
    %56 = tpu.matmul %54, %55, %cst_18 {dimension_numbers = #tpu.dot_dimension_numbers<[1], [0], [0], [1], [0, 0, 1, 1], [], []>} : vector<5x5xbf16>, vector<5x8xbf16>, vector<5x8xf32> -> vector<5x8xf32>
    %57 = vector.extract_strided_slice %34 {offsets = [0, 8], sizes = [5, 8], strides = [1, 1]} : vector<5x32xbf16> to vector<5x8xbf16>
    %58 = vector.extract_strided_slice %36 {offsets = [0, 8], sizes = [5, 8], strides = [1, 1]} : vector<5x32xbf16> to vector<5x8xbf16>
    %cst_19 = arith.constant dense<0.000000e+00> : vector<5x5xf32>
    %59 = tpu.matmul %57, %58, %cst_19 {dimension_numbers = #tpu.dot_dimension_numbers<[1], [1], [0], [0], [0, 0, 1, 0], [], []>} : vector<5x8xbf16>, vector<5x8xbf16>, vector<5x5xf32> -> vector<5x5xf32>
    %cst_20 = arith.constant 0.353553385 : f32
    %60 = vector.broadcast %cst_20 : f32 to vector<5x5xf32>
    %61 = arith.mulf %59, %60 : vector<5x5xf32>
    %cst_21 = arith.constant dense<0xFF800000> : vector<5xf32>
    %62 = vector.multi_reduction <maximumf>, %61, %cst_21 [1] : vector<5x5xf32> to vector<5xf32>
    %63 = vector.shape_cast %62 : vector<5xf32> to vector<5x1xf32>
    %64 = vector.broadcast %63 : vector<5x1xf32> to vector<5x5xf32>
    %65 = arith.subf %61, %64 : vector<5x5xf32>
    %66 = math.exp %65 : vector<5x5xf32>
    %cst_22 = arith.constant dense<0.000000e+00> : vector<5xf32>
    %67 = vector.multi_reduction <add>, %66, %cst_22 [1] : vector<5x5xf32> to vector<5xf32>
    %68 = vector.shape_cast %67 : vector<5xf32> to vector<5x1xf32>
    %69 = tpu.reciprocal %68 {approx = true} : vector<5x1xf32> -> vector<5x1xf32>
    %70 = vector.broadcast %69 : vector<5x1xf32> to vector<5x5xf32>
    %71 = arith.mulf %66, %70 : vector<5x5xf32>
    %72 = arith.truncf %71 : vector<5x5xf32> to vector<5x5xbf16>
    %73 = vector.extract_strided_slice %38 {offsets = [0, 8], sizes = [5, 8], strides = [1, 1]} : vector<5x32xbf16> to vector<5x8xbf16>
    %cst_23 = arith.constant dense<0.000000e+00> : vector<5x8xf32>
    %74 = tpu.matmul %72, %73, %cst_23 {dimension_numbers = #tpu.dot_dimension_numbers<[1], [0], [0], [1], [0, 0, 1, 1], [], []>} : vector<5x5xbf16>, vector<5x8xbf16>, vector<5x8xf32> -> vector<5x8xf32>
    %75 = vector.extract_strided_slice %34 {offsets = [0, 16], sizes = [5, 8], strides = [1, 1]} : vector<5x32xbf16> to vector<5x8xbf16>
    %76 = vector.extract_strided_slice %36 {offsets = [0, 16], sizes = [5, 8], strides = [1, 1]} : vector<5x32xbf16> to vector<5x8xbf16>
    %cst_24 = arith.constant dense<0.000000e+00> : vector<5x5xf32>
    %77 = tpu.matmul %75, %76, %cst_24 {dimension_numbers = #tpu.dot_dimension_numbers<[1], [1], [0], [0], [0, 0, 1, 0], [], []>} : vector<5x8xbf16>, vector<5x8xbf16>, vector<5x5xf32> -> vector<5x5xf32>
    %cst_25 = arith.constant 0.353553385 : f32
    %78 = vector.broadcast %cst_25 : f32 to vector<5x5xf32>
    %79 = arith.mulf %77, %78 : vector<5x5xf32>
    %cst_26 = arith.constant dense<0xFF800000> : vector<5xf32>
    %80 = vector.multi_reduction <maximumf>, %79, %cst_26 [1] : vector<5x5xf32> to vector<5xf32>
    %81 = vector.shape_cast %80 : vector<5xf32> to vector<5x1xf32>
    %82 = vector.broadcast %81 : vector<5x1xf32> to vector<5x5xf32>
    %83 = arith.subf %79, %82 : vector<5x5xf32>
    %84 = math.exp %83 : vector<5x5xf32>
    %cst_27 = arith.constant dense<0.000000e+00> : vector<5xf32>
    %85 = vector.multi_reduction <add>, %84, %cst_27 [1] : vector<5x5xf32> to vector<5xf32>
    %86 = vector.shape_cast %85 : vector<5xf32> to vector<5x1xf32>
    %87 = tpu.reciprocal %86 {approx = true} : vector<5x1xf32> -> vector<5x1xf32>
    %88 = vector.broadcast %87 : vector<5x1xf32> to vector<5x5xf32>
    %89 = arith.mulf %84, %88 : vector<5x5xf32>
    %90 = arith.truncf %89 : vector<5x5xf32> to vector<5x5xbf16>
    %91 = vector.extract_strided_slice %38 {offsets = [0, 16], sizes = [5, 8], strides = [1, 1]} : vector<5x32xbf16> to vector<5x8xbf16>
    %cst_28 = arith.constant dense<0.000000e+00> : vector<5x8xf32>
    %92 = tpu.matmul %90, %91, %cst_28 {dimension_numbers = #tpu.dot_dimension_numbers<[1], [0], [0], [1], [0, 0, 1, 1], [], []>} : vector<5x5xbf16>, vector<5x8xbf16>, vector<5x8xf32> -> vector<5x8xf32>
    %93 = vector.extract_strided_slice %34 {offsets = [0, 24], sizes = [5, 8], strides = [1, 1]} : vector<5x32xbf16> to vector<5x8xbf16>
    %94 = vector.extract_strided_slice %36 {offsets = [0, 24], sizes = [5, 8], strides = [1, 1]} : vector<5x32xbf16> to vector<5x8xbf16>
    %cst_29 = arith.constant dense<0.000000e+00> : vector<5x5xf32>
    %95 = tpu.matmul %93, %94, %cst_29 {dimension_numbers = #tpu.dot_dimension_numbers<[1], [1], [0], [0], [0, 0, 1, 0], [], []>} : vector<5x8xbf16>, vector<5x8xbf16>, vector<5x5xf32> -> vector<5x5xf32>
    %cst_30 = arith.constant 0.353553385 : f32
    %96 = vector.broadcast %cst_30 : f32 to vector<5x5xf32>
    %97 = arith.mulf %95, %96 : vector<5x5xf32>
    %cst_31 = arith.constant dense<0xFF800000> : vector<5xf32>
    %98 = vector.multi_reduction <maximumf>, %97, %cst_31 [1] : vector<5x5xf32> to vector<5xf32>
    %99 = vector.shape_cast %98 : vector<5xf32> to vector<5x1xf32>
    %100 = vector.broadcast %99 : vector<5x1xf32> to vector<5x5xf32>
    %101 = arith.subf %97, %100 : vector<5x5xf32>
    %102 = math.exp %101 : vector<5x5xf32>
    %cst_32 = arith.constant dense<0.000000e+00> : vector<5xf32>
    %103 = vector.multi_reduction <add>, %102, %cst_32 [1] : vector<5x5xf32> to vector<5xf32>
    %104 = vector.shape_cast %103 : vector<5xf32> to vector<5x1xf32>
    %105 = tpu.reciprocal %104 {approx = true} : vector<5x1xf32> -> vector<5x1xf32>
    %106 = vector.broadcast %105 : vector<5x1xf32> to vector<5x5xf32>
    %107 = arith.mulf %102, %106 : vector<5x5xf32>
    %108 = arith.truncf %107 : vector<5x5xf32> to vector<5x5xbf16>
    %109 = vector.extract_strided_slice %38 {offsets = [0, 24], sizes = [5, 8], strides = [1, 1]} : vector<5x32xbf16> to vector<5x8xbf16>
    %cst_33 = arith.constant dense<0.000000e+00> : vector<5x8xf32>
    %110 = tpu.matmul %108, %109, %cst_33 {dimension_numbers = #tpu.dot_dimension_numbers<[1], [0], [0], [1], [0, 0, 1, 1], [], []>} : vector<5x5xbf16>, vector<5x8xbf16>, vector<5x8xf32> -> vector<5x8xf32>
    %111 = tpu.concatenate %56, %74, %92, %110 in 1 : vector<5x8xf32>, vector<5x8xf32>, vector<5x8xf32>, vector<5x8xf32> -> vector<5x32xf32>
    %112 = vector.extract_strided_slice %30 {offsets = [5, 0], sizes = [5, 32], strides = [1, 1]} : vector<20x32xf32> to vector<5x32xf32>
    %113 = arith.truncf %112 : vector<5x32xf32> to vector<5x32xbf16>
    %114 = vector.extract_strided_slice %31 {offsets = [5, 0], sizes = [5, 32], strides = [1, 1]} : vector<20x32xf32> to vector<5x32xf32>
    %115 = arith.truncf %114 : vector<5x32xf32> to vector<5x32xbf16>
    %116 = vector.extract_strided_slice %32 {offsets = [5, 0], sizes = [5, 32], strides = [1, 1]} : vector<20x32xf32> to vector<5x32xf32>
    %117 = arith.truncf %116 : vector<5x32xf32> to vector<5x32xbf16>
    %118 = vector.extract_strided_slice %113 {offsets = [0, 0], sizes = [5, 8], strides = [1, 1]} : vector<5x32xbf16> to vector<5x8xbf16>
    %119 = vector.extract_strided_slice %115 {offsets = [0, 0], sizes = [5, 8], strides = [1, 1]} : vector<5x32xbf16> to vector<5x8xbf16>
    %cst_34 = arith.constant dense<0.000000e+00> : vector<5x5xf32>
    %120 = tpu.matmul %118, %119, %cst_34 {dimension_numbers = #tpu.dot_dimension_numbers<[1], [1], [0], [0], [0, 0, 1, 0], [], []>} : vector<5x8xbf16>, vector<5x8xbf16>, vector<5x5xf32> -> vector<5x5xf32>
    %cst_35 = arith.constant 0.353553385 : f32
    %121 = vector.broadcast %cst_35 : f32 to vector<5x5xf32>
    %122 = arith.mulf %120, %121 : vector<5x5xf32>
    %cst_36 = arith.constant dense<0xFF800000> : vector<5xf32>
    %123 = vector.multi_reduction <maximumf>, %122, %cst_36 [1] : vector<5x5xf32> to vector<5xf32>
    %124 = vector.shape_cast %123 : vector<5xf32> to vector<5x1xf32>
    %125 = vector.broadcast %124 : vector<5x1xf32> to vector<5x5xf32>
    %126 = arith.subf %122, %125 : vector<5x5xf32>
    %127 = math.exp %126 : vector<5x5xf32>
    %cst_37 = arith.constant dense<0.000000e+00> : vector<5xf32>
    %128 = vector.multi_reduction <add>, %127, %cst_37 [1] : vector<5x5xf32> to vector<5xf32>
    %129 = vector.shape_cast %128 : vector<5xf32> to vector<5x1xf32>
    %130 = tpu.reciprocal %129 {approx = true} : vector<5x1xf32> -> vector<5x1xf32>
    %131 = vector.broadcast %130 : vector<5x1xf32> to vector<5x5xf32>
    %132 = arith.mulf %127, %131 : vector<5x5xf32>
    %133 = arith.truncf %132 : vector<5x5xf32> to vector<5x5xbf16>
    %134 = vector.extract_strided_slice %117 {offsets = [0, 0], sizes = [5, 8], strides = [1, 1]} : vector<5x32xbf16> to vector<5x8xbf16>
    %cst_38 = arith.constant dense<0.000000e+00> : vector<5x8xf32>
    %135 = tpu.matmul %133, %134, %cst_38 {dimension_numbers = #tpu.dot_dimension_numbers<[1], [0], [0], [1], [0, 0, 1, 1], [], []>} : vector<5x5xbf16>, vector<5x8xbf16>, vector<5x8xf32> -> vector<5x8xf32>
    %136 = vector.extract_strided_slice %113 {offsets = [0, 8], sizes = [5, 8], strides = [1, 1]} : vector<5x32xbf16> to vector<5x8xbf16>
    %137 = vector.extract_strided_slice %115 {offsets = [0, 8], sizes = [5, 8], strides = [1, 1]} : vector<5x32xbf16> to vector<5x8xbf16>
    %cst_39 = arith.constant dense<0.000000e+00> : vector<5x5xf32>
    %138 = tpu.matmul %136, %137, %cst_39 {dimension_numbers = #tpu.dot_dimension_numbers<[1], [1], [0], [0], [0, 0, 1, 0], [], []>} : vector<5x8xbf16>, vector<5x8xbf16>, vector<5x5xf32> -> vector<5x5xf32>
    %cst_40 = arith.constant 0.353553385 : f32
    %139 = vector.broadcast %cst_40 : f32 to vector<5x5xf32>
    %140 = arith.mulf %138, %139 : vector<5x5xf32>
    %cst_41 = arith.constant dense<0xFF800000> : vector<5xf32>
    %141 = vector.multi_reduction <maximumf>, %140, %cst_41 [1] : vector<5x5xf32> to vector<5xf32>
    %142 = vector.shape_cast %141 : vector<5xf32> to vector<5x1xf32>
    %143 = vector.broadcast %142 : vector<5x1xf32> to vector<5x5xf32>
    %144 = arith.subf %140, %143 : vector<5x5xf32>
    %145 = math.exp %144 : vector<5x5xf32>
    %cst_42 = arith.constant dense<0.000000e+00> : vector<5xf32>
    %146 = vector.multi_reduction <add>, %145, %cst_42 [1] : vector<5x5xf32> to vector<5xf32>
    %147 = vector.shape_cast %146 : vector<5xf32> to vector<5x1xf32>
    %148 = tpu.reciprocal %147 {approx = true} : vector<5x1xf32> -> vector<5x1xf32>
    %149 = vector.broadcast %148 : vector<5x1xf32> to vector<5x5xf32>
    %150 = arith.mulf %145, %149 : vector<5x5xf32>
    %151 = arith.truncf %150 : vector<5x5xf32> to vector<5x5xbf16>
    %152 = vector.extract_strided_slice %117 {offsets = [0, 8], sizes = [5, 8], strides = [1, 1]} : vector<5x32xbf16> to vector<5x8xbf16>
    %cst_43 = arith.constant dense<0.000000e+00> : vector<5x8xf32>
    %153 = tpu.matmul %151, %152, %cst_43 {dimension_numbers = #tpu.dot_dimension_numbers<[1], [0], [0], [1], [0, 0, 1, 1], [], []>} : vector<5x5xbf16>, vector<5x8xbf16>, vector<5x8xf32> -> vector<5x8xf32>
    %154 = vector.extract_strided_slice %113 {offsets = [0, 16], sizes = [5, 8], strides = [1, 1]} : vector<5x32xbf16> to vector<5x8xbf16>
    %155 = vector.extract_strided_slice %115 {offsets = [0, 16], sizes = [5, 8], strides = [1, 1]} : vector<5x32xbf16> to vector<5x8xbf16>
    %cst_44 = arith.constant dense<0.000000e+00> : vector<5x5xf32>
    %156 = tpu.matmul %154, %155, %cst_44 {dimension_numbers = #tpu.dot_dimension_numbers<[1], [1], [0], [0], [0, 0, 1, 0], [], []>} : vector<5x8xbf16>, vector<5x8xbf16>, vector<5x5xf32> -> vector<5x5xf32>
    %cst_45 = arith.constant 0.353553385 : f32
    %157 = vector.broadcast %cst_45 : f32 to vector<5x5xf32>
    %158 = arith.mulf %156, %157 : vector<5x5xf32>
    %cst_46 = arith.constant dense<0xFF800000> : vector<5xf32>
    %159 = vector.multi_reduction <maximumf>, %158, %cst_46 [1] : vector<5x5xf32> to vector<5xf32>
    %160 = vector.shape_cast %159 : vector<5xf32> to vector<5x1xf32>
    %161 = vector.broadcast %160 : vector<5x1xf32> to vector<5x5xf32>
    %162 = arith.subf %158, %161 : vector<5x5xf32>
    %163 = math.exp %162 : vector<5x5xf32>
    %cst_47 = arith.constant dense<0.000000e+00> : vector<5xf32>
    %164 = vector.multi_reduction <add>, %163, %cst_47 [1] : vector<5x5xf32> to vector<5xf32>
    %165 = vector.shape_cast %164 : vector<5xf32> to vector<5x1xf32>
    %166 = tpu.reciprocal %165 {approx = true} : vector<5x1xf32> -> vector<5x1xf32>
    %167 = vector.broadcast %166 : vector<5x1xf32> to vector<5x5xf32>
    %168 = arith.mulf %163, %167 : vector<5x5xf32>
    %169 = arith.truncf %168 : vector<5x5xf32> to vector<5x5xbf16>
    %170 = vector.extract_strided_slice %117 {offsets = [0, 16], sizes = [5, 8], strides = [1, 1]} : vector<5x32xbf16> to vector<5x8xbf16>
    %cst_48 = arith.constant dense<0.000000e+00> : vector<5x8xf32>
    %171 = tpu.matmul %169, %170, %cst_48 {dimension_numbers = #tpu.dot_dimension_numbers<[1], [0], [0], [1], [0, 0, 1, 1], [], []>} : vector<5x5xbf16>, vector<5x8xbf16>, vector<5x8xf32> -> vector<5x8xf32>
    %172 = vector.extract_strided_slice %113 {offsets = [0, 24], sizes = [5, 8], strides = [1, 1]} : vector<5x32xbf16> to vector<5x8xbf16>
    %173 = vector.extract_strided_slice %115 {offsets = [0, 24], sizes = [5, 8], strides = [1, 1]} : vector<5x32xbf16> to vector<5x8xbf16>
    %cst_49 = arith.constant dense<0.000000e+00> : vector<5x5xf32>
    %174 = tpu.matmul %172, %173, %cst_49 {dimension_numbers = #tpu.dot_dimension_numbers<[1], [1], [0], [0], [0, 0, 1, 0], [], []>} : vector<5x8xbf16>, vector<5x8xbf16>, vector<5x5xf32> -> vector<5x5xf32>
    %cst_50 = arith.constant 0.353553385 : f32
    %175 = vector.broadcast %cst_50 : f32 to vector<5x5xf32>
    %176 = arith.mulf %174, %175 : vector<5x5xf32>
    %cst_51 = arith.constant dense<0xFF800000> : vector<5xf32>
    %177 = vector.multi_reduction <maximumf>, %176, %cst_51 [1] : vector<5x5xf32> to vector<5xf32>
    %178 = vector.shape_cast %177 : vector<5xf32> to vector<5x1xf32>
    %179 = vector.broadcast %178 : vector<5x1xf32> to vector<5x5xf32>
    %180 = arith.subf %176, %179 : vector<5x5xf32>
    %181 = math.exp %180 : vector<5x5xf32>
    %cst_52 = arith.constant dense<0.000000e+00> : vector<5xf32>
    %182 = vector.multi_reduction <add>, %181, %cst_52 [1] : vector<5x5xf32> to vector<5xf32>
    %183 = vector.shape_cast %182 : vector<5xf32> to vector<5x1xf32>
    %184 = tpu.reciprocal %183 {approx = true} : vector<5x1xf32> -> vector<5x1xf32>
    %185 = vector.broadcast %184 : vector<5x1xf32> to vector<5x5xf32>
    %186 = arith.mulf %181, %185 : vector<5x5xf32>
    %187 = arith.truncf %186 : vector<5x5xf32> to vector<5x5xbf16>
    %188 = vector.extract_strided_slice %117 {offsets = [0, 24], sizes = [5, 8], strides = [1, 1]} : vector<5x32xbf16> to vector<5x8xbf16>
    %cst_53 = arith.constant dense<0.000000e+00> : vector<5x8xf32>
    %189 = tpu.matmul %187, %188, %cst_53 {dimension_numbers = #tpu.dot_dimension_numbers<[1], [0], [0], [1], [0, 0, 1, 1], [], []>} : vector<5x5xbf16>, vector<5x8xbf16>, vector<5x8xf32> -> vector<5x8xf32>
    %190 = tpu.concatenate %135, %153, %171, %189 in 1 : vector<5x8xf32>, vector<5x8xf32>, vector<5x8xf32>, vector<5x8xf32> -> vector<5x32xf32>
    %191 = vector.extract_strided_slice %30 {offsets = [10, 0], sizes = [5, 32], strides = [1, 1]} : vector<20x32xf32> to vector<5x32xf32>
    %192 = arith.truncf %191 : vector<5x32xf32> to vector<5x32xbf16>
    %193 = vector.extract_strided_slice %31 {offsets = [10, 0], sizes = [5, 32], strides = [1, 1]} : vector<20x32xf32> to vector<5x32xf32>
    %194 = arith.truncf %193 : vector<5x32xf32> to vector<5x32xbf16>
    %195 = vector.extract_strided_slice %32 {offsets = [10, 0], sizes = [5, 32], strides = [1, 1]} : vector<20x32xf32> to vector<5x32xf32>
    %196 = arith.truncf %195 : vector<5x32xf32> to vector<5x32xbf16>
    %197 = vector.extract_strided_slice %192 {offsets = [0, 0], sizes = [5, 8], strides = [1, 1]} : vector<5x32xbf16> to vector<5x8xbf16>
    %198 = vector.extract_strided_slice %194 {offsets = [0, 0], sizes = [5, 8], strides = [1, 1]} : vector<5x32xbf16> to vector<5x8xbf16>
    %cst_54 = arith.constant dense<0.000000e+00> : vector<5x5xf32>
    %199 = tpu.matmul %197, %198, %cst_54 {dimension_numbers = #tpu.dot_dimension_numbers<[1], [1], [0], [0], [0, 0, 1, 0], [], []>} : vector<5x8xbf16>, vector<5x8xbf16>, vector<5x5xf32> -> vector<5x5xf32>
    %cst_55 = arith.constant 0.353553385 : f32
    %200 = vector.broadcast %cst_55 : f32 to vector<5x5xf32>
    %201 = arith.mulf %199, %200 : vector<5x5xf32>
    %cst_56 = arith.constant dense<0xFF800000> : vector<5xf32>
    %202 = vector.multi_reduction <maximumf>, %201, %cst_56 [1] : vector<5x5xf32> to vector<5xf32>
    %203 = vector.shape_cast %202 : vector<5xf32> to vector<5x1xf32>
    %204 = vector.broadcast %203 : vector<5x1xf32> to vector<5x5xf32>
    %205 = arith.subf %201, %204 : vector<5x5xf32>
    %206 = math.exp %205 : vector<5x5xf32>
    %cst_57 = arith.constant dense<0.000000e+00> : vector<5xf32>
    %207 = vector.multi_reduction <add>, %206, %cst_57 [1] : vector<5x5xf32> to vector<5xf32>
    %208 = vector.shape_cast %207 : vector<5xf32> to vector<5x1xf32>
    %209 = tpu.reciprocal %208 {approx = true} : vector<5x1xf32> -> vector<5x1xf32>
    %210 = vector.broadcast %209 : vector<5x1xf32> to vector<5x5xf32>
    %211 = arith.mulf %206, %210 : vector<5x5xf32>
    %212 = arith.truncf %211 : vector<5x5xf32> to vector<5x5xbf16>
    %213 = vector.extract_strided_slice %196 {offsets = [0, 0], sizes = [5, 8], strides = [1, 1]} : vector<5x32xbf16> to vector<5x8xbf16>
    %cst_58 = arith.constant dense<0.000000e+00> : vector<5x8xf32>
    %214 = tpu.matmul %212, %213, %cst_58 {dimension_numbers = #tpu.dot_dimension_numbers<[1], [0], [0], [1], [0, 0, 1, 1], [], []>} : vector<5x5xbf16>, vector<5x8xbf16>, vector<5x8xf32> -> vector<5x8xf32>
    %215 = vector.extract_strided_slice %192 {offsets = [0, 8], sizes = [5, 8], strides = [1, 1]} : vector<5x32xbf16> to vector<5x8xbf16>
    %216 = vector.extract_strided_slice %194 {offsets = [0, 8], sizes = [5, 8], strides = [1, 1]} : vector<5x32xbf16> to vector<5x8xbf16>
    %cst_59 = arith.constant dense<0.000000e+00> : vector<5x5xf32>
    %217 = tpu.matmul %215, %216, %cst_59 {dimension_numbers = #tpu.dot_dimension_numbers<[1], [1], [0], [0], [0, 0, 1, 0], [], []>} : vector<5x8xbf16>, vector<5x8xbf16>, vector<5x5xf32> -> vector<5x5xf32>
    %cst_60 = arith.constant 0.353553385 : f32
    %218 = vector.broadcast %cst_60 : f32 to vector<5x5xf32>
    %219 = arith.mulf %217, %218 : vector<5x5xf32>
    %cst_61 = arith.constant dense<0xFF800000> : vector<5xf32>
    %220 = vector.multi_reduction <maximumf>, %219, %cst_61 [1] : vector<5x5xf32> to vector<5xf32>
    %221 = vector.shape_cast %220 : vector<5xf32> to vector<5x1xf32>
    %222 = vector.broadcast %221 : vector<5x1xf32> to vector<5x5xf32>
    %223 = arith.subf %219, %222 : vector<5x5xf32>
    %224 = math.exp %223 : vector<5x5xf32>
    %cst_62 = arith.constant dense<0.000000e+00> : vector<5xf32>
    %225 = vector.multi_reduction <add>, %224, %cst_62 [1] : vector<5x5xf32> to vector<5xf32>
    %226 = vector.shape_cast %225 : vector<5xf32> to vector<5x1xf32>
    %227 = tpu.reciprocal %226 {approx = true} : vector<5x1xf32> -> vector<5x1xf32>
    %228 = vector.broadcast %227 : vector<5x1xf32> to vector<5x5xf32>
    %229 = arith.mulf %224, %228 : vector<5x5xf32>
    %230 = arith.truncf %229 : vector<5x5xf32> to vector<5x5xbf16>
    %231 = vector.extract_strided_slice %196 {offsets = [0, 8], sizes = [5, 8], strides = [1, 1]} : vector<5x32xbf16> to vector<5x8xbf16>
    %cst_63 = arith.constant dense<0.000000e+00> : vector<5x8xf32>
    %232 = tpu.matmul %230, %231, %cst_63 {dimension_numbers = #tpu.dot_dimension_numbers<[1], [0], [0], [1], [0, 0, 1, 1], [], []>} : vector<5x5xbf16>, vector<5x8xbf16>, vector<5x8xf32> -> vector<5x8xf32>
    %233 = vector.extract_strided_slice %192 {offsets = [0, 16], sizes = [5, 8], strides = [1, 1]} : vector<5x32xbf16> to vector<5x8xbf16>
    %234 = vector.extract_strided_slice %194 {offsets = [0, 16], sizes = [5, 8], strides = [1, 1]} : vector<5x32xbf16> to vector<5x8xbf16>
    %cst_64 = arith.constant dense<0.000000e+00> : vector<5x5xf32>
    %235 = tpu.matmul %233, %234, %cst_64 {dimension_numbers = #tpu.dot_dimension_numbers<[1], [1], [0], [0], [0, 0, 1, 0], [], []>} : vector<5x8xbf16>, vector<5x8xbf16>, vector<5x5xf32> -> vector<5x5xf32>
    %cst_65 = arith.constant 0.353553385 : f32
    %236 = vector.broadcast %cst_65 : f32 to vector<5x5xf32>
    %237 = arith.mulf %235, %236 : vector<5x5xf32>
    %cst_66 = arith.constant dense<0xFF800000> : vector<5xf32>
    %238 = vector.multi_reduction <maximumf>, %237, %cst_66 [1] : vector<5x5xf32> to vector<5xf32>
    %239 = vector.shape_cast %238 : vector<5xf32> to vector<5x1xf32>
    %240 = vector.broadcast %239 : vector<5x1xf32> to vector<5x5xf32>
    %241 = arith.subf %237, %240 : vector<5x5xf32>
    %242 = math.exp %241 : vector<5x5xf32>
    %cst_67 = arith.constant dense<0.000000e+00> : vector<5xf32>
    %243 = vector.multi_reduction <add>, %242, %cst_67 [1] : vector<5x5xf32> to vector<5xf32>
    %244 = vector.shape_cast %243 : vector<5xf32> to vector<5x1xf32>
    %245 = tpu.reciprocal %244 {approx = true} : vector<5x1xf32> -> vector<5x1xf32>
    %246 = vector.broadcast %245 : vector<5x1xf32> to vector<5x5xf32>
    %247 = arith.mulf %242, %246 : vector<5x5xf32>
    %248 = arith.truncf %247 : vector<5x5xf32> to vector<5x5xbf16>
    %249 = vector.extract_strided_slice %196 {offsets = [0, 16], sizes = [5, 8], strides = [1, 1]} : vector<5x32xbf16> to vector<5x8xbf16>
    %cst_68 = arith.constant dense<0.000000e+00> : vector<5x8xf32>
    %250 = tpu.matmul %248, %249, %cst_68 {dimension_numbers = #tpu.dot_dimension_numbers<[1], [0], [0], [1], [0, 0, 1, 1], [], []>} : vector<5x5xbf16>, vector<5x8xbf16>, vector<5x8xf32> -> vector<5x8xf32>
    %251 = vector.extract_strided_slice %192 {offsets = [0, 24], sizes = [5, 8], strides = [1, 1]} : vector<5x32xbf16> to vector<5x8xbf16>
    %252 = vector.extract_strided_slice %194 {offsets = [0, 24], sizes = [5, 8], strides = [1, 1]} : vector<5x32xbf16> to vector<5x8xbf16>
    %cst_69 = arith.constant dense<0.000000e+00> : vector<5x5xf32>
    %253 = tpu.matmul %251, %252, %cst_69 {dimension_numbers = #tpu.dot_dimension_numbers<[1], [1], [0], [0], [0, 0, 1, 0], [], []>} : vector<5x8xbf16>, vector<5x8xbf16>, vector<5x5xf32> -> vector<5x5xf32>
    %cst_70 = arith.constant 0.353553385 : f32
    %254 = vector.broadcast %cst_70 : f32 to vector<5x5xf32>
    %255 = arith.mulf %253, %254 : vector<5x5xf32>
    %cst_71 = arith.constant dense<0xFF800000> : vector<5xf32>
    %256 = vector.multi_reduction <maximumf>, %255, %cst_71 [1] : vector<5x5xf32> to vector<5xf32>
    %257 = vector.shape_cast %256 : vector<5xf32> to vector<5x1xf32>
    %258 = vector.broadcast %257 : vector<5x1xf32> to vector<5x5xf32>
    %259 = arith.subf %255, %258 : vector<5x5xf32>
    %260 = math.exp %259 : vector<5x5xf32>
    %cst_72 = arith.constant dense<0.000000e+00> : vector<5xf32>
    %261 = vector.multi_reduction <add>, %260, %cst_72 [1] : vector<5x5xf32> to vector<5xf32>
    %262 = vector.shape_cast %261 : vector<5xf32> to vector<5x1xf32>
    %263 = tpu.reciprocal %262 {approx = true} : vector<5x1xf32> -> vector<5x1xf32>
    %264 = vector.broadcast %263 : vector<5x1xf32> to vector<5x5xf32>
    %265 = arith.mulf %260, %264 : vector<5x5xf32>
    %266 = arith.truncf %265 : vector<5x5xf32> to vector<5x5xbf16>
    %267 = vector.extract_strided_slice %196 {offsets = [0, 24], sizes = [5, 8], strides = [1, 1]} : vector<5x32xbf16> to vector<5x8xbf16>
    %cst_73 = arith.constant dense<0.000000e+00> : vector<5x8xf32>
    %268 = tpu.matmul %266, %267, %cst_73 {dimension_numbers = #tpu.dot_dimension_numbers<[1], [0], [0], [1], [0, 0, 1, 1], [], []>} : vector<5x5xbf16>, vector<5x8xbf16>, vector<5x8xf32> -> vector<5x8xf32>
    %269 = tpu.concatenate %214, %232, %250, %268 in 1 : vector<5x8xf32>, vector<5x8xf32>, vector<5x8xf32>, vector<5x8xf32> -> vector<5x32xf32>
    %270 = vector.extract_strided_slice %30 {offsets = [15, 0], sizes = [5, 32], strides = [1, 1]} : vector<20x32xf32> to vector<5x32xf32>
    %271 = arith.truncf %270 : vector<5x32xf32> to vector<5x32xbf16>
    %272 = vector.extract_strided_slice %31 {offsets = [15, 0], sizes = [5, 32], strides = [1, 1]} : vector<20x32xf32> to vector<5x32xf32>
    %273 = arith.truncf %272 : vector<5x32xf32> to vector<5x32xbf16>
    %274 = vector.extract_strided_slice %32 {offsets = [15, 0], sizes = [5, 32], strides = [1, 1]} : vector<20x32xf32> to vector<5x32xf32>
    %275 = arith.truncf %274 : vector<5x32xf32> to vector<5x32xbf16>
    %276 = vector.extract_strided_slice %271 {offsets = [0, 0], sizes = [5, 8], strides = [1, 1]} : vector<5x32xbf16> to vector<5x8xbf16>
    %277 = vector.extract_strided_slice %273 {offsets = [0, 0], sizes = [5, 8], strides = [1, 1]} : vector<5x32xbf16> to vector<5x8xbf16>
    %cst_74 = arith.constant dense<0.000000e+00> : vector<5x5xf32>
    %278 = tpu.matmul %276, %277, %cst_74 {dimension_numbers = #tpu.dot_dimension_numbers<[1], [1], [0], [0], [0, 0, 1, 0], [], []>} : vector<5x8xbf16>, vector<5x8xbf16>, vector<5x5xf32> -> vector<5x5xf32>
    %cst_75 = arith.constant 0.353553385 : f32
    %279 = vector.broadcast %cst_75 : f32 to vector<5x5xf32>
    %280 = arith.mulf %278, %279 : vector<5x5xf32>
    %cst_76 = arith.constant dense<0xFF800000> : vector<5xf32>
    %281 = vector.multi_reduction <maximumf>, %280, %cst_76 [1] : vector<5x5xf32> to vector<5xf32>
    %282 = vector.shape_cast %281 : vector<5xf32> to vector<5x1xf32>
    %283 = vector.broadcast %282 : vector<5x1xf32> to vector<5x5xf32>
    %284 = arith.subf %280, %283 : vector<5x5xf32>
    %285 = math.exp %284 : vector<5x5xf32>
    %cst_77 = arith.constant dense<0.000000e+00> : vector<5xf32>
    %286 = vector.multi_reduction <add>, %285, %cst_77 [1] : vector<5x5xf32> to vector<5xf32>
    %287 = vector.shape_cast %286 : vector<5xf32> to vector<5x1xf32>
    %288 = tpu.reciprocal %287 {approx = true} : vector<5x1xf32> -> vector<5x1xf32>
    %289 = vector.broadcast %288 : vector<5x1xf32> to vector<5x5xf32>
    %290 = arith.mulf %285, %289 : vector<5x5xf32>
    %291 = arith.truncf %290 : vector<5x5xf32> to vector<5x5xbf16>
    %292 = vector.extract_strided_slice %275 {offsets = [0, 0], sizes = [5, 8], strides = [1, 1]} : vector<5x32xbf16> to vector<5x8xbf16>
    %cst_78 = arith.constant dense<0.000000e+00> : vector<5x8xf32>
    %293 = tpu.matmul %291, %292, %cst_78 {dimension_numbers = #tpu.dot_dimension_numbers<[1], [0], [0], [1], [0, 0, 1, 1], [], []>} : vector<5x5xbf16>, vector<5x8xbf16>, vector<5x8xf32> -> vector<5x8xf32>
    %294 = vector.extract_strided_slice %271 {offsets = [0, 8], sizes = [5, 8], strides = [1, 1]} : vector<5x32xbf16> to vector<5x8xbf16>
    %295 = vector.extract_strided_slice %273 {offsets = [0, 8], sizes = [5, 8], strides = [1, 1]} : vector<5x32xbf16> to vector<5x8xbf16>
    %cst_79 = arith.constant dense<0.000000e+00> : vector<5x5xf32>
    %296 = tpu.matmul %294, %295, %cst_79 {dimension_numbers = #tpu.dot_dimension_numbers<[1], [1], [0], [0], [0, 0, 1, 0], [], []>} : vector<5x8xbf16>, vector<5x8xbf16>, vector<5x5xf32> -> vector<5x5xf32>
    %cst_80 = arith.constant 0.353553385 : f32
    %297 = vector.broadcast %cst_80 : f32 to vector<5x5xf32>
    %298 = arith.mulf %296, %297 : vector<5x5xf32>
    %cst_81 = arith.constant dense<0xFF800000> : vector<5xf32>
    %299 = vector.multi_reduction <maximumf>, %298, %cst_81 [1] : vector<5x5xf32> to vector<5xf32>
    %300 = vector.shape_cast %299 : vector<5xf32> to vector<5x1xf32>
    %301 = vector.broadcast %300 : vector<5x1xf32> to vector<5x5xf32>
    %302 = arith.subf %298, %301 : vector<5x5xf32>
    %303 = math.exp %302 : vector<5x5xf32>
    %cst_82 = arith.constant dense<0.000000e+00> : vector<5xf32>
    %304 = vector.multi_reduction <add>, %303, %cst_82 [1] : vector<5x5xf32> to vector<5xf32>
    %305 = vector.shape_cast %304 : vector<5xf32> to vector<5x1xf32>
    %306 = tpu.reciprocal %305 {approx = true} : vector<5x1xf32> -> vector<5x1xf32>
    %307 = vector.broadcast %306 : vector<5x1xf32> to vector<5x5xf32>
    %308 = arith.mulf %303, %307 : vector<5x5xf32>
    %309 = arith.truncf %308 : vector<5x5xf32> to vector<5x5xbf16>
    %310 = vector.extract_strided_slice %275 {offsets = [0, 8], sizes = [5, 8], strides = [1, 1]} : vector<5x32xbf16> to vector<5x8xbf16>
    %cst_83 = arith.constant dense<0.000000e+00> : vector<5x8xf32>
    %311 = tpu.matmul %309, %310, %cst_83 {dimension_numbers = #tpu.dot_dimension_numbers<[1], [0], [0], [1], [0, 0, 1, 1], [], []>} : vector<5x5xbf16>, vector<5x8xbf16>, vector<5x8xf32> -> vector<5x8xf32>
    %312 = vector.extract_strided_slice %271 {offsets = [0, 16], sizes = [5, 8], strides = [1, 1]} : vector<5x32xbf16> to vector<5x8xbf16>
    %313 = vector.extract_strided_slice %273 {offsets = [0, 16], sizes = [5, 8], strides = [1, 1]} : vector<5x32xbf16> to vector<5x8xbf16>
    %cst_84 = arith.constant dense<0.000000e+00> : vector<5x5xf32>
    %314 = tpu.matmul %312, %313, %cst_84 {dimension_numbers = #tpu.dot_dimension_numbers<[1], [1], [0], [0], [0, 0, 1, 0], [], []>} : vector<5x8xbf16>, vector<5x8xbf16>, vector<5x5xf32> -> vector<5x5xf32>
    %cst_85 = arith.constant 0.353553385 : f32
    %315 = vector.broadcast %cst_85 : f32 to vector<5x5xf32>
    %316 = arith.mulf %314, %315 : vector<5x5xf32>
    %cst_86 = arith.constant dense<0xFF800000> : vector<5xf32>
    %317 = vector.multi_reduction <maximumf>, %316, %cst_86 [1] : vector<5x5xf32> to vector<5xf32>
    %318 = vector.shape_cast %317 : vector<5xf32> to vector<5x1xf32>
    %319 = vector.broadcast %318 : vector<5x1xf32> to vector<5x5xf32>
    %320 = arith.subf %316, %319 : vector<5x5xf32>
    %321 = math.exp %320 : vector<5x5xf32>
    %cst_87 = arith.constant dense<0.000000e+00> : vector<5xf32>
    %322 = vector.multi_reduction <add>, %321, %cst_87 [1] : vector<5x5xf32> to vector<5xf32>
    %323 = vector.shape_cast %322 : vector<5xf32> to vector<5x1xf32>
    %324 = tpu.reciprocal %323 {approx = true} : vector<5x1xf32> -> vector<5x1xf32>
    %325 = vector.broadcast %324 : vector<5x1xf32> to vector<5x5xf32>
    %326 = arith.mulf %321, %325 : vector<5x5xf32>
    %327 = arith.truncf %326 : vector<5x5xf32> to vector<5x5xbf16>
    %328 = vector.extract_strided_slice %275 {offsets = [0, 16], sizes = [5, 8], strides = [1, 1]} : vector<5x32xbf16> to vector<5x8xbf16>
    %cst_88 = arith.constant dense<0.000000e+00> : vector<5x8xf32>
    %329 = tpu.matmul %327, %328, %cst_88 {dimension_numbers = #tpu.dot_dimension_numbers<[1], [0], [0], [1], [0, 0, 1, 1], [], []>} : vector<5x5xbf16>, vector<5x8xbf16>, vector<5x8xf32> -> vector<5x8xf32>
    %330 = vector.extract_strided_slice %271 {offsets = [0, 24], sizes = [5, 8], strides = [1, 1]} : vector<5x32xbf16> to vector<5x8xbf16>
    %331 = vector.extract_strided_slice %273 {offsets = [0, 24], sizes = [5, 8], strides = [1, 1]} : vector<5x32xbf16> to vector<5x8xbf16>
    %cst_89 = arith.constant dense<0.000000e+00> : vector<5x5xf32>
    %332 = tpu.matmul %330, %331, %cst_89 {dimension_numbers = #tpu.dot_dimension_numbers<[1], [1], [0], [0], [0, 0, 1, 0], [], []>} : vector<5x8xbf16>, vector<5x8xbf16>, vector<5x5xf32> -> vector<5x5xf32>
    %cst_90 = arith.constant 0.353553385 : f32
    %333 = vector.broadcast %cst_90 : f32 to vector<5x5xf32>
    %334 = arith.mulf %332, %333 : vector<5x5xf32>
    %cst_91 = arith.constant dense<0xFF800000> : vector<5xf32>
    %335 = vector.multi_reduction <maximumf>, %334, %cst_91 [1] : vector<5x5xf32> to vector<5xf32>
    %336 = vector.shape_cast %335 : vector<5xf32> to vector<5x1xf32>
    %337 = vector.broadcast %336 : vector<5x1xf32> to vector<5x5xf32>
    %338 = arith.subf %334, %337 : vector<5x5xf32>
    %339 = math.exp %338 : vector<5x5xf32>
    %cst_92 = arith.constant dense<0.000000e+00> : vector<5xf32>
    %340 = vector.multi_reduction <add>, %339, %cst_92 [1] : vector<5x5xf32> to vector<5xf32>
    %341 = vector.shape_cast %340 : vector<5xf32> to vector<5x1xf32>
    %342 = tpu.reciprocal %341 {approx = true} : vector<5x1xf32> -> vector<5x1xf32>
    %343 = vector.broadcast %342 : vector<5x1xf32> to vector<5x5xf32>
    %344 = arith.mulf %339, %343 : vector<5x5xf32>
    %345 = arith.truncf %344 : vector<5x5xf32> to vector<5x5xbf16>
    %346 = vector.extract_strided_slice %275 {offsets = [0, 24], sizes = [5, 8], strides = [1, 1]} : vector<5x32xbf16> to vector<5x8xbf16>
    %cst_93 = arith.constant dense<0.000000e+00> : vector<5x8xf32>
    %347 = tpu.matmul %345, %346, %cst_93 {dimension_numbers = #tpu.dot_dimension_numbers<[1], [0], [0], [1], [0, 0, 1, 1], [], []>} : vector<5x5xbf16>, vector<5x8xbf16>, vector<5x8xf32> -> vector<5x8xf32>
    %348 = tpu.concatenate %293, %311, %329, %347 in 1 : vector<5x8xf32>, vector<5x8xf32>, vector<5x8xf32>, vector<5x8xf32> -> vector<5x32xf32>
    %349 = tpu.concatenate %111, %190, %269, %348 in 0 : vector<5x32xf32>, vector<5x32xf32>, vector<5x32xf32>, vector<5x32xf32> -> vector<20x32xf32>
    %350 = arith.truncf %349 : vector<20x32xf32> to vector<20x32xbf16>
    %c0_94 = arith.constant 0 : index
    %c0_95 = arith.constant 0 : index
    %351 = vector.load %arg5[%c0_94, %c0_95] : memref<32x32xbf16, #tpu.memory_space<vmem>>, vector<32x32xbf16>
    %cst_96 = arith.constant dense<0.000000e+00> : vector<20x32xf32>
    %352 = tpu.matmul %350, %351, %cst_96 {dimension_numbers = #tpu.dot_dimension_numbers<[1], [0], [0], [1], [0, 0, 1, 1], [], []>} : vector<20x32xbf16>, vector<32x32xbf16>, vector<20x32xf32> -> vector<20x32xf32>
    %c0_97 = arith.constant 0 : index
    %c0_98 = arith.constant 0 : index
    %353 = vector.load %arg6[%c0_97, %c0_98] : memref<1x32xf32, #tpu.memory_space<vmem>>, vector<1x32xf32>
    %354 = vector.broadcast %353 : vector<1x32xf32> to vector<20x32xf32>
    %355 = arith.addf %352, %354 : vector<20x32xf32>
    %356 = arith.addf %1, %355 : vector<20x32xf32>
    %c0_99 = arith.constant 0 : index
    %c0_100 = arith.constant 0 : index
    %357 = vector.load %arg7[%c0_99, %c0_100] : memref<1x32xf32, #tpu.memory_space<vmem>>, vector<1x32xf32>
    %c0_101 = arith.constant 0 : index
    %c0_102 = arith.constant 0 : index
    %358 = vector.load %arg8[%c0_101, %c0_102] : memref<1x32xf32, #tpu.memory_space<vmem>>, vector<1x32xf32>
    %cst_103 = arith.constant dense<0.000000e+00> : vector<20xf32>
    %359 = vector.multi_reduction <add>, %356, %cst_103 [1] : vector<20x32xf32> to vector<20xf32>
    %360 = vector.shape_cast %359 : vector<20xf32> to vector<20x1xf32>
    %cst_104 = arith.constant 3.200000e+01 : f32
    %361 = vector.broadcast %cst_104 : f32 to vector<20x1xf32>
    %362 = arith.divf %360, %361 : vector<20x1xf32>
    %363 = vector.broadcast %362 : vector<20x1xf32> to vector<20x32xf32>
    %364 = arith.subf %356, %363 : vector<20x32xf32>
    %365 = arith.mulf %364, %364 : vector<20x32xf32>
    %cst_105 = arith.constant dense<0.000000e+00> : vector<20xf32>
    %366 = vector.multi_reduction <add>, %365, %cst_105 [1] : vector<20x32xf32> to vector<20xf32>
    %367 = vector.shape_cast %366 : vector<20xf32> to vector<20x1xf32>
    %cst_106 = arith.constant 3.200000e+01 : f32
    %368 = vector.broadcast %cst_106 : f32 to vector<20x1xf32>
    %369 = arith.divf %367, %368 : vector<20x1xf32>
    %cst_107 = arith.constant 9.99999974E-6 : f32
    %370 = vector.broadcast %cst_107 : f32 to vector<20x1xf32>
    %371 = arith.addf %369, %370 : vector<20x1xf32>
    %372 = math.rsqrt %371 : vector<20x1xf32>
    %373 = vector.broadcast %372 : vector<20x1xf32> to vector<20x32xf32>
    %374 = arith.mulf %364, %373 : vector<20x32xf32>
    %375 = vector.broadcast %357 : vector<1x32xf32> to vector<20x32xf32>
    %376 = arith.mulf %374, %375 : vector<20x32xf32>
    %377 = vector.broadcast %358 : vector<1x32xf32> to vector<20x32xf32>
    %378 = arith.addf %376, %377 : vector<20x32xf32>
    %379 = arith.truncf %378 : vector<20x32xf32> to vector<20x32xbf16>
    %c0_108 = arith.constant 0 : index
    %c0_109 = arith.constant 0 : index
    %380 = vector.load %arg9[%c0_108, %c0_109] : memref<32x128xbf16, #tpu.memory_space<vmem>>, vector<32x128xbf16>
    %cst_110 = arith.constant dense<0.000000e+00> : vector<20x128xf32>
    %381 = tpu.matmul %379, %380, %cst_110 {dimension_numbers = #tpu.dot_dimension_numbers<[1], [0], [0], [1], [0, 0, 1, 1], [], []>} : vector<20x32xbf16>, vector<32x128xbf16>, vector<20x128xf32> -> vector<20x128xf32>
    %c0_111 = arith.constant 0 : index
    %c0_112 = arith.constant 0 : index
    %382 = vector.load %arg10[%c0_111, %c0_112] : memref<1x128xf32, #tpu.memory_space<vmem>>, vector<1x128xf32>
    %383 = vector.broadcast %382 : vector<1x128xf32> to vector<20x128xf32>
    %384 = arith.addf %381, %383 : vector<20x128xf32>
    %cst_113 = arith.constant -1.702000e+00 : f32
    %385 = vector.broadcast %cst_113 : f32 to vector<20x128xf32>
    %386 = arith.mulf %385, %384 : vector<20x128xf32>
    %387 = math.exp %386 : vector<20x128xf32>
    %cst_114 = arith.constant 1.000000e+00 : f32
    %388 = vector.broadcast %cst_114 : f32 to vector<20x128xf32>
    %389 = arith.addf %388, %387 : vector<20x128xf32>
    %cst_115 = arith.constant 1.000000e+00 : f32
    %390 = vector.broadcast %cst_115 : f32 to vector<20x128xf32>
    %391 = arith.divf %390, %389 : vector<20x128xf32>
    %392 = arith.mulf %384, %391 : vector<20x128xf32>
    %393 = arith.truncf %392 : vector<20x128xf32> to vector<20x128xbf16>
    %c0_116 = arith.constant 0 : index
    %c0_117 = arith.constant 0 : index
    %394 = vector.load %arg11[%c0_116, %c0_117] : memref<128x32xbf16, #tpu.memory_space<vmem>>, vector<128x32xbf16>
    %cst_118 = arith.constant dense<0.000000e+00> : vector<20x32xf32>
    %395 = tpu.matmul %393, %394, %cst_118 {dimension_numbers = #tpu.dot_dimension_numbers<[1], [0], [0], [1], [0, 0, 1, 1], [], []>} : vector<20x128xbf16>, vector<128x32xbf16>, vector<20x32xf32> -> vector<20x32xf32>
    %c0_119 = arith.constant 0 : index
    %c0_120 = arith.constant 0 : index
    %396 = vector.load %arg12[%c0_119, %c0_120] : memref<1x32xf32, #tpu.memory_space<vmem>>, vector<1x32xf32>
    %397 = vector.broadcast %396 : vector<1x32xf32> to vector<20x32xf32>
    %398 = arith.addf %395, %397 : vector<20x32xf32>
    %399 = arith.addf %356, %398 : vector<20x32xf32>
    %400 = arith.truncf %399 : vector<20x32xf32> to vector<20x32xbf16>
    %c0_121 = arith.constant 0 : index
    %c0_122 = arith.constant 0 : index
    %401 = vector.load %arg13[%c0_121, %c0_122] : memref<20x32xbf16, #tpu.memory_space<vmem>>, vector<20x32xbf16>
    tpu.vector_store %arg13[%c0_121, %c0_122], %400 {strides = array<i32>} : memref<20x32xbf16, #tpu.memory_space<vmem>>, vector<20x32xbf16>,
    return
  }
}

module attributes {stable_mosaic.version = 11 : i64} {
  func.func @_dec_block_kernel(%arg0: memref<20x32xbf16, #tpu.memory_space<vmem>>, %arg1: memref<2x32xf32, #tpu.memory_space<vmem>>, %arg2: memref<27x32xf32, #tpu.memory_space<vmem>>, %arg3: memref<1x32xf32, #tpu.memory_space<vmem>>, %arg4: memref<1x32xf32, #tpu.memory_space<vmem>>, %arg5: memref<1x32xf32, #tpu.memory_space<vmem>>, %arg6: memref<1x32xf32, #tpu.memory_space<vmem>>, %arg7: memref<1x32xf32, #tpu.memory_space<vmem>>, %arg8: memref<32x32xbf16, #tpu.memory_space<vmem>>, %arg9: memref<1x32xf32, #tpu.memory_space<vmem>>, %arg10: memref<32x64xbf16, #tpu.memory_space<vmem>>, %arg11: memref<1x64xf32, #tpu.memory_space<vmem>>, %arg12: memref<32x32xbf16, #tpu.memory_space<vmem>>, %arg13: memref<1x32xf32, #tpu.memory_space<vmem>>, %arg14: memref<1x32xf32, #tpu.memory_space<vmem>>, %arg15: memref<1x32xf32, #tpu.memory_space<vmem>>, %arg16: memref<32x128xbf16, #tpu.memory_space<vmem>>, %arg17: memref<1x128xf32, #tpu.memory_space<vmem>>, %arg18: memref<128x32xbf16, #tpu.memory_space<vmem>>, %arg19: memref<1x32xf32, #tpu.memory_space<vmem>>, %arg20: memref<2x32xf32, #tpu.memory_space<vmem>>) attributes {dimension_semantics = [], scalar_prefetch = 0 : i64, scratch_operands = 0 : i64, tpu.core_type = #tpu.core_type<tc>} {
    %c0 = arith.constant 0 : index
    %c0_0 = arith.constant 0 : index
    %0 = vector.load %arg0[%c0, %c0_0] : memref<20x32xbf16, #tpu.memory_space<vmem>>, vector<20x32xbf16>
    %1 = arith.extf %0 : vector<20x32xbf16> to vector<20x32xf32>
    %c0_1 = arith.constant 0 : index
    %c0_2 = arith.constant 0 : index
    %2 = vector.load %arg2[%c0_1, %c0_2] : memref<27x32xf32, #tpu.memory_space<vmem>>, vector<27x32xf32>
    %c0_3 = arith.constant 0 : index
    %c0_4 = arith.constant 0 : index
    %3 = vector.load %arg3[%c0_3, %c0_4] : memref<1x32xf32, #tpu.memory_space<vmem>>, vector<1x32xf32>
    %4 = vector.extract_strided_slice %1 {offsets = [0, 0], sizes = [1, 32], strides = [1, 1]} : vector<20x32xf32> to vector<1x32xf32>
    %5 = vector.extract_strided_slice %2 {offsets = [13, 0], sizes = [1, 32], strides = [1, 1]} : vector<27x32xf32> to vector<1x32xf32>
    %6 = vector.extract_strided_slice %1 {offsets = [1, 0], sizes = [1, 32], strides = [1, 1]} : vector<20x32xf32> to vector<1x32xf32>
    %7 = arith.mulf %5, %6 : vector<1x32xf32>
    %8 = arith.addf %3, %7 : vector<1x32xf32>
    %9 = vector.extract_strided_slice %2 {offsets = [14, 0], sizes = [1, 32], strides = [1, 1]} : vector<27x32xf32> to vector<1x32xf32>
    %10 = vector.extract_strided_slice %1 {offsets = [2, 0], sizes = [1, 32], strides = [1, 1]} : vector<20x32xf32> to vector<1x32xf32>
    %11 = arith.mulf %9, %10 : vector<1x32xf32>
    %12 = arith.addf %8, %11 : vector<1x32xf32>
    %13 = vector.extract_strided_slice %2 {offsets = [16, 0], sizes = [1, 32], strides = [1, 1]} : vector<27x32xf32> to vector<1x32xf32>
    %14 = vector.extract_strided_slice %1 {offsets = [3, 0], sizes = [1, 32], strides = [1, 1]} : vector<20x32xf32> to vector<1x32xf32>
    %15 = arith.mulf %13, %14 : vector<1x32xf32>
    %16 = arith.addf %12, %15 : vector<1x32xf32>
    %17 = vector.extract_strided_slice %2 {offsets = [17, 0], sizes = [1, 32], strides = [1, 1]} : vector<27x32xf32> to vector<1x32xf32>
    %18 = vector.extract_strided_slice %1 {offsets = [4, 0], sizes = [1, 32], strides = [1, 1]} : vector<20x32xf32> to vector<1x32xf32>
    %19 = arith.mulf %17, %18 : vector<1x32xf32>
    %20 = arith.addf %16, %19 : vector<1x32xf32>
    %21 = vector.extract_strided_slice %2 {offsets = [22, 0], sizes = [1, 32], strides = [1, 1]} : vector<27x32xf32> to vector<1x32xf32>
    %22 = vector.extract_strided_slice %1 {offsets = [6, 0], sizes = [1, 32], strides = [1, 1]} : vector<20x32xf32> to vector<1x32xf32>
    %23 = arith.mulf %21, %22 : vector<1x32xf32>
    %24 = arith.addf %20, %23 : vector<1x32xf32>
    %25 = vector.extract_strided_slice %2 {offsets = [23, 0], sizes = [1, 32], strides = [1, 1]} : vector<27x32xf32> to vector<1x32xf32>
    %26 = vector.extract_strided_slice %1 {offsets = [7, 0], sizes = [1, 32], strides = [1, 1]} : vector<20x32xf32> to vector<1x32xf32>
    %27 = arith.mulf %25, %26 : vector<1x32xf32>
    %28 = arith.addf %24, %27 : vector<1x32xf32>
    %29 = vector.extract_strided_slice %2 {offsets = [25, 0], sizes = [1, 32], strides = [1, 1]} : vector<27x32xf32> to vector<1x32xf32>
    %30 = vector.extract_strided_slice %1 {offsets = [8, 0], sizes = [1, 32], strides = [1, 1]} : vector<20x32xf32> to vector<1x32xf32>
    %31 = arith.mulf %29, %30 : vector<1x32xf32>
    %32 = arith.addf %28, %31 : vector<1x32xf32>
    %33 = vector.extract_strided_slice %2 {offsets = [26, 0], sizes = [1, 32], strides = [1, 1]} : vector<27x32xf32> to vector<1x32xf32>
    %34 = vector.extract_strided_slice %1 {offsets = [9, 0], sizes = [1, 32], strides = [1, 1]} : vector<20x32xf32> to vector<1x32xf32>
    %35 = arith.mulf %33, %34 : vector<1x32xf32>
    %36 = arith.addf %32, %35 : vector<1x32xf32>
    %37 = vector.extract_strided_slice %1 {offsets = [1, 0], sizes = [1, 32], strides = [1, 1]} : vector<20x32xf32> to vector<1x32xf32>
    %38 = arith.addf %37, %36 : vector<1x32xf32>
    %39 = vector.extract_strided_slice %2 {offsets = [12, 0], sizes = [1, 32], strides = [1, 1]} : vector<27x32xf32> to vector<1x32xf32>
    %40 = vector.extract_strided_slice %1 {offsets = [1, 0], sizes = [1, 32], strides = [1, 1]} : vector<20x32xf32> to vector<1x32xf32>
    %41 = arith.mulf %39, %40 : vector<1x32xf32>
    %42 = arith.addf %3, %41 : vector<1x32xf32>
    %43 = vector.extract_strided_slice %2 {offsets = [13, 0], sizes = [1, 32], strides = [1, 1]} : vector<27x32xf32> to vector<1x32xf32>
    %44 = vector.extract_strided_slice %1 {offsets = [2, 0], sizes = [1, 32], strides = [1, 1]} : vector<20x32xf32> to vector<1x32xf32>
    %45 = arith.mulf %43, %44 : vector<1x32xf32>
    %46 = arith.addf %42, %45 : vector<1x32xf32>
    %47 = vector.extract_strided_slice %2 {offsets = [15, 0], sizes = [1, 32], strides = [1, 1]} : vector<27x32xf32> to vector<1x32xf32>
    %48 = vector.extract_strided_slice %1 {offsets = [3, 0], sizes = [1, 32], strides = [1, 1]} : vector<20x32xf32> to vector<1x32xf32>
    %49 = arith.mulf %47, %48 : vector<1x32xf32>
    %50 = arith.addf %46, %49 : vector<1x32xf32>
    %51 = vector.extract_strided_slice %2 {offsets = [16, 0], sizes = [1, 32], strides = [1, 1]} : vector<27x32xf32> to vector<1x32xf32>
    %52 = vector.extract_strided_slice %1 {offsets = [4, 0], sizes = [1, 32], strides = [1, 1]} : vector<20x32xf32> to vector<1x32xf32>
    %53 = arith.mulf %51, %52 : vector<1x32xf32>
    %54 = arith.addf %50, %53 : vector<1x32xf32>
    %55 = vector.extract_strided_slice %2 {offsets = [21, 0], sizes = [1, 32], strides = [1, 1]} : vector<27x32xf32> to vector<1x32xf32>
    %56 = vector.extract_strided_slice %1 {offsets = [6, 0], sizes = [1, 32], strides = [1, 1]} : vector<20x32xf32> to vector<1x32xf32>
    %57 = arith.mulf %55, %56 : vector<1x32xf32>
    %58 = arith.addf %54, %57 : vector<1x32xf32>
    %59 = vector.extract_strided_slice %2 {offsets = [22, 0], sizes = [1, 32], strides = [1, 1]} : vector<27x32xf32> to vector<1x32xf32>
    %60 = vector.extract_strided_slice %1 {offsets = [7, 0], sizes = [1, 32], strides = [1, 1]} : vector<20x32xf32> to vector<1x32xf32>
    %61 = arith.mulf %59, %60 : vector<1x32xf32>
    %62 = arith.addf %58, %61 : vector<1x32xf32>
    %63 = vector.extract_strided_slice %2 {offsets = [24, 0], sizes = [1, 32], strides = [1, 1]} : vector<27x32xf32> to vector<1x32xf32>
    %64 = vector.extract_strided_slice %1 {offsets = [8, 0], sizes = [1, 32], strides = [1, 1]} : vector<20x32xf32> to vector<1x32xf32>
    %65 = arith.mulf %63, %64 : vector<1x32xf32>
    %66 = arith.addf %62, %65 : vector<1x32xf32>
    %67 = vector.extract_strided_slice %2 {offsets = [25, 0], sizes = [1, 32], strides = [1, 1]} : vector<27x32xf32> to vector<1x32xf32>
    %68 = vector.extract_strided_slice %1 {offsets = [9, 0], sizes = [1, 32], strides = [1, 1]} : vector<20x32xf32> to vector<1x32xf32>
    %69 = arith.mulf %67, %68 : vector<1x32xf32>
    %70 = arith.addf %66, %69 : vector<1x32xf32>
    %71 = vector.extract_strided_slice %1 {offsets = [2, 0], sizes = [1, 32], strides = [1, 1]} : vector<20x32xf32> to vector<1x32xf32>
    %72 = arith.addf %71, %70 : vector<1x32xf32>
    %73 = vector.extract_strided_slice %2 {offsets = [10, 0], sizes = [1, 32], strides = [1, 1]} : vector<27x32xf32> to vector<1x32xf32>
    %74 = vector.extract_strided_slice %1 {offsets = [1, 0], sizes = [1, 32], strides = [1, 1]} : vector<20x32xf32> to vector<1x32xf32>
    %75 = arith.mulf %73, %74 : vector<1x32xf32>
    %76 = arith.addf %3, %75 : vector<1x32xf32>
    %77 = vector.extract_strided_slice %2 {offsets = [11, 0], sizes = [1, 32], strides = [1, 1]} : vector<27x32xf32> to vector<1x32xf32>
    %78 = vector.extract_strided_slice %1 {offsets = [2, 0], sizes = [1, 32], strides = [1, 1]} : vector<20x32xf32> to vector<1x32xf32>
    %79 = arith.mulf %77, %78 : vector<1x32xf32>
    %80 = arith.addf %76, %79 : vector<1x32xf32>
    %81 = vector.extract_strided_slice %2 {offsets = [13, 0], sizes = [1, 32], strides = [1, 1]} : vector<27x32xf32> to vector<1x32xf32>
    %82 = vector.extract_strided_slice %1 {offsets = [3, 0], sizes = [1, 32], strides = [1, 1]} : vector<20x32xf32> to vector<1x32xf32>
    %83 = arith.mulf %81, %82 : vector<1x32xf32>
    %84 = arith.addf %80, %83 : vector<1x32xf32>
    %85 = vector.extract_strided_slice %2 {offsets = [14, 0], sizes = [1, 32], strides = [1, 1]} : vector<27x32xf32> to vector<1x32xf32>
    %86 = vector.extract_strided_slice %1 {offsets = [4, 0], sizes = [1, 32], strides = [1, 1]} : vector<20x32xf32> to vector<1x32xf32>
    %87 = arith.mulf %85, %86 : vector<1x32xf32>
    %88 = arith.addf %84, %87 : vector<1x32xf32>
    %89 = vector.extract_strided_slice %2 {offsets = [19, 0], sizes = [1, 32], strides = [1, 1]} : vector<27x32xf32> to vector<1x32xf32>
    %90 = vector.extract_strided_slice %1 {offsets = [6, 0], sizes = [1, 32], strides = [1, 1]} : vector<20x32xf32> to vector<1x32xf32>
    %91 = arith.mulf %89, %90 : vector<1x32xf32>
    %92 = arith.addf %88, %91 : vector<1x32xf32>
    %93 = vector.extract_strided_slice %2 {offsets = [20, 0], sizes = [1, 32], strides = [1, 1]} : vector<27x32xf32> to vector<1x32xf32>
    %94 = vector.extract_strided_slice %1 {offsets = [7, 0], sizes = [1, 32], strides = [1, 1]} : vector<20x32xf32> to vector<1x32xf32>
    %95 = arith.mulf %93, %94 : vector<1x32xf32>
    %96 = arith.addf %92, %95 : vector<1x32xf32>
    %97 = vector.extract_strided_slice %2 {offsets = [22, 0], sizes = [1, 32], strides = [1, 1]} : vector<27x32xf32> to vector<1x32xf32>
    %98 = vector.extract_strided_slice %1 {offsets = [8, 0], sizes = [1, 32], strides = [1, 1]} : vector<20x32xf32> to vector<1x32xf32>
    %99 = arith.mulf %97, %98 : vector<1x32xf32>
    %100 = arith.addf %96, %99 : vector<1x32xf32>
    %101 = vector.extract_strided_slice %2 {offsets = [23, 0], sizes = [1, 32], strides = [1, 1]} : vector<27x32xf32> to vector<1x32xf32>
    %102 = vector.extract_strided_slice %1 {offsets = [9, 0], sizes = [1, 32], strides = [1, 1]} : vector<20x32xf32> to vector<1x32xf32>
    %103 = arith.mulf %101, %102 : vector<1x32xf32>
    %104 = arith.addf %100, %103 : vector<1x32xf32>
    %105 = vector.extract_strided_slice %1 {offsets = [3, 0], sizes = [1, 32], strides = [1, 1]} : vector<20x32xf32> to vector<1x32xf32>
    %106 = arith.addf %105, %104 : vector<1x32xf32>
    %107 = vector.extract_strided_slice %2 {offsets = [9, 0], sizes = [1, 32], strides = [1, 1]} : vector<27x32xf32> to vector<1x32xf32>
    %108 = vector.extract_strided_slice %1 {offsets = [1, 0], sizes = [1, 32], strides = [1, 1]} : vector<20x32xf32> to vector<1x32xf32>
    %109 = arith.mulf %107, %108 : vector<1x32xf32>
    %110 = arith.addf %3, %109 : vector<1x32xf32>
    %111 = vector.extract_strided_slice %2 {offsets = [10, 0], sizes = [1, 32], strides = [1, 1]} : vector<27x32xf32> to vector<1x32xf32>
    %112 = vector.extract_strided_slice %1 {offsets = [2, 0], sizes = [1, 32], strides = [1, 1]} : vector<20x32xf32> to vector<1x32xf32>
    %113 = arith.mulf %111, %112 : vector<1x32xf32>
    %114 = arith.addf %110, %113 : vector<1x32xf32>
    %115 = vector.extract_strided_slice %2 {offsets = [12, 0], sizes = [1, 32], strides = [1, 1]} : vector<27x32xf32> to vector<1x32xf32>
    %116 = vector.extract_strided_slice %1 {offsets = [3, 0], sizes = [1, 32], strides = [1, 1]} : vector<20x32xf32> to vector<1x32xf32>
    %117 = arith.mulf %115, %116 : vector<1x32xf32>
    %118 = arith.addf %114, %117 : vector<1x32xf32>
    %119 = vector.extract_strided_slice %2 {offsets = [13, 0], sizes = [1, 32], strides = [1, 1]} : vector<27x32xf32> to vector<1x32xf32>
    %120 = vector.extract_strided_slice %1 {offsets = [4, 0], sizes = [1, 32], strides = [1, 1]} : vector<20x32xf32> to vector<1x32xf32>
    %121 = arith.mulf %119, %120 : vector<1x32xf32>
    %122 = arith.addf %118, %121 : vector<1x32xf32>
    %123 = vector.extract_strided_slice %2 {offsets = [18, 0], sizes = [1, 32], strides = [1, 1]} : vector<27x32xf32> to vector<1x32xf32>
    %124 = vector.extract_strided_slice %1 {offsets = [6, 0], sizes = [1, 32], strides = [1, 1]} : vector<20x32xf32> to vector<1x32xf32>
    %125 = arith.mulf %123, %124 : vector<1x32xf32>
    %126 = arith.addf %122, %125 : vector<1x32xf32>
    %127 = vector.extract_strided_slice %2 {offsets = [19, 0], sizes = [1, 32], strides = [1, 1]} : vector<27x32xf32> to vector<1x32xf32>
    %128 = vector.extract_strided_slice %1 {offsets = [7, 0], sizes = [1, 32], strides = [1, 1]} : vector<20x32xf32> to vector<1x32xf32>
    %129 = arith.mulf %127, %128 : vector<1x32xf32>
    %130 = arith.addf %126, %129 : vector<1x32xf32>
    %131 = vector.extract_strided_slice %2 {offsets = [21, 0], sizes = [1, 32], strides = [1, 1]} : vector<27x32xf32> to vector<1x32xf32>
    %132 = vector.extract_strided_slice %1 {offsets = [8, 0], sizes = [1, 32], strides = [1, 1]} : vector<20x32xf32> to vector<1x32xf32>
    %133 = arith.mulf %131, %132 : vector<1x32xf32>
    %134 = arith.addf %130, %133 : vector<1x32xf32>
    %135 = vector.extract_strided_slice %2 {offsets = [22, 0], sizes = [1, 32], strides = [1, 1]} : vector<27x32xf32> to vector<1x32xf32>
    %136 = vector.extract_strided_slice %1 {offsets = [9, 0], sizes = [1, 32], strides = [1, 1]} : vector<20x32xf32> to vector<1x32xf32>
    %137 = arith.mulf %135, %136 : vector<1x32xf32>
    %138 = arith.addf %134, %137 : vector<1x32xf32>
    %139 = vector.extract_strided_slice %1 {offsets = [4, 0], sizes = [1, 32], strides = [1, 1]} : vector<20x32xf32> to vector<1x32xf32>
    %140 = arith.addf %139, %138 : vector<1x32xf32>
    %141 = tpu.concatenate %4, %38, %72, %106, %140 in 0 : vector<1x32xf32>, vector<1x32xf32>, vector<1x32xf32>, vector<1x32xf32>, vector<1x32xf32> -> vector<5x32xf32>
    %142 = vector.extract_strided_slice %1 {offsets = [5, 0], sizes = [1, 32], strides = [1, 1]} : vector<20x32xf32> to vector<1x32xf32>
    %143 = vector.extract_strided_slice %2 {offsets = [4, 0], sizes = [1, 32], strides = [1, 1]} : vector<27x32xf32> to vector<1x32xf32>
    %144 = vector.extract_strided_slice %1 {offsets = [1, 0], sizes = [1, 32], strides = [1, 1]} : vector<20x32xf32> to vector<1x32xf32>
    %145 = arith.mulf %143, %144 : vector<1x32xf32>
    %146 = arith.addf %3, %145 : vector<1x32xf32>
    %147 = vector.extract_strided_slice %2 {offsets = [5, 0], sizes = [1, 32], strides = [1, 1]} : vector<27x32xf32> to vector<1x32xf32>
    %148 = vector.extract_strided_slice %1 {offsets = [2, 0], sizes = [1, 32], strides = [1, 1]} : vector<20x32xf32> to vector<1x32xf32>
    %149 = arith.mulf %147, %148 : vector<1x32xf32>
    %150 = arith.addf %146, %149 : vector<1x32xf32>
    %151 = vector.extract_strided_slice %2 {offsets = [7, 0], sizes = [1, 32], strides = [1, 1]} : vector<27x32xf32> to vector<1x32xf32>
    %152 = vector.extract_strided_slice %1 {offsets = [3, 0], sizes = [1, 32], strides = [1, 1]} : vector<20x32xf32> to vector<1x32xf32>
    %153 = arith.mulf %151, %152 : vector<1x32xf32>
    %154 = arith.addf %150, %153 : vector<1x32xf32>
    %155 = vector.extract_strided_slice %2 {offsets = [8, 0], sizes = [1, 32], strides = [1, 1]} : vector<27x32xf32> to vector<1x32xf32>
    %156 = vector.extract_strided_slice %1 {offsets = [4, 0], sizes = [1, 32], strides = [1, 1]} : vector<20x32xf32> to vector<1x32xf32>
    %157 = arith.mulf %155, %156 : vector<1x32xf32>
    %158 = arith.addf %154, %157 : vector<1x32xf32>
    %159 = vector.extract_strided_slice %2 {offsets = [13, 0], sizes = [1, 32], strides = [1, 1]} : vector<27x32xf32> to vector<1x32xf32>
    %160 = vector.extract_strided_slice %1 {offsets = [6, 0], sizes = [1, 32], strides = [1, 1]} : vector<20x32xf32> to vector<1x32xf32>
    %161 = arith.mulf %159, %160 : vector<1x32xf32>
    %162 = arith.addf %158, %161 : vector<1x32xf32>
    %163 = vector.extract_strided_slice %2 {offsets = [14, 0], sizes = [1, 32], strides = [1, 1]} : vector<27x32xf32> to vector<1x32xf32>
    %164 = vector.extract_strided_slice %1 {offsets = [7, 0], sizes = [1, 32], strides = [1, 1]} : vector<20x32xf32> to vector<1x32xf32>
    %165 = arith.mulf %163, %164 : vector<1x32xf32>
    %166 = arith.addf %162, %165 : vector<1x32xf32>
    %167 = vector.extract_strided_slice %2 {offsets = [16, 0], sizes = [1, 32], strides = [1, 1]} : vector<27x32xf32> to vector<1x32xf32>
    %168 = vector.extract_strided_slice %1 {offsets = [8, 0], sizes = [1, 32], strides = [1, 1]} : vector<20x32xf32> to vector<1x32xf32>
    %169 = arith.mulf %167, %168 : vector<1x32xf32>
    %170 = arith.addf %166, %169 : vector<1x32xf32>
    %171 = vector.extract_strided_slice %2 {offsets = [17, 0], sizes = [1, 32], strides = [1, 1]} : vector<27x32xf32> to vector<1x32xf32>
    %172 = vector.extract_strided_slice %1 {offsets = [9, 0], sizes = [1, 32], strides = [1, 1]} : vector<20x32xf32> to vector<1x32xf32>
    %173 = arith.mulf %171, %172 : vector<1x32xf32>
    %174 = arith.addf %170, %173 : vector<1x32xf32>
    %175 = vector.extract_strided_slice %1 {offsets = [6, 0], sizes = [1, 32], strides = [1, 1]} : vector<20x32xf32> to vector<1x32xf32>
    %176 = arith.addf %175, %174 : vector<1x32xf32>
    %177 = vector.extract_strided_slice %2 {offsets = [3, 0], sizes = [1, 32], strides = [1, 1]} : vector<27x32xf32> to vector<1x32xf32>
    %178 = vector.extract_strided_slice %1 {offsets = [1, 0], sizes = [1, 32], strides = [1, 1]} : vector<20x32xf32> to vector<1x32xf32>
    %179 = arith.mulf %177, %178 : vector<1x32xf32>
    %180 = arith.addf %3, %179 : vector<1x32xf32>
    %181 = vector.extract_strided_slice %2 {offsets = [4, 0], sizes = [1, 32], strides = [1, 1]} : vector<27x32xf32> to vector<1x32xf32>
    %182 = vector.extract_strided_slice %1 {offsets = [2, 0], sizes = [1, 32], strides = [1, 1]} : vector<20x32xf32> to vector<1x32xf32>
    %183 = arith.mulf %181, %182 : vector<1x32xf32>
    %184 = arith.addf %180, %183 : vector<1x32xf32>
    %185 = vector.extract_strided_slice %2 {offsets = [6, 0], sizes = [1, 32], strides = [1, 1]} : vector<27x32xf32> to vector<1x32xf32>
    %186 = vector.extract_strided_slice %1 {offsets = [3, 0], sizes = [1, 32], strides = [1, 1]} : vector<20x32xf32> to vector<1x32xf32>
    %187 = arith.mulf %185, %186 : vector<1x32xf32>
    %188 = arith.addf %184, %187 : vector<1x32xf32>
    %189 = vector.extract_strided_slice %2 {offsets = [7, 0], sizes = [1, 32], strides = [1, 1]} : vector<27x32xf32> to vector<1x32xf32>
    %190 = vector.extract_strided_slice %1 {offsets = [4, 0], sizes = [1, 32], strides = [1, 1]} : vector<20x32xf32> to vector<1x32xf32>
    %191 = arith.mulf %189, %190 : vector<1x32xf32>
    %192 = arith.addf %188, %191 : vector<1x32xf32>
    %193 = vector.extract_strided_slice %2 {offsets = [12, 0], sizes = [1, 32], strides = [1, 1]} : vector<27x32xf32> to vector<1x32xf32>
    %194 = vector.extract_strided_slice %1 {offsets = [6, 0], sizes = [1, 32], strides = [1, 1]} : vector<20x32xf32> to vector<1x32xf32>
    %195 = arith.mulf %193, %194 : vector<1x32xf32>
    %196 = arith.addf %192, %195 : vector<1x32xf32>
    %197 = vector.extract_strided_slice %2 {offsets = [13, 0], sizes = [1, 32], strides = [1, 1]} : vector<27x32xf32> to vector<1x32xf32>
    %198 = vector.extract_strided_slice %1 {offsets = [7, 0], sizes = [1, 32], strides = [1, 1]} : vector<20x32xf32> to vector<1x32xf32>
    %199 = arith.mulf %197, %198 : vector<1x32xf32>
    %200 = arith.addf %196, %199 : vector<1x32xf32>
    %201 = vector.extract_strided_slice %2 {offsets = [15, 0], sizes = [1, 32], strides = [1, 1]} : vector<27x32xf32> to vector<1x32xf32>
    %202 = vector.extract_strided_slice %1 {offsets = [8, 0], sizes = [1, 32], strides = [1, 1]} : vector<20x32xf32> to vector<1x32xf32>
    %203 = arith.mulf %201, %202 : vector<1x32xf32>
    %204 = arith.addf %200, %203 : vector<1x32xf32>
    %205 = vector.extract_strided_slice %2 {offsets = [16, 0], sizes = [1, 32], strides = [1, 1]} : vector<27x32xf32> to vector<1x32xf32>
    %206 = vector.extract_strided_slice %1 {offsets = [9, 0], sizes = [1, 32], strides = [1, 1]} : vector<20x32xf32> to vector<1x32xf32>
    %207 = arith.mulf %205, %206 : vector<1x32xf32>
    %208 = arith.addf %204, %207 : vector<1x32xf32>
    %209 = vector.extract_strided_slice %1 {offsets = [7, 0], sizes = [1, 32], strides = [1, 1]} : vector<20x32xf32> to vector<1x32xf32>
    %210 = arith.addf %209, %208 : vector<1x32xf32>
    %211 = vector.extract_strided_slice %2 {offsets = [1, 0], sizes = [1, 32], strides = [1, 1]} : vector<27x32xf32> to vector<1x32xf32>
    %212 = vector.extract_strided_slice %1 {offsets = [1, 0], sizes = [1, 32], strides = [1, 1]} : vector<20x32xf32> to vector<1x32xf32>
    %213 = arith.mulf %211, %212 : vector<1x32xf32>
    %214 = arith.addf %3, %213 : vector<1x32xf32>
    %215 = vector.extract_strided_slice %2 {offsets = [2, 0], sizes = [1, 32], strides = [1, 1]} : vector<27x32xf32> to vector<1x32xf32>
    %216 = vector.extract_strided_slice %1 {offsets = [2, 0], sizes = [1, 32], strides = [1, 1]} : vector<20x32xf32> to vector<1x32xf32>
    %217 = arith.mulf %215, %216 : vector<1x32xf32>
    %218 = arith.addf %214, %217 : vector<1x32xf32>
    %219 = vector.extract_strided_slice %2 {offsets = [4, 0], sizes = [1, 32], strides = [1, 1]} : vector<27x32xf32> to vector<1x32xf32>
    %220 = vector.extract_strided_slice %1 {offsets = [3, 0], sizes = [1, 32], strides = [1, 1]} : vector<20x32xf32> to vector<1x32xf32>
    %221 = arith.mulf %219, %220 : vector<1x32xf32>
    %222 = arith.addf %218, %221 : vector<1x32xf32>
    %223 = vector.extract_strided_slice %2 {offsets = [5, 0], sizes = [1, 32], strides = [1, 1]} : vector<27x32xf32> to vector<1x32xf32>
    %224 = vector.extract_strided_slice %1 {offsets = [4, 0], sizes = [1, 32], strides = [1, 1]} : vector<20x32xf32> to vector<1x32xf32>
    %225 = arith.mulf %223, %224 : vector<1x32xf32>
    %226 = arith.addf %222, %225 : vector<1x32xf32>
    %227 = vector.extract_strided_slice %2 {offsets = [10, 0], sizes = [1, 32], strides = [1, 1]} : vector<27x32xf32> to vector<1x32xf32>
    %228 = vector.extract_strided_slice %1 {offsets = [6, 0], sizes = [1, 32], strides = [1, 1]} : vector<20x32xf32> to vector<1x32xf32>
    %229 = arith.mulf %227, %228 : vector<1x32xf32>
    %230 = arith.addf %226, %229 : vector<1x32xf32>
    %231 = vector.extract_strided_slice %2 {offsets = [11, 0], sizes = [1, 32], strides = [1, 1]} : vector<27x32xf32> to vector<1x32xf32>
    %232 = vector.extract_strided_slice %1 {offsets = [7, 0], sizes = [1, 32], strides = [1, 1]} : vector<20x32xf32> to vector<1x32xf32>
    %233 = arith.mulf %231, %232 : vector<1x32xf32>
    %234 = arith.addf %230, %233 : vector<1x32xf32>
    %235 = vector.extract_strided_slice %2 {offsets = [13, 0], sizes = [1, 32], strides = [1, 1]} : vector<27x32xf32> to vector<1x32xf32>
    %236 = vector.extract_strided_slice %1 {offsets = [8, 0], sizes = [1, 32], strides = [1, 1]} : vector<20x32xf32> to vector<1x32xf32>
    %237 = arith.mulf %235, %236 : vector<1x32xf32>
    %238 = arith.addf %234, %237 : vector<1x32xf32>
    %239 = vector.extract_strided_slice %2 {offsets = [14, 0], sizes = [1, 32], strides = [1, 1]} : vector<27x32xf32> to vector<1x32xf32>
    %240 = vector.extract_strided_slice %1 {offsets = [9, 0], sizes = [1, 32], strides = [1, 1]} : vector<20x32xf32> to vector<1x32xf32>
    %241 = arith.mulf %239, %240 : vector<1x32xf32>
    %242 = arith.addf %238, %241 : vector<1x32xf32>
    %243 = vector.extract_strided_slice %1 {offsets = [8, 0], sizes = [1, 32], strides = [1, 1]} : vector<20x32xf32> to vector<1x32xf32>
    %244 = arith.addf %243, %242 : vector<1x32xf32>
    %245 = vector.extract_strided_slice %2 {offsets = [0, 0], sizes = [1, 32], strides = [1, 1]} : vector<27x32xf32> to vector<1x32xf32>
    %246 = vector.extract_strided_slice %1 {offsets = [1, 0], sizes = [1, 32], strides = [1, 1]} : vector<20x32xf32> to vector<1x32xf32>
    %247 = arith.mulf %245, %246 : vector<1x32xf32>
    %248 = arith.addf %3, %247 : vector<1x32xf32>
    %249 = vector.extract_strided_slice %2 {offsets = [1, 0], sizes = [1, 32], strides = [1, 1]} : vector<27x32xf32> to vector<1x32xf32>
    %250 = vector.extract_strided_slice %1 {offsets = [2, 0], sizes = [1, 32], strides = [1, 1]} : vector<20x32xf32> to vector<1x32xf32>
    %251 = arith.mulf %249, %250 : vector<1x32xf32>
    %252 = arith.addf %248, %251 : vector<1x32xf32>
    %253 = vector.extract_strided_slice %2 {offsets = [3, 0], sizes = [1, 32], strides = [1, 1]} : vector<27x32xf32> to vector<1x32xf32>
    %254 = vector.extract_strided_slice %1 {offsets = [3, 0], sizes = [1, 32], strides = [1, 1]} : vector<20x32xf32> to vector<1x32xf32>
    %255 = arith.mulf %253, %254 : vector<1x32xf32>
    %256 = arith.addf %252, %255 : vector<1x32xf32>
    %257 = vector.extract_strided_slice %2 {offsets = [4, 0], sizes = [1, 32], strides = [1, 1]} : vector<27x32xf32> to vector<1x32xf32>
    %258 = vector.extract_strided_slice %1 {offsets = [4, 0], sizes = [1, 32], strides = [1, 1]} : vector<20x32xf32> to vector<1x32xf32>
    %259 = arith.mulf %257, %258 : vector<1x32xf32>
    %260 = arith.addf %256, %259 : vector<1x32xf32>
    %261 = vector.extract_strided_slice %2 {offsets = [9, 0], sizes = [1, 32], strides = [1, 1]} : vector<27x32xf32> to vector<1x32xf32>
    %262 = vector.extract_strided_slice %1 {offsets = [6, 0], sizes = [1, 32], strides = [1, 1]} : vector<20x32xf32> to vector<1x32xf32>
    %263 = arith.mulf %261, %262 : vector<1x32xf32>
    %264 = arith.addf %260, %263 : vector<1x32xf32>
    %265 = vector.extract_strided_slice %2 {offsets = [10, 0], sizes = [1, 32], strides = [1, 1]} : vector<27x32xf32> to vector<1x32xf32>
    %266 = vector.extract_strided_slice %1 {offsets = [7, 0], sizes = [1, 32], strides = [1, 1]} : vector<20x32xf32> to vector<1x32xf32>
    %267 = arith.mulf %265, %266 : vector<1x32xf32>
    %268 = arith.addf %264, %267 : vector<1x32xf32>
    %269 = vector.extract_strided_slice %2 {offsets = [12, 0], sizes = [1, 32], strides = [1, 1]} : vector<27x32xf32> to vector<1x32xf32>
    %270 = vector.extract_strided_slice %1 {offsets = [8, 0], sizes = [1, 32], strides = [1, 1]} : vector<20x32xf32> to vector<1x32xf32>
    %271 = arith.mulf %269, %270 : vector<1x32xf32>
    %272 = arith.addf %268, %271 : vector<1x32xf32>
    %273 = vector.extract_strided_slice %2 {offsets = [13, 0], sizes = [1, 32], strides = [1, 1]} : vector<27x32xf32> to vector<1x32xf32>
    %274 = vector.extract_strided_slice %1 {offsets = [9, 0], sizes = [1, 32], strides = [1, 1]} : vector<20x32xf32> to vector<1x32xf32>
    %275 = arith.mulf %273, %274 : vector<1x32xf32>
    %276 = arith.addf %272, %275 : vector<1x32xf32>
    %277 = vector.extract_strided_slice %1 {offsets = [9, 0], sizes = [1, 32], strides = [1, 1]} : vector<20x32xf32> to vector<1x32xf32>
    %278 = arith.addf %277, %276 : vector<1x32xf32>
    %279 = tpu.concatenate %142, %176, %210, %244, %278 in 0 : vector<1x32xf32>, vector<1x32xf32>, vector<1x32xf32>, vector<1x32xf32>, vector<1x32xf32> -> vector<5x32xf32>
    %280 = vector.extract_strided_slice %1 {offsets = [10, 0], sizes = [1, 32], strides = [1, 1]} : vector<20x32xf32> to vector<1x32xf32>
    %281 = vector.extract_strided_slice %2 {offsets = [13, 0], sizes = [1, 32], strides = [1, 1]} : vector<27x32xf32> to vector<1x32xf32>
    %282 = vector.extract_strided_slice %1 {offsets = [11, 0], sizes = [1, 32], strides = [1, 1]} : vector<20x32xf32> to vector<1x32xf32>
    %283 = arith.mulf %281, %282 : vector<1x32xf32>
    %284 = arith.addf %3, %283 : vector<1x32xf32>
    %285 = vector.extract_strided_slice %2 {offsets = [14, 0], sizes = [1, 32], strides = [1, 1]} : vector<27x32xf32> to vector<1x32xf32>
    %286 = vector.extract_strided_slice %1 {offsets = [12, 0], sizes = [1, 32], strides = [1, 1]} : vector<20x32xf32> to vector<1x32xf32>
    %287 = arith.mulf %285, %286 : vector<1x32xf32>
    %288 = arith.addf %284, %287 : vector<1x32xf32>
    %289 = vector.extract_strided_slice %2 {offsets = [16, 0], sizes = [1, 32], strides = [1, 1]} : vector<27x32xf32> to vector<1x32xf32>
    %290 = vector.extract_strided_slice %1 {offsets = [13, 0], sizes = [1, 32], strides = [1, 1]} : vector<20x32xf32> to vector<1x32xf32>
    %291 = arith.mulf %289, %290 : vector<1x32xf32>
    %292 = arith.addf %288, %291 : vector<1x32xf32>
    %293 = vector.extract_strided_slice %2 {offsets = [17, 0], sizes = [1, 32], strides = [1, 1]} : vector<27x32xf32> to vector<1x32xf32>
    %294 = vector.extract_strided_slice %1 {offsets = [14, 0], sizes = [1, 32], strides = [1, 1]} : vector<20x32xf32> to vector<1x32xf32>
    %295 = arith.mulf %293, %294 : vector<1x32xf32>
    %296 = arith.addf %292, %295 : vector<1x32xf32>
    %297 = vector.extract_strided_slice %2 {offsets = [22, 0], sizes = [1, 32], strides = [1, 1]} : vector<27x32xf32> to vector<1x32xf32>
    %298 = vector.extract_strided_slice %1 {offsets = [16, 0], sizes = [1, 32], strides = [1, 1]} : vector<20x32xf32> to vector<1x32xf32>
    %299 = arith.mulf %297, %298 : vector<1x32xf32>
    %300 = arith.addf %296, %299 : vector<1x32xf32>
    %301 = vector.extract_strided_slice %2 {offsets = [23, 0], sizes = [1, 32], strides = [1, 1]} : vector<27x32xf32> to vector<1x32xf32>
    %302 = vector.extract_strided_slice %1 {offsets = [17, 0], sizes = [1, 32], strides = [1, 1]} : vector<20x32xf32> to vector<1x32xf32>
    %303 = arith.mulf %301, %302 : vector<1x32xf32>
    %304 = arith.addf %300, %303 : vector<1x32xf32>
    %305 = vector.extract_strided_slice %2 {offsets = [25, 0], sizes = [1, 32], strides = [1, 1]} : vector<27x32xf32> to vector<1x32xf32>
    %306 = vector.extract_strided_slice %1 {offsets = [18, 0], sizes = [1, 32], strides = [1, 1]} : vector<20x32xf32> to vector<1x32xf32>
    %307 = arith.mulf %305, %306 : vector<1x32xf32>
    %308 = arith.addf %304, %307 : vector<1x32xf32>
    %309 = vector.extract_strided_slice %2 {offsets = [26, 0], sizes = [1, 32], strides = [1, 1]} : vector<27x32xf32> to vector<1x32xf32>
    %310 = vector.extract_strided_slice %1 {offsets = [19, 0], sizes = [1, 32], strides = [1, 1]} : vector<20x32xf32> to vector<1x32xf32>
    %311 = arith.mulf %309, %310 : vector<1x32xf32>
    %312 = arith.addf %308, %311 : vector<1x32xf32>
    %313 = vector.extract_strided_slice %1 {offsets = [11, 0], sizes = [1, 32], strides = [1, 1]} : vector<20x32xf32> to vector<1x32xf32>
    %314 = arith.addf %313, %312 : vector<1x32xf32>
    %315 = vector.extract_strided_slice %2 {offsets = [12, 0], sizes = [1, 32], strides = [1, 1]} : vector<27x32xf32> to vector<1x32xf32>
    %316 = vector.extract_strided_slice %1 {offsets = [11, 0], sizes = [1, 32], strides = [1, 1]} : vector<20x32xf32> to vector<1x32xf32>
    %317 = arith.mulf %315, %316 : vector<1x32xf32>
    %318 = arith.addf %3, %317 : vector<1x32xf32>
    %319 = vector.extract_strided_slice %2 {offsets = [13, 0], sizes = [1, 32], strides = [1, 1]} : vector<27x32xf32> to vector<1x32xf32>
    %320 = vector.extract_strided_slice %1 {offsets = [12, 0], sizes = [1, 32], strides = [1, 1]} : vector<20x32xf32> to vector<1x32xf32>
    %321 = arith.mulf %319, %320 : vector<1x32xf32>
    %322 = arith.addf %318, %321 : vector<1x32xf32>
    %323 = vector.extract_strided_slice %2 {offsets = [15, 0], sizes = [1, 32], strides = [1, 1]} : vector<27x32xf32> to vector<1x32xf32>
    %324 = vector.extract_strided_slice %1 {offsets = [13, 0], sizes = [1, 32], strides = [1, 1]} : vector<20x32xf32> to vector<1x32xf32>
    %325 = arith.mulf %323, %324 : vector<1x32xf32>
    %326 = arith.addf %322, %325 : vector<1x32xf32>
    %327 = vector.extract_strided_slice %2 {offsets = [16, 0], sizes = [1, 32], strides = [1, 1]} : vector<27x32xf32> to vector<1x32xf32>
    %328 = vector.extract_strided_slice %1 {offsets = [14, 0], sizes = [1, 32], strides = [1, 1]} : vector<20x32xf32> to vector<1x32xf32>
    %329 = arith.mulf %327, %328 : vector<1x32xf32>
    %330 = arith.addf %326, %329 : vector<1x32xf32>
    %331 = vector.extract_strided_slice %2 {offsets = [21, 0], sizes = [1, 32], strides = [1, 1]} : vector<27x32xf32> to vector<1x32xf32>
    %332 = vector.extract_strided_slice %1 {offsets = [16, 0], sizes = [1, 32], strides = [1, 1]} : vector<20x32xf32> to vector<1x32xf32>
    %333 = arith.mulf %331, %332 : vector<1x32xf32>
    %334 = arith.addf %330, %333 : vector<1x32xf32>
    %335 = vector.extract_strided_slice %2 {offsets = [22, 0], sizes = [1, 32], strides = [1, 1]} : vector<27x32xf32> to vector<1x32xf32>
    %336 = vector.extract_strided_slice %1 {offsets = [17, 0], sizes = [1, 32], strides = [1, 1]} : vector<20x32xf32> to vector<1x32xf32>
    %337 = arith.mulf %335, %336 : vector<1x32xf32>
    %338 = arith.addf %334, %337 : vector<1x32xf32>
    %339 = vector.extract_strided_slice %2 {offsets = [24, 0], sizes = [1, 32], strides = [1, 1]} : vector<27x32xf32> to vector<1x32xf32>
    %340 = vector.extract_strided_slice %1 {offsets = [18, 0], sizes = [1, 32], strides = [1, 1]} : vector<20x32xf32> to vector<1x32xf32>
    %341 = arith.mulf %339, %340 : vector<1x32xf32>
    %342 = arith.addf %338, %341 : vector<1x32xf32>
    %343 = vector.extract_strided_slice %2 {offsets = [25, 0], sizes = [1, 32], strides = [1, 1]} : vector<27x32xf32> to vector<1x32xf32>
    %344 = vector.extract_strided_slice %1 {offsets = [19, 0], sizes = [1, 32], strides = [1, 1]} : vector<20x32xf32> to vector<1x32xf32>
    %345 = arith.mulf %343, %344 : vector<1x32xf32>
    %346 = arith.addf %342, %345 : vector<1x32xf32>
    %347 = vector.extract_strided_slice %1 {offsets = [12, 0], sizes = [1, 32], strides = [1, 1]} : vector<20x32xf32> to vector<1x32xf32>
    %348 = arith.addf %347, %346 : vector<1x32xf32>
    %349 = vector.extract_strided_slice %2 {offsets = [10, 0], sizes = [1, 32], strides = [1, 1]} : vector<27x32xf32> to vector<1x32xf32>
    %350 = vector.extract_strided_slice %1 {offsets = [11, 0], sizes = [1, 32], strides = [1, 1]} : vector<20x32xf32> to vector<1x32xf32>
    %351 = arith.mulf %349, %350 : vector<1x32xf32>
    %352 = arith.addf %3, %351 : vector<1x32xf32>
    %353 = vector.extract_strided_slice %2 {offsets = [11, 0], sizes = [1, 32], strides = [1, 1]} : vector<27x32xf32> to vector<1x32xf32>
    %354 = vector.extract_strided_slice %1 {offsets = [12, 0], sizes = [1, 32], strides = [1, 1]} : vector<20x32xf32> to vector<1x32xf32>
    %355 = arith.mulf %353, %354 : vector<1x32xf32>
    %356 = arith.addf %352, %355 : vector<1x32xf32>
    %357 = vector.extract_strided_slice %2 {offsets = [13, 0], sizes = [1, 32], strides = [1, 1]} : vector<27x32xf32> to vector<1x32xf32>
    %358 = vector.extract_strided_slice %1 {offsets = [13, 0], sizes = [1, 32], strides = [1, 1]} : vector<20x32xf32> to vector<1x32xf32>
    %359 = arith.mulf %357, %358 : vector<1x32xf32>
    %360 = arith.addf %356, %359 : vector<1x32xf32>
    %361 = vector.extract_strided_slice %2 {offsets = [14, 0], sizes = [1, 32], strides = [1, 1]} : vector<27x32xf32> to vector<1x32xf32>
    %362 = vector.extract_strided_slice %1 {offsets = [14, 0], sizes = [1, 32], strides = [1, 1]} : vector<20x32xf32> to vector<1x32xf32>
    %363 = arith.mulf %361, %362 : vector<1x32xf32>
    %364 = arith.addf %360, %363 : vector<1x32xf32>
    %365 = vector.extract_strided_slice %2 {offsets = [19, 0], sizes = [1, 32], strides = [1, 1]} : vector<27x32xf32> to vector<1x32xf32>
    %366 = vector.extract_strided_slice %1 {offsets = [16, 0], sizes = [1, 32], strides = [1, 1]} : vector<20x32xf32> to vector<1x32xf32>
    %367 = arith.mulf %365, %366 : vector<1x32xf32>
    %368 = arith.addf %364, %367 : vector<1x32xf32>
    %369 = vector.extract_strided_slice %2 {offsets = [20, 0], sizes = [1, 32], strides = [1, 1]} : vector<27x32xf32> to vector<1x32xf32>
    %370 = vector.extract_strided_slice %1 {offsets = [17, 0], sizes = [1, 32], strides = [1, 1]} : vector<20x32xf32> to vector<1x32xf32>
    %371 = arith.mulf %369, %370 : vector<1x32xf32>
    %372 = arith.addf %368, %371 : vector<1x32xf32>
    %373 = vector.extract_strided_slice %2 {offsets = [22, 0], sizes = [1, 32], strides = [1, 1]} : vector<27x32xf32> to vector<1x32xf32>
    %374 = vector.extract_strided_slice %1 {offsets = [18, 0], sizes = [1, 32], strides = [1, 1]} : vector<20x32xf32> to vector<1x32xf32>
    %375 = arith.mulf %373, %374 : vector<1x32xf32>
    %376 = arith.addf %372, %375 : vector<1x32xf32>
    %377 = vector.extract_strided_slice %2 {offsets = [23, 0], sizes = [1, 32], strides = [1, 1]} : vector<27x32xf32> to vector<1x32xf32>
    %378 = vector.extract_strided_slice %1 {offsets = [19, 0], sizes = [1, 32], strides = [1, 1]} : vector<20x32xf32> to vector<1x32xf32>
    %379 = arith.mulf %377, %378 : vector<1x32xf32>
    %380 = arith.addf %376, %379 : vector<1x32xf32>
    %381 = vector.extract_strided_slice %1 {offsets = [13, 0], sizes = [1, 32], strides = [1, 1]} : vector<20x32xf32> to vector<1x32xf32>
    %382 = arith.addf %381, %380 : vector<1x32xf32>
    %383 = vector.extract_strided_slice %2 {offsets = [9, 0], sizes = [1, 32], strides = [1, 1]} : vector<27x32xf32> to vector<1x32xf32>
    %384 = vector.extract_strided_slice %1 {offsets = [11, 0], sizes = [1, 32], strides = [1, 1]} : vector<20x32xf32> to vector<1x32xf32>
    %385 = arith.mulf %383, %384 : vector<1x32xf32>
    %386 = arith.addf %3, %385 : vector<1x32xf32>
    %387 = vector.extract_strided_slice %2 {offsets = [10, 0], sizes = [1, 32], strides = [1, 1]} : vector<27x32xf32> to vector<1x32xf32>
    %388 = vector.extract_strided_slice %1 {offsets = [12, 0], sizes = [1, 32], strides = [1, 1]} : vector<20x32xf32> to vector<1x32xf32>
    %389 = arith.mulf %387, %388 : vector<1x32xf32>
    %390 = arith.addf %386, %389 : vector<1x32xf32>
    %391 = vector.extract_strided_slice %2 {offsets = [12, 0], sizes = [1, 32], strides = [1, 1]} : vector<27x32xf32> to vector<1x32xf32>
    %392 = vector.extract_strided_slice %1 {offsets = [13, 0], sizes = [1, 32], strides = [1, 1]} : vector<20x32xf32> to vector<1x32xf32>
    %393 = arith.mulf %391, %392 : vector<1x32xf32>
    %394 = arith.addf %390, %393 : vector<1x32xf32>
    %395 = vector.extract_strided_slice %2 {offsets = [13, 0], sizes = [1, 32], strides = [1, 1]} : vector<27x32xf32> to vector<1x32xf32>
    %396 = vector.extract_strided_slice %1 {offsets = [14, 0], sizes = [1, 32], strides = [1, 1]} : vector<20x32xf32> to vector<1x32xf32>
    %397 = arith.mulf %395, %396 : vector<1x32xf32>
    %398 = arith.addf %394, %397 : vector<1x32xf32>
    %399 = vector.extract_strided_slice %2 {offsets = [18, 0], sizes = [1, 32], strides = [1, 1]} : vector<27x32xf32> to vector<1x32xf32>
    %400 = vector.extract_strided_slice %1 {offsets = [16, 0], sizes = [1, 32], strides = [1, 1]} : vector<20x32xf32> to vector<1x32xf32>
    %401 = arith.mulf %399, %400 : vector<1x32xf32>
    %402 = arith.addf %398, %401 : vector<1x32xf32>
    %403 = vector.extract_strided_slice %2 {offsets = [19, 0], sizes = [1, 32], strides = [1, 1]} : vector<27x32xf32> to vector<1x32xf32>
    %404 = vector.extract_strided_slice %1 {offsets = [17, 0], sizes = [1, 32], strides = [1, 1]} : vector<20x32xf32> to vector<1x32xf32>
    %405 = arith.mulf %403, %404 : vector<1x32xf32>
    %406 = arith.addf %402, %405 : vector<1x32xf32>
    %407 = vector.extract_strided_slice %2 {offsets = [21, 0], sizes = [1, 32], strides = [1, 1]} : vector<27x32xf32> to vector<1x32xf32>
    %408 = vector.extract_strided_slice %1 {offsets = [18, 0], sizes = [1, 32], strides = [1, 1]} : vector<20x32xf32> to vector<1x32xf32>
    %409 = arith.mulf %407, %408 : vector<1x32xf32>
    %410 = arith.addf %406, %409 : vector<1x32xf32>
    %411 = vector.extract_strided_slice %2 {offsets = [22, 0], sizes = [1, 32], strides = [1, 1]} : vector<27x32xf32> to vector<1x32xf32>
    %412 = vector.extract_strided_slice %1 {offsets = [19, 0], sizes = [1, 32], strides = [1, 1]} : vector<20x32xf32> to vector<1x32xf32>
    %413 = arith.mulf %411, %412 : vector<1x32xf32>
    %414 = arith.addf %410, %413 : vector<1x32xf32>
    %415 = vector.extract_strided_slice %1 {offsets = [14, 0], sizes = [1, 32], strides = [1, 1]} : vector<20x32xf32> to vector<1x32xf32>
    %416 = arith.addf %415, %414 : vector<1x32xf32>
    %417 = tpu.concatenate %280, %314, %348, %382, %416 in 0 : vector<1x32xf32>, vector<1x32xf32>, vector<1x32xf32>, vector<1x32xf32>, vector<1x32xf32> -> vector<5x32xf32>
    %418 = vector.extract_strided_slice %1 {offsets = [15, 0], sizes = [1, 32], strides = [1, 1]} : vector<20x32xf32> to vector<1x32xf32>
    %419 = vector.extract_strided_slice %2 {offsets = [4, 0], sizes = [1, 32], strides = [1, 1]} : vector<27x32xf32> to vector<1x32xf32>
    %420 = vector.extract_strided_slice %1 {offsets = [11, 0], sizes = [1, 32], strides = [1, 1]} : vector<20x32xf32> to vector<1x32xf32>
    %421 = arith.mulf %419, %420 : vector<1x32xf32>
    %422 = arith.addf %3, %421 : vector<1x32xf32>
    %423 = vector.extract_strided_slice %2 {offsets = [5, 0], sizes = [1, 32], strides = [1, 1]} : vector<27x32xf32> to vector<1x32xf32>
    %424 = vector.extract_strided_slice %1 {offsets = [12, 0], sizes = [1, 32], strides = [1, 1]} : vector<20x32xf32> to vector<1x32xf32>
    %425 = arith.mulf %423, %424 : vector<1x32xf32>
    %426 = arith.addf %422, %425 : vector<1x32xf32>
    %427 = vector.extract_strided_slice %2 {offsets = [7, 0], sizes = [1, 32], strides = [1, 1]} : vector<27x32xf32> to vector<1x32xf32>
    %428 = vector.extract_strided_slice %1 {offsets = [13, 0], sizes = [1, 32], strides = [1, 1]} : vector<20x32xf32> to vector<1x32xf32>
    %429 = arith.mulf %427, %428 : vector<1x32xf32>
    %430 = arith.addf %426, %429 : vector<1x32xf32>
    %431 = vector.extract_strided_slice %2 {offsets = [8, 0], sizes = [1, 32], strides = [1, 1]} : vector<27x32xf32> to vector<1x32xf32>
    %432 = vector.extract_strided_slice %1 {offsets = [14, 0], sizes = [1, 32], strides = [1, 1]} : vector<20x32xf32> to vector<1x32xf32>
    %433 = arith.mulf %431, %432 : vector<1x32xf32>
    %434 = arith.addf %430, %433 : vector<1x32xf32>
    %435 = vector.extract_strided_slice %2 {offsets = [13, 0], sizes = [1, 32], strides = [1, 1]} : vector<27x32xf32> to vector<1x32xf32>
    %436 = vector.extract_strided_slice %1 {offsets = [16, 0], sizes = [1, 32], strides = [1, 1]} : vector<20x32xf32> to vector<1x32xf32>
    %437 = arith.mulf %435, %436 : vector<1x32xf32>
    %438 = arith.addf %434, %437 : vector<1x32xf32>
    %439 = vector.extract_strided_slice %2 {offsets = [14, 0], sizes = [1, 32], strides = [1, 1]} : vector<27x32xf32> to vector<1x32xf32>
    %440 = vector.extract_strided_slice %1 {offsets = [17, 0], sizes = [1, 32], strides = [1, 1]} : vector<20x32xf32> to vector<1x32xf32>
    %441 = arith.mulf %439, %440 : vector<1x32xf32>
    %442 = arith.addf %438, %441 : vector<1x32xf32>
    %443 = vector.extract_strided_slice %2 {offsets = [16, 0], sizes = [1, 32], strides = [1, 1]} : vector<27x32xf32> to vector<1x32xf32>
    %444 = vector.extract_strided_slice %1 {offsets = [18, 0], sizes = [1, 32], strides = [1, 1]} : vector<20x32xf32> to vector<1x32xf32>
    %445 = arith.mulf %443, %444 : vector<1x32xf32>
    %446 = arith.addf %442, %445 : vector<1x32xf32>
    %447 = vector.extract_strided_slice %2 {offsets = [17, 0], sizes = [1, 32], strides = [1, 1]} : vector<27x32xf32> to vector<1x32xf32>
    %448 = vector.extract_strided_slice %1 {offsets = [19, 0], sizes = [1, 32], strides = [1, 1]} : vector<20x32xf32> to vector<1x32xf32>
    %449 = arith.mulf %447, %448 : vector<1x32xf32>
    %450 = arith.addf %446, %449 : vector<1x32xf32>
    %451 = vector.extract_strided_slice %1 {offsets = [16, 0], sizes = [1, 32], strides = [1, 1]} : vector<20x32xf32> to vector<1x32xf32>
    %452 = arith.addf %451, %450 : vector<1x32xf32>
    %453 = vector.extract_strided_slice %2 {offsets = [3, 0], sizes = [1, 32], strides = [1, 1]} : vector<27x32xf32> to vector<1x32xf32>
    %454 = vector.extract_strided_slice %1 {offsets = [11, 0], sizes = [1, 32], strides = [1, 1]} : vector<20x32xf32> to vector<1x32xf32>
    %455 = arith.mulf %453, %454 : vector<1x32xf32>
    %456 = arith.addf %3, %455 : vector<1x32xf32>
    %457 = vector.extract_strided_slice %2 {offsets = [4, 0], sizes = [1, 32], strides = [1, 1]} : vector<27x32xf32> to vector<1x32xf32>
    %458 = vector.extract_strided_slice %1 {offsets = [12, 0], sizes = [1, 32], strides = [1, 1]} : vector<20x32xf32> to vector<1x32xf32>
    %459 = arith.mulf %457, %458 : vector<1x32xf32>
    %460 = arith.addf %456, %459 : vector<1x32xf32>
    %461 = vector.extract_strided_slice %2 {offsets = [6, 0], sizes = [1, 32], strides = [1, 1]} : vector<27x32xf32> to vector<1x32xf32>
    %462 = vector.extract_strided_slice %1 {offsets = [13, 0], sizes = [1, 32], strides = [1, 1]} : vector<20x32xf32> to vector<1x32xf32>
    %463 = arith.mulf %461, %462 : vector<1x32xf32>
    %464 = arith.addf %460, %463 : vector<1x32xf32>
    %465 = vector.extract_strided_slice %2 {offsets = [7, 0], sizes = [1, 32], strides = [1, 1]} : vector<27x32xf32> to vector<1x32xf32>
    %466 = vector.extract_strided_slice %1 {offsets = [14, 0], sizes = [1, 32], strides = [1, 1]} : vector<20x32xf32> to vector<1x32xf32>
    %467 = arith.mulf %465, %466 : vector<1x32xf32>
    %468 = arith.addf %464, %467 : vector<1x32xf32>
    %469 = vector.extract_strided_slice %2 {offsets = [12, 0], sizes = [1, 32], strides = [1, 1]} : vector<27x32xf32> to vector<1x32xf32>
    %470 = vector.extract_strided_slice %1 {offsets = [16, 0], sizes = [1, 32], strides = [1, 1]} : vector<20x32xf32> to vector<1x32xf32>
    %471 = arith.mulf %469, %470 : vector<1x32xf32>
    %472 = arith.addf %468, %471 : vector<1x32xf32>
    %473 = vector.extract_strided_slice %2 {offsets = [13, 0], sizes = [1, 32], strides = [1, 1]} : vector<27x32xf32> to vector<1x32xf32>
    %474 = vector.extract_strided_slice %1 {offsets = [17, 0], sizes = [1, 32], strides = [1, 1]} : vector<20x32xf32> to vector<1x32xf32>
    %475 = arith.mulf %473, %474 : vector<1x32xf32>
    %476 = arith.addf %472, %475 : vector<1x32xf32>
    %477 = vector.extract_strided_slice %2 {offsets = [15, 0], sizes = [1, 32], strides = [1, 1]} : vector<27x32xf32> to vector<1x32xf32>
    %478 = vector.extract_strided_slice %1 {offsets = [18, 0], sizes = [1, 32], strides = [1, 1]} : vector<20x32xf32> to vector<1x32xf32>
    %479 = arith.mulf %477, %478 : vector<1x32xf32>
    %480 = arith.addf %476, %479 : vector<1x32xf32>
    %481 = vector.extract_strided_slice %2 {offsets = [16, 0], sizes = [1, 32], strides = [1, 1]} : vector<27x32xf32> to vector<1x32xf32>
    %482 = vector.extract_strided_slice %1 {offsets = [19, 0], sizes = [1, 32], strides = [1, 1]} : vector<20x32xf32> to vector<1x32xf32>
    %483 = arith.mulf %481, %482 : vector<1x32xf32>
    %484 = arith.addf %480, %483 : vector<1x32xf32>
    %485 = vector.extract_strided_slice %1 {offsets = [17, 0], sizes = [1, 32], strides = [1, 1]} : vector<20x32xf32> to vector<1x32xf32>
    %486 = arith.addf %485, %484 : vector<1x32xf32>
    %487 = vector.extract_strided_slice %2 {offsets = [1, 0], sizes = [1, 32], strides = [1, 1]} : vector<27x32xf32> to vector<1x32xf32>
    %488 = vector.extract_strided_slice %1 {offsets = [11, 0], sizes = [1, 32], strides = [1, 1]} : vector<20x32xf32> to vector<1x32xf32>
    %489 = arith.mulf %487, %488 : vector<1x32xf32>
    %490 = arith.addf %3, %489 : vector<1x32xf32>
    %491 = vector.extract_strided_slice %2 {offsets = [2, 0], sizes = [1, 32], strides = [1, 1]} : vector<27x32xf32> to vector<1x32xf32>
    %492 = vector.extract_strided_slice %1 {offsets = [12, 0], sizes = [1, 32], strides = [1, 1]} : vector<20x32xf32> to vector<1x32xf32>
    %493 = arith.mulf %491, %492 : vector<1x32xf32>
    %494 = arith.addf %490, %493 : vector<1x32xf32>
    %495 = vector.extract_strided_slice %2 {offsets = [4, 0], sizes = [1, 32], strides = [1, 1]} : vector<27x32xf32> to vector<1x32xf32>
    %496 = vector.extract_strided_slice %1 {offsets = [13, 0], sizes = [1, 32], strides = [1, 1]} : vector<20x32xf32> to vector<1x32xf32>
    %497 = arith.mulf %495, %496 : vector<1x32xf32>
    %498 = arith.addf %494, %497 : vector<1x32xf32>
    %499 = vector.extract_strided_slice %2 {offsets = [5, 0], sizes = [1, 32], strides = [1, 1]} : vector<27x32xf32> to vector<1x32xf32>
    %500 = vector.extract_strided_slice %1 {offsets = [14, 0], sizes = [1, 32], strides = [1, 1]} : vector<20x32xf32> to vector<1x32xf32>
    %501 = arith.mulf %499, %500 : vector<1x32xf32>
    %502 = arith.addf %498, %501 : vector<1x32xf32>
    %503 = vector.extract_strided_slice %2 {offsets = [10, 0], sizes = [1, 32], strides = [1, 1]} : vector<27x32xf32> to vector<1x32xf32>
    %504 = vector.extract_strided_slice %1 {offsets = [16, 0], sizes = [1, 32], strides = [1, 1]} : vector<20x32xf32> to vector<1x32xf32>
    %505 = arith.mulf %503, %504 : vector<1x32xf32>
    %506 = arith.addf %502, %505 : vector<1x32xf32>
    %507 = vector.extract_strided_slice %2 {offsets = [11, 0], sizes = [1, 32], strides = [1, 1]} : vector<27x32xf32> to vector<1x32xf32>
    %508 = vector.extract_strided_slice %1 {offsets = [17, 0], sizes = [1, 32], strides = [1, 1]} : vector<20x32xf32> to vector<1x32xf32>
    %509 = arith.mulf %507, %508 : vector<1x32xf32>
    %510 = arith.addf %506, %509 : vector<1x32xf32>
    %511 = vector.extract_strided_slice %2 {offsets = [13, 0], sizes = [1, 32], strides = [1, 1]} : vector<27x32xf32> to vector<1x32xf32>
    %512 = vector.extract_strided_slice %1 {offsets = [18, 0], sizes = [1, 32], strides = [1, 1]} : vector<20x32xf32> to vector<1x32xf32>
    %513 = arith.mulf %511, %512 : vector<1x32xf32>
    %514 = arith.addf %510, %513 : vector<1x32xf32>
    %515 = vector.extract_strided_slice %2 {offsets = [14, 0], sizes = [1, 32], strides = [1, 1]} : vector<27x32xf32> to vector<1x32xf32>
    %516 = vector.extract_strided_slice %1 {offsets = [19, 0], sizes = [1, 32], strides = [1, 1]} : vector<20x32xf32> to vector<1x32xf32>
    %517 = arith.mulf %515, %516 : vector<1x32xf32>
    %518 = arith.addf %514, %517 : vector<1x32xf32>
    %519 = vector.extract_strided_slice %1 {offsets = [18, 0], sizes = [1, 32], strides = [1, 1]} : vector<20x32xf32> to vector<1x32xf32>
    %520 = arith.addf %519, %518 : vector<1x32xf32>
    %521 = vector.extract_strided_slice %2 {offsets = [0, 0], sizes = [1, 32], strides = [1, 1]} : vector<27x32xf32> to vector<1x32xf32>
    %522 = vector.extract_strided_slice %1 {offsets = [11, 0], sizes = [1, 32], strides = [1, 1]} : vector<20x32xf32> to vector<1x32xf32>
    %523 = arith.mulf %521, %522 : vector<1x32xf32>
    %524 = arith.addf %3, %523 : vector<1x32xf32>
    %525 = vector.extract_strided_slice %2 {offsets = [1, 0], sizes = [1, 32], strides = [1, 1]} : vector<27x32xf32> to vector<1x32xf32>
    %526 = vector.extract_strided_slice %1 {offsets = [12, 0], sizes = [1, 32], strides = [1, 1]} : vector<20x32xf32> to vector<1x32xf32>
    %527 = arith.mulf %525, %526 : vector<1x32xf32>
    %528 = arith.addf %524, %527 : vector<1x32xf32>
    %529 = vector.extract_strided_slice %2 {offsets = [3, 0], sizes = [1, 32], strides = [1, 1]} : vector<27x32xf32> to vector<1x32xf32>
    %530 = vector.extract_strided_slice %1 {offsets = [13, 0], sizes = [1, 32], strides = [1, 1]} : vector<20x32xf32> to vector<1x32xf32>
    %531 = arith.mulf %529, %530 : vector<1x32xf32>
    %532 = arith.addf %528, %531 : vector<1x32xf32>
    %533 = vector.extract_strided_slice %2 {offsets = [4, 0], sizes = [1, 32], strides = [1, 1]} : vector<27x32xf32> to vector<1x32xf32>
    %534 = vector.extract_strided_slice %1 {offsets = [14, 0], sizes = [1, 32], strides = [1, 1]} : vector<20x32xf32> to vector<1x32xf32>
    %535 = arith.mulf %533, %534 : vector<1x32xf32>
    %536 = arith.addf %532, %535 : vector<1x32xf32>
    %537 = vector.extract_strided_slice %2 {offsets = [9, 0], sizes = [1, 32], strides = [1, 1]} : vector<27x32xf32> to vector<1x32xf32>
    %538 = vector.extract_strided_slice %1 {offsets = [16, 0], sizes = [1, 32], strides = [1, 1]} : vector<20x32xf32> to vector<1x32xf32>
    %539 = arith.mulf %537, %538 : vector<1x32xf32>
    %540 = arith.addf %536, %539 : vector<1x32xf32>
    %541 = vector.extract_strided_slice %2 {offsets = [10, 0], sizes = [1, 32], strides = [1, 1]} : vector<27x32xf32> to vector<1x32xf32>
    %542 = vector.extract_strided_slice %1 {offsets = [17, 0], sizes = [1, 32], strides = [1, 1]} : vector<20x32xf32> to vector<1x32xf32>
    %543 = arith.mulf %541, %542 : vector<1x32xf32>
    %544 = arith.addf %540, %543 : vector<1x32xf32>
    %545 = vector.extract_strided_slice %2 {offsets = [12, 0], sizes = [1, 32], strides = [1, 1]} : vector<27x32xf32> to vector<1x32xf32>
    %546 = vector.extract_strided_slice %1 {offsets = [18, 0], sizes = [1, 32], strides = [1, 1]} : vector<20x32xf32> to vector<1x32xf32>
    %547 = arith.mulf %545, %546 : vector<1x32xf32>
    %548 = arith.addf %544, %547 : vector<1x32xf32>
    %549 = vector.extract_strided_slice %2 {offsets = [13, 0], sizes = [1, 32], strides = [1, 1]} : vector<27x32xf32> to vector<1x32xf32>
    %550 = vector.extract_strided_slice %1 {offsets = [19, 0], sizes = [1, 32], strides = [1, 1]} : vector<20x32xf32> to vector<1x32xf32>
    %551 = arith.mulf %549, %550 : vector<1x32xf32>
    %552 = arith.addf %548, %551 : vector<1x32xf32>
    %553 = vector.extract_strided_slice %1 {offsets = [19, 0], sizes = [1, 32], strides = [1, 1]} : vector<20x32xf32> to vector<1x32xf32>
    %554 = arith.addf %553, %552 : vector<1x32xf32>
    %555 = tpu.concatenate %418, %452, %486, %520, %554 in 0 : vector<1x32xf32>, vector<1x32xf32>, vector<1x32xf32>, vector<1x32xf32>, vector<1x32xf32> -> vector<5x32xf32>
    %556 = tpu.concatenate %141, %279, %417, %555 in 0 : vector<5x32xf32>, vector<5x32xf32>, vector<5x32xf32>, vector<5x32xf32> -> vector<20x32xf32>
    %c0_5 = arith.constant 0 : index
    %c0_6 = arith.constant 0 : index
    %557 = vector.load %arg6[%c0_5, %c0_6] : memref<1x32xf32, #tpu.memory_space<vmem>>, vector<1x32xf32>
    %c0_7 = arith.constant 0 : index
    %c0_8 = arith.constant 0 : index
    %558 = vector.load %arg7[%c0_7, %c0_8] : memref<1x32xf32, #tpu.memory_space<vmem>>, vector<1x32xf32>
    %cst = arith.constant dense<0.000000e+00> : vector<20xf32>
    %559 = vector.multi_reduction <add>, %556, %cst [1] : vector<20x32xf32> to vector<20xf32>
    %560 = vector.shape_cast %559 : vector<20xf32> to vector<20x1xf32>
    %cst_9 = arith.constant 3.200000e+01 : f32
    %561 = vector.broadcast %cst_9 : f32 to vector<20x1xf32>
    %562 = arith.divf %560, %561 : vector<20x1xf32>
    %563 = vector.broadcast %562 : vector<20x1xf32> to vector<20x32xf32>
    %564 = arith.subf %556, %563 : vector<20x32xf32>
    %565 = arith.mulf %564, %564 : vector<20x32xf32>
    %cst_10 = arith.constant dense<0.000000e+00> : vector<20xf32>
    %566 = vector.multi_reduction <add>, %565, %cst_10 [1] : vector<20x32xf32> to vector<20xf32>
    %567 = vector.shape_cast %566 : vector<20xf32> to vector<20x1xf32>
    %cst_11 = arith.constant 3.200000e+01 : f32
    %568 = vector.broadcast %cst_11 : f32 to vector<20x1xf32>
    %569 = arith.divf %567, %568 : vector<20x1xf32>
    %cst_12 = arith.constant 9.99999974E-6 : f32
    %570 = vector.broadcast %cst_12 : f32 to vector<20x1xf32>
    %571 = arith.addf %569, %570 : vector<20x1xf32>
    %572 = math.rsqrt %571 : vector<20x1xf32>
    %573 = vector.broadcast %572 : vector<20x1xf32> to vector<20x32xf32>
    %574 = arith.mulf %564, %573 : vector<20x32xf32>
    %575 = vector.broadcast %557 : vector<1x32xf32> to vector<20x32xf32>
    %576 = arith.mulf %574, %575 : vector<20x32xf32>
    %577 = vector.broadcast %558 : vector<1x32xf32> to vector<20x32xf32>
    %578 = arith.addf %576, %577 : vector<20x32xf32>
    %579 = arith.truncf %578 : vector<20x32xf32> to vector<20x32xbf16>
    %c0_13 = arith.constant 0 : index
    %c0_14 = arith.constant 0 : index
    %580 = vector.load %arg10[%c0_13, %c0_14] : memref<32x64xbf16, #tpu.memory_space<vmem>>, vector<32x64xbf16>
    %cst_15 = arith.constant dense<0.000000e+00> : vector<20x64xf32>
    %581 = tpu.matmul %579, %580, %cst_15 {dimension_numbers = #tpu.dot_dimension_numbers<[1], [0], [0], [1], [0, 0, 1, 1], [], []>} : vector<20x32xbf16>, vector<32x64xbf16>, vector<20x64xf32> -> vector<20x64xf32>
    %c0_16 = arith.constant 0 : index
    %c0_17 = arith.constant 0 : index
    %582 = vector.load %arg11[%c0_16, %c0_17] : memref<1x64xf32, #tpu.memory_space<vmem>>, vector<1x64xf32>
    %583 = vector.broadcast %582 : vector<1x64xf32> to vector<20x64xf32>
    %584 = arith.addf %581, %583 : vector<20x64xf32>
    %585 = vector.extract_strided_slice %584 {offsets = [0, 0], sizes = [20, 32], strides = [1, 1]} : vector<20x64xf32> to vector<20x32xf32>
    %586 = vector.extract_strided_slice %584 {offsets = [0, 32], sizes = [20, 32], strides = [1, 1]} : vector<20x64xf32> to vector<20x32xf32>
    %c0_18 = arith.constant 0 : index
    %c0_19 = arith.constant 0 : index
    %587 = vector.load %arg1[%c0_18, %c0_19] : memref<2x32xf32, #tpu.memory_space<vmem>>, vector<2x32xf32>
    %c0_20 = arith.constant 0 : index
    %c0_21 = arith.constant 0 : index
    %588 = vector.load %arg4[%c0_20, %c0_21] : memref<1x32xf32, #tpu.memory_space<vmem>>, vector<1x32xf32>
    %c0_22 = arith.constant 0 : index
    %c0_23 = arith.constant 0 : index
    %589 = vector.load %arg5[%c0_22, %c0_23] : memref<1x32xf32, #tpu.memory_space<vmem>>, vector<1x32xf32>
    %cst_24 = arith.constant dense<0.000000e+00> : vector<2xf32>
    %590 = vector.multi_reduction <add>, %587, %cst_24 [1] : vector<2x32xf32> to vector<2xf32>
    %591 = vector.shape_cast %590 : vector<2xf32> to vector<2x1xf32>
    %cst_25 = arith.constant 3.200000e+01 : f32
    %592 = vector.broadcast %cst_25 : f32 to vector<2x1xf32>
    %593 = arith.divf %591, %592 : vector<2x1xf32>
    %594 = vector.broadcast %593 : vector<2x1xf32> to vector<2x32xf32>
    %595 = arith.subf %587, %594 : vector<2x32xf32>
    %596 = arith.mulf %595, %595 : vector<2x32xf32>
    %cst_26 = arith.constant dense<0.000000e+00> : vector<2xf32>
    %597 = vector.multi_reduction <add>, %596, %cst_26 [1] : vector<2x32xf32> to vector<2xf32>
    %598 = vector.shape_cast %597 : vector<2xf32> to vector<2x1xf32>
    %cst_27 = arith.constant 3.200000e+01 : f32
    %599 = vector.broadcast %cst_27 : f32 to vector<2x1xf32>
    %600 = arith.divf %598, %599 : vector<2x1xf32>
    %cst_28 = arith.constant 9.99999974E-6 : f32
    %601 = vector.broadcast %cst_28 : f32 to vector<2x1xf32>
    %602 = arith.addf %600, %601 : vector<2x1xf32>
    %603 = math.rsqrt %602 : vector<2x1xf32>
    %604 = vector.broadcast %603 : vector<2x1xf32> to vector<2x32xf32>
    %605 = arith.mulf %595, %604 : vector<2x32xf32>
    %606 = vector.broadcast %588 : vector<1x32xf32> to vector<2x32xf32>
    %607 = arith.mulf %605, %606 : vector<2x32xf32>
    %608 = vector.broadcast %589 : vector<1x32xf32> to vector<2x32xf32>
    %609 = arith.addf %607, %608 : vector<2x32xf32>
    %610 = arith.truncf %609 : vector<2x32xf32> to vector<2x32xbf16>
    %c0_29 = arith.constant 0 : index
    %c0_30 = arith.constant 0 : index
    %611 = vector.load %arg8[%c0_29, %c0_30] : memref<32x32xbf16, #tpu.memory_space<vmem>>, vector<32x32xbf16>
    %cst_31 = arith.constant dense<0.000000e+00> : vector<2x32xf32>
    %612 = tpu.matmul %610, %611, %cst_31 {dimension_numbers = #tpu.dot_dimension_numbers<[1], [0], [0], [1], [0, 0, 1, 1], [], []>} : vector<2x32xbf16>, vector<32x32xbf16>, vector<2x32xf32> -> vector<2x32xf32>
    %c0_32 = arith.constant 0 : index
    %c0_33 = arith.constant 0 : index
    %613 = vector.load %arg9[%c0_32, %c0_33] : memref<1x32xf32, #tpu.memory_space<vmem>>, vector<1x32xf32>
    %614 = vector.broadcast %613 : vector<1x32xf32> to vector<2x32xf32>
    %615 = arith.addf %612, %614 : vector<2x32xf32>
    %616 = vector.extract_strided_slice %585 {offsets = [0, 0], sizes = [10, 32], strides = [1, 1]} : vector<20x32xf32> to vector<10x32xf32>
    %617 = vector.extract_strided_slice %586 {offsets = [0, 0], sizes = [10, 32], strides = [1, 1]} : vector<20x32xf32> to vector<10x32xf32>
    %618 = vector.extract_strided_slice %615 {offsets = [0, 0], sizes = [1, 8], strides = [1, 1]} : vector<2x32xf32> to vector<1x8xf32>
    %619 = vector.extract_strided_slice %616 {offsets = [0, 0], sizes = [10, 8], strides = [1, 1]} : vector<10x32xf32> to vector<10x8xf32>
    %620 = vector.extract_strided_slice %617 {offsets = [0, 0], sizes = [10, 8], strides = [1, 1]} : vector<10x32xf32> to vector<10x8xf32>
    %621 = vector.broadcast %618 : vector<1x8xf32> to vector<10x8xf32>
    %622 = arith.mulf %621, %619 : vector<10x8xf32>
    %cst_34 = arith.constant dense<0.000000e+00> : vector<10xf32>
    %623 = vector.multi_reduction <add>, %622, %cst_34 [1] : vector<10x8xf32> to vector<10xf32>
    %624 = vector.shape_cast %623 : vector<10xf32> to vector<10x1xf32>
    %cst_35 = arith.constant 0.353553385 : f32
    %625 = vector.broadcast %cst_35 : f32 to vector<10x1xf32>
    %626 = arith.mulf %624, %625 : vector<10x1xf32>
    %cst_36 = arith.constant dense<0xFF800000> : vector<1xf32>
    %627 = vector.multi_reduction <maximumf>, %626, %cst_36 [0] : vector<10x1xf32> to vector<1xf32>
    %628 = vector.shape_cast %627 : vector<1xf32> to vector<1x1xf32>
    %629 = vector.broadcast %628 : vector<1x1xf32> to vector<10x1xf32>
    %630 = arith.subf %626, %629 : vector<10x1xf32>
    %631 = math.exp %630 : vector<10x1xf32>
    %cst_37 = arith.constant dense<0.000000e+00> : vector<1xf32>
    %632 = vector.multi_reduction <add>, %631, %cst_37 [0] : vector<10x1xf32> to vector<1xf32>
    %633 = vector.shape_cast %632 : vector<1xf32> to vector<1x1xf32>
    %634 = tpu.reciprocal %633 {approx = true} : vector<1x1xf32> -> vector<1x1xf32>
    %635 = vector.broadcast %634 : vector<1x1xf32> to vector<10x1xf32>
    %636 = arith.mulf %631, %635 : vector<10x1xf32>
    %637 = vector.broadcast %636 : vector<10x1xf32> to vector<10x8xf32>
    %638 = arith.mulf %637, %620 : vector<10x8xf32>
    %cst_38 = arith.constant dense<0.000000e+00> : vector<8xf32>
    %639 = vector.multi_reduction <add>, %638, %cst_38 [0] : vector<10x8xf32> to vector<8xf32>
    %640 = vector.shape_cast %639 : vector<8xf32> to vector<1x8xf32>
    %641 = vector.extract_strided_slice %615 {offsets = [0, 8], sizes = [1, 8], strides = [1, 1]} : vector<2x32xf32> to vector<1x8xf32>
    %642 = vector.extract_strided_slice %616 {offsets = [0, 8], sizes = [10, 8], strides = [1, 1]} : vector<10x32xf32> to vector<10x8xf32>
    %643 = vector.extract_strided_slice %617 {offsets = [0, 8], sizes = [10, 8], strides = [1, 1]} : vector<10x32xf32> to vector<10x8xf32>
    %644 = vector.broadcast %641 : vector<1x8xf32> to vector<10x8xf32>
    %645 = arith.mulf %644, %642 : vector<10x8xf32>
    %cst_39 = arith.constant dense<0.000000e+00> : vector<10xf32>
    %646 = vector.multi_reduction <add>, %645, %cst_39 [1] : vector<10x8xf32> to vector<10xf32>
    %647 = vector.shape_cast %646 : vector<10xf32> to vector<10x1xf32>
    %cst_40 = arith.constant 0.353553385 : f32
    %648 = vector.broadcast %cst_40 : f32 to vector<10x1xf32>
    %649 = arith.mulf %647, %648 : vector<10x1xf32>
    %cst_41 = arith.constant dense<0xFF800000> : vector<1xf32>
    %650 = vector.multi_reduction <maximumf>, %649, %cst_41 [0] : vector<10x1xf32> to vector<1xf32>
    %651 = vector.shape_cast %650 : vector<1xf32> to vector<1x1xf32>
    %652 = vector.broadcast %651 : vector<1x1xf32> to vector<10x1xf32>
    %653 = arith.subf %649, %652 : vector<10x1xf32>
    %654 = math.exp %653 : vector<10x1xf32>
    %cst_42 = arith.constant dense<0.000000e+00> : vector<1xf32>
    %655 = vector.multi_reduction <add>, %654, %cst_42 [0] : vector<10x1xf32> to vector<1xf32>
    %656 = vector.shape_cast %655 : vector<1xf32> to vector<1x1xf32>
    %657 = tpu.reciprocal %656 {approx = true} : vector<1x1xf32> -> vector<1x1xf32>
    %658 = vector.broadcast %657 : vector<1x1xf32> to vector<10x1xf32>
    %659 = arith.mulf %654, %658 : vector<10x1xf32>
    %660 = vector.broadcast %659 : vector<10x1xf32> to vector<10x8xf32>
    %661 = arith.mulf %660, %643 : vector<10x8xf32>
    %cst_43 = arith.constant dense<0.000000e+00> : vector<8xf32>
    %662 = vector.multi_reduction <add>, %661, %cst_43 [0] : vector<10x8xf32> to vector<8xf32>
    %663 = vector.shape_cast %662 : vector<8xf32> to vector<1x8xf32>
    %664 = vector.extract_strided_slice %615 {offsets = [0, 16], sizes = [1, 8], strides = [1, 1]} : vector<2x32xf32> to vector<1x8xf32>
    %665 = vector.extract_strided_slice %616 {offsets = [0, 16], sizes = [10, 8], strides = [1, 1]} : vector<10x32xf32> to vector<10x8xf32>
    %666 = vector.extract_strided_slice %617 {offsets = [0, 16], sizes = [10, 8], strides = [1, 1]} : vector<10x32xf32> to vector<10x8xf32>
    %667 = vector.broadcast %664 : vector<1x8xf32> to vector<10x8xf32>
    %668 = arith.mulf %667, %665 : vector<10x8xf32>
    %cst_44 = arith.constant dense<0.000000e+00> : vector<10xf32>
    %669 = vector.multi_reduction <add>, %668, %cst_44 [1] : vector<10x8xf32> to vector<10xf32>
    %670 = vector.shape_cast %669 : vector<10xf32> to vector<10x1xf32>
    %cst_45 = arith.constant 0.353553385 : f32
    %671 = vector.broadcast %cst_45 : f32 to vector<10x1xf32>
    %672 = arith.mulf %670, %671 : vector<10x1xf32>
    %cst_46 = arith.constant dense<0xFF800000> : vector<1xf32>
    %673 = vector.multi_reduction <maximumf>, %672, %cst_46 [0] : vector<10x1xf32> to vector<1xf32>
    %674 = vector.shape_cast %673 : vector<1xf32> to vector<1x1xf32>
    %675 = vector.broadcast %674 : vector<1x1xf32> to vector<10x1xf32>
    %676 = arith.subf %672, %675 : vector<10x1xf32>
    %677 = math.exp %676 : vector<10x1xf32>
    %cst_47 = arith.constant dense<0.000000e+00> : vector<1xf32>
    %678 = vector.multi_reduction <add>, %677, %cst_47 [0] : vector<10x1xf32> to vector<1xf32>
    %679 = vector.shape_cast %678 : vector<1xf32> to vector<1x1xf32>
    %680 = tpu.reciprocal %679 {approx = true} : vector<1x1xf32> -> vector<1x1xf32>
    %681 = vector.broadcast %680 : vector<1x1xf32> to vector<10x1xf32>
    %682 = arith.mulf %677, %681 : vector<10x1xf32>
    %683 = vector.broadcast %682 : vector<10x1xf32> to vector<10x8xf32>
    %684 = arith.mulf %683, %666 : vector<10x8xf32>
    %cst_48 = arith.constant dense<0.000000e+00> : vector<8xf32>
    %685 = vector.multi_reduction <add>, %684, %cst_48 [0] : vector<10x8xf32> to vector<8xf32>
    %686 = vector.shape_cast %685 : vector<8xf32> to vector<1x8xf32>
    %687 = vector.extract_strided_slice %615 {offsets = [0, 24], sizes = [1, 8], strides = [1, 1]} : vector<2x32xf32> to vector<1x8xf32>
    %688 = vector.extract_strided_slice %616 {offsets = [0, 24], sizes = [10, 8], strides = [1, 1]} : vector<10x32xf32> to vector<10x8xf32>
    %689 = vector.extract_strided_slice %617 {offsets = [0, 24], sizes = [10, 8], strides = [1, 1]} : vector<10x32xf32> to vector<10x8xf32>
    %690 = vector.broadcast %687 : vector<1x8xf32> to vector<10x8xf32>
    %691 = arith.mulf %690, %688 : vector<10x8xf32>
    %cst_49 = arith.constant dense<0.000000e+00> : vector<10xf32>
    %692 = vector.multi_reduction <add>, %691, %cst_49 [1] : vector<10x8xf32> to vector<10xf32>
    %693 = vector.shape_cast %692 : vector<10xf32> to vector<10x1xf32>
    %cst_50 = arith.constant 0.353553385 : f32
    %694 = vector.broadcast %cst_50 : f32 to vector<10x1xf32>
    %695 = arith.mulf %693, %694 : vector<10x1xf32>
    %cst_51 = arith.constant dense<0xFF800000> : vector<1xf32>
    %696 = vector.multi_reduction <maximumf>, %695, %cst_51 [0] : vector<10x1xf32> to vector<1xf32>
    %697 = vector.shape_cast %696 : vector<1xf32> to vector<1x1xf32>
    %698 = vector.broadcast %697 : vector<1x1xf32> to vector<10x1xf32>
    %699 = arith.subf %695, %698 : vector<10x1xf32>
    %700 = math.exp %699 : vector<10x1xf32>
    %cst_52 = arith.constant dense<0.000000e+00> : vector<1xf32>
    %701 = vector.multi_reduction <add>, %700, %cst_52 [0] : vector<10x1xf32> to vector<1xf32>
    %702 = vector.shape_cast %701 : vector<1xf32> to vector<1x1xf32>
    %703 = tpu.reciprocal %702 {approx = true} : vector<1x1xf32> -> vector<1x1xf32>
    %704 = vector.broadcast %703 : vector<1x1xf32> to vector<10x1xf32>
    %705 = arith.mulf %700, %704 : vector<10x1xf32>
    %706 = vector.broadcast %705 : vector<10x1xf32> to vector<10x8xf32>
    %707 = arith.mulf %706, %689 : vector<10x8xf32>
    %cst_53 = arith.constant dense<0.000000e+00> : vector<8xf32>
    %708 = vector.multi_reduction <add>, %707, %cst_53 [0] : vector<10x8xf32> to vector<8xf32>
    %709 = vector.shape_cast %708 : vector<8xf32> to vector<1x8xf32>
    %710 = tpu.concatenate %640, %663, %686, %709 in 1 : vector<1x8xf32>, vector<1x8xf32>, vector<1x8xf32>, vector<1x8xf32> -> vector<1x32xf32>
    %711 = vector.extract_strided_slice %585 {offsets = [10, 0], sizes = [10, 32], strides = [1, 1]} : vector<20x32xf32> to vector<10x32xf32>
    %712 = vector.extract_strided_slice %586 {offsets = [10, 0], sizes = [10, 32], strides = [1, 1]} : vector<20x32xf32> to vector<10x32xf32>
    %713 = vector.extract_strided_slice %615 {offsets = [1, 0], sizes = [1, 8], strides = [1, 1]} : vector<2x32xf32> to vector<1x8xf32>
    %714 = vector.extract_strided_slice %711 {offsets = [0, 0], sizes = [10, 8], strides = [1, 1]} : vector<10x32xf32> to vector<10x8xf32>
    %715 = vector.extract_strided_slice %712 {offsets = [0, 0], sizes = [10, 8], strides = [1, 1]} : vector<10x32xf32> to vector<10x8xf32>
    %716 = vector.broadcast %713 : vector<1x8xf32> to vector<10x8xf32>
    %717 = arith.mulf %716, %714 : vector<10x8xf32>
    %cst_54 = arith.constant dense<0.000000e+00> : vector<10xf32>
    %718 = vector.multi_reduction <add>, %717, %cst_54 [1] : vector<10x8xf32> to vector<10xf32>
    %719 = vector.shape_cast %718 : vector<10xf32> to vector<10x1xf32>
    %cst_55 = arith.constant 0.353553385 : f32
    %720 = vector.broadcast %cst_55 : f32 to vector<10x1xf32>
    %721 = arith.mulf %719, %720 : vector<10x1xf32>
    %cst_56 = arith.constant dense<0xFF800000> : vector<1xf32>
    %722 = vector.multi_reduction <maximumf>, %721, %cst_56 [0] : vector<10x1xf32> to vector<1xf32>
    %723 = vector.shape_cast %722 : vector<1xf32> to vector<1x1xf32>
    %724 = vector.broadcast %723 : vector<1x1xf32> to vector<10x1xf32>
    %725 = arith.subf %721, %724 : vector<10x1xf32>
    %726 = math.exp %725 : vector<10x1xf32>
    %cst_57 = arith.constant dense<0.000000e+00> : vector<1xf32>
    %727 = vector.multi_reduction <add>, %726, %cst_57 [0] : vector<10x1xf32> to vector<1xf32>
    %728 = vector.shape_cast %727 : vector<1xf32> to vector<1x1xf32>
    %729 = tpu.reciprocal %728 {approx = true} : vector<1x1xf32> -> vector<1x1xf32>
    %730 = vector.broadcast %729 : vector<1x1xf32> to vector<10x1xf32>
    %731 = arith.mulf %726, %730 : vector<10x1xf32>
    %732 = vector.broadcast %731 : vector<10x1xf32> to vector<10x8xf32>
    %733 = arith.mulf %732, %715 : vector<10x8xf32>
    %cst_58 = arith.constant dense<0.000000e+00> : vector<8xf32>
    %734 = vector.multi_reduction <add>, %733, %cst_58 [0] : vector<10x8xf32> to vector<8xf32>
    %735 = vector.shape_cast %734 : vector<8xf32> to vector<1x8xf32>
    %736 = vector.extract_strided_slice %615 {offsets = [1, 8], sizes = [1, 8], strides = [1, 1]} : vector<2x32xf32> to vector<1x8xf32>
    %737 = vector.extract_strided_slice %711 {offsets = [0, 8], sizes = [10, 8], strides = [1, 1]} : vector<10x32xf32> to vector<10x8xf32>
    %738 = vector.extract_strided_slice %712 {offsets = [0, 8], sizes = [10, 8], strides = [1, 1]} : vector<10x32xf32> to vector<10x8xf32>
    %739 = vector.broadcast %736 : vector<1x8xf32> to vector<10x8xf32>
    %740 = arith.mulf %739, %737 : vector<10x8xf32>
    %cst_59 = arith.constant dense<0.000000e+00> : vector<10xf32>
    %741 = vector.multi_reduction <add>, %740, %cst_59 [1] : vector<10x8xf32> to vector<10xf32>
    %742 = vector.shape_cast %741 : vector<10xf32> to vector<10x1xf32>
    %cst_60 = arith.constant 0.353553385 : f32
    %743 = vector.broadcast %cst_60 : f32 to vector<10x1xf32>
    %744 = arith.mulf %742, %743 : vector<10x1xf32>
    %cst_61 = arith.constant dense<0xFF800000> : vector<1xf32>
    %745 = vector.multi_reduction <maximumf>, %744, %cst_61 [0] : vector<10x1xf32> to vector<1xf32>
    %746 = vector.shape_cast %745 : vector<1xf32> to vector<1x1xf32>
    %747 = vector.broadcast %746 : vector<1x1xf32> to vector<10x1xf32>
    %748 = arith.subf %744, %747 : vector<10x1xf32>
    %749 = math.exp %748 : vector<10x1xf32>
    %cst_62 = arith.constant dense<0.000000e+00> : vector<1xf32>
    %750 = vector.multi_reduction <add>, %749, %cst_62 [0] : vector<10x1xf32> to vector<1xf32>
    %751 = vector.shape_cast %750 : vector<1xf32> to vector<1x1xf32>
    %752 = tpu.reciprocal %751 {approx = true} : vector<1x1xf32> -> vector<1x1xf32>
    %753 = vector.broadcast %752 : vector<1x1xf32> to vector<10x1xf32>
    %754 = arith.mulf %749, %753 : vector<10x1xf32>
    %755 = vector.broadcast %754 : vector<10x1xf32> to vector<10x8xf32>
    %756 = arith.mulf %755, %738 : vector<10x8xf32>
    %cst_63 = arith.constant dense<0.000000e+00> : vector<8xf32>
    %757 = vector.multi_reduction <add>, %756, %cst_63 [0] : vector<10x8xf32> to vector<8xf32>
    %758 = vector.shape_cast %757 : vector<8xf32> to vector<1x8xf32>
    %759 = vector.extract_strided_slice %615 {offsets = [1, 16], sizes = [1, 8], strides = [1, 1]} : vector<2x32xf32> to vector<1x8xf32>
    %760 = vector.extract_strided_slice %711 {offsets = [0, 16], sizes = [10, 8], strides = [1, 1]} : vector<10x32xf32> to vector<10x8xf32>
    %761 = vector.extract_strided_slice %712 {offsets = [0, 16], sizes = [10, 8], strides = [1, 1]} : vector<10x32xf32> to vector<10x8xf32>
    %762 = vector.broadcast %759 : vector<1x8xf32> to vector<10x8xf32>
    %763 = arith.mulf %762, %760 : vector<10x8xf32>
    %cst_64 = arith.constant dense<0.000000e+00> : vector<10xf32>
    %764 = vector.multi_reduction <add>, %763, %cst_64 [1] : vector<10x8xf32> to vector<10xf32>
    %765 = vector.shape_cast %764 : vector<10xf32> to vector<10x1xf32>
    %cst_65 = arith.constant 0.353553385 : f32
    %766 = vector.broadcast %cst_65 : f32 to vector<10x1xf32>
    %767 = arith.mulf %765, %766 : vector<10x1xf32>
    %cst_66 = arith.constant dense<0xFF800000> : vector<1xf32>
    %768 = vector.multi_reduction <maximumf>, %767, %cst_66 [0] : vector<10x1xf32> to vector<1xf32>
    %769 = vector.shape_cast %768 : vector<1xf32> to vector<1x1xf32>
    %770 = vector.broadcast %769 : vector<1x1xf32> to vector<10x1xf32>
    %771 = arith.subf %767, %770 : vector<10x1xf32>
    %772 = math.exp %771 : vector<10x1xf32>
    %cst_67 = arith.constant dense<0.000000e+00> : vector<1xf32>
    %773 = vector.multi_reduction <add>, %772, %cst_67 [0] : vector<10x1xf32> to vector<1xf32>
    %774 = vector.shape_cast %773 : vector<1xf32> to vector<1x1xf32>
    %775 = tpu.reciprocal %774 {approx = true} : vector<1x1xf32> -> vector<1x1xf32>
    %776 = vector.broadcast %775 : vector<1x1xf32> to vector<10x1xf32>
    %777 = arith.mulf %772, %776 : vector<10x1xf32>
    %778 = vector.broadcast %777 : vector<10x1xf32> to vector<10x8xf32>
    %779 = arith.mulf %778, %761 : vector<10x8xf32>
    %cst_68 = arith.constant dense<0.000000e+00> : vector<8xf32>
    %780 = vector.multi_reduction <add>, %779, %cst_68 [0] : vector<10x8xf32> to vector<8xf32>
    %781 = vector.shape_cast %780 : vector<8xf32> to vector<1x8xf32>
    %782 = vector.extract_strided_slice %615 {offsets = [1, 24], sizes = [1, 8], strides = [1, 1]} : vector<2x32xf32> to vector<1x8xf32>
    %783 = vector.extract_strided_slice %711 {offsets = [0, 24], sizes = [10, 8], strides = [1, 1]} : vector<10x32xf32> to vector<10x8xf32>
    %784 = vector.extract_strided_slice %712 {offsets = [0, 24], sizes = [10, 8], strides = [1, 1]} : vector<10x32xf32> to vector<10x8xf32>
    %785 = vector.broadcast %782 : vector<1x8xf32> to vector<10x8xf32>
    %786 = arith.mulf %785, %783 : vector<10x8xf32>
    %cst_69 = arith.constant dense<0.000000e+00> : vector<10xf32>
    %787 = vector.multi_reduction <add>, %786, %cst_69 [1] : vector<10x8xf32> to vector<10xf32>
    %788 = vector.shape_cast %787 : vector<10xf32> to vector<10x1xf32>
    %cst_70 = arith.constant 0.353553385 : f32
    %789 = vector.broadcast %cst_70 : f32 to vector<10x1xf32>
    %790 = arith.mulf %788, %789 : vector<10x1xf32>
    %cst_71 = arith.constant dense<0xFF800000> : vector<1xf32>
    %791 = vector.multi_reduction <maximumf>, %790, %cst_71 [0] : vector<10x1xf32> to vector<1xf32>
    %792 = vector.shape_cast %791 : vector<1xf32> to vector<1x1xf32>
    %793 = vector.broadcast %792 : vector<1x1xf32> to vector<10x1xf32>
    %794 = arith.subf %790, %793 : vector<10x1xf32>
    %795 = math.exp %794 : vector<10x1xf32>
    %cst_72 = arith.constant dense<0.000000e+00> : vector<1xf32>
    %796 = vector.multi_reduction <add>, %795, %cst_72 [0] : vector<10x1xf32> to vector<1xf32>
    %797 = vector.shape_cast %796 : vector<1xf32> to vector<1x1xf32>
    %798 = tpu.reciprocal %797 {approx = true} : vector<1x1xf32> -> vector<1x1xf32>
    %799 = vector.broadcast %798 : vector<1x1xf32> to vector<10x1xf32>
    %800 = arith.mulf %795, %799 : vector<10x1xf32>
    %801 = vector.broadcast %800 : vector<10x1xf32> to vector<10x8xf32>
    %802 = arith.mulf %801, %784 : vector<10x8xf32>
    %cst_73 = arith.constant dense<0.000000e+00> : vector<8xf32>
    %803 = vector.multi_reduction <add>, %802, %cst_73 [0] : vector<10x8xf32> to vector<8xf32>
    %804 = vector.shape_cast %803 : vector<8xf32> to vector<1x8xf32>
    %805 = tpu.concatenate %735, %758, %781, %804 in 1 : vector<1x8xf32>, vector<1x8xf32>, vector<1x8xf32>, vector<1x8xf32> -> vector<1x32xf32>
    %806 = tpu.concatenate %710, %805 in 0 : vector<1x32xf32>, vector<1x32xf32> -> vector<2x32xf32>
    %807 = arith.truncf %806 : vector<2x32xf32> to vector<2x32xbf16>
    %c0_74 = arith.constant 0 : index
    %c0_75 = arith.constant 0 : index
    %808 = vector.load %arg12[%c0_74, %c0_75] : memref<32x32xbf16, #tpu.memory_space<vmem>>, vector<32x32xbf16>
    %cst_76 = arith.constant dense<0.000000e+00> : vector<2x32xf32>
    %809 = tpu.matmul %807, %808, %cst_76 {dimension_numbers = #tpu.dot_dimension_numbers<[1], [0], [0], [1], [0, 0, 1, 1], [], []>} : vector<2x32xbf16>, vector<32x32xbf16>, vector<2x32xf32> -> vector<2x32xf32>
    %c0_77 = arith.constant 0 : index
    %c0_78 = arith.constant 0 : index
    %810 = vector.load %arg13[%c0_77, %c0_78] : memref<1x32xf32, #tpu.memory_space<vmem>>, vector<1x32xf32>
    %811 = vector.broadcast %810 : vector<1x32xf32> to vector<2x32xf32>
    %812 = arith.addf %809, %811 : vector<2x32xf32>
    %813 = arith.addf %587, %812 : vector<2x32xf32>
    %c0_79 = arith.constant 0 : index
    %c0_80 = arith.constant 0 : index
    %814 = vector.load %arg14[%c0_79, %c0_80] : memref<1x32xf32, #tpu.memory_space<vmem>>, vector<1x32xf32>
    %c0_81 = arith.constant 0 : index
    %c0_82 = arith.constant 0 : index
    %815 = vector.load %arg15[%c0_81, %c0_82] : memref<1x32xf32, #tpu.memory_space<vmem>>, vector<1x32xf32>
    %cst_83 = arith.constant dense<0.000000e+00> : vector<2xf32>
    %816 = vector.multi_reduction <add>, %813, %cst_83 [1] : vector<2x32xf32> to vector<2xf32>
    %817 = vector.shape_cast %816 : vector<2xf32> to vector<2x1xf32>
    %cst_84 = arith.constant 3.200000e+01 : f32
    %818 = vector.broadcast %cst_84 : f32 to vector<2x1xf32>
    %819 = arith.divf %817, %818 : vector<2x1xf32>
    %820 = vector.broadcast %819 : vector<2x1xf32> to vector<2x32xf32>
    %821 = arith.subf %813, %820 : vector<2x32xf32>
    %822 = arith.mulf %821, %821 : vector<2x32xf32>
    %cst_85 = arith.constant dense<0.000000e+00> : vector<2xf32>
    %823 = vector.multi_reduction <add>, %822, %cst_85 [1] : vector<2x32xf32> to vector<2xf32>
    %824 = vector.shape_cast %823 : vector<2xf32> to vector<2x1xf32>
    %cst_86 = arith.constant 3.200000e+01 : f32
    %825 = vector.broadcast %cst_86 : f32 to vector<2x1xf32>
    %826 = arith.divf %824, %825 : vector<2x1xf32>
    %cst_87 = arith.constant 9.99999974E-6 : f32
    %827 = vector.broadcast %cst_87 : f32 to vector<2x1xf32>
    %828 = arith.addf %826, %827 : vector<2x1xf32>
    %829 = math.rsqrt %828 : vector<2x1xf32>
    %830 = vector.broadcast %829 : vector<2x1xf32> to vector<2x32xf32>
    %831 = arith.mulf %821, %830 : vector<2x32xf32>
    %832 = vector.broadcast %814 : vector<1x32xf32> to vector<2x32xf32>
    %833 = arith.mulf %831, %832 : vector<2x32xf32>
    %834 = vector.broadcast %815 : vector<1x32xf32> to vector<2x32xf32>
    %835 = arith.addf %833, %834 : vector<2x32xf32>
    %836 = arith.truncf %835 : vector<2x32xf32> to vector<2x32xbf16>
    %c0_88 = arith.constant 0 : index
    %c0_89 = arith.constant 0 : index
    %837 = vector.load %arg16[%c0_88, %c0_89] : memref<32x128xbf16, #tpu.memory_space<vmem>>, vector<32x128xbf16>
    %cst_90 = arith.constant dense<0.000000e+00> : vector<2x128xf32>
    %838 = tpu.matmul %836, %837, %cst_90 {dimension_numbers = #tpu.dot_dimension_numbers<[1], [0], [0], [1], [0, 0, 1, 1], [], []>} : vector<2x32xbf16>, vector<32x128xbf16>, vector<2x128xf32> -> vector<2x128xf32>
    %c0_91 = arith.constant 0 : index
    %c0_92 = arith.constant 0 : index
    %839 = vector.load %arg17[%c0_91, %c0_92] : memref<1x128xf32, #tpu.memory_space<vmem>>, vector<1x128xf32>
    %840 = vector.broadcast %839 : vector<1x128xf32> to vector<2x128xf32>
    %841 = arith.addf %838, %840 : vector<2x128xf32>
    %cst_93 = arith.constant -1.702000e+00 : f32
    %842 = vector.broadcast %cst_93 : f32 to vector<2x128xf32>
    %843 = arith.mulf %842, %841 : vector<2x128xf32>
    %844 = math.exp %843 : vector<2x128xf32>
    %cst_94 = arith.constant 1.000000e+00 : f32
    %845 = vector.broadcast %cst_94 : f32 to vector<2x128xf32>
    %846 = arith.addf %845, %844 : vector<2x128xf32>
    %cst_95 = arith.constant 1.000000e+00 : f32
    %847 = vector.broadcast %cst_95 : f32 to vector<2x128xf32>
    %848 = arith.divf %847, %846 : vector<2x128xf32>
    %849 = arith.mulf %841, %848 : vector<2x128xf32>
    %850 = arith.truncf %849 : vector<2x128xf32> to vector<2x128xbf16>
    %c0_96 = arith.constant 0 : index
    %c0_97 = arith.constant 0 : index
    %851 = vector.load %arg18[%c0_96, %c0_97] : memref<128x32xbf16, #tpu.memory_space<vmem>>, vector<128x32xbf16>
    %cst_98 = arith.constant dense<0.000000e+00> : vector<2x32xf32>
    %852 = tpu.matmul %850, %851, %cst_98 {dimension_numbers = #tpu.dot_dimension_numbers<[1], [0], [0], [1], [0, 0, 1, 1], [], []>} : vector<2x128xbf16>, vector<128x32xbf16>, vector<2x32xf32> -> vector<2x32xf32>
    %c0_99 = arith.constant 0 : index
    %c0_100 = arith.constant 0 : index
    %853 = vector.load %arg19[%c0_99, %c0_100] : memref<1x32xf32, #tpu.memory_space<vmem>>, vector<1x32xf32>
    %854 = vector.broadcast %853 : vector<1x32xf32> to vector<2x32xf32>
    %855 = arith.addf %852, %854 : vector<2x32xf32>
    %856 = arith.addf %813, %855 : vector<2x32xf32>
    %c0_101 = arith.constant 0 : index
    %c0_102 = arith.constant 0 : index
    %857 = vector.load %arg20[%c0_101, %c0_102] : memref<2x32xf32, #tpu.memory_space<vmem>>, vector<2x32xf32>
    tpu.vector_store %arg20[%c0_101, %c0_102], %856 {strides = array<i32>} : memref<2x32xf32, #tpu.memory_space<vmem>>, vector<2x32xf32>,
    return
  }
}

module attributes {stable_mosaic.version = 11 : i64} {
  func.func @_dec_block_kernel(%arg0: memref<20x32xbf16, #tpu.memory_space<vmem>>, %arg1: memref<2x32xf32, #tpu.memory_space<vmem>>, %arg2: memref<27x32xf32, #tpu.memory_space<vmem>>, %arg3: memref<1x32xf32, #tpu.memory_space<vmem>>, %arg4: memref<1x32xf32, #tpu.memory_space<vmem>>, %arg5: memref<1x32xf32, #tpu.memory_space<vmem>>, %arg6: memref<1x32xf32, #tpu.memory_space<vmem>>, %arg7: memref<1x32xf32, #tpu.memory_space<vmem>>, %arg8: memref<32x32xbf16, #tpu.memory_space<vmem>>, %arg9: memref<1x32xf32, #tpu.memory_space<vmem>>, %arg10: memref<32x64xbf16, #tpu.memory_space<vmem>>, %arg11: memref<1x64xf32, #tpu.memory_space<vmem>>, %arg12: memref<32x32xbf16, #tpu.memory_space<vmem>>, %arg13: memref<1x32xf32, #tpu.memory_space<vmem>>, %arg14: memref<1x32xf32, #tpu.memory_space<vmem>>, %arg15: memref<1x32xf32, #tpu.memory_space<vmem>>, %arg16: memref<32x128xbf16, #tpu.memory_space<vmem>>, %arg17: memref<1x128xf32, #tpu.memory_space<vmem>>, %arg18: memref<128x32xbf16, #tpu.memory_space<vmem>>, %arg19: memref<1x32xf32, #tpu.memory_space<vmem>>, %arg20: memref<2x32xf32, #tpu.memory_space<vmem>>) attributes {dimension_semantics = [], scalar_prefetch = 0 : i64, scratch_operands = 0 : i64, tpu.core_type = #tpu.core_type<tc>} {
    %c0 = arith.constant 0 : index
    %c0_0 = arith.constant 0 : index
    %0 = vector.load %arg0[%c0, %c0_0] : memref<20x32xbf16, #tpu.memory_space<vmem>>, vector<20x32xbf16>
    %1 = arith.extf %0 : vector<20x32xbf16> to vector<20x32xf32>
    %c0_1 = arith.constant 0 : index
    %c0_2 = arith.constant 0 : index
    %2 = vector.load %arg2[%c0_1, %c0_2] : memref<27x32xf32, #tpu.memory_space<vmem>>, vector<27x32xf32>
    %c0_3 = arith.constant 0 : index
    %c0_4 = arith.constant 0 : index
    %3 = vector.load %arg3[%c0_3, %c0_4] : memref<1x32xf32, #tpu.memory_space<vmem>>, vector<1x32xf32>
    %4 = vector.extract_strided_slice %1 {offsets = [0, 0], sizes = [1, 32], strides = [1, 1]} : vector<20x32xf32> to vector<1x32xf32>
    %5 = vector.extract_strided_slice %2 {offsets = [13, 0], sizes = [1, 32], strides = [1, 1]} : vector<27x32xf32> to vector<1x32xf32>
    %6 = vector.extract_strided_slice %1 {offsets = [1, 0], sizes = [1, 32], strides = [1, 1]} : vector<20x32xf32> to vector<1x32xf32>
    %7 = arith.mulf %5, %6 : vector<1x32xf32>
    %8 = arith.addf %3, %7 : vector<1x32xf32>
    %9 = vector.extract_strided_slice %2 {offsets = [14, 0], sizes = [1, 32], strides = [1, 1]} : vector<27x32xf32> to vector<1x32xf32>
    %10 = vector.extract_strided_slice %1 {offsets = [2, 0], sizes = [1, 32], strides = [1, 1]} : vector<20x32xf32> to vector<1x32xf32>
    %11 = arith.mulf %9, %10 : vector<1x32xf32>
    %12 = arith.addf %8, %11 : vector<1x32xf32>
    %13 = vector.extract_strided_slice %2 {offsets = [16, 0], sizes = [1, 32], strides = [1, 1]} : vector<27x32xf32> to vector<1x32xf32>
    %14 = vector.extract_strided_slice %1 {offsets = [3, 0], sizes = [1, 32], strides = [1, 1]} : vector<20x32xf32> to vector<1x32xf32>
    %15 = arith.mulf %13, %14 : vector<1x32xf32>
    %16 = arith.addf %12, %15 : vector<1x32xf32>
    %17 = vector.extract_strided_slice %2 {offsets = [17, 0], sizes = [1, 32], strides = [1, 1]} : vector<27x32xf32> to vector<1x32xf32>
    %18 = vector.extract_strided_slice %1 {offsets = [4, 0], sizes = [1, 32], strides = [1, 1]} : vector<20x32xf32> to vector<1x32xf32>
    %19 = arith.mulf %17, %18 : vector<1x32xf32>
    %20 = arith.addf %16, %19 : vector<1x32xf32>
    %21 = vector.extract_strided_slice %2 {offsets = [22, 0], sizes = [1, 32], strides = [1, 1]} : vector<27x32xf32> to vector<1x32xf32>
    %22 = vector.extract_strided_slice %1 {offsets = [6, 0], sizes = [1, 32], strides = [1, 1]} : vector<20x32xf32> to vector<1x32xf32>
    %23 = arith.mulf %21, %22 : vector<1x32xf32>
    %24 = arith.addf %20, %23 : vector<1x32xf32>
    %25 = vector.extract_strided_slice %2 {offsets = [23, 0], sizes = [1, 32], strides = [1, 1]} : vector<27x32xf32> to vector<1x32xf32>
    %26 = vector.extract_strided_slice %1 {offsets = [7, 0], sizes = [1, 32], strides = [1, 1]} : vector<20x32xf32> to vector<1x32xf32>
    %27 = arith.mulf %25, %26 : vector<1x32xf32>
    %28 = arith.addf %24, %27 : vector<1x32xf32>
    %29 = vector.extract_strided_slice %2 {offsets = [25, 0], sizes = [1, 32], strides = [1, 1]} : vector<27x32xf32> to vector<1x32xf32>
    %30 = vector.extract_strided_slice %1 {offsets = [8, 0], sizes = [1, 32], strides = [1, 1]} : vector<20x32xf32> to vector<1x32xf32>
    %31 = arith.mulf %29, %30 : vector<1x32xf32>
    %32 = arith.addf %28, %31 : vector<1x32xf32>
    %33 = vector.extract_strided_slice %2 {offsets = [26, 0], sizes = [1, 32], strides = [1, 1]} : vector<27x32xf32> to vector<1x32xf32>
    %34 = vector.extract_strided_slice %1 {offsets = [9, 0], sizes = [1, 32], strides = [1, 1]} : vector<20x32xf32> to vector<1x32xf32>
    %35 = arith.mulf %33, %34 : vector<1x32xf32>
    %36 = arith.addf %32, %35 : vector<1x32xf32>
    %37 = vector.extract_strided_slice %1 {offsets = [1, 0], sizes = [1, 32], strides = [1, 1]} : vector<20x32xf32> to vector<1x32xf32>
    %38 = arith.addf %37, %36 : vector<1x32xf32>
    %39 = vector.extract_strided_slice %2 {offsets = [12, 0], sizes = [1, 32], strides = [1, 1]} : vector<27x32xf32> to vector<1x32xf32>
    %40 = vector.extract_strided_slice %1 {offsets = [1, 0], sizes = [1, 32], strides = [1, 1]} : vector<20x32xf32> to vector<1x32xf32>
    %41 = arith.mulf %39, %40 : vector<1x32xf32>
    %42 = arith.addf %3, %41 : vector<1x32xf32>
    %43 = vector.extract_strided_slice %2 {offsets = [13, 0], sizes = [1, 32], strides = [1, 1]} : vector<27x32xf32> to vector<1x32xf32>
    %44 = vector.extract_strided_slice %1 {offsets = [2, 0], sizes = [1, 32], strides = [1, 1]} : vector<20x32xf32> to vector<1x32xf32>
    %45 = arith.mulf %43, %44 : vector<1x32xf32>
    %46 = arith.addf %42, %45 : vector<1x32xf32>
    %47 = vector.extract_strided_slice %2 {offsets = [15, 0], sizes = [1, 32], strides = [1, 1]} : vector<27x32xf32> to vector<1x32xf32>
    %48 = vector.extract_strided_slice %1 {offsets = [3, 0], sizes = [1, 32], strides = [1, 1]} : vector<20x32xf32> to vector<1x32xf32>
    %49 = arith.mulf %47, %48 : vector<1x32xf32>
    %50 = arith.addf %46, %49 : vector<1x32xf32>
    %51 = vector.extract_strided_slice %2 {offsets = [16, 0], sizes = [1, 32], strides = [1, 1]} : vector<27x32xf32> to vector<1x32xf32>
    %52 = vector.extract_strided_slice %1 {offsets = [4, 0], sizes = [1, 32], strides = [1, 1]} : vector<20x32xf32> to vector<1x32xf32>
    %53 = arith.mulf %51, %52 : vector<1x32xf32>
    %54 = arith.addf %50, %53 : vector<1x32xf32>
    %55 = vector.extract_strided_slice %2 {offsets = [21, 0], sizes = [1, 32], strides = [1, 1]} : vector<27x32xf32> to vector<1x32xf32>
    %56 = vector.extract_strided_slice %1 {offsets = [6, 0], sizes = [1, 32], strides = [1, 1]} : vector<20x32xf32> to vector<1x32xf32>
    %57 = arith.mulf %55, %56 : vector<1x32xf32>
    %58 = arith.addf %54, %57 : vector<1x32xf32>
    %59 = vector.extract_strided_slice %2 {offsets = [22, 0], sizes = [1, 32], strides = [1, 1]} : vector<27x32xf32> to vector<1x32xf32>
    %60 = vector.extract_strided_slice %1 {offsets = [7, 0], sizes = [1, 32], strides = [1, 1]} : vector<20x32xf32> to vector<1x32xf32>
    %61 = arith.mulf %59, %60 : vector<1x32xf32>
    %62 = arith.addf %58, %61 : vector<1x32xf32>
    %63 = vector.extract_strided_slice %2 {offsets = [24, 0], sizes = [1, 32], strides = [1, 1]} : vector<27x32xf32> to vector<1x32xf32>
    %64 = vector.extract_strided_slice %1 {offsets = [8, 0], sizes = [1, 32], strides = [1, 1]} : vector<20x32xf32> to vector<1x32xf32>
    %65 = arith.mulf %63, %64 : vector<1x32xf32>
    %66 = arith.addf %62, %65 : vector<1x32xf32>
    %67 = vector.extract_strided_slice %2 {offsets = [25, 0], sizes = [1, 32], strides = [1, 1]} : vector<27x32xf32> to vector<1x32xf32>
    %68 = vector.extract_strided_slice %1 {offsets = [9, 0], sizes = [1, 32], strides = [1, 1]} : vector<20x32xf32> to vector<1x32xf32>
    %69 = arith.mulf %67, %68 : vector<1x32xf32>
    %70 = arith.addf %66, %69 : vector<1x32xf32>
    %71 = vector.extract_strided_slice %1 {offsets = [2, 0], sizes = [1, 32], strides = [1, 1]} : vector<20x32xf32> to vector<1x32xf32>
    %72 = arith.addf %71, %70 : vector<1x32xf32>
    %73 = vector.extract_strided_slice %2 {offsets = [10, 0], sizes = [1, 32], strides = [1, 1]} : vector<27x32xf32> to vector<1x32xf32>
    %74 = vector.extract_strided_slice %1 {offsets = [1, 0], sizes = [1, 32], strides = [1, 1]} : vector<20x32xf32> to vector<1x32xf32>
    %75 = arith.mulf %73, %74 : vector<1x32xf32>
    %76 = arith.addf %3, %75 : vector<1x32xf32>
    %77 = vector.extract_strided_slice %2 {offsets = [11, 0], sizes = [1, 32], strides = [1, 1]} : vector<27x32xf32> to vector<1x32xf32>
    %78 = vector.extract_strided_slice %1 {offsets = [2, 0], sizes = [1, 32], strides = [1, 1]} : vector<20x32xf32> to vector<1x32xf32>
    %79 = arith.mulf %77, %78 : vector<1x32xf32>
    %80 = arith.addf %76, %79 : vector<1x32xf32>
    %81 = vector.extract_strided_slice %2 {offsets = [13, 0], sizes = [1, 32], strides = [1, 1]} : vector<27x32xf32> to vector<1x32xf32>
    %82 = vector.extract_strided_slice %1 {offsets = [3, 0], sizes = [1, 32], strides = [1, 1]} : vector<20x32xf32> to vector<1x32xf32>
    %83 = arith.mulf %81, %82 : vector<1x32xf32>
    %84 = arith.addf %80, %83 : vector<1x32xf32>
    %85 = vector.extract_strided_slice %2 {offsets = [14, 0], sizes = [1, 32], strides = [1, 1]} : vector<27x32xf32> to vector<1x32xf32>
    %86 = vector.extract_strided_slice %1 {offsets = [4, 0], sizes = [1, 32], strides = [1, 1]} : vector<20x32xf32> to vector<1x32xf32>
    %87 = arith.mulf %85, %86 : vector<1x32xf32>
    %88 = arith.addf %84, %87 : vector<1x32xf32>
    %89 = vector.extract_strided_slice %2 {offsets = [19, 0], sizes = [1, 32], strides = [1, 1]} : vector<27x32xf32> to vector<1x32xf32>
    %90 = vector.extract_strided_slice %1 {offsets = [6, 0], sizes = [1, 32], strides = [1, 1]} : vector<20x32xf32> to vector<1x32xf32>
    %91 = arith.mulf %89, %90 : vector<1x32xf32>
    %92 = arith.addf %88, %91 : vector<1x32xf32>
    %93 = vector.extract_strided_slice %2 {offsets = [20, 0], sizes = [1, 32], strides = [1, 1]} : vector<27x32xf32> to vector<1x32xf32>
    %94 = vector.extract_strided_slice %1 {offsets = [7, 0], sizes = [1, 32], strides = [1, 1]} : vector<20x32xf32> to vector<1x32xf32>
    %95 = arith.mulf %93, %94 : vector<1x32xf32>
    %96 = arith.addf %92, %95 : vector<1x32xf32>
    %97 = vector.extract_strided_slice %2 {offsets = [22, 0], sizes = [1, 32], strides = [1, 1]} : vector<27x32xf32> to vector<1x32xf32>
    %98 = vector.extract_strided_slice %1 {offsets = [8, 0], sizes = [1, 32], strides = [1, 1]} : vector<20x32xf32> to vector<1x32xf32>
    %99 = arith.mulf %97, %98 : vector<1x32xf32>
    %100 = arith.addf %96, %99 : vector<1x32xf32>
    %101 = vector.extract_strided_slice %2 {offsets = [23, 0], sizes = [1, 32], strides = [1, 1]} : vector<27x32xf32> to vector<1x32xf32>
    %102 = vector.extract_strided_slice %1 {offsets = [9, 0], sizes = [1, 32], strides = [1, 1]} : vector<20x32xf32> to vector<1x32xf32>
    %103 = arith.mulf %101, %102 : vector<1x32xf32>
    %104 = arith.addf %100, %103 : vector<1x32xf32>
    %105 = vector.extract_strided_slice %1 {offsets = [3, 0], sizes = [1, 32], strides = [1, 1]} : vector<20x32xf32> to vector<1x32xf32>
    %106 = arith.addf %105, %104 : vector<1x32xf32>
    %107 = vector.extract_strided_slice %2 {offsets = [9, 0], sizes = [1, 32], strides = [1, 1]} : vector<27x32xf32> to vector<1x32xf32>
    %108 = vector.extract_strided_slice %1 {offsets = [1, 0], sizes = [1, 32], strides = [1, 1]} : vector<20x32xf32> to vector<1x32xf32>
    %109 = arith.mulf %107, %108 : vector<1x32xf32>
    %110 = arith.addf %3, %109 : vector<1x32xf32>
    %111 = vector.extract_strided_slice %2 {offsets = [10, 0], sizes = [1, 32], strides = [1, 1]} : vector<27x32xf32> to vector<1x32xf32>
    %112 = vector.extract_strided_slice %1 {offsets = [2, 0], sizes = [1, 32], strides = [1, 1]} : vector<20x32xf32> to vector<1x32xf32>
    %113 = arith.mulf %111, %112 : vector<1x32xf32>
    %114 = arith.addf %110, %113 : vector<1x32xf32>
    %115 = vector.extract_strided_slice %2 {offsets = [12, 0], sizes = [1, 32], strides = [1, 1]} : vector<27x32xf32> to vector<1x32xf32>
    %116 = vector.extract_strided_slice %1 {offsets = [3, 0], sizes = [1, 32], strides = [1, 1]} : vector<20x32xf32> to vector<1x32xf32>
    %117 = arith.mulf %115, %116 : vector<1x32xf32>
    %118 = arith.addf %114, %117 : vector<1x32xf32>
    %119 = vector.extract_strided_slice %2 {offsets = [13, 0], sizes = [1, 32], strides = [1, 1]} : vector<27x32xf32> to vector<1x32xf32>
    %120 = vector.extract_strided_slice %1 {offsets = [4, 0], sizes = [1, 32], strides = [1, 1]} : vector<20x32xf32> to vector<1x32xf32>
    %121 = arith.mulf %119, %120 : vector<1x32xf32>
    %122 = arith.addf %118, %121 : vector<1x32xf32>
    %123 = vector.extract_strided_slice %2 {offsets = [18, 0], sizes = [1, 32], strides = [1, 1]} : vector<27x32xf32> to vector<1x32xf32>
    %124 = vector.extract_strided_slice %1 {offsets = [6, 0], sizes = [1, 32], strides = [1, 1]} : vector<20x32xf32> to vector<1x32xf32>
    %125 = arith.mulf %123, %124 : vector<1x32xf32>
    %126 = arith.addf %122, %125 : vector<1x32xf32>
    %127 = vector.extract_strided_slice %2 {offsets = [19, 0], sizes = [1, 32], strides = [1, 1]} : vector<27x32xf32> to vector<1x32xf32>
    %128 = vector.extract_strided_slice %1 {offsets = [7, 0], sizes = [1, 32], strides = [1, 1]} : vector<20x32xf32> to vector<1x32xf32>
    %129 = arith.mulf %127, %128 : vector<1x32xf32>
    %130 = arith.addf %126, %129 : vector<1x32xf32>
    %131 = vector.extract_strided_slice %2 {offsets = [21, 0], sizes = [1, 32], strides = [1, 1]} : vector<27x32xf32> to vector<1x32xf32>
    %132 = vector.extract_strided_slice %1 {offsets = [8, 0], sizes = [1, 32], strides = [1, 1]} : vector<20x32xf32> to vector<1x32xf32>
    %133 = arith.mulf %131, %132 : vector<1x32xf32>
    %134 = arith.addf %130, %133 : vector<1x32xf32>
    %135 = vector.extract_strided_slice %2 {offsets = [22, 0], sizes = [1, 32], strides = [1, 1]} : vector<27x32xf32> to vector<1x32xf32>
    %136 = vector.extract_strided_slice %1 {offsets = [9, 0], sizes = [1, 32], strides = [1, 1]} : vector<20x32xf32> to vector<1x32xf32>
    %137 = arith.mulf %135, %136 : vector<1x32xf32>
    %138 = arith.addf %134, %137 : vector<1x32xf32>
    %139 = vector.extract_strided_slice %1 {offsets = [4, 0], sizes = [1, 32], strides = [1, 1]} : vector<20x32xf32> to vector<1x32xf32>
    %140 = arith.addf %139, %138 : vector<1x32xf32>
    %141 = tpu.concatenate %4, %38, %72, %106, %140 in 0 : vector<1x32xf32>, vector<1x32xf32>, vector<1x32xf32>, vector<1x32xf32>, vector<1x32xf32> -> vector<5x32xf32>
    %142 = vector.extract_strided_slice %1 {offsets = [5, 0], sizes = [1, 32], strides = [1, 1]} : vector<20x32xf32> to vector<1x32xf32>
    %143 = vector.extract_strided_slice %2 {offsets = [4, 0], sizes = [1, 32], strides = [1, 1]} : vector<27x32xf32> to vector<1x32xf32>
    %144 = vector.extract_strided_slice %1 {offsets = [1, 0], sizes = [1, 32], strides = [1, 1]} : vector<20x32xf32> to vector<1x32xf32>
    %145 = arith.mulf %143, %144 : vector<1x32xf32>
    %146 = arith.addf %3, %145 : vector<1x32xf32>
    %147 = vector.extract_strided_slice %2 {offsets = [5, 0], sizes = [1, 32], strides = [1, 1]} : vector<27x32xf32> to vector<1x32xf32>
    %148 = vector.extract_strided_slice %1 {offsets = [2, 0], sizes = [1, 32], strides = [1, 1]} : vector<20x32xf32> to vector<1x32xf32>
    %149 = arith.mulf %147, %148 : vector<1x32xf32>
    %150 = arith.addf %146, %149 : vector<1x32xf32>
    %151 = vector.extract_strided_slice %2 {offsets = [7, 0], sizes = [1, 32], strides = [1, 1]} : vector<27x32xf32> to vector<1x32xf32>
    %152 = vector.extract_strided_slice %1 {offsets = [3, 0], sizes = [1, 32], strides = [1, 1]} : vector<20x32xf32> to vector<1x32xf32>
    %153 = arith.mulf %151, %152 : vector<1x32xf32>
    %154 = arith.addf %150, %153 : vector<1x32xf32>
    %155 = vector.extract_strided_slice %2 {offsets = [8, 0], sizes = [1, 32], strides = [1, 1]} : vector<27x32xf32> to vector<1x32xf32>
    %156 = vector.extract_strided_slice %1 {offsets = [4, 0], sizes = [1, 32], strides = [1, 1]} : vector<20x32xf32> to vector<1x32xf32>
    %157 = arith.mulf %155, %156 : vector<1x32xf32>
    %158 = arith.addf %154, %157 : vector<1x32xf32>
    %159 = vector.extract_strided_slice %2 {offsets = [13, 0], sizes = [1, 32], strides = [1, 1]} : vector<27x32xf32> to vector<1x32xf32>
    %160 = vector.extract_strided_slice %1 {offsets = [6, 0], sizes = [1, 32], strides = [1, 1]} : vector<20x32xf32> to vector<1x32xf32>
    %161 = arith.mulf %159, %160 : vector<1x32xf32>
    %162 = arith.addf %158, %161 : vector<1x32xf32>
    %163 = vector.extract_strided_slice %2 {offsets = [14, 0], sizes = [1, 32], strides = [1, 1]} : vector<27x32xf32> to vector<1x32xf32>
    %164 = vector.extract_strided_slice %1 {offsets = [7, 0], sizes = [1, 32], strides = [1, 1]} : vector<20x32xf32> to vector<1x32xf32>
    %165 = arith.mulf %163, %164 : vector<1x32xf32>
    %166 = arith.addf %162, %165 : vector<1x32xf32>
    %167 = vector.extract_strided_slice %2 {offsets = [16, 0], sizes = [1, 32], strides = [1, 1]} : vector<27x32xf32> to vector<1x32xf32>
    %168 = vector.extract_strided_slice %1 {offsets = [8, 0], sizes = [1, 32], strides = [1, 1]} : vector<20x32xf32> to vector<1x32xf32>
    %169 = arith.mulf %167, %168 : vector<1x32xf32>
    %170 = arith.addf %166, %169 : vector<1x32xf32>
    %171 = vector.extract_strided_slice %2 {offsets = [17, 0], sizes = [1, 32], strides = [1, 1]} : vector<27x32xf32> to vector<1x32xf32>
    %172 = vector.extract_strided_slice %1 {offsets = [9, 0], sizes = [1, 32], strides = [1, 1]} : vector<20x32xf32> to vector<1x32xf32>
    %173 = arith.mulf %171, %172 : vector<1x32xf32>
    %174 = arith.addf %170, %173 : vector<1x32xf32>
    %175 = vector.extract_strided_slice %1 {offsets = [6, 0], sizes = [1, 32], strides = [1, 1]} : vector<20x32xf32> to vector<1x32xf32>
    %176 = arith.addf %175, %174 : vector<1x32xf32>
    %177 = vector.extract_strided_slice %2 {offsets = [3, 0], sizes = [1, 32], strides = [1, 1]} : vector<27x32xf32> to vector<1x32xf32>
    %178 = vector.extract_strided_slice %1 {offsets = [1, 0], sizes = [1, 32], strides = [1, 1]} : vector<20x32xf32> to vector<1x32xf32>
    %179 = arith.mulf %177, %178 : vector<1x32xf32>
    %180 = arith.addf %3, %179 : vector<1x32xf32>
    %181 = vector.extract_strided_slice %2 {offsets = [4, 0], sizes = [1, 32], strides = [1, 1]} : vector<27x32xf32> to vector<1x32xf32>
    %182 = vector.extract_strided_slice %1 {offsets = [2, 0], sizes = [1, 32], strides = [1, 1]} : vector<20x32xf32> to vector<1x32xf32>
    %183 = arith.mulf %181, %182 : vector<1x32xf32>
    %184 = arith.addf %180, %183 : vector<1x32xf32>
    %185 = vector.extract_strided_slice %2 {offsets = [6, 0], sizes = [1, 32], strides = [1, 1]} : vector<27x32xf32> to vector<1x32xf32>
    %186 = vector.extract_strided_slice %1 {offsets = [3, 0], sizes = [1, 32], strides = [1, 1]} : vector<20x32xf32> to vector<1x32xf32>
    %187 = arith.mulf %185, %186 : vector<1x32xf32>
    %188 = arith.addf %184, %187 : vector<1x32xf32>
    %189 = vector.extract_strided_slice %2 {offsets = [7, 0], sizes = [1, 32], strides = [1, 1]} : vector<27x32xf32> to vector<1x32xf32>
    %190 = vector.extract_strided_slice %1 {offsets = [4, 0], sizes = [1, 32], strides = [1, 1]} : vector<20x32xf32> to vector<1x32xf32>
    %191 = arith.mulf %189, %190 : vector<1x32xf32>
    %192 = arith.addf %188, %191 : vector<1x32xf32>
    %193 = vector.extract_strided_slice %2 {offsets = [12, 0], sizes = [1, 32], strides = [1, 1]} : vector<27x32xf32> to vector<1x32xf32>
    %194 = vector.extract_strided_slice %1 {offsets = [6, 0], sizes = [1, 32], strides = [1, 1]} : vector<20x32xf32> to vector<1x32xf32>
    %195 = arith.mulf %193, %194 : vector<1x32xf32>
    %196 = arith.addf %192, %195 : vector<1x32xf32>
    %197 = vector.extract_strided_slice %2 {offsets = [13, 0], sizes = [1, 32], strides = [1, 1]} : vector<27x32xf32> to vector<1x32xf32>
    %198 = vector.extract_strided_slice %1 {offsets = [7, 0], sizes = [1, 32], strides = [1, 1]} : vector<20x32xf32> to vector<1x32xf32>
    %199 = arith.mulf %197, %198 : vector<1x32xf32>
    %200 = arith.addf %196, %199 : vector<1x32xf32>
    %201 = vector.extract_strided_slice %2 {offsets = [15, 0], sizes = [1, 32], strides = [1, 1]} : vector<27x32xf32> to vector<1x32xf32>
    %202 = vector.extract_strided_slice %1 {offsets = [8, 0], sizes = [1, 32], strides = [1, 1]} : vector<20x32xf32> to vector<1x32xf32>
    %203 = arith.mulf %201, %202 : vector<1x32xf32>
    %204 = arith.addf %200, %203 : vector<1x32xf32>
    %205 = vector.extract_strided_slice %2 {offsets = [16, 0], sizes = [1, 32], strides = [1, 1]} : vector<27x32xf32> to vector<1x32xf32>
    %206 = vector.extract_strided_slice %1 {offsets = [9, 0], sizes = [1, 32], strides = [1, 1]} : vector<20x32xf32> to vector<1x32xf32>
    %207 = arith.mulf %205, %206 : vector<1x32xf32>
    %208 = arith.addf %204, %207 : vector<1x32xf32>
    %209 = vector.extract_strided_slice %1 {offsets = [7, 0], sizes = [1, 32], strides = [1, 1]} : vector<20x32xf32> to vector<1x32xf32>
    %210 = arith.addf %209, %208 : vector<1x32xf32>
    %211 = vector.extract_strided_slice %2 {offsets = [1, 0], sizes = [1, 32], strides = [1, 1]} : vector<27x32xf32> to vector<1x32xf32>
    %212 = vector.extract_strided_slice %1 {offsets = [1, 0], sizes = [1, 32], strides = [1, 1]} : vector<20x32xf32> to vector<1x32xf32>
    %213 = arith.mulf %211, %212 : vector<1x32xf32>
    %214 = arith.addf %3, %213 : vector<1x32xf32>
    %215 = vector.extract_strided_slice %2 {offsets = [2, 0], sizes = [1, 32], strides = [1, 1]} : vector<27x32xf32> to vector<1x32xf32>
    %216 = vector.extract_strided_slice %1 {offsets = [2, 0], sizes = [1, 32], strides = [1, 1]} : vector<20x32xf32> to vector<1x32xf32>
    %217 = arith.mulf %215, %216 : vector<1x32xf32>
    %218 = arith.addf %214, %217 : vector<1x32xf32>
    %219 = vector.extract_strided_slice %2 {offsets = [4, 0], sizes = [1, 32], strides = [1, 1]} : vector<27x32xf32> to vector<1x32xf32>
    %220 = vector.extract_strided_slice %1 {offsets = [3, 0], sizes = [1, 32], strides = [1, 1]} : vector<20x32xf32> to vector<1x32xf32>
    %221 = arith.mulf %219, %220 : vector<1x32xf32>
    %222 = arith.addf %218, %221 : vector<1x32xf32>
    %223 = vector.extract_strided_slice %2 {offsets = [5, 0], sizes = [1, 32], strides = [1, 1]} : vector<27x32xf32> to vector<1x32xf32>
    %224 = vector.extract_strided_slice %1 {offsets = [4, 0], sizes = [1, 32], strides = [1, 1]} : vector<20x32xf32> to vector<1x32xf32>
    %225 = arith.mulf %223, %224 : vector<1x32xf32>
    %226 = arith.addf %222, %225 : vector<1x32xf32>
    %227 = vector.extract_strided_slice %2 {offsets = [10, 0], sizes = [1, 32], strides = [1, 1]} : vector<27x32xf32> to vector<1x32xf32>
    %228 = vector.extract_strided_slice %1 {offsets = [6, 0], sizes = [1, 32], strides = [1, 1]} : vector<20x32xf32> to vector<1x32xf32>
    %229 = arith.mulf %227, %228 : vector<1x32xf32>
    %230 = arith.addf %226, %229 : vector<1x32xf32>
    %231 = vector.extract_strided_slice %2 {offsets = [11, 0], sizes = [1, 32], strides = [1, 1]} : vector<27x32xf32> to vector<1x32xf32>
    %232 = vector.extract_strided_slice %1 {offsets = [7, 0], sizes = [1, 32], strides = [1, 1]} : vector<20x32xf32> to vector<1x32xf32>
    %233 = arith.mulf %231, %232 : vector<1x32xf32>
    %234 = arith.addf %230, %233 : vector<1x32xf32>
    %235 = vector.extract_strided_slice %2 {offsets = [13, 0], sizes = [1, 32], strides = [1, 1]} : vector<27x32xf32> to vector<1x32xf32>
    %236 = vector.extract_strided_slice %1 {offsets = [8, 0], sizes = [1, 32], strides = [1, 1]} : vector<20x32xf32> to vector<1x32xf32>
    %237 = arith.mulf %235, %236 : vector<1x32xf32>
    %238 = arith.addf %234, %237 : vector<1x32xf32>
    %239 = vector.extract_strided_slice %2 {offsets = [14, 0], sizes = [1, 32], strides = [1, 1]} : vector<27x32xf32> to vector<1x32xf32>
    %240 = vector.extract_strided_slice %1 {offsets = [9, 0], sizes = [1, 32], strides = [1, 1]} : vector<20x32xf32> to vector<1x32xf32>
    %241 = arith.mulf %239, %240 : vector<1x32xf32>
    %242 = arith.addf %238, %241 : vector<1x32xf32>
    %243 = vector.extract_strided_slice %1 {offsets = [8, 0], sizes = [1, 32], strides = [1, 1]} : vector<20x32xf32> to vector<1x32xf32>
    %244 = arith.addf %243, %242 : vector<1x32xf32>
    %245 = vector.extract_strided_slice %2 {offsets = [0, 0], sizes = [1, 32], strides = [1, 1]} : vector<27x32xf32> to vector<1x32xf32>
    %246 = vector.extract_strided_slice %1 {offsets = [1, 0], sizes = [1, 32], strides = [1, 1]} : vector<20x32xf32> to vector<1x32xf32>
    %247 = arith.mulf %245, %246 : vector<1x32xf32>
    %248 = arith.addf %3, %247 : vector<1x32xf32>
    %249 = vector.extract_strided_slice %2 {offsets = [1, 0], sizes = [1, 32], strides = [1, 1]} : vector<27x32xf32> to vector<1x32xf32>
    %250 = vector.extract_strided_slice %1 {offsets = [2, 0], sizes = [1, 32], strides = [1, 1]} : vector<20x32xf32> to vector<1x32xf32>
    %251 = arith.mulf %249, %250 : vector<1x32xf32>
    %252 = arith.addf %248, %251 : vector<1x32xf32>
    %253 = vector.extract_strided_slice %2 {offsets = [3, 0], sizes = [1, 32], strides = [1, 1]} : vector<27x32xf32> to vector<1x32xf32>
    %254 = vector.extract_strided_slice %1 {offsets = [3, 0], sizes = [1, 32], strides = [1, 1]} : vector<20x32xf32> to vector<1x32xf32>
    %255 = arith.mulf %253, %254 : vector<1x32xf32>
    %256 = arith.addf %252, %255 : vector<1x32xf32>
    %257 = vector.extract_strided_slice %2 {offsets = [4, 0], sizes = [1, 32], strides = [1, 1]} : vector<27x32xf32> to vector<1x32xf32>
    %258 = vector.extract_strided_slice %1 {offsets = [4, 0], sizes = [1, 32], strides = [1, 1]} : vector<20x32xf32> to vector<1x32xf32>
    %259 = arith.mulf %257, %258 : vector<1x32xf32>
    %260 = arith.addf %256, %259 : vector<1x32xf32>
    %261 = vector.extract_strided_slice %2 {offsets = [9, 0], sizes = [1, 32], strides = [1, 1]} : vector<27x32xf32> to vector<1x32xf32>
    %262 = vector.extract_strided_slice %1 {offsets = [6, 0], sizes = [1, 32], strides = [1, 1]} : vector<20x32xf32> to vector<1x32xf32>
    %263 = arith.mulf %261, %262 : vector<1x32xf32>
    %264 = arith.addf %260, %263 : vector<1x32xf32>
    %265 = vector.extract_strided_slice %2 {offsets = [10, 0], sizes = [1, 32], strides = [1, 1]} : vector<27x32xf32> to vector<1x32xf32>
    %266 = vector.extract_strided_slice %1 {offsets = [7, 0], sizes = [1, 32], strides = [1, 1]} : vector<20x32xf32> to vector<1x32xf32>
    %267 = arith.mulf %265, %266 : vector<1x32xf32>
    %268 = arith.addf %264, %267 : vector<1x32xf32>
    %269 = vector.extract_strided_slice %2 {offsets = [12, 0], sizes = [1, 32], strides = [1, 1]} : vector<27x32xf32> to vector<1x32xf32>
    %270 = vector.extract_strided_slice %1 {offsets = [8, 0], sizes = [1, 32], strides = [1, 1]} : vector<20x32xf32> to vector<1x32xf32>
    %271 = arith.mulf %269, %270 : vector<1x32xf32>
    %272 = arith.addf %268, %271 : vector<1x32xf32>
    %273 = vector.extract_strided_slice %2 {offsets = [13, 0], sizes = [1, 32], strides = [1, 1]} : vector<27x32xf32> to vector<1x32xf32>
    %274 = vector.extract_strided_slice %1 {offsets = [9, 0], sizes = [1, 32], strides = [1, 1]} : vector<20x32xf32> to vector<1x32xf32>
    %275 = arith.mulf %273, %274 : vector<1x32xf32>
    %276 = arith.addf %272, %275 : vector<1x32xf32>
    %277 = vector.extract_strided_slice %1 {offsets = [9, 0], sizes = [1, 32], strides = [1, 1]} : vector<20x32xf32> to vector<1x32xf32>
    %278 = arith.addf %277, %276 : vector<1x32xf32>
    %279 = tpu.concatenate %142, %176, %210, %244, %278 in 0 : vector<1x32xf32>, vector<1x32xf32>, vector<1x32xf32>, vector<1x32xf32>, vector<1x32xf32> -> vector<5x32xf32>
    %280 = vector.extract_strided_slice %1 {offsets = [10, 0], sizes = [1, 32], strides = [1, 1]} : vector<20x32xf32> to vector<1x32xf32>
    %281 = vector.extract_strided_slice %2 {offsets = [13, 0], sizes = [1, 32], strides = [1, 1]} : vector<27x32xf32> to vector<1x32xf32>
    %282 = vector.extract_strided_slice %1 {offsets = [11, 0], sizes = [1, 32], strides = [1, 1]} : vector<20x32xf32> to vector<1x32xf32>
    %283 = arith.mulf %281, %282 : vector<1x32xf32>
    %284 = arith.addf %3, %283 : vector<1x32xf32>
    %285 = vector.extract_strided_slice %2 {offsets = [14, 0], sizes = [1, 32], strides = [1, 1]} : vector<27x32xf32> to vector<1x32xf32>
    %286 = vector.extract_strided_slice %1 {offsets = [12, 0], sizes = [1, 32], strides = [1, 1]} : vector<20x32xf32> to vector<1x32xf32>
    %287 = arith.mulf %285, %286 : vector<1x32xf32>
    %288 = arith.addf %284, %287 : vector<1x32xf32>
    %289 = vector.extract_strided_slice %2 {offsets = [16, 0], sizes = [1, 32], strides = [1, 1]} : vector<27x32xf32> to vector<1x32xf32>
    %290 = vector.extract_strided_slice %1 {offsets = [13, 0], sizes = [1, 32], strides = [1, 1]} : vector<20x32xf32> to vector<1x32xf32>
    %291 = arith.mulf %289, %290 : vector<1x32xf32>
    %292 = arith.addf %288, %291 : vector<1x32xf32>
    %293 = vector.extract_strided_slice %2 {offsets = [17, 0], sizes = [1, 32], strides = [1, 1]} : vector<27x32xf32> to vector<1x32xf32>
    %294 = vector.extract_strided_slice %1 {offsets = [14, 0], sizes = [1, 32], strides = [1, 1]} : vector<20x32xf32> to vector<1x32xf32>
    %295 = arith.mulf %293, %294 : vector<1x32xf32>
    %296 = arith.addf %292, %295 : vector<1x32xf32>
    %297 = vector.extract_strided_slice %2 {offsets = [22, 0], sizes = [1, 32], strides = [1, 1]} : vector<27x32xf32> to vector<1x32xf32>
    %298 = vector.extract_strided_slice %1 {offsets = [16, 0], sizes = [1, 32], strides = [1, 1]} : vector<20x32xf32> to vector<1x32xf32>
    %299 = arith.mulf %297, %298 : vector<1x32xf32>
    %300 = arith.addf %296, %299 : vector<1x32xf32>
    %301 = vector.extract_strided_slice %2 {offsets = [23, 0], sizes = [1, 32], strides = [1, 1]} : vector<27x32xf32> to vector<1x32xf32>
    %302 = vector.extract_strided_slice %1 {offsets = [17, 0], sizes = [1, 32], strides = [1, 1]} : vector<20x32xf32> to vector<1x32xf32>
    %303 = arith.mulf %301, %302 : vector<1x32xf32>
    %304 = arith.addf %300, %303 : vector<1x32xf32>
    %305 = vector.extract_strided_slice %2 {offsets = [25, 0], sizes = [1, 32], strides = [1, 1]} : vector<27x32xf32> to vector<1x32xf32>
    %306 = vector.extract_strided_slice %1 {offsets = [18, 0], sizes = [1, 32], strides = [1, 1]} : vector<20x32xf32> to vector<1x32xf32>
    %307 = arith.mulf %305, %306 : vector<1x32xf32>
    %308 = arith.addf %304, %307 : vector<1x32xf32>
    %309 = vector.extract_strided_slice %2 {offsets = [26, 0], sizes = [1, 32], strides = [1, 1]} : vector<27x32xf32> to vector<1x32xf32>
    %310 = vector.extract_strided_slice %1 {offsets = [19, 0], sizes = [1, 32], strides = [1, 1]} : vector<20x32xf32> to vector<1x32xf32>
    %311 = arith.mulf %309, %310 : vector<1x32xf32>
    %312 = arith.addf %308, %311 : vector<1x32xf32>
    %313 = vector.extract_strided_slice %1 {offsets = [11, 0], sizes = [1, 32], strides = [1, 1]} : vector<20x32xf32> to vector<1x32xf32>
    %314 = arith.addf %313, %312 : vector<1x32xf32>
    %315 = vector.extract_strided_slice %2 {offsets = [12, 0], sizes = [1, 32], strides = [1, 1]} : vector<27x32xf32> to vector<1x32xf32>
    %316 = vector.extract_strided_slice %1 {offsets = [11, 0], sizes = [1, 32], strides = [1, 1]} : vector<20x32xf32> to vector<1x32xf32>
    %317 = arith.mulf %315, %316 : vector<1x32xf32>
    %318 = arith.addf %3, %317 : vector<1x32xf32>
    %319 = vector.extract_strided_slice %2 {offsets = [13, 0], sizes = [1, 32], strides = [1, 1]} : vector<27x32xf32> to vector<1x32xf32>
    %320 = vector.extract_strided_slice %1 {offsets = [12, 0], sizes = [1, 32], strides = [1, 1]} : vector<20x32xf32> to vector<1x32xf32>
    %321 = arith.mulf %319, %320 : vector<1x32xf32>
    %322 = arith.addf %318, %321 : vector<1x32xf32>
    %323 = vector.extract_strided_slice %2 {offsets = [15, 0], sizes = [1, 32], strides = [1, 1]} : vector<27x32xf32> to vector<1x32xf32>
    %324 = vector.extract_strided_slice %1 {offsets = [13, 0], sizes = [1, 32], strides = [1, 1]} : vector<20x32xf32> to vector<1x32xf32>
    %325 = arith.mulf %323, %324 : vector<1x32xf32>
    %326 = arith.addf %322, %325 : vector<1x32xf32>
    %327 = vector.extract_strided_slice %2 {offsets = [16, 0], sizes = [1, 32], strides = [1, 1]} : vector<27x32xf32> to vector<1x32xf32>
    %328 = vector.extract_strided_slice %1 {offsets = [14, 0], sizes = [1, 32], strides = [1, 1]} : vector<20x32xf32> to vector<1x32xf32>
    %329 = arith.mulf %327, %328 : vector<1x32xf32>
    %330 = arith.addf %326, %329 : vector<1x32xf32>
    %331 = vector.extract_strided_slice %2 {offsets = [21, 0], sizes = [1, 32], strides = [1, 1]} : vector<27x32xf32> to vector<1x32xf32>
    %332 = vector.extract_strided_slice %1 {offsets = [16, 0], sizes = [1, 32], strides = [1, 1]} : vector<20x32xf32> to vector<1x32xf32>
    %333 = arith.mulf %331, %332 : vector<1x32xf32>
    %334 = arith.addf %330, %333 : vector<1x32xf32>
    %335 = vector.extract_strided_slice %2 {offsets = [22, 0], sizes = [1, 32], strides = [1, 1]} : vector<27x32xf32> to vector<1x32xf32>
    %336 = vector.extract_strided_slice %1 {offsets = [17, 0], sizes = [1, 32], strides = [1, 1]} : vector<20x32xf32> to vector<1x32xf32>
    %337 = arith.mulf %335, %336 : vector<1x32xf32>
    %338 = arith.addf %334, %337 : vector<1x32xf32>
    %339 = vector.extract_strided_slice %2 {offsets = [24, 0], sizes = [1, 32], strides = [1, 1]} : vector<27x32xf32> to vector<1x32xf32>
    %340 = vector.extract_strided_slice %1 {offsets = [18, 0], sizes = [1, 32], strides = [1, 1]} : vector<20x32xf32> to vector<1x32xf32>
    %341 = arith.mulf %339, %340 : vector<1x32xf32>
    %342 = arith.addf %338, %341 : vector<1x32xf32>
    %343 = vector.extract_strided_slice %2 {offsets = [25, 0], sizes = [1, 32], strides = [1, 1]} : vector<27x32xf32> to vector<1x32xf32>
    %344 = vector.extract_strided_slice %1 {offsets = [19, 0], sizes = [1, 32], strides = [1, 1]} : vector<20x32xf32> to vector<1x32xf32>
    %345 = arith.mulf %343, %344 : vector<1x32xf32>
    %346 = arith.addf %342, %345 : vector<1x32xf32>
    %347 = vector.extract_strided_slice %1 {offsets = [12, 0], sizes = [1, 32], strides = [1, 1]} : vector<20x32xf32> to vector<1x32xf32>
    %348 = arith.addf %347, %346 : vector<1x32xf32>
    %349 = vector.extract_strided_slice %2 {offsets = [10, 0], sizes = [1, 32], strides = [1, 1]} : vector<27x32xf32> to vector<1x32xf32>
    %350 = vector.extract_strided_slice %1 {offsets = [11, 0], sizes = [1, 32], strides = [1, 1]} : vector<20x32xf32> to vector<1x32xf32>
    %351 = arith.mulf %349, %350 : vector<1x32xf32>
    %352 = arith.addf %3, %351 : vector<1x32xf32>
    %353 = vector.extract_strided_slice %2 {offsets = [11, 0], sizes = [1, 32], strides = [1, 1]} : vector<27x32xf32> to vector<1x32xf32>
    %354 = vector.extract_strided_slice %1 {offsets = [12, 0], sizes = [1, 32], strides = [1, 1]} : vector<20x32xf32> to vector<1x32xf32>
    %355 = arith.mulf %353, %354 : vector<1x32xf32>
    %356 = arith.addf %352, %355 : vector<1x32xf32>
    %357 = vector.extract_strided_slice %2 {offsets = [13, 0], sizes = [1, 32], strides = [1, 1]} : vector<27x32xf32> to vector<1x32xf32>
    %358 = vector.extract_strided_slice %1 {offsets = [13, 0], sizes = [1, 32], strides = [1, 1]} : vector<20x32xf32> to vector<1x32xf32>
    %359 = arith.mulf %357, %358 : vector<1x32xf32>
    %360 = arith.addf %356, %359 : vector<1x32xf32>
    %361 = vector.extract_strided_slice %2 {offsets = [14, 0], sizes = [1, 32], strides = [1, 1]} : vector<27x32xf32> to vector<1x32xf32>
    %362 = vector.extract_strided_slice %1 {offsets = [14, 0], sizes = [1, 32], strides = [1, 1]} : vector<20x32xf32> to vector<1x32xf32>
    %363 = arith.mulf %361, %362 : vector<1x32xf32>
    %364 = arith.addf %360, %363 : vector<1x32xf32>
    %365 = vector.extract_strided_slice %2 {offsets = [19, 0], sizes = [1, 32], strides = [1, 1]} : vector<27x32xf32> to vector<1x32xf32>
    %366 = vector.extract_strided_slice %1 {offsets = [16, 0], sizes = [1, 32], strides = [1, 1]} : vector<20x32xf32> to vector<1x32xf32>
    %367 = arith.mulf %365, %366 : vector<1x32xf32>
    %368 = arith.addf %364, %367 : vector<1x32xf32>
    %369 = vector.extract_strided_slice %2 {offsets = [20, 0], sizes = [1, 32], strides = [1, 1]} : vector<27x32xf32> to vector<1x32xf32>
    %370 = vector.extract_strided_slice %1 {offsets = [17, 0], sizes = [1, 32], strides = [1, 1]} : vector<20x32xf32> to vector<1x32xf32>
    %371 = arith.mulf %369, %370 : vector<1x32xf32>
    %372 = arith.addf %368, %371 : vector<1x32xf32>
    %373 = vector.extract_strided_slice %2 {offsets = [22, 0], sizes = [1, 32], strides = [1, 1]} : vector<27x32xf32> to vector<1x32xf32>
    %374 = vector.extract_strided_slice %1 {offsets = [18, 0], sizes = [1, 32], strides = [1, 1]} : vector<20x32xf32> to vector<1x32xf32>
    %375 = arith.mulf %373, %374 : vector<1x32xf32>
    %376 = arith.addf %372, %375 : vector<1x32xf32>
    %377 = vector.extract_strided_slice %2 {offsets = [23, 0], sizes = [1, 32], strides = [1, 1]} : vector<27x32xf32> to vector<1x32xf32>
    %378 = vector.extract_strided_slice %1 {offsets = [19, 0], sizes = [1, 32], strides = [1, 1]} : vector<20x32xf32> to vector<1x32xf32>
    %379 = arith.mulf %377, %378 : vector<1x32xf32>
    %380 = arith.addf %376, %379 : vector<1x32xf32>
    %381 = vector.extract_strided_slice %1 {offsets = [13, 0], sizes = [1, 32], strides = [1, 1]} : vector<20x32xf32> to vector<1x32xf32>
    %382 = arith.addf %381, %380 : vector<1x32xf32>
    %383 = vector.extract_strided_slice %2 {offsets = [9, 0], sizes = [1, 32], strides = [1, 1]} : vector<27x32xf32> to vector<1x32xf32>
    %384 = vector.extract_strided_slice %1 {offsets = [11, 0], sizes = [1, 32], strides = [1, 1]} : vector<20x32xf32> to vector<1x32xf32>
    %385 = arith.mulf %383, %384 : vector<1x32xf32>
    %386 = arith.addf %3, %385 : vector<1x32xf32>
    %387 = vector.extract_strided_slice %2 {offsets = [10, 0], sizes = [1, 32], strides = [1, 1]} : vector<27x32xf32> to vector<1x32xf32>
    %388 = vector.extract_strided_slice %1 {offsets = [12, 0], sizes = [1, 32], strides = [1, 1]} : vector<20x32xf32> to vector<1x32xf32>
    %389 = arith.mulf %387, %388 : vector<1x32xf32>
    %390 = arith.addf %386, %389 : vector<1x32xf32>
    %391 = vector.extract_strided_slice %2 {offsets = [12, 0], sizes = [1, 32], strides = [1, 1]} : vector<27x32xf32> to vector<1x32xf32>
    %392 = vector.extract_strided_slice %1 {offsets = [13, 0], sizes = [1, 32], strides = [1, 1]} : vector<20x32xf32> to vector<1x32xf32>
    %393 = arith.mulf %391, %392 : vector<1x32xf32>
    %394 = arith.addf %390, %393 : vector<1x32xf32>
    %395 = vector.extract_strided_slice %2 {offsets = [13, 0], sizes = [1, 32], strides = [1, 1]} : vector<27x32xf32> to vector<1x32xf32>
    %396 = vector.extract_strided_slice %1 {offsets = [14, 0], sizes = [1, 32], strides = [1, 1]} : vector<20x32xf32> to vector<1x32xf32>
    %397 = arith.mulf %395, %396 : vector<1x32xf32>
    %398 = arith.addf %394, %397 : vector<1x32xf32>
    %399 = vector.extract_strided_slice %2 {offsets = [18, 0], sizes = [1, 32], strides = [1, 1]} : vector<27x32xf32> to vector<1x32xf32>
    %400 = vector.extract_strided_slice %1 {offsets = [16, 0], sizes = [1, 32], strides = [1, 1]} : vector<20x32xf32> to vector<1x32xf32>
    %401 = arith.mulf %399, %400 : vector<1x32xf32>
    %402 = arith.addf %398, %401 : vector<1x32xf32>
    %403 = vector.extract_strided_slice %2 {offsets = [19, 0], sizes = [1, 32], strides = [1, 1]} : vector<27x32xf32> to vector<1x32xf32>
    %404 = vector.extract_strided_slice %1 {offsets = [17, 0], sizes = [1, 32], strides = [1, 1]} : vector<20x32xf32> to vector<1x32xf32>
    %405 = arith.mulf %403, %404 : vector<1x32xf32>
    %406 = arith.addf %402, %405 : vector<1x32xf32>
    %407 = vector.extract_strided_slice %2 {offsets = [21, 0], sizes = [1, 32], strides = [1, 1]} : vector<27x32xf32> to vector<1x32xf32>
    %408 = vector.extract_strided_slice %1 {offsets = [18, 0], sizes = [1, 32], strides = [1, 1]} : vector<20x32xf32> to vector<1x32xf32>
    %409 = arith.mulf %407, %408 : vector<1x32xf32>
    %410 = arith.addf %406, %409 : vector<1x32xf32>
    %411 = vector.extract_strided_slice %2 {offsets = [22, 0], sizes = [1, 32], strides = [1, 1]} : vector<27x32xf32> to vector<1x32xf32>
    %412 = vector.extract_strided_slice %1 {offsets = [19, 0], sizes = [1, 32], strides = [1, 1]} : vector<20x32xf32> to vector<1x32xf32>
    %413 = arith.mulf %411, %412 : vector<1x32xf32>
    %414 = arith.addf %410, %413 : vector<1x32xf32>
    %415 = vector.extract_strided_slice %1 {offsets = [14, 0], sizes = [1, 32], strides = [1, 1]} : vector<20x32xf32> to vector<1x32xf32>
    %416 = arith.addf %415, %414 : vector<1x32xf32>
    %417 = tpu.concatenate %280, %314, %348, %382, %416 in 0 : vector<1x32xf32>, vector<1x32xf32>, vector<1x32xf32>, vector<1x32xf32>, vector<1x32xf32> -> vector<5x32xf32>
    %418 = vector.extract_strided_slice %1 {offsets = [15, 0], sizes = [1, 32], strides = [1, 1]} : vector<20x32xf32> to vector<1x32xf32>
    %419 = vector.extract_strided_slice %2 {offsets = [4, 0], sizes = [1, 32], strides = [1, 1]} : vector<27x32xf32> to vector<1x32xf32>
    %420 = vector.extract_strided_slice %1 {offsets = [11, 0], sizes = [1, 32], strides = [1, 1]} : vector<20x32xf32> to vector<1x32xf32>
    %421 = arith.mulf %419, %420 : vector<1x32xf32>
    %422 = arith.addf %3, %421 : vector<1x32xf32>
    %423 = vector.extract_strided_slice %2 {offsets = [5, 0], sizes = [1, 32], strides = [1, 1]} : vector<27x32xf32> to vector<1x32xf32>
    %424 = vector.extract_strided_slice %1 {offsets = [12, 0], sizes = [1, 32], strides = [1, 1]} : vector<20x32xf32> to vector<1x32xf32>
    %425 = arith.mulf %423, %424 : vector<1x32xf32>
    %426 = arith.addf %422, %425 : vector<1x32xf32>
    %427 = vector.extract_strided_slice %2 {offsets = [7, 0], sizes = [1, 32], strides = [1, 1]} : vector<27x32xf32> to vector<1x32xf32>
    %428 = vector.extract_strided_slice %1 {offsets = [13, 0], sizes = [1, 32], strides = [1, 1]} : vector<20x32xf32> to vector<1x32xf32>
    %429 = arith.mulf %427, %428 : vector<1x32xf32>
    %430 = arith.addf %426, %429 : vector<1x32xf32>
    %431 = vector.extract_strided_slice %2 {offsets = [8, 0], sizes = [1, 32], strides = [1, 1]} : vector<27x32xf32> to vector<1x32xf32>
    %432 = vector.extract_strided_slice %1 {offsets = [14, 0], sizes = [1, 32], strides = [1, 1]} : vector<20x32xf32> to vector<1x32xf32>
    %433 = arith.mulf %431, %432 : vector<1x32xf32>
    %434 = arith.addf %430, %433 : vector<1x32xf32>
    %435 = vector.extract_strided_slice %2 {offsets = [13, 0], sizes = [1, 32], strides = [1, 1]} : vector<27x32xf32> to vector<1x32xf32>
    %436 = vector.extract_strided_slice %1 {offsets = [16, 0], sizes = [1, 32], strides = [1, 1]} : vector<20x32xf32> to vector<1x32xf32>
    %437 = arith.mulf %435, %436 : vector<1x32xf32>
    %438 = arith.addf %434, %437 : vector<1x32xf32>
    %439 = vector.extract_strided_slice %2 {offsets = [14, 0], sizes = [1, 32], strides = [1, 1]} : vector<27x32xf32> to vector<1x32xf32>
    %440 = vector.extract_strided_slice %1 {offsets = [17, 0], sizes = [1, 32], strides = [1, 1]} : vector<20x32xf32> to vector<1x32xf32>
    %441 = arith.mulf %439, %440 : vector<1x32xf32>
    %442 = arith.addf %438, %441 : vector<1x32xf32>
    %443 = vector.extract_strided_slice %2 {offsets = [16, 0], sizes = [1, 32], strides = [1, 1]} : vector<27x32xf32> to vector<1x32xf32>
    %444 = vector.extract_strided_slice %1 {offsets = [18, 0], sizes = [1, 32], strides = [1, 1]} : vector<20x32xf32> to vector<1x32xf32>
    %445 = arith.mulf %443, %444 : vector<1x32xf32>
    %446 = arith.addf %442, %445 : vector<1x32xf32>
    %447 = vector.extract_strided_slice %2 {offsets = [17, 0], sizes = [1, 32], strides = [1, 1]} : vector<27x32xf32> to vector<1x32xf32>
    %448 = vector.extract_strided_slice %1 {offsets = [19, 0], sizes = [1, 32], strides = [1, 1]} : vector<20x32xf32> to vector<1x32xf32>
    %449 = arith.mulf %447, %448 : vector<1x32xf32>
    %450 = arith.addf %446, %449 : vector<1x32xf32>
    %451 = vector.extract_strided_slice %1 {offsets = [16, 0], sizes = [1, 32], strides = [1, 1]} : vector<20x32xf32> to vector<1x32xf32>
    %452 = arith.addf %451, %450 : vector<1x32xf32>
    %453 = vector.extract_strided_slice %2 {offsets = [3, 0], sizes = [1, 32], strides = [1, 1]} : vector<27x32xf32> to vector<1x32xf32>
    %454 = vector.extract_strided_slice %1 {offsets = [11, 0], sizes = [1, 32], strides = [1, 1]} : vector<20x32xf32> to vector<1x32xf32>
    %455 = arith.mulf %453, %454 : vector<1x32xf32>
    %456 = arith.addf %3, %455 : vector<1x32xf32>
    %457 = vector.extract_strided_slice %2 {offsets = [4, 0], sizes = [1, 32], strides = [1, 1]} : vector<27x32xf32> to vector<1x32xf32>
    %458 = vector.extract_strided_slice %1 {offsets = [12, 0], sizes = [1, 32], strides = [1, 1]} : vector<20x32xf32> to vector<1x32xf32>
    %459 = arith.mulf %457, %458 : vector<1x32xf32>
    %460 = arith.addf %456, %459 : vector<1x32xf32>
    %461 = vector.extract_strided_slice %2 {offsets = [6, 0], sizes = [1, 32], strides = [1, 1]} : vector<27x32xf32> to vector<1x32xf32>
    %462 = vector.extract_strided_slice %1 {offsets = [13, 0], sizes = [1, 32], strides = [1, 1]} : vector<20x32xf32> to vector<1x32xf32>
    %463 = arith.mulf %461, %462 : vector<1x32xf32>
    %464 = arith.addf %460, %463 : vector<1x32xf32>
    %465 = vector.extract_strided_slice %2 {offsets = [7, 0], sizes = [1, 32], strides = [1, 1]} : vector<27x32xf32> to vector<1x32xf32>
    %466 = vector.extract_strided_slice %1 {offsets = [14, 0], sizes = [1, 32], strides = [1, 1]} : vector<20x32xf32> to vector<1x32xf32>
    %467 = arith.mulf %465, %466 : vector<1x32xf32>
    %468 = arith.addf %464, %467 : vector<1x32xf32>
    %469 = vector.extract_strided_slice %2 {offsets = [12, 0], sizes = [1, 32], strides = [1, 1]} : vector<27x32xf32> to vector<1x32xf32>
    %470 = vector.extract_strided_slice %1 {offsets = [16, 0], sizes = [1, 32], strides = [1, 1]} : vector<20x32xf32> to vector<1x32xf32>
    %471 = arith.mulf %469, %470 : vector<1x32xf32>
    %472 = arith.addf %468, %471 : vector<1x32xf32>
    %473 = vector.extract_strided_slice %2 {offsets = [13, 0], sizes = [1, 32], strides = [1, 1]} : vector<27x32xf32> to vector<1x32xf32>
    %474 = vector.extract_strided_slice %1 {offsets = [17, 0], sizes = [1, 32], strides = [1, 1]} : vector<20x32xf32> to vector<1x32xf32>
    %475 = arith.mulf %473, %474 : vector<1x32xf32>
    %476 = arith.addf %472, %475 : vector<1x32xf32>
    %477 = vector.extract_strided_slice %2 {offsets = [15, 0], sizes = [1, 32], strides = [1, 1]} : vector<27x32xf32> to vector<1x32xf32>
    %478 = vector.extract_strided_slice %1 {offsets = [18, 0], sizes = [1, 32], strides = [1, 1]} : vector<20x32xf32> to vector<1x32xf32>
    %479 = arith.mulf %477, %478 : vector<1x32xf32>
    %480 = arith.addf %476, %479 : vector<1x32xf32>
    %481 = vector.extract_strided_slice %2 {offsets = [16, 0], sizes = [1, 32], strides = [1, 1]} : vector<27x32xf32> to vector<1x32xf32>
    %482 = vector.extract_strided_slice %1 {offsets = [19, 0], sizes = [1, 32], strides = [1, 1]} : vector<20x32xf32> to vector<1x32xf32>
    %483 = arith.mulf %481, %482 : vector<1x32xf32>
    %484 = arith.addf %480, %483 : vector<1x32xf32>
    %485 = vector.extract_strided_slice %1 {offsets = [17, 0], sizes = [1, 32], strides = [1, 1]} : vector<20x32xf32> to vector<1x32xf32>
    %486 = arith.addf %485, %484 : vector<1x32xf32>
    %487 = vector.extract_strided_slice %2 {offsets = [1, 0], sizes = [1, 32], strides = [1, 1]} : vector<27x32xf32> to vector<1x32xf32>
    %488 = vector.extract_strided_slice %1 {offsets = [11, 0], sizes = [1, 32], strides = [1, 1]} : vector<20x32xf32> to vector<1x32xf32>
    %489 = arith.mulf %487, %488 : vector<1x32xf32>
    %490 = arith.addf %3, %489 : vector<1x32xf32>
    %491 = vector.extract_strided_slice %2 {offsets = [2, 0], sizes = [1, 32], strides = [1, 1]} : vector<27x32xf32> to vector<1x32xf32>
    %492 = vector.extract_strided_slice %1 {offsets = [12, 0], sizes = [1, 32], strides = [1, 1]} : vector<20x32xf32> to vector<1x32xf32>
    %493 = arith.mulf %491, %492 : vector<1x32xf32>
    %494 = arith.addf %490, %493 : vector<1x32xf32>
    %495 = vector.extract_strided_slice %2 {offsets = [4, 0], sizes = [1, 32], strides = [1, 1]} : vector<27x32xf32> to vector<1x32xf32>
    %496 = vector.extract_strided_slice %1 {offsets = [13, 0], sizes = [1, 32], strides = [1, 1]} : vector<20x32xf32> to vector<1x32xf32>
    %497 = arith.mulf %495, %496 : vector<1x32xf32>
    %498 = arith.addf %494, %497 : vector<1x32xf32>
    %499 = vector.extract_strided_slice %2 {offsets = [5, 0], sizes = [1, 32], strides = [1, 1]} : vector<27x32xf32> to vector<1x32xf32>
    %500 = vector.extract_strided_slice %1 {offsets = [14, 0], sizes = [1, 32], strides = [1, 1]} : vector<20x32xf32> to vector<1x32xf32>
    %501 = arith.mulf %499, %500 : vector<1x32xf32>
    %502 = arith.addf %498, %501 : vector<1x32xf32>
    %503 = vector.extract_strided_slice %2 {offsets = [10, 0], sizes = [1, 32], strides = [1, 1]} : vector<27x32xf32> to vector<1x32xf32>
    %504 = vector.extract_strided_slice %1 {offsets = [16, 0], sizes = [1, 32], strides = [1, 1]} : vector<20x32xf32> to vector<1x32xf32>
    %505 = arith.mulf %503, %504 : vector<1x32xf32>
    %506 = arith.addf %502, %505 : vector<1x32xf32>
    %507 = vector.extract_strided_slice %2 {offsets = [11, 0], sizes = [1, 32], strides = [1, 1]} : vector<27x32xf32> to vector<1x32xf32>
    %508 = vector.extract_strided_slice %1 {offsets = [17, 0], sizes = [1, 32], strides = [1, 1]} : vector<20x32xf32> to vector<1x32xf32>
    %509 = arith.mulf %507, %508 : vector<1x32xf32>
    %510 = arith.addf %506, %509 : vector<1x32xf32>
    %511 = vector.extract_strided_slice %2 {offsets = [13, 0], sizes = [1, 32], strides = [1, 1]} : vector<27x32xf32> to vector<1x32xf32>
    %512 = vector.extract_strided_slice %1 {offsets = [18, 0], sizes = [1, 32], strides = [1, 1]} : vector<20x32xf32> to vector<1x32xf32>
    %513 = arith.mulf %511, %512 : vector<1x32xf32>
    %514 = arith.addf %510, %513 : vector<1x32xf32>
    %515 = vector.extract_strided_slice %2 {offsets = [14, 0], sizes = [1, 32], strides = [1, 1]} : vector<27x32xf32> to vector<1x32xf32>
    %516 = vector.extract_strided_slice %1 {offsets = [19, 0], sizes = [1, 32], strides = [1, 1]} : vector<20x32xf32> to vector<1x32xf32>
    %517 = arith.mulf %515, %516 : vector<1x32xf32>
    %518 = arith.addf %514, %517 : vector<1x32xf32>
    %519 = vector.extract_strided_slice %1 {offsets = [18, 0], sizes = [1, 32], strides = [1, 1]} : vector<20x32xf32> to vector<1x32xf32>
    %520 = arith.addf %519, %518 : vector<1x32xf32>
    %521 = vector.extract_strided_slice %2 {offsets = [0, 0], sizes = [1, 32], strides = [1, 1]} : vector<27x32xf32> to vector<1x32xf32>
    %522 = vector.extract_strided_slice %1 {offsets = [11, 0], sizes = [1, 32], strides = [1, 1]} : vector<20x32xf32> to vector<1x32xf32>
    %523 = arith.mulf %521, %522 : vector<1x32xf32>
    %524 = arith.addf %3, %523 : vector<1x32xf32>
    %525 = vector.extract_strided_slice %2 {offsets = [1, 0], sizes = [1, 32], strides = [1, 1]} : vector<27x32xf32> to vector<1x32xf32>
    %526 = vector.extract_strided_slice %1 {offsets = [12, 0], sizes = [1, 32], strides = [1, 1]} : vector<20x32xf32> to vector<1x32xf32>
    %527 = arith.mulf %525, %526 : vector<1x32xf32>
    %528 = arith.addf %524, %527 : vector<1x32xf32>
    %529 = vector.extract_strided_slice %2 {offsets = [3, 0], sizes = [1, 32], strides = [1, 1]} : vector<27x32xf32> to vector<1x32xf32>
    %530 = vector.extract_strided_slice %1 {offsets = [13, 0], sizes = [1, 32], strides = [1, 1]} : vector<20x32xf32> to vector<1x32xf32>
    %531 = arith.mulf %529, %530 : vector<1x32xf32>
    %532 = arith.addf %528, %531 : vector<1x32xf32>
    %533 = vector.extract_strided_slice %2 {offsets = [4, 0], sizes = [1, 32], strides = [1, 1]} : vector<27x32xf32> to vector<1x32xf32>
    %534 = vector.extract_strided_slice %1 {offsets = [14, 0], sizes = [1, 32], strides = [1, 1]} : vector<20x32xf32> to vector<1x32xf32>
    %535 = arith.mulf %533, %534 : vector<1x32xf32>
    %536 = arith.addf %532, %535 : vector<1x32xf32>
    %537 = vector.extract_strided_slice %2 {offsets = [9, 0], sizes = [1, 32], strides = [1, 1]} : vector<27x32xf32> to vector<1x32xf32>
    %538 = vector.extract_strided_slice %1 {offsets = [16, 0], sizes = [1, 32], strides = [1, 1]} : vector<20x32xf32> to vector<1x32xf32>
    %539 = arith.mulf %537, %538 : vector<1x32xf32>
    %540 = arith.addf %536, %539 : vector<1x32xf32>
    %541 = vector.extract_strided_slice %2 {offsets = [10, 0], sizes = [1, 32], strides = [1, 1]} : vector<27x32xf32> to vector<1x32xf32>
    %542 = vector.extract_strided_slice %1 {offsets = [17, 0], sizes = [1, 32], strides = [1, 1]} : vector<20x32xf32> to vector<1x32xf32>
    %543 = arith.mulf %541, %542 : vector<1x32xf32>
    %544 = arith.addf %540, %543 : vector<1x32xf32>
    %545 = vector.extract_strided_slice %2 {offsets = [12, 0], sizes = [1, 32], strides = [1, 1]} : vector<27x32xf32> to vector<1x32xf32>
    %546 = vector.extract_strided_slice %1 {offsets = [18, 0], sizes = [1, 32], strides = [1, 1]} : vector<20x32xf32> to vector<1x32xf32>
    %547 = arith.mulf %545, %546 : vector<1x32xf32>
    %548 = arith.addf %544, %547 : vector<1x32xf32>
    %549 = vector.extract_strided_slice %2 {offsets = [13, 0], sizes = [1, 32], strides = [1, 1]} : vector<27x32xf32> to vector<1x32xf32>
    %550 = vector.extract_strided_slice %1 {offsets = [19, 0], sizes = [1, 32], strides = [1, 1]} : vector<20x32xf32> to vector<1x32xf32>
    %551 = arith.mulf %549, %550 : vector<1x32xf32>
    %552 = arith.addf %548, %551 : vector<1x32xf32>
    %553 = vector.extract_strided_slice %1 {offsets = [19, 0], sizes = [1, 32], strides = [1, 1]} : vector<20x32xf32> to vector<1x32xf32>
    %554 = arith.addf %553, %552 : vector<1x32xf32>
    %555 = tpu.concatenate %418, %452, %486, %520, %554 in 0 : vector<1x32xf32>, vector<1x32xf32>, vector<1x32xf32>, vector<1x32xf32>, vector<1x32xf32> -> vector<5x32xf32>
    %556 = tpu.concatenate %141, %279, %417, %555 in 0 : vector<5x32xf32>, vector<5x32xf32>, vector<5x32xf32>, vector<5x32xf32> -> vector<20x32xf32>
    %c0_5 = arith.constant 0 : index
    %c0_6 = arith.constant 0 : index
    %557 = vector.load %arg6[%c0_5, %c0_6] : memref<1x32xf32, #tpu.memory_space<vmem>>, vector<1x32xf32>
    %c0_7 = arith.constant 0 : index
    %c0_8 = arith.constant 0 : index
    %558 = vector.load %arg7[%c0_7, %c0_8] : memref<1x32xf32, #tpu.memory_space<vmem>>, vector<1x32xf32>
    %cst = arith.constant dense<0.000000e+00> : vector<20xf32>
    %559 = vector.multi_reduction <add>, %556, %cst [1] : vector<20x32xf32> to vector<20xf32>
    %560 = vector.shape_cast %559 : vector<20xf32> to vector<20x1xf32>
    %cst_9 = arith.constant 3.200000e+01 : f32
    %561 = vector.broadcast %cst_9 : f32 to vector<20x1xf32>
    %562 = arith.divf %560, %561 : vector<20x1xf32>
    %563 = vector.broadcast %562 : vector<20x1xf32> to vector<20x32xf32>
    %564 = arith.subf %556, %563 : vector<20x32xf32>
    %565 = arith.mulf %564, %564 : vector<20x32xf32>
    %cst_10 = arith.constant dense<0.000000e+00> : vector<20xf32>
    %566 = vector.multi_reduction <add>, %565, %cst_10 [1] : vector<20x32xf32> to vector<20xf32>
    %567 = vector.shape_cast %566 : vector<20xf32> to vector<20x1xf32>
    %cst_11 = arith.constant 3.200000e+01 : f32
    %568 = vector.broadcast %cst_11 : f32 to vector<20x1xf32>
    %569 = arith.divf %567, %568 : vector<20x1xf32>
    %cst_12 = arith.constant 9.99999974E-6 : f32
    %570 = vector.broadcast %cst_12 : f32 to vector<20x1xf32>
    %571 = arith.addf %569, %570 : vector<20x1xf32>
    %572 = math.rsqrt %571 : vector<20x1xf32>
    %573 = vector.broadcast %572 : vector<20x1xf32> to vector<20x32xf32>
    %574 = arith.mulf %564, %573 : vector<20x32xf32>
    %575 = vector.broadcast %557 : vector<1x32xf32> to vector<20x32xf32>
    %576 = arith.mulf %574, %575 : vector<20x32xf32>
    %577 = vector.broadcast %558 : vector<1x32xf32> to vector<20x32xf32>
    %578 = arith.addf %576, %577 : vector<20x32xf32>
    %579 = arith.truncf %578 : vector<20x32xf32> to vector<20x32xbf16>
    %c0_13 = arith.constant 0 : index
    %c0_14 = arith.constant 0 : index
    %580 = vector.load %arg10[%c0_13, %c0_14] : memref<32x64xbf16, #tpu.memory_space<vmem>>, vector<32x64xbf16>
    %cst_15 = arith.constant dense<0.000000e+00> : vector<20x64xf32>
    %581 = tpu.matmul %579, %580, %cst_15 {dimension_numbers = #tpu.dot_dimension_numbers<[1], [0], [0], [1], [0, 0, 1, 1], [], []>} : vector<20x32xbf16>, vector<32x64xbf16>, vector<20x64xf32> -> vector<20x64xf32>
    %c0_16 = arith.constant 0 : index
    %c0_17 = arith.constant 0 : index
    %582 = vector.load %arg11[%c0_16, %c0_17] : memref<1x64xf32, #tpu.memory_space<vmem>>, vector<1x64xf32>
    %583 = vector.broadcast %582 : vector<1x64xf32> to vector<20x64xf32>
    %584 = arith.addf %581, %583 : vector<20x64xf32>
    %585 = vector.extract_strided_slice %584 {offsets = [0, 0], sizes = [20, 32], strides = [1, 1]} : vector<20x64xf32> to vector<20x32xf32>
    %586 = vector.extract_strided_slice %584 {offsets = [0, 32], sizes = [20, 32], strides = [1, 1]} : vector<20x64xf32> to vector<20x32xf32>
    %c0_18 = arith.constant 0 : index
    %c0_19 = arith.constant 0 : index
    %587 = vector.load %arg1[%c0_18, %c0_19] : memref<2x32xf32, #tpu.memory_space<vmem>>, vector<2x32xf32>
    %c0_20 = arith.constant 0 : index
    %c0_21 = arith.constant 0 : index
    %588 = vector.load %arg4[%c0_20, %c0_21] : memref<1x32xf32, #tpu.memory_space<vmem>>, vector<1x32xf32>
    %c0_22 = arith.constant 0 : index
    %c0_23 = arith.constant 0 : index
    %589 = vector.load %arg5[%c0_22, %c0_23] : memref<1x32xf32, #tpu.memory_space<vmem>>, vector<1x32xf32>
    %cst_24 = arith.constant dense<0.000000e+00> : vector<2xf32>
    %590 = vector.multi_reduction <add>, %587, %cst_24 [1] : vector<2x32xf32> to vector<2xf32>
    %591 = vector.shape_cast %590 : vector<2xf32> to vector<2x1xf32>
    %cst_25 = arith.constant 3.200000e+01 : f32
    %592 = vector.broadcast %cst_25 : f32 to vector<2x1xf32>
    %593 = arith.divf %591, %592 : vector<2x1xf32>
    %594 = vector.broadcast %593 : vector<2x1xf32> to vector<2x32xf32>
    %595 = arith.subf %587, %594 : vector<2x32xf32>
    %596 = arith.mulf %595, %595 : vector<2x32xf32>
    %cst_26 = arith.constant dense<0.000000e+00> : vector<2xf32>
    %597 = vector.multi_reduction <add>, %596, %cst_26 [1] : vector<2x32xf32> to vector<2xf32>
    %598 = vector.shape_cast %597 : vector<2xf32> to vector<2x1xf32>
    %cst_27 = arith.constant 3.200000e+01 : f32
    %599 = vector.broadcast %cst_27 : f32 to vector<2x1xf32>
    %600 = arith.divf %598, %599 : vector<2x1xf32>
    %cst_28 = arith.constant 9.99999974E-6 : f32
    %601 = vector.broadcast %cst_28 : f32 to vector<2x1xf32>
    %602 = arith.addf %600, %601 : vector<2x1xf32>
    %603 = math.rsqrt %602 : vector<2x1xf32>
    %604 = vector.broadcast %603 : vector<2x1xf32> to vector<2x32xf32>
    %605 = arith.mulf %595, %604 : vector<2x32xf32>
    %606 = vector.broadcast %588 : vector<1x32xf32> to vector<2x32xf32>
    %607 = arith.mulf %605, %606 : vector<2x32xf32>
    %608 = vector.broadcast %589 : vector<1x32xf32> to vector<2x32xf32>
    %609 = arith.addf %607, %608 : vector<2x32xf32>
    %610 = arith.truncf %609 : vector<2x32xf32> to vector<2x32xbf16>
    %c0_29 = arith.constant 0 : index
    %c0_30 = arith.constant 0 : index
    %611 = vector.load %arg8[%c0_29, %c0_30] : memref<32x32xbf16, #tpu.memory_space<vmem>>, vector<32x32xbf16>
    %cst_31 = arith.constant dense<0.000000e+00> : vector<2x32xf32>
    %612 = tpu.matmul %610, %611, %cst_31 {dimension_numbers = #tpu.dot_dimension_numbers<[1], [0], [0], [1], [0, 0, 1, 1], [], []>} : vector<2x32xbf16>, vector<32x32xbf16>, vector<2x32xf32> -> vector<2x32xf32>
    %c0_32 = arith.constant 0 : index
    %c0_33 = arith.constant 0 : index
    %613 = vector.load %arg9[%c0_32, %c0_33] : memref<1x32xf32, #tpu.memory_space<vmem>>, vector<1x32xf32>
    %614 = vector.broadcast %613 : vector<1x32xf32> to vector<2x32xf32>
    %615 = arith.addf %612, %614 : vector<2x32xf32>
    %616 = vector.extract_strided_slice %585 {offsets = [0, 0], sizes = [10, 32], strides = [1, 1]} : vector<20x32xf32> to vector<10x32xf32>
    %617 = vector.extract_strided_slice %586 {offsets = [0, 0], sizes = [10, 32], strides = [1, 1]} : vector<20x32xf32> to vector<10x32xf32>
    %618 = vector.extract_strided_slice %615 {offsets = [0, 0], sizes = [1, 8], strides = [1, 1]} : vector<2x32xf32> to vector<1x8xf32>
    %619 = vector.extract_strided_slice %616 {offsets = [0, 0], sizes = [10, 8], strides = [1, 1]} : vector<10x32xf32> to vector<10x8xf32>
    %620 = vector.extract_strided_slice %617 {offsets = [0, 0], sizes = [10, 8], strides = [1, 1]} : vector<10x32xf32> to vector<10x8xf32>
    %621 = vector.broadcast %618 : vector<1x8xf32> to vector<10x8xf32>
    %622 = arith.mulf %621, %619 : vector<10x8xf32>
    %cst_34 = arith.constant dense<0.000000e+00> : vector<10xf32>
    %623 = vector.multi_reduction <add>, %622, %cst_34 [1] : vector<10x8xf32> to vector<10xf32>
    %624 = vector.shape_cast %623 : vector<10xf32> to vector<10x1xf32>
    %cst_35 = arith.constant 0.353553385 : f32
    %625 = vector.broadcast %cst_35 : f32 to vector<10x1xf32>
    %626 = arith.mulf %624, %625 : vector<10x1xf32>
    %cst_36 = arith.constant dense<0xFF800000> : vector<1xf32>
    %627 = vector.multi_reduction <maximumf>, %626, %cst_36 [0] : vector<10x1xf32> to vector<1xf32>
    %628 = vector.shape_cast %627 : vector<1xf32> to vector<1x1xf32>
    %629 = vector.broadcast %628 : vector<1x1xf32> to vector<10x1xf32>
    %630 = arith.subf %626, %629 : vector<10x1xf32>
    %631 = math.exp %630 : vector<10x1xf32>
    %cst_37 = arith.constant dense<0.000000e+00> : vector<1xf32>
    %632 = vector.multi_reduction <add>, %631, %cst_37 [0] : vector<10x1xf32> to vector<1xf32>
    %633 = vector.shape_cast %632 : vector<1xf32> to vector<1x1xf32>
    %634 = tpu.reciprocal %633 {approx = true} : vector<1x1xf32> -> vector<1x1xf32>
    %635 = vector.broadcast %634 : vector<1x1xf32> to vector<10x1xf32>
    %636 = arith.mulf %631, %635 : vector<10x1xf32>
    %637 = vector.broadcast %636 : vector<10x1xf32> to vector<10x8xf32>
    %638 = arith.mulf %637, %620 : vector<10x8xf32>
    %cst_38 = arith.constant dense<0.000000e+00> : vector<8xf32>
    %639 = vector.multi_reduction <add>, %638, %cst_38 [0] : vector<10x8xf32> to vector<8xf32>
    %640 = vector.shape_cast %639 : vector<8xf32> to vector<1x8xf32>
    %641 = vector.extract_strided_slice %615 {offsets = [0, 8], sizes = [1, 8], strides = [1, 1]} : vector<2x32xf32> to vector<1x8xf32>
    %642 = vector.extract_strided_slice %616 {offsets = [0, 8], sizes = [10, 8], strides = [1, 1]} : vector<10x32xf32> to vector<10x8xf32>
    %643 = vector.extract_strided_slice %617 {offsets = [0, 8], sizes = [10, 8], strides = [1, 1]} : vector<10x32xf32> to vector<10x8xf32>
    %644 = vector.broadcast %641 : vector<1x8xf32> to vector<10x8xf32>
    %645 = arith.mulf %644, %642 : vector<10x8xf32>
    %cst_39 = arith.constant dense<0.000000e+00> : vector<10xf32>
    %646 = vector.multi_reduction <add>, %645, %cst_39 [1] : vector<10x8xf32> to vector<10xf32>
    %647 = vector.shape_cast %646 : vector<10xf32> to vector<10x1xf32>
    %cst_40 = arith.constant 0.353553385 : f32
    %648 = vector.broadcast %cst_40 : f32 to vector<10x1xf32>
    %649 = arith.mulf %647, %648 : vector<10x1xf32>
    %cst_41 = arith.constant dense<0xFF800000> : vector<1xf32>
    %650 = vector.multi_reduction <maximumf>, %649, %cst_41 [0] : vector<10x1xf32> to vector<1xf32>
    %651 = vector.shape_cast %650 : vector<1xf32> to vector<1x1xf32>
    %652 = vector.broadcast %651 : vector<1x1xf32> to vector<10x1xf32>
    %653 = arith.subf %649, %652 : vector<10x1xf32>
    %654 = math.exp %653 : vector<10x1xf32>
    %cst_42 = arith.constant dense<0.000000e+00> : vector<1xf32>
    %655 = vector.multi_reduction <add>, %654, %cst_42 [0] : vector<10x1xf32> to vector<1xf32>
    %656 = vector.shape_cast %655 : vector<1xf32> to vector<1x1xf32>
    %657 = tpu.reciprocal %656 {approx = true} : vector<1x1xf32> -> vector<1x1xf32>
    %658 = vector.broadcast %657 : vector<1x1xf32> to vector<10x1xf32>
    %659 = arith.mulf %654, %658 : vector<10x1xf32>
    %660 = vector.broadcast %659 : vector<10x1xf32> to vector<10x8xf32>
    %661 = arith.mulf %660, %643 : vector<10x8xf32>
    %cst_43 = arith.constant dense<0.000000e+00> : vector<8xf32>
    %662 = vector.multi_reduction <add>, %661, %cst_43 [0] : vector<10x8xf32> to vector<8xf32>
    %663 = vector.shape_cast %662 : vector<8xf32> to vector<1x8xf32>
    %664 = vector.extract_strided_slice %615 {offsets = [0, 16], sizes = [1, 8], strides = [1, 1]} : vector<2x32xf32> to vector<1x8xf32>
    %665 = vector.extract_strided_slice %616 {offsets = [0, 16], sizes = [10, 8], strides = [1, 1]} : vector<10x32xf32> to vector<10x8xf32>
    %666 = vector.extract_strided_slice %617 {offsets = [0, 16], sizes = [10, 8], strides = [1, 1]} : vector<10x32xf32> to vector<10x8xf32>
    %667 = vector.broadcast %664 : vector<1x8xf32> to vector<10x8xf32>
    %668 = arith.mulf %667, %665 : vector<10x8xf32>
    %cst_44 = arith.constant dense<0.000000e+00> : vector<10xf32>
    %669 = vector.multi_reduction <add>, %668, %cst_44 [1] : vector<10x8xf32> to vector<10xf32>
    %670 = vector.shape_cast %669 : vector<10xf32> to vector<10x1xf32>
    %cst_45 = arith.constant 0.353553385 : f32
    %671 = vector.broadcast %cst_45 : f32 to vector<10x1xf32>
    %672 = arith.mulf %670, %671 : vector<10x1xf32>
    %cst_46 = arith.constant dense<0xFF800000> : vector<1xf32>
    %673 = vector.multi_reduction <maximumf>, %672, %cst_46 [0] : vector<10x1xf32> to vector<1xf32>
    %674 = vector.shape_cast %673 : vector<1xf32> to vector<1x1xf32>
    %675 = vector.broadcast %674 : vector<1x1xf32> to vector<10x1xf32>
    %676 = arith.subf %672, %675 : vector<10x1xf32>
    %677 = math.exp %676 : vector<10x1xf32>
    %cst_47 = arith.constant dense<0.000000e+00> : vector<1xf32>
    %678 = vector.multi_reduction <add>, %677, %cst_47 [0] : vector<10x1xf32> to vector<1xf32>
    %679 = vector.shape_cast %678 : vector<1xf32> to vector<1x1xf32>
    %680 = tpu.reciprocal %679 {approx = true} : vector<1x1xf32> -> vector<1x1xf32>
    %681 = vector.broadcast %680 : vector<1x1xf32> to vector<10x1xf32>
    %682 = arith.mulf %677, %681 : vector<10x1xf32>
    %683 = vector.broadcast %682 : vector<10x1xf32> to vector<10x8xf32>
    %684 = arith.mulf %683, %666 : vector<10x8xf32>
    %cst_48 = arith.constant dense<0.000000e+00> : vector<8xf32>
    %685 = vector.multi_reduction <add>, %684, %cst_48 [0] : vector<10x8xf32> to vector<8xf32>
    %686 = vector.shape_cast %685 : vector<8xf32> to vector<1x8xf32>
    %687 = vector.extract_strided_slice %615 {offsets = [0, 24], sizes = [1, 8], strides = [1, 1]} : vector<2x32xf32> to vector<1x8xf32>
    %688 = vector.extract_strided_slice %616 {offsets = [0, 24], sizes = [10, 8], strides = [1, 1]} : vector<10x32xf32> to vector<10x8xf32>
    %689 = vector.extract_strided_slice %617 {offsets = [0, 24], sizes = [10, 8], strides = [1, 1]} : vector<10x32xf32> to vector<10x8xf32>
    %690 = vector.broadcast %687 : vector<1x8xf32> to vector<10x8xf32>
    %691 = arith.mulf %690, %688 : vector<10x8xf32>
    %cst_49 = arith.constant dense<0.000000e+00> : vector<10xf32>
    %692 = vector.multi_reduction <add>, %691, %cst_49 [1] : vector<10x8xf32> to vector<10xf32>
    %693 = vector.shape_cast %692 : vector<10xf32> to vector<10x1xf32>
    %cst_50 = arith.constant 0.353553385 : f32
    %694 = vector.broadcast %cst_50 : f32 to vector<10x1xf32>
    %695 = arith.mulf %693, %694 : vector<10x1xf32>
    %cst_51 = arith.constant dense<0xFF800000> : vector<1xf32>
    %696 = vector.multi_reduction <maximumf>, %695, %cst_51 [0] : vector<10x1xf32> to vector<1xf32>
    %697 = vector.shape_cast %696 : vector<1xf32> to vector<1x1xf32>
    %698 = vector.broadcast %697 : vector<1x1xf32> to vector<10x1xf32>
    %699 = arith.subf %695, %698 : vector<10x1xf32>
    %700 = math.exp %699 : vector<10x1xf32>
    %cst_52 = arith.constant dense<0.000000e+00> : vector<1xf32>
    %701 = vector.multi_reduction <add>, %700, %cst_52 [0] : vector<10x1xf32> to vector<1xf32>
    %702 = vector.shape_cast %701 : vector<1xf32> to vector<1x1xf32>
    %703 = tpu.reciprocal %702 {approx = true} : vector<1x1xf32> -> vector<1x1xf32>
    %704 = vector.broadcast %703 : vector<1x1xf32> to vector<10x1xf32>
    %705 = arith.mulf %700, %704 : vector<10x1xf32>
    %706 = vector.broadcast %705 : vector<10x1xf32> to vector<10x8xf32>
    %707 = arith.mulf %706, %689 : vector<10x8xf32>
    %cst_53 = arith.constant dense<0.000000e+00> : vector<8xf32>
    %708 = vector.multi_reduction <add>, %707, %cst_53 [0] : vector<10x8xf32> to vector<8xf32>
    %709 = vector.shape_cast %708 : vector<8xf32> to vector<1x8xf32>
    %710 = tpu.concatenate %640, %663, %686, %709 in 1 : vector<1x8xf32>, vector<1x8xf32>, vector<1x8xf32>, vector<1x8xf32> -> vector<1x32xf32>
    %711 = vector.extract_strided_slice %585 {offsets = [10, 0], sizes = [10, 32], strides = [1, 1]} : vector<20x32xf32> to vector<10x32xf32>
    %712 = vector.extract_strided_slice %586 {offsets = [10, 0], sizes = [10, 32], strides = [1, 1]} : vector<20x32xf32> to vector<10x32xf32>
    %713 = vector.extract_strided_slice %615 {offsets = [1, 0], sizes = [1, 8], strides = [1, 1]} : vector<2x32xf32> to vector<1x8xf32>
    %714 = vector.extract_strided_slice %711 {offsets = [0, 0], sizes = [10, 8], strides = [1, 1]} : vector<10x32xf32> to vector<10x8xf32>
    %715 = vector.extract_strided_slice %712 {offsets = [0, 0], sizes = [10, 8], strides = [1, 1]} : vector<10x32xf32> to vector<10x8xf32>
    %716 = vector.broadcast %713 : vector<1x8xf32> to vector<10x8xf32>
    %717 = arith.mulf %716, %714 : vector<10x8xf32>
    %cst_54 = arith.constant dense<0.000000e+00> : vector<10xf32>
    %718 = vector.multi_reduction <add>, %717, %cst_54 [1] : vector<10x8xf32> to vector<10xf32>
    %719 = vector.shape_cast %718 : vector<10xf32> to vector<10x1xf32>
    %cst_55 = arith.constant 0.353553385 : f32
    %720 = vector.broadcast %cst_55 : f32 to vector<10x1xf32>
    %721 = arith.mulf %719, %720 : vector<10x1xf32>
    %cst_56 = arith.constant dense<0xFF800000> : vector<1xf32>
    %722 = vector.multi_reduction <maximumf>, %721, %cst_56 [0] : vector<10x1xf32> to vector<1xf32>
    %723 = vector.shape_cast %722 : vector<1xf32> to vector<1x1xf32>
    %724 = vector.broadcast %723 : vector<1x1xf32> to vector<10x1xf32>
    %725 = arith.subf %721, %724 : vector<10x1xf32>
    %726 = math.exp %725 : vector<10x1xf32>
    %cst_57 = arith.constant dense<0.000000e+00> : vector<1xf32>
    %727 = vector.multi_reduction <add>, %726, %cst_57 [0] : vector<10x1xf32> to vector<1xf32>
    %728 = vector.shape_cast %727 : vector<1xf32> to vector<1x1xf32>
    %729 = tpu.reciprocal %728 {approx = true} : vector<1x1xf32> -> vector<1x1xf32>
    %730 = vector.broadcast %729 : vector<1x1xf32> to vector<10x1xf32>
    %731 = arith.mulf %726, %730 : vector<10x1xf32>
    %732 = vector.broadcast %731 : vector<10x1xf32> to vector<10x8xf32>
    %733 = arith.mulf %732, %715 : vector<10x8xf32>
    %cst_58 = arith.constant dense<0.000000e+00> : vector<8xf32>
    %734 = vector.multi_reduction <add>, %733, %cst_58 [0] : vector<10x8xf32> to vector<8xf32>
    %735 = vector.shape_cast %734 : vector<8xf32> to vector<1x8xf32>
    %736 = vector.extract_strided_slice %615 {offsets = [1, 8], sizes = [1, 8], strides = [1, 1]} : vector<2x32xf32> to vector<1x8xf32>
    %737 = vector.extract_strided_slice %711 {offsets = [0, 8], sizes = [10, 8], strides = [1, 1]} : vector<10x32xf32> to vector<10x8xf32>
    %738 = vector.extract_strided_slice %712 {offsets = [0, 8], sizes = [10, 8], strides = [1, 1]} : vector<10x32xf32> to vector<10x8xf32>
    %739 = vector.broadcast %736 : vector<1x8xf32> to vector<10x8xf32>
    %740 = arith.mulf %739, %737 : vector<10x8xf32>
    %cst_59 = arith.constant dense<0.000000e+00> : vector<10xf32>
    %741 = vector.multi_reduction <add>, %740, %cst_59 [1] : vector<10x8xf32> to vector<10xf32>
    %742 = vector.shape_cast %741 : vector<10xf32> to vector<10x1xf32>
    %cst_60 = arith.constant 0.353553385 : f32
    %743 = vector.broadcast %cst_60 : f32 to vector<10x1xf32>
    %744 = arith.mulf %742, %743 : vector<10x1xf32>
    %cst_61 = arith.constant dense<0xFF800000> : vector<1xf32>
    %745 = vector.multi_reduction <maximumf>, %744, %cst_61 [0] : vector<10x1xf32> to vector<1xf32>
    %746 = vector.shape_cast %745 : vector<1xf32> to vector<1x1xf32>
    %747 = vector.broadcast %746 : vector<1x1xf32> to vector<10x1xf32>
    %748 = arith.subf %744, %747 : vector<10x1xf32>
    %749 = math.exp %748 : vector<10x1xf32>
    %cst_62 = arith.constant dense<0.000000e+00> : vector<1xf32>
    %750 = vector.multi_reduction <add>, %749, %cst_62 [0] : vector<10x1xf32> to vector<1xf32>
    %751 = vector.shape_cast %750 : vector<1xf32> to vector<1x1xf32>
    %752 = tpu.reciprocal %751 {approx = true} : vector<1x1xf32> -> vector<1x1xf32>
    %753 = vector.broadcast %752 : vector<1x1xf32> to vector<10x1xf32>
    %754 = arith.mulf %749, %753 : vector<10x1xf32>
    %755 = vector.broadcast %754 : vector<10x1xf32> to vector<10x8xf32>
    %756 = arith.mulf %755, %738 : vector<10x8xf32>
    %cst_63 = arith.constant dense<0.000000e+00> : vector<8xf32>
    %757 = vector.multi_reduction <add>, %756, %cst_63 [0] : vector<10x8xf32> to vector<8xf32>
    %758 = vector.shape_cast %757 : vector<8xf32> to vector<1x8xf32>
    %759 = vector.extract_strided_slice %615 {offsets = [1, 16], sizes = [1, 8], strides = [1, 1]} : vector<2x32xf32> to vector<1x8xf32>
    %760 = vector.extract_strided_slice %711 {offsets = [0, 16], sizes = [10, 8], strides = [1, 1]} : vector<10x32xf32> to vector<10x8xf32>
    %761 = vector.extract_strided_slice %712 {offsets = [0, 16], sizes = [10, 8], strides = [1, 1]} : vector<10x32xf32> to vector<10x8xf32>
    %762 = vector.broadcast %759 : vector<1x8xf32> to vector<10x8xf32>
    %763 = arith.mulf %762, %760 : vector<10x8xf32>
    %cst_64 = arith.constant dense<0.000000e+00> : vector<10xf32>
    %764 = vector.multi_reduction <add>, %763, %cst_64 [1] : vector<10x8xf32> to vector<10xf32>
    %765 = vector.shape_cast %764 : vector<10xf32> to vector<10x1xf32>
    %cst_65 = arith.constant 0.353553385 : f32
    %766 = vector.broadcast %cst_65 : f32 to vector<10x1xf32>
    %767 = arith.mulf %765, %766 : vector<10x1xf32>
    %cst_66 = arith.constant dense<0xFF800000> : vector<1xf32>
    %768 = vector.multi_reduction <maximumf>, %767, %cst_66 [0] : vector<10x1xf32> to vector<1xf32>
    %769 = vector.shape_cast %768 : vector<1xf32> to vector<1x1xf32>
    %770 = vector.broadcast %769 : vector<1x1xf32> to vector<10x1xf32>
    %771 = arith.subf %767, %770 : vector<10x1xf32>
    %772 = math.exp %771 : vector<10x1xf32>
    %cst_67 = arith.constant dense<0.000000e+00> : vector<1xf32>
    %773 = vector.multi_reduction <add>, %772, %cst_67 [0] : vector<10x1xf32> to vector<1xf32>
    %774 = vector.shape_cast %773 : vector<1xf32> to vector<1x1xf32>
    %775 = tpu.reciprocal %774 {approx = true} : vector<1x1xf32> -> vector<1x1xf32>
    %776 = vector.broadcast %775 : vector<1x1xf32> to vector<10x1xf32>
    %777 = arith.mulf %772, %776 : vector<10x1xf32>
    %778 = vector.broadcast %777 : vector<10x1xf32> to vector<10x8xf32>
    %779 = arith.mulf %778, %761 : vector<10x8xf32>
    %cst_68 = arith.constant dense<0.000000e+00> : vector<8xf32>
    %780 = vector.multi_reduction <add>, %779, %cst_68 [0] : vector<10x8xf32> to vector<8xf32>
    %781 = vector.shape_cast %780 : vector<8xf32> to vector<1x8xf32>
    %782 = vector.extract_strided_slice %615 {offsets = [1, 24], sizes = [1, 8], strides = [1, 1]} : vector<2x32xf32> to vector<1x8xf32>
    %783 = vector.extract_strided_slice %711 {offsets = [0, 24], sizes = [10, 8], strides = [1, 1]} : vector<10x32xf32> to vector<10x8xf32>
    %784 = vector.extract_strided_slice %712 {offsets = [0, 24], sizes = [10, 8], strides = [1, 1]} : vector<10x32xf32> to vector<10x8xf32>
    %785 = vector.broadcast %782 : vector<1x8xf32> to vector<10x8xf32>
    %786 = arith.mulf %785, %783 : vector<10x8xf32>
    %cst_69 = arith.constant dense<0.000000e+00> : vector<10xf32>
    %787 = vector.multi_reduction <add>, %786, %cst_69 [1] : vector<10x8xf32> to vector<10xf32>
    %788 = vector.shape_cast %787 : vector<10xf32> to vector<10x1xf32>
    %cst_70 = arith.constant 0.353553385 : f32
    %789 = vector.broadcast %cst_70 : f32 to vector<10x1xf32>
    %790 = arith.mulf %788, %789 : vector<10x1xf32>
    %cst_71 = arith.constant dense<0xFF800000> : vector<1xf32>
    %791 = vector.multi_reduction <maximumf>, %790, %cst_71 [0] : vector<10x1xf32> to vector<1xf32>
    %792 = vector.shape_cast %791 : vector<1xf32> to vector<1x1xf32>
    %793 = vector.broadcast %792 : vector<1x1xf32> to vector<10x1xf32>
    %794 = arith.subf %790, %793 : vector<10x1xf32>
    %795 = math.exp %794 : vector<10x1xf32>
    %cst_72 = arith.constant dense<0.000000e+00> : vector<1xf32>
    %796 = vector.multi_reduction <add>, %795, %cst_72 [0] : vector<10x1xf32> to vector<1xf32>
    %797 = vector.shape_cast %796 : vector<1xf32> to vector<1x1xf32>
    %798 = tpu.reciprocal %797 {approx = true} : vector<1x1xf32> -> vector<1x1xf32>
    %799 = vector.broadcast %798 : vector<1x1xf32> to vector<10x1xf32>
    %800 = arith.mulf %795, %799 : vector<10x1xf32>
    %801 = vector.broadcast %800 : vector<10x1xf32> to vector<10x8xf32>
    %802 = arith.mulf %801, %784 : vector<10x8xf32>
    %cst_73 = arith.constant dense<0.000000e+00> : vector<8xf32>
    %803 = vector.multi_reduction <add>, %802, %cst_73 [0] : vector<10x8xf32> to vector<8xf32>
    %804 = vector.shape_cast %803 : vector<8xf32> to vector<1x8xf32>
    %805 = tpu.concatenate %735, %758, %781, %804 in 1 : vector<1x8xf32>, vector<1x8xf32>, vector<1x8xf32>, vector<1x8xf32> -> vector<1x32xf32>
    %806 = tpu.concatenate %710, %805 in 0 : vector<1x32xf32>, vector<1x32xf32> -> vector<2x32xf32>
    %807 = arith.truncf %806 : vector<2x32xf32> to vector<2x32xbf16>
    %c0_74 = arith.constant 0 : index
    %c0_75 = arith.constant 0 : index
    %808 = vector.load %arg12[%c0_74, %c0_75] : memref<32x32xbf16, #tpu.memory_space<vmem>>, vector<32x32xbf16>
    %cst_76 = arith.constant dense<0.000000e+00> : vector<2x32xf32>
    %809 = tpu.matmul %807, %808, %cst_76 {dimension_numbers = #tpu.dot_dimension_numbers<[1], [0], [0], [1], [0, 0, 1, 1], [], []>} : vector<2x32xbf16>, vector<32x32xbf16>, vector<2x32xf32> -> vector<2x32xf32>
    %c0_77 = arith.constant 0 : index
    %c0_78 = arith.constant 0 : index
    %810 = vector.load %arg13[%c0_77, %c0_78] : memref<1x32xf32, #tpu.memory_space<vmem>>, vector<1x32xf32>
    %811 = vector.broadcast %810 : vector<1x32xf32> to vector<2x32xf32>
    %812 = arith.addf %809, %811 : vector<2x32xf32>
    %813 = arith.addf %587, %812 : vector<2x32xf32>
    %c0_79 = arith.constant 0 : index
    %c0_80 = arith.constant 0 : index
    %814 = vector.load %arg14[%c0_79, %c0_80] : memref<1x32xf32, #tpu.memory_space<vmem>>, vector<1x32xf32>
    %c0_81 = arith.constant 0 : index
    %c0_82 = arith.constant 0 : index
    %815 = vector.load %arg15[%c0_81, %c0_82] : memref<1x32xf32, #tpu.memory_space<vmem>>, vector<1x32xf32>
    %cst_83 = arith.constant dense<0.000000e+00> : vector<2xf32>
    %816 = vector.multi_reduction <add>, %813, %cst_83 [1] : vector<2x32xf32> to vector<2xf32>
    %817 = vector.shape_cast %816 : vector<2xf32> to vector<2x1xf32>
    %cst_84 = arith.constant 3.200000e+01 : f32
    %818 = vector.broadcast %cst_84 : f32 to vector<2x1xf32>
    %819 = arith.divf %817, %818 : vector<2x1xf32>
    %820 = vector.broadcast %819 : vector<2x1xf32> to vector<2x32xf32>
    %821 = arith.subf %813, %820 : vector<2x32xf32>
    %822 = arith.mulf %821, %821 : vector<2x32xf32>
    %cst_85 = arith.constant dense<0.000000e+00> : vector<2xf32>
    %823 = vector.multi_reduction <add>, %822, %cst_85 [1] : vector<2x32xf32> to vector<2xf32>
    %824 = vector.shape_cast %823 : vector<2xf32> to vector<2x1xf32>
    %cst_86 = arith.constant 3.200000e+01 : f32
    %825 = vector.broadcast %cst_86 : f32 to vector<2x1xf32>
    %826 = arith.divf %824, %825 : vector<2x1xf32>
    %cst_87 = arith.constant 9.99999974E-6 : f32
    %827 = vector.broadcast %cst_87 : f32 to vector<2x1xf32>
    %828 = arith.addf %826, %827 : vector<2x1xf32>
    %829 = math.rsqrt %828 : vector<2x1xf32>
    %830 = vector.broadcast %829 : vector<2x1xf32> to vector<2x32xf32>
    %831 = arith.mulf %821, %830 : vector<2x32xf32>
    %832 = vector.broadcast %814 : vector<1x32xf32> to vector<2x32xf32>
    %833 = arith.mulf %831, %832 : vector<2x32xf32>
    %834 = vector.broadcast %815 : vector<1x32xf32> to vector<2x32xf32>
    %835 = arith.addf %833, %834 : vector<2x32xf32>
    %836 = arith.truncf %835 : vector<2x32xf32> to vector<2x32xbf16>
    %c0_88 = arith.constant 0 : index
    %c0_89 = arith.constant 0 : index
    %837 = vector.load %arg16[%c0_88, %c0_89] : memref<32x128xbf16, #tpu.memory_space<vmem>>, vector<32x128xbf16>
    %cst_90 = arith.constant dense<0.000000e+00> : vector<2x128xf32>
    %838 = tpu.matmul %836, %837, %cst_90 {dimension_numbers = #tpu.dot_dimension_numbers<[1], [0], [0], [1], [0, 0, 1, 1], [], []>} : vector<2x32xbf16>, vector<32x128xbf16>, vector<2x128xf32> -> vector<2x128xf32>
    %c0_91 = arith.constant 0 : index
    %c0_92 = arith.constant 0 : index
    %839 = vector.load %arg17[%c0_91, %c0_92] : memref<1x128xf32, #tpu.memory_space<vmem>>, vector<1x128xf32>
    %840 = vector.broadcast %839 : vector<1x128xf32> to vector<2x128xf32>
    %841 = arith.addf %838, %840 : vector<2x128xf32>
    %cst_93 = arith.constant -1.702000e+00 : f32
    %842 = vector.broadcast %cst_93 : f32 to vector<2x128xf32>
    %843 = arith.mulf %842, %841 : vector<2x128xf32>
    %844 = math.exp %843 : vector<2x128xf32>
    %cst_94 = arith.constant 1.000000e+00 : f32
    %845 = vector.broadcast %cst_94 : f32 to vector<2x128xf32>
    %846 = arith.addf %845, %844 : vector<2x128xf32>
    %cst_95 = arith.constant 1.000000e+00 : f32
    %847 = vector.broadcast %cst_95 : f32 to vector<2x128xf32>
    %848 = arith.divf %847, %846 : vector<2x128xf32>
    %849 = arith.mulf %841, %848 : vector<2x128xf32>
    %850 = arith.truncf %849 : vector<2x128xf32> to vector<2x128xbf16>
    %c0_96 = arith.constant 0 : index
    %c0_97 = arith.constant 0 : index
    %851 = vector.load %arg18[%c0_96, %c0_97] : memref<128x32xbf16, #tpu.memory_space<vmem>>, vector<128x32xbf16>
    %cst_98 = arith.constant dense<0.000000e+00> : vector<2x32xf32>
    %852 = tpu.matmul %850, %851, %cst_98 {dimension_numbers = #tpu.dot_dimension_numbers<[1], [0], [0], [1], [0, 0, 1, 1], [], []>} : vector<2x128xbf16>, vector<128x32xbf16>, vector<2x32xf32> -> vector<2x32xf32>
    %c0_99 = arith.constant 0 : index
    %c0_100 = arith.constant 0 : index
    %853 = vector.load %arg19[%c0_99, %c0_100] : memref<1x32xf32, #tpu.memory_space<vmem>>, vector<1x32xf32>
    %854 = vector.broadcast %853 : vector<1x32xf32> to vector<2x32xf32>
    %855 = arith.addf %852, %854 : vector<2x32xf32>
    %856 = arith.addf %813, %855 : vector<2x32xf32>
    %c0_101 = arith.constant 0 : index
    %c0_102 = arith.constant 0 : index
    %857 = vector.load %arg20[%c0_101, %c0_102] : memref<2x32xf32, #tpu.memory_space<vmem>>, vector<2x32xf32>
    tpu.vector_store %arg20[%c0_101, %c0_102], %856 {strides = array<i32>} : memref<2x32xf32, #tpu.memory_space<vmem>>, vector<2x32xf32>,
    return
  }
}

</mosaic_0001>

<llo_original>
// kernel: vision_transformer_forward.5
$region0: #{vision_transformer_forward.5}
  #allocation0 [shape = 'u32[]', space=smem, size = 0x4, offset = 0x4, fixed_abs, tag = 'smem constant byte address 0x4 - core index']
  #allocation1 [shape = 'u32[72,128]{1,0:T(1,128)}', space=vmem, size = 0x9000, scoped, tag = 'internal scratch']
  %s0 = inlined_call_operand.vmem [shape: f32[16,192], index: 0, kind: input, shape index: {}]
  %s1 = inlined_call_operand.vmem [shape: bf16[192,32], index: 1, kind: input, shape index: {}]
  %s2 = inlined_call_operand.vmem [shape: f32[5,32], index: 2, kind: input, shape index: {}]
  %s3 = inlined_call_operand.vmem [shape: f32[1,32], index: 3, kind: input, shape index: {}]
  %s4 = inlined_call_operand.vmem [shape: f32[1,32], index: 4, kind: input, shape index: {}]
  %s5 = inlined_call_operand.vmem [shape: bf16[20,32], index: 5, kind: output, shape index: {}]
  %s6 = sld [smem:[#allocation0]]
  $region30: #{vision_transformer_forward.5} parent=0
    _
  %s8 = ssub.s32 1, %s6
  %s9 = scalar_select 0, %s8, %s6
  // Predicated region
  $region2: #{vision_transformer_forward.5} parent=0 // pred_check
    _
  $region3: #{vision_transformer_forward.5} parent=0 // pred_check_branch
    %11 = sbr.rel (0) target = $region5
  $region4: #{vision_transformer_forward.5} parent=0 // pred_region
    _
  $region5: #{vision_transformer_forward.5} parent=0 // pred_fallthru
    _
  // Predicated region
  $region6: #{vision_transformer_forward.5} parent=0 // pred_check
    _
  $region7: #{vision_transformer_forward.5} parent=0 // pred_check_branch
    %13 = sbr.rel (0) target = $region9
  $region8: #{vision_transformer_forward.5} parent=0 // pred_region
    _
  $region9: #{vision_transformer_forward.5} parent=0 // pred_fallthru
    _
  // Predicated region
  $region10: #{vision_transformer_forward.5} parent=0 // pred_check
    _
  $region11: #{vision_transformer_forward.5} parent=0 // pred_check_branch
    %15 = sbr.rel (0) target = $region13
  $region12: #{vision_transformer_forward.5} parent=0 // pred_region
    _
  $region13: #{vision_transformer_forward.5} parent=0 // pred_fallthru
    _
  // Predicated region
  $region14: #{vision_transformer_forward.5} parent=0 // pred_check
    _
  $region15: #{vision_transformer_forward.5} parent=0 // pred_check_branch
    %17 = sbr.rel (0) target = $region17
  $region16: #{vision_transformer_forward.5} parent=0 // pred_region
    _
  $region17: #{vision_transformer_forward.5} parent=0 // pred_fallthru
    _
  // Predicated region
  $region18: #{vision_transformer_forward.5} parent=0 // pred_check
    _
  $region19: #{vision_transformer_forward.5} parent=0 // pred_check_branch
    %19 = sbr.rel (0) target = $region21
  $region20: #{vision_transformer_forward.5} parent=0 // pred_region
    _
  $region21: #{vision_transformer_forward.5} parent=0 // pred_fallthru
    _
  %v21 = vld [vmem:[%s3] sm:$0x1]
  %v22 = vld [vmem:[%s4] sm:$0x1]
  %v23 = vld [vmem:[%s0] sm:$0xff]
  %v24 = vld [vmem:[%s0 + $0x8] sm:$0xff]
  %v25 = vld [vmem:[%s0 + $0x10] sm:$0xff]
  %v26 = vld [vmem:[%s0 + $0x18] sm:$0xff]
  %v27 = vpack.c.bf16 %v25, %v23
  %v28 = vpack.c.bf16 %v26, %v24
  %v29 = vld [vmem:[%s1] sm:$0xf]
  %v30 = vld [vmem:[%s1 + $0x4] sm:$0xf]
  %v31 = vld [vmem:[%s1 + $0x8] sm:$0xf]
  %v32 = vld [vmem:[%s1 + $0xc] sm:$0xf]
  %v33 = vld [vmem:[%s1 + $0x10] sm:$0xf]
  %v34 = vld [vmem:[%s1 + $0x14] sm:$0xf]
  %v35 = vld [vmem:[%s1 + $0x18] sm:$0xf]
  %v36 = vld [vmem:[%s1 + $0x1c] sm:$0xf]
  %v37 = vld [vmem:[%s1 + $0x20] sm:$0xf]
  %v38 = vld [vmem:[%s1 + $0x24] sm:$0xf]
  %v39 = vld [vmem:[%s1 + $0x28] sm:$0xf]
  %v40 = vld [vmem:[%s1 + $0x2c] sm:$0xf]
  %v41 = vld [vmem:[%s1 + $0x30] sm:$0xf]
  %v42 = vld [vmem:[%s1 + $0x34] sm:$0xf]
  %v43 = vld [vmem:[%s1 + $0x38] sm:$0xf]
  %v44 = vld [vmem:[%s1 + $0x3c] sm:$0xf]
  %v45 = vld [vmem:[%s1 + $0x40] sm:$0xf]
  %v46 = vld [vmem:[%s1 + $0x44] sm:$0xf]
  %v47 = vld [vmem:[%s1 + $0x48] sm:$0xf]
  %v48 = vld [vmem:[%s1 + $0x4c] sm:$0xf]
  %v49 = vld [vmem:[%s1 + $0x50] sm:$0xf]
  %v50 = vld [vmem:[%s1 + $0x54] sm:$0xf]
  %v51 = vld [vmem:[%s1 + $0x58] sm:$0xf]
  %v52 = vld [vmem:[%s1 + $0x5c] sm:$0xf]
  %v77 = vunpack.c.l.b16 %v29
  %v78 = vunpack.c.l.b16 %v30
  %v79 = vunpack.c.l.b16 %v31
  %v80 = vunpack.c.l.b16 %v32
  %v81 = vunpack.c.l.b16 %v33
  %v82 = vunpack.c.l.b16 %v34
  %v83 = vunpack.c.l.b16 %v35
  %v84 = vunpack.c.l.b16 %v36
  %v85 = vunpack.c.l.b16 %v37
  %v86 = vunpack.c.l.b16 %v38
  %v87 = vunpack.c.l.b16 %v39
  %v88 = vunpack.c.l.b16 %v40
  %v89 = vunpack.c.l.b16 %v41
  %v90 = vunpack.c.l.b16 %v42
  %v91 = vunpack.c.l.b16 %v43
  %v92 = vunpack.c.l.b16 %v44
  %v93 = vunpack.c.l.b16 %v45
  %v94 = vunpack.c.l.b16 %v46
  %v95 = vunpack.c.l.b16 %v47
  %v96 = vunpack.c.l.b16 %v48
  %v97 = vunpack.c.l.b16 %v49
  %v98 = vunpack.c.l.b16 %v50
  %v99 = vunpack.c.l.b16 %v51
  %v100 = vunpack.c.l.b16 %v52
  %v101 = vpack.c.b16 %v78, %v77
  %v102 = vpack.c.b16 %v80, %v79
  %v103 = vpack.c.b16 %v82, %v81
  %v104 = vpack.c.b16 %v84, %v83
  %v105 = vpack.c.b16 %v86, %v85
  %v106 = vpack.c.b16 %v88, %v87
  %v107 = vpack.c.b16 %v90, %v89
  %v108 = vpack.c.b16 %v92, %v91
  %v109 = vpack.c.b16 %v94, %v93
  %v110 = vpack.c.b16 %v96, %v95
  %v111 = vpack.c.b16 %v98, %v97
  %v112 = vpack.c.b16 %v100, %v99
  %vm125 = vcmask 523264
  %v127 = vsel %vm125, %v28, 0
  %129 = vmatpush.bf16.msra.mxu0 %v108
  %130 = vmatpush.bf16.msra.mxu0 %v107
  %131 = vmatpush.bf16.msra.mxu0 %v106
  %132 = vmatpush.bf16.msra.mxu0 %v105
  %133 = vmatpush.bf16.msra.mxu0 %v104
  %134 = vmatpush.bf16.msra.mxu0 %v103
  %135 = vmatpush.bf16.msra.mxu0 %v102
  %136 = vmatpush.bf16.msra.mxu0 %v101
  %137 = vmatmul.bf16.gmra.mxu0 %v27
  %v138 = vpop.f32.mrf.mxu0
  %v139 = vadd.f32 0.0, %v138
  %v140 = vpop.f32.mrf.mxu0
  %v141 = vadd.f32 0.0, %v140
  %142 = vdwg.mxu0
  %143 = vmatpush.bf16.msra.mxu0 0
  %144 = vmatpush.bf16.msra.mxu0 0
  %145 = vmatpush.bf16.msra.mxu0 0
  %146 = vmatpush.bf16.msra.mxu0 0
  %147 = vmatpush.bf16.msra.mxu0 %v112
  %148 = vmatpush.bf16.msra.mxu0 %v111
  %149 = vmatpush.bf16.msra.mxu0 %v110
  %150 = vmatpush.bf16.msra.mxu0 %v109
  %151 = vmatmul.bf16.gmra.mxu0 %v127
  %v152 = vpop.f32.mrf.mxu0
  %v153 = vadd.f32 %v139, %v152
  %v154 = vpop.f32.mrf.mxu0
  %v155 = vadd.f32 %v141, %v154
  %156 = vdwg.mxu0
  %v157 = vld [vmem:[%s2] sm:$0x1]
  %vm158 = vcmask 253952
  %v159 = vsel %vm158, %v157, 0.0
  %160 = vadd.xlane.f32.xlu0 %v159
  %v161 = vpop.xlane.xlu0 %160
  %v162 = vrcp.pop 32.0
  %v163 = vmul.f32 32.0, %v162
  %v164 = vsub.f32 1.0, %v163
  %v165 = vmul.f32 %v162, %v164
  %v166 = vadd.f32 %v162, %v165
  %vm167 = vweird.f32 %v162
  %v168 = vsel %vm167, %v162, %v166
  %v169 = vmul.f32 %v161, %v168
  %v170 = vsub.f32 %v157, %v169
  %v171 = vmul.f32 %v170, %v170
  %v172 = vsel %vm158, %v171, 0.0
  %173 = vadd.xlane.f32.xlu0 %v172
  %v174 = vpop.xlane.xlu0 %173
  %v175 = vmul.f32 %v174, %v168
  %v176 = vadd.f32 %v175, 1e-05
  %v177 = vrsqrt.pop %v176
  %v178 = vmul.f32 %v177, %v176
  %v179 = vmul.f32 %v178, %v177
  %v180 = vmul.f32 0.5, %v179
  %v181 = vsub.f32 1.5, %v180
  %v182 = vmul.f32 %v177, %v181
  %vm183 = vweird.f32 %v176
  %vm184 = vweird.f32 %v177
  %vm185 = vmor %vm183, %vm184
  %v186 = vsel %vm185, %v177, %v182
  %v187 = vmul.f32 %v170, %v186
  %v188 = vmul.f32 %v187, %v21
  %v189 = vadd.f32 %v188, %v22
  %v190 = vld [vmem:[%s2 + $0x1] sm:$0xf]
  %v191 = vadd.f32 %v153, %v190
  %vm192 = vcmask 257024
  %v193 = vsel %vm192, %v191, 0.0
  %194 = vadd.xlane.f32.xlu0 %v193
  %v195 = vpop.xlane.xlu0 %194
  %v196 = vmul.f32 %v195, %v168
  %v197 = vsub.f32 %v191, %v196
  %v198 = vmul.f32 %v197, %v197
  %v199 = vsel %vm192, %v198, 0.0
  %200 = vadd.xlane.f32.xlu0 %v199
  %v201 = vpop.xlane.xlu0 %200
  %v202 = vmul.f32 %v201, %v168
  %v203 = vadd.f32 %v202, 1e-05
  %v204 = vrsqrt.pop %v203
  %v205 = vmul.f32 %v204, %v203
  %v206 = vmul.f32 %v205, %v204
  %v207 = vmul.f32 0.5, %v206
  %v208 = vsub.f32 1.5, %v207
  %v209 = vmul.f32 %v204, %v208
  %vm210 = vweird.f32 %v203
  %vm211 = vweird.f32 %v204
  %vm212 = vmor %vm210, %vm211
  %v213 = vsel %vm212, %v204, %v209
  %v214 = vmul.f32 %v197, %v213
  %v216 = vperm.slane %v21, 0
  %v218 = vmul.f32 %v214, %v216
  %v220 = vperm.slane %v22, 0
  %v222 = vadd.f32 %v218, %v220
  %v224 = vrot.slane %v190, 4
  %v226 = vadd.f32 %v153, %v224
  %vm227 = vcmask 261124
  %v228 = vsel %vm227, %v226, 0.0
  %229 = vadd.xlane.f32.xlu0 %v228
  %v230 = vpop.xlane.xlu0 %229
  %v231 = vmul.f32 %v230, %v168
  %v232 = vsub.f32 %v226, %v231
  %v233 = vmul.f32 %v232, %v232
  %v234 = vsel %vm227, %v233, 0.0
  %235 = vadd.xlane.f32.xlu0 %v234
  %v236 = vpop.xlane.xlu0 %235
  %v237 = vmul.f32 %v236, %v168
  %v238 = vadd.f32 %v237, 1e-05
  %v239 = vrsqrt.pop %v238
  %v240 = vmul.f32 %v239, %v238
  %v241 = vmul.f32 %v240, %v239
  %v242 = vmul.f32 0.5, %v241
  %v243 = vsub.f32 1.5, %v242
  %v244 = vmul.f32 %v239, %v243
  %vm245 = vweird.f32 %v238
  %vm246 = vweird.f32 %v239
  %vm247 = vmor %vm245, %vm246
  %v248 = vsel %vm247, %v239, %v244
  %v249 = vmul.f32 %v232, %v248
  %v250 = vmul.f32 %v249, %v216
  %v251 = vadd.f32 %v250, %v220
  %v252 = vadd.f32 %v155, %v190
  %v253 = vsel %vm192, %v252, 0.0
  %254 = vadd.xlane.f32.xlu0 %v253
  %v255 = vpop.xlane.xlu0 %254
  %v256 = vmul.f32 %v255, %v168
  %v257 = vsub.f32 %v252, %v256
  %v258 = vmul.f32 %v257, %v257
  %v259 = vsel %vm192, %v258, 0.0
  %260 = vadd.xlane.f32.xlu0 %v259
  %v261 = vpop.xlane.xlu0 %260
  %v262 = vmul.f32 %v261, %v168
  %v263 = vadd.f32 %v262, 1e-05
  %v264 = vrsqrt.pop %v263
  %v265 = vmul.f32 %v264, %v263
  %v266 = vmul.f32 %v265, %v264
  %v267 = vmul.f32 0.5, %v266
  %v268 = vsub.f32 1.5, %v267
  %v269 = vmul.f32 %v264, %v268
  %vm270 = vweird.f32 %v263
  %vm271 = vweird.f32 %v264
  %vm272 = vmor %vm270, %vm271
  %v273 = vsel %vm272, %v264, %v269
  %v274 = vmul.f32 %v257, %v273
  %v275 = vmul.f32 %v274, %v216
  %v276 = vadd.f32 %v275, %v220
  %v277 = vadd.f32 %v155, %v224
  %v278 = vsel %vm227, %v277, 0.0
  %279 = vadd.xlane.f32.xlu0 %v278
  %v280 = vpop.xlane.xlu0 %279
  %v281 = vmul.f32 %v280, %v168
  %v282 = vsub.f32 %v277, %v281
  %v283 = vmul.f32 %v282, %v282
  %v284 = vsel %vm227, %v283, 0.0
  %285 = vadd.xlane.f32.xlu0 %v284
  %v286 = vpop.xlane.xlu0 %285
  %v287 = vmul.f32 %v286, %v168
  %v288 = vadd.f32 %v287, 1e-05
  %v289 = vrsqrt.pop %v288
  %v290 = vmul.f32 %v289, %v288
  %v291 = vmul.f32 %v290, %v289
  %v292 = vmul.f32 0.5, %v291
  %v293 = vsub.f32 1.5, %v292
  %v294 = vmul.f32 %v289, %v293
  %vm295 = vweird.f32 %v288
  %vm296 = vweird.f32 %v289
  %vm297 = vmor %vm295, %vm296
  %v298 = vsel %vm297, %v289, %v294
  %v299 = vmul.f32 %v282, %v298
  %v300 = vmul.f32 %v299, %v216
  %v301 = vadd.f32 %v300, %v220
  %v303 = vrot.slane %v222, 7
  %v306 = vrot.slane %v189, 3
  %v309 = vrot.slane %v251, 6
  %v311 = vrot.slane %v189, 6
  %v314 = vrot.slane %v276, 5
  %v316 = vrot.slane %v189, 1
  %v319 = vrot.slane %v301, 4
  %vm321 = vcmask 1040384
  %v322 = vsel %vm321, %v189, %v303
  %vm323 = vcmask 1044480
  %v324 = vsel %vm323, %v322, %v306
  %vm325 = vcmask 1045504
  %v326 = vsel %vm325, %v324, %v309
  %vm327 = vcmask 1041408
  %v328 = vsel %vm327, %v309, %v311
  %vm329 = vcmask 1042432
  %v330 = vsel %vm329, %v328, %v314
  %vm331 = vcmask 1046528
  %v332 = vsel %vm331, %v330, %v316
  %v333 = vpack.c.bf16 %v326, %v326
  %v334 = vpack.c.bf16 %v332, %v332
  %v335 = vpack.c.bf16 %v319, %v319
  %336 = vst.msk [vmem:[%s5] sm:$0xf] %vm192, %v333
  %337 = vst.msk [vmem:[%s5 + $0x4] sm:$0xf] %vm192, %v334
  %vm338 = vcmask 254976
  %339 = vst.msk [vmem:[%s5 + $0x8] sm:$0x3] %vm338, %v335
  // Predicated region
  $region22: #{vision_transformer_forward.5} parent=0 // pred_check
    _
  $region23: #{vision_transformer_forward.5} parent=0 // pred_check_branch
    %341 = sbr.rel (0) target = $region25
  $region24: #{vision_transformer_forward.5} parent=0 // pred_region
    _
  $region25: #{vision_transformer_forward.5} parent=0 // pred_fallthru
    _
  // Predicated region
  $region26: #{vision_transformer_forward.5} parent=0 // pred_check
    _
  $region27: #{vision_transformer_forward.5} parent=0 // pred_check_branch
    %343 = sbr.rel (0) target = $region29
  $region28: #{vision_transformer_forward.5} parent=0 // pred_region
    _
  $region29: #{vision_transformer_forward.5} parent=0 // pred_fallthru
    _

// kernel: vision_transformer_forward.6
$region0: #{vision_transformer_forward.6}
  #allocation0 [shape = 'u32[]', space=smem, size = 0x4, offset = 0x4, fixed_abs, tag = 'smem constant byte address 0x4 - core index']
  #allocation1 [shape = 'u32[72,128]{1,0:T(1,128)}', space=vmem, size = 0x9000, scoped, tag = 'internal scratch']
  %s0 = inlined_call_operand.vmem [shape: bf16[20,32], index: 0, kind: input, shape index: {}]
  %s1 = inlined_call_operand.vmem [shape: f32[1,32], index: 1, kind: input, shape index: {}]
  %s2 = inlined_call_operand.vmem [shape: f32[1,32], index: 2, kind: input, shape index: {}]
  %s3 = inlined_call_operand.vmem [shape: bf16[32,96], index: 3, kind: input, shape index: {}]
  %s4 = inlined_call_operand.vmem [shape: f32[1,96], index: 4, kind: input, shape index: {}]
  %s5 = inlined_call_operand.vmem [shape: bf16[32,32], index: 5, kind: input, shape index: {}]
  %s6 = inlined_call_operand.vmem [shape: f32[1,32], index: 6, kind: input, shape index: {}]
  %s7 = inlined_call_operand.vmem [shape: f32[1,32], index: 7, kind: input, shape index: {}]
  %s8 = inlined_call_operand.vmem [shape: f32[1,32], index: 8, kind: input, shape index: {}]
  %s9 = inlined_call_operand.vmem [shape: bf16[32,128], index: 9, kind: input, shape index: {}]
  %s10 = inlined_call_operand.vmem [shape: f32[1,128], index: 10, kind: input, shape index: {}]
  %s11 = inlined_call_operand.vmem [shape: bf16[128,32], index: 11, kind: input, shape index: {}]
  %s12 = inlined_call_operand.vmem [shape: f32[1,32], index: 12, kind: input, shape index: {}]
  %s13 = inlined_call_operand.vmem [shape: bf16[20,32], index: 13, kind: output, shape index: {}]
  %s14 = sld [smem:[#allocation0]]
  $region62: #{vision_transformer_forward.6} parent=0
    _
  %s16 = ssub.s32 1, %s14
  %s17 = scalar_select 0, %s16, %s14
  // Predicated region
  $region2: #{vision_transformer_forward.6} parent=0 // pred_check
    _
  $region3: #{vision_transformer_forward.6} parent=0 // pred_check_branch
    %19 = sbr.rel (0) target = $region5
  $region4: #{vision_transformer_forward.6} parent=0 // pred_region
    _
  $region5: #{vision_transformer_forward.6} parent=0 // pred_fallthru
    _
  // Predicated region
  $region6: #{vision_transformer_forward.6} parent=0 // pred_check
    _
  $region7: #{vision_transformer_forward.6} parent=0 // pred_check_branch
    %21 = sbr.rel (0) target = $region9
  $region8: #{vision_transformer_forward.6} parent=0 // pred_region
    _
  $region9: #{vision_transformer_forward.6} parent=0 // pred_fallthru
    _
  // Predicated region
  $region10: #{vision_transformer_forward.6} parent=0 // pred_check
    _
  $region11: #{vision_transformer_forward.6} parent=0 // pred_check_branch
    %23 = sbr.rel (0) target = $region13
  $region12: #{vision_transformer_forward.6} parent=0 // pred_region
    _
  $region13: #{vision_transformer_forward.6} parent=0 // pred_fallthru
    _
  // Predicated region
  $region14: #{vision_transformer_forward.6} parent=0 // pred_check
    _
  $region15: #{vision_transformer_forward.6} parent=0 // pred_check_branch
    %25 = sbr.rel (0) target = $region17
  $region16: #{vision_transformer_forward.6} parent=0 // pred_region
    _
  $region17: #{vision_transformer_forward.6} parent=0 // pred_fallthru
    _
  // Predicated region
  $region18: #{vision_transformer_forward.6} parent=0 // pred_check
    _
  $region19: #{vision_transformer_forward.6} parent=0 // pred_check_branch
    %27 = sbr.rel (0) target = $region21
  $region20: #{vision_transformer_forward.6} parent=0 // pred_region
    _
  $region21: #{vision_transformer_forward.6} parent=0 // pred_fallthru
    _
  // Predicated region
  $region22: #{vision_transformer_forward.6} parent=0 // pred_check
    _
  $region23: #{vision_transformer_forward.6} parent=0 // pred_check_branch
    %29 = sbr.rel (0) target = $region25
  $region24: #{vision_transformer_forward.6} parent=0 // pred_region
    _
  $region25: #{vision_transformer_forward.6} parent=0 // pred_fallthru
    _
  // Predicated region
  $region26: #{vision_transformer_forward.6} parent=0 // pred_check
    _
  $region27: #{vision_transformer_forward.6} parent=0 // pred_check_branch
    %31 = sbr.rel (0) target = $region29
  $region28: #{vision_transformer_forward.6} parent=0 // pred_region
    _
  $region29: #{vision_transformer_forward.6} parent=0 // pred_fallthru
    _
  // Predicated region
  $region30: #{vision_transformer_forward.6} parent=0 // pred_check
    _
  $region31: #{vision_transformer_forward.6} parent=0 // pred_check_branch
    %33 = sbr.rel (0) target = $region33
  $region32: #{vision_transformer_forward.6} parent=0 // pred_region
    _
  $region33: #{vision_transformer_forward.6} parent=0 // pred_fallthru
    _
  // Predicated region
  $region34: #{vision_transformer_forward.6} parent=0 // pred_check
    _
  $region35: #{vision_transformer_forward.6} parent=0 // pred_check_branch
    %35 = sbr.rel (0) target = $region37
  $region36: #{vision_transformer_forward.6} parent=0 // pred_region
    _
  $region37: #{vision_transformer_forward.6} parent=0 // pred_fallthru
    _
  // Predicated region
  $region38: #{vision_transformer_forward.6} parent=0 // pred_check
    _
  $region39: #{vision_transformer_forward.6} parent=0 // pred_check_branch
    %37 = sbr.rel (0) target = $region41
  $region40: #{vision_transformer_forward.6} parent=0 // pred_region
    _
  $region41: #{vision_transformer_forward.6} parent=0 // pred_fallthru
    _
  // Predicated region
  $region42: #{vision_transformer_forward.6} parent=0 // pred_check
    _
  $region43: #{vision_transformer_forward.6} parent=0 // pred_check_branch
    %39 = sbr.rel (0) target = $region45
  $region44: #{vision_transformer_forward.6} parent=0 // pred_region
    _
  $region45: #{vision_transformer_forward.6} parent=0 // pred_fallthru
    _
  // Predicated region
  $region46: #{vision_transformer_forward.6} parent=0 // pred_check
    _
  $region47: #{vision_transformer_forward.6} parent=0 // pred_check_branch
    %41 = sbr.rel (0) target = $region49
  $region48: #{vision_transformer_forward.6} parent=0 // pred_region
    _
  $region49: #{vision_transformer_forward.6} parent=0 // pred_fallthru
    _
  // Predicated region
  $region50: #{vision_transformer_forward.6} parent=0 // pred_check
    _
  $region51: #{vision_transformer_forward.6} parent=0 // pred_check_branch
    %43 = sbr.rel (0) target = $region53
  $region52: #{vision_transformer_forward.6} parent=0 // pred_region
    _
  $region53: #{vision_transformer_forward.6} parent=0 // pred_fallthru
    _
  %v45 = vld [vmem:[%s0] sm:$0xf]
  %v46 = vld [vmem:[%s0 + $0x4] sm:$0xf]
  %v47 = vld [vmem:[%s0 + $0x8] sm:$0x3]
  %v48 = vunpack.c.l.bf16 %v45
  %v49 = vunpack.c.l.bf16 %v46
  %v50 = vunpack.c.l.bf16 %v47
  %v51 = vld [vmem:[%s1] sm:$0x1]
  %v52 = vld [vmem:[%s2] sm:$0x1]
  %vm53 = vcmask 261120
  %v54 = vsel %vm53, %v48, 0.0
  %55 = vadd.xlane.f32.xlu0 %v54
  %v56 = vpop.xlane.xlu0 %55
  %v57 = vsel %vm53, %v49, 0.0
  %58 = vadd.xlane.f32.xlu0 %v57
  %v59 = vpop.xlane.xlu0 %58
  %vm60 = vcmask 257024
  %v61 = vsel %vm60, %v50, 0.0
  %62 = vadd.xlane.f32.xlu0 %v61
  %v63 = vpop.xlane.xlu0 %62
  %v64 = vrcp.pop 32.0
  %v65 = vmul.f32 32.0, %v64
  %v66 = vsub.f32 1.0, %v65
  %v67 = vmul.f32 %v64, %v66
  %v68 = vadd.f32 %v64, %v67
  %vm69 = vweird.f32 %v64
  %v70 = vsel %vm69, %v64, %v68
  %v71 = vmul.f32 %v56, %v70
  %v72 = vmul.f32 %v59, %v70
  %v73 = vmul.f32 %v63, %v70
  %v74 = vsub.f32 %v48, %v71
  %v75 = vsub.f32 %v49, %v72
  %v76 = vsub.f32 %v50, %v73
  %v77 = vmul.f32 %v74, %v74
  %v78 = vmul.f32 %v75, %v75
  %v79 = vmul.f32 %v76, %v76
  %v80 = vsel %vm53, %v77, 0.0
  %81 = vadd.xlane.f32.xlu0 %v80
  %v82 = vpop.xlane.xlu0 %81
  %v83 = vsel %vm53, %v78, 0.0
  %84 = vadd.xlane.f32.xlu0 %v83
  %v85 = vpop.xlane.xlu0 %84
  %v86 = vsel %vm60, %v79, 0.0
  %87 = vadd.xlane.f32.xlu0 %v86
  %v88 = vpop.xlane.xlu0 %87
  %v89 = vmul.f32 %v82, %v70
  %v90 = vmul.f32 %v85, %v70
  %v91 = vmul.f32 %v88, %v70
  %v92 = vadd.f32 %v89, 1e-05
  %v93 = vadd.f32 %v90, 1e-05
  %v94 = vadd.f32 %v91, 1e-05
  %v95 = vrsqrt.pop %v92
  %v96 = vmul.f32 %v95, %v92
  %v97 = vmul.f32 %v96, %v95
  %v98 = vmul.f32 0.5, %v97
  %v99 = vsub.f32 1.5, %v98
  %v100 = vmul.f32 %v95, %v99
  %vm101 = vweird.f32 %v92
  %vm102 = vweird.f32 %v95
  %vm103 = vmor %vm101, %vm102
  %v104 = vsel %vm103, %v95, %v100
  %v105 = vrsqrt.pop %v93
  %v106 = vmul.f32 %v105, %v93
  %v107 = vmul.f32 %v106, %v105
  %v108 = vmul.f32 0.5, %v107
  %v109 = vsub.f32 1.5, %v108
  %v110 = vmul.f32 %v105, %v109
  %vm111 = vweird.f32 %v93
  %vm112 = vweird.f32 %v105
  %vm113 = vmor %vm111, %vm112
  %v114 = vsel %vm113, %v105, %v110
  %v115 = vrsqrt.pop %v94
  %v116 = vmul.f32 %v115, %v94
  %v117 = vmul.f32 %v116, %v115
  %v118 = vmul.f32 0.5, %v117
  %v119 = vsub.f32 1.5, %v118
  %v120 = vmul.f32 %v115, %v119
  %vm121 = vweird.f32 %v94
  %vm122 = vweird.f32 %v115
  %vm123 = vmor %vm121, %vm122
  %v124 = vsel %vm123, %v115, %v120
  %v125 = vmul.f32 %v74, %v104
  %v126 = vmul.f32 %v75, %v114
  %v127 = vmul.f32 %v76, %v124
  %v129 = vperm.slane %v51, 0
  %v131 = vmul.f32 %v125, %v129
  %v132 = vmul.f32 %v126, %v129
  %v133 = vmul.f32 %v127, %v129
  %v135 = vperm.slane %v52, 0
  %v137 = vadd.f32 %v131, %v135
  %v138 = vadd.f32 %v132, %v135
  %v139 = vadd.f32 %v133, %v135
  %v140 = vpack.c.bf16 %v138, %v137
  %v141 = vpack.c.bf16 %v139, %v139
  %v142 = vld [vmem:[%s3] sm:$0xf]
  %v143 = vld [vmem:[%s3 + $0x4] sm:$0xf]
  %v144 = vld [vmem:[%s3 + $0x8] sm:$0xf]
  %v145 = vld [vmem:[%s3 + $0xc] sm:$0xf]
  %v146 = vld [vmem:[%s4] sm:$0x1]
  %v148 = vperm.slane %v146, 0
  %v154 = vunpack.c.l.b16 %v142
  %v155 = vunpack.c.l.b16 %v143
  %v156 = vunpack.c.l.b16 %v144
  %v157 = vunpack.c.l.b16 %v145
  %v158 = vpack.c.b16 %v155, %v154
  %v159 = vpack.c.b16 %v157, %v156
  %v163 = vsel %vm53, %v140, 0
  %v166 = vsel %vm53, %v141, 0
  %168 = vmatpush.bf16.msra.mxu0 0
  %169 = vmatpush.bf16.msra.mxu0 0
  %170 = vmatpush.bf16.msra.mxu0 0
  %171 = vmatpush.bf16.msra.mxu0 0
  %172 = vmatpush.bf16.msra.mxu0 0
  %173 = vmatpush.bf16.msra.mxu0 0
  %174 = vmatpush.bf16.msra.mxu0 %v159
  %175 = vmatpush.bf16.msra.mxu0 %v158
  %176 = vmatmul.bf16.gmra.mxu0 %v163
  %v177 = vpop.f32.mrf.mxu0
  %v178 = vadd.f32 %v148, %v177
  %v179 = vpop.f32.mrf.mxu0
  %v180 = vadd.f32 %v148, %v179
  %181 = vmatmul.bf16.gmra.mxu0 %v166
  %v182 = vpop.f32.mrf.mxu0
  %v183 = vadd.f32 %v148, %v182
  %v184 = vpop.f32.mrf.mxu0
  %185 = vdwg.mxu0
  %v186 = vpack.c.bf16 %v178, %v178
  %v188 = vunpack.c.l.b16 %v186
  %v189 = vpack.c.b16 %v188, %v188
  %190 = vrot.lane.b32.xlu0 %v189, 96
  %v191 = vpop.permute.xlu0 %190
  %vm192 = vcmask 64512
  %v194 = vsel %vm192, %v186, 0
  %v197 = vsel %vm192, %v191, 0
  %199 = vmatpush.bf16.xpose.msra.mxu0 0
  %200 = vmatpush.bf16.xpose.msra.mxu0 0
  %201 = vmatpush.bf16.xpose.msra.mxu0 0
  %202 = vmatpush.bf16.xpose.msra.mxu0 0
  %203 = vmatpush.bf16.xpose.msra.mxu0 0
  %204 = vmatpush.bf16.xpose.msra.mxu0 0
  %205 = vmatpush.bf16.xpose.msra.mxu0 0
  %206 = vmatpush.bf16.xpose.msra.mxu0 %v197
  %207 = vmatmul.bf16.gmra.mxu0 %v194
  %v208 = vpop.f32.mrf.mxu0
  %v209 = vadd.f32 0.0, %v208
  %v210 = vpop.f32.mrf.mxu0
  %211 = vdwg.mxu0
  %v212 = vmul.f32 %v209, 0.35355338
  %vm213 = vcmask 36864
  %v214 = vsel %vm213, %v212, -inf
  %215 = vmax.xlane.f32.xlu0 %v214
  %v216 = vpop.xlane.xlu0 %215
  %v217 = vsub.f32 %v212, %v216
  %v218 = vmul.f32 %v217, 1.442695
  %v219 = vpow.pop %v218
  %v220 = vsel %vm213, %v219, 0.0
  %221 = vadd.xlane.f32.xlu0 %v220
  %v222 = vpop.xlane.xlu0 %221
  %v223 = vrcp.pop %v222
  %v224 = vmul.f32 %v219, %v223
  %v225 = vpack.c.bf16 %v224, %v224
  %226 = vrot.lane.b32.xlu0 %v189, 64
  %v227 = vpop.permute.xlu0 %226
  %vm228 = vcmask 39936
  %v230 = vsel %vm228, %v225, 0
  %vm232 = vcmask 1041408
  %vm233 = vcmask 1042432
  %v234 = vsel %vm232, 4294967295, 65535
  %v235 = vsel %vm233, %v234, 0
  %v237 = vand.u32 %v227, %v235
  %239 = vmatpush.bf16.msra.mxu0 0
  %240 = vmatpush.bf16.msra.mxu0 0
  %241 = vmatpush.bf16.msra.mxu0 0
  %242 = vmatpush.bf16.msra.mxu0 0
  %243 = vmatpush.bf16.msra.mxu0 0
  %244 = vmatpush.bf16.msra.mxu0 0
  %245 = vmatpush.bf16.msra.mxu0 0
  %246 = vmatpush.bf16.msra.mxu0 %v237
  %247 = vmatmul.bf16.gmra.mxu0 %v230
  %v248 = vpop.f32.mrf.mxu0
  %v249 = vadd.f32 0.0, %v248
  %v250 = vpop.f32.mrf.mxu0
  %251 = vdwg.mxu0
  %252 = vrot.lane.b32.xlu0 %v189, 120
  %v253 = vpop.permute.xlu0 %252
  %254 = vrot.lane.b32.xlu0 %v189, 88
  %v255 = vpop.permute.xlu0 %254
  %v257 = vsel %vm192, %v253, 0
  %v260 = vsel %vm192, %v255, 0
  %262 = vmatpush.bf16.xpose.msra.mxu0 0
  %263 = vmatpush.bf16.xpose.msra.mxu0 0
  %264 = vmatpush.bf16.xpose.msra.mxu0 0
  %265 = vmatpush.bf16.xpose.msra.mxu0 0
  %266 = vmatpush.bf16.xpose.msra.mxu0 0
  %267 = vmatpush.bf16.xpose.msra.mxu0 0
  %268 = vmatpush.bf16.xpose.msra.mxu0 0
  %269 = vmatpush.bf16.xpose.msra.mxu0 %v260
  %270 = vmatmul.bf16.gmra.mxu0 %v257
  %v271 = vpop.f32.mrf.mxu0
  %v272 = vadd.f32 0.0, %v271
  %v273 = vpop.f32.mrf.mxu0
  %274 = vdwg.mxu0
  %v275 = vmul.f32 %v272, 0.35355338
  %v276 = vsel %vm213, %v275, -inf
  %277 = vmax.xlane.f32.xlu0 %v276
  %v278 = vpop.xlane.xlu0 %277
  %v279 = vsub.f32 %v275, %v278
  %v280 = vmul.f32 %v279, 1.442695
  %v281 = vpow.pop %v280
  %v282 = vsel %vm213, %v281, 0.0
  %283 = vadd.xlane.f32.xlu0 %v282
  %v284 = vpop.xlane.xlu0 %283
  %v285 = vrcp.pop %v284
  %v286 = vmul.f32 %v281, %v285
  %v287 = vpack.c.bf16 %v286, %v286
  %288 = vrot.lane.b32.xlu0 %v189, 56
  %v289 = vpop.permute.xlu0 %288
  %v291 = vsel %vm228, %v287, 0
  %v294 = vand.u32 %v289, %v235
  %296 = vmatpush.bf16.msra.mxu0 0
  %297 = vmatpush.bf16.msra.mxu0 0
  %298 = vmatpush.bf16.msra.mxu0 0
  %299 = vmatpush.bf16.msra.mxu0 0
  %300 = vmatpush.bf16.msra.mxu0 0
  %301 = vmatpush.bf16.msra.mxu0 0
  %302 = vmatpush.bf16.msra.mxu0 0
  %303 = vmatpush.bf16.msra.mxu0 %v294
  %304 = vmatmul.bf16.gmra.mxu0 %v291
  %v305 = vpop.f32.mrf.mxu0
  %v306 = vadd.f32 0.0, %v305
  %v307 = vpop.f32.mrf.mxu0
  %308 = vdwg.mxu0
  %309 = vrot.lane.b32.xlu0 %v189, 112
  %v310 = vpop.permute.xlu0 %309
  %311 = vrot.lane.b32.xlu0 %v189, 80
  %v312 = vpop.permute.xlu0 %311
  %v314 = vsel %vm192, %v310, 0
  %v317 = vsel %vm192, %v312, 0
  %319 = vmatpush.bf16.xpose.msra.mxu0 0
  %320 = vmatpush.bf16.xpose.msra.mxu0 0
  %321 = vmatpush.bf16.xpose.msra.mxu0 0
  %322 = vmatpush.bf16.xpose.msra.mxu0 0
  %323 = vmatpush.bf16.xpose.msra.mxu0 0
  %324 = vmatpush.bf16.xpose.msra.mxu0 0
  %325 = vmatpush.bf16.xpose.msra.mxu0 0
  %326 = vmatpush.bf16.xpose.msra.mxu0 %v317
  %327 = vmatmul.bf16.gmra.mxu0 %v314
  %v328 = vpop.f32.mrf.mxu0
  %v329 = vadd.f32 0.0, %v328
  %v330 = vpop.f32.mrf.mxu0
  %331 = vdwg.mxu0
  %v332 = vmul.f32 %v329, 0.35355338
  %v333 = vsel %vm213, %v332, -inf
  %334 = vmax.xlane.f32.xlu0 %v333
  %v335 = vpop.xlane.xlu0 %334
  %v336 = vsub.f32 %v332, %v335
  %v337 = vmul.f32 %v336, 1.442695
  %v338 = vpow.pop %v337
  %v339 = vsel %vm213, %v338, 0.0
  %340 = vadd.xlane.f32.xlu0 %v339
  %v341 = vpop.xlane.xlu0 %340
  %v342 = vrcp.pop %v341
  %v343 = vmul.f32 %v338, %v342
  %v344 = vpack.c.bf16 %v343, %v343
  %345 = vrot.lane.b32.xlu0 %v189, 48
  %v346 = vpop.permute.xlu0 %345
  %v348 = vsel %vm228, %v344, 0
  %v351 = vand.u32 %v346, %v235
  %353 = vmatpush.bf16.msra.mxu0 0
  %354 = vmatpush.bf16.msra.mxu0 0
  %355 = vmatpush.bf16.msra.mxu0 0
  %356 = vmatpush.bf16.msra.mxu0 0
  %357 = vmatpush.bf16.msra.mxu0 0
  %358 = vmatpush.bf16.msra.mxu0 0
  %359 = vmatpush.bf16.msra.mxu0 0
  %360 = vmatpush.bf16.msra.mxu0 %v351
  %361 = vmatmul.bf16.gmra.mxu0 %v348
  %v362 = vpop.f32.mrf.mxu0
  %v363 = vadd.f32 0.0, %v362
  %v364 = vpop.f32.mrf.mxu0
  %365 = vdwg.mxu0
  %366 = vrot.lane.b32.xlu0 %v189, 104
  %v367 = vpop.permute.xlu0 %366
  %368 = vrot.lane.b32.xlu0 %v189, 72
  %v369 = vpop.permute.xlu0 %368
  %v371 = vsel %vm192, %v367, 0
  %v374 = vsel %vm192, %v369, 0
  %376 = vmatpush.bf16.xpose.msra.mxu0 0
  %377 = vmatpush.bf16.xpose.msra.mxu0 0
  %378 = vmatpush.bf16.xpose.msra.mxu0 0
  %379 = vmatpush.bf16.xpose.msra.mxu0 0
  %380 = vmatpush.bf16.xpose.msra.mxu0 0
  %381 = vmatpush.bf16.xpose.msra.mxu0 0
  %382 = vmatpush.bf16.xpose.msra.mxu0 0
  %383 = vmatpush.bf16.xpose.msra.mxu0 %v374
  %384 = vmatmul.bf16.gmra.mxu0 %v371
  %v385 = vpop.f32.mrf.mxu0
  %v386 = vadd.f32 0.0, %v385
  %v387 = vpop.f32.mrf.mxu0
  %388 = vdwg.mxu0
  %v389 = vmul.f32 %v386, 0.35355338
  %v390 = vsel %vm213, %v389, -inf
  %391 = vmax.xlane.f32.xlu0 %v390
  %v392 = vpop.xlane.xlu0 %391
  %v393 = vsub.f32 %v389, %v392
  %v394 = vmul.f32 %v393, 1.442695
  %v395 = vpow.pop %v394
  %v396 = vsel %vm213, %v395, 0.0
  %397 = vadd.xlane.f32.xlu0 %v396
  %v398 = vpop.xlane.xlu0 %397
  %v399 = vrcp.pop %v398
  %v400 = vmul.f32 %v395, %v399
  %v401 = vpack.c.bf16 %v400, %v400
  %402 = vrot.lane.b32.xlu0 %v189, 40
  %v403 = vpop.permute.xlu0 %402
  %v405 = vsel %vm228, %v401, 0
  %v408 = vand.u32 %v403, %v235
  %410 = vmatpush.bf16.msra.mxu0 0
  %411 = vmatpush.bf16.msra.mxu0 0
  %412 = vmatpush.bf16.msra.mxu0 0
  %413 = vmatpush.bf16.msra.mxu0 0
  %414 = vmatpush.bf16.msra.mxu0 0
  %415 = vmatpush.bf16.msra.mxu0 0
  %416 = vmatpush.bf16.msra.mxu0 0
  %417 = vmatpush.bf16.msra.mxu0 %v408
  %418 = vmatmul.bf16.gmra.mxu0 %v405
  %v419 = vpop.f32.mrf.mxu0
  %v420 = vadd.f32 0.0, %v419
  %v421 = vpop.f32.mrf.mxu0
  %422 = vdwg.mxu0
  %424 = vrot.lane.b32.xlu0 %v306, 8
  %v425 = vpop.permute.xlu0 %424
  %428 = vrot.lane.b32.xlu0 %v363, 16
  %v429 = vpop.permute.xlu0 %428
  %432 = vrot.lane.b32.xlu0 %v420, 24
  %v433 = vpop.permute.xlu0 %432
  %v435 = vsel %vm192, %v249, %v425
  %vm436 = vcmask 130048
  %v437 = vsel %vm436, %v435, %v429
  %vm438 = vcmask 195584
  %v439 = vsel %vm438, %v437, %v433
  %v440 = vpack.c.bf16 %v180, %v180
  %v442 = vunpack.c.l.b16 %v440
  %v443 = vpack.c.b16 %v442, %v188
  %v445 = vshrl.u32 %v443, 16
  %v447 = vrot.slane %v445, 2
  %v448 = vshll.u32 %v443, 16
  %v450 = vrot.slane %v448, 3
  %v451 = vor.u32 %v447, %v450
  %452 = vrot.lane.b32.xlu0 %v451, 96
  %v453 = vpop.permute.xlu0 %452
  %v455 = vsel %vm192, %v451, 0
  %v458 = vsel %vm192, %v453, 0
  %460 = vmatpush.bf16.xpose.msra.mxu0 0
  %461 = vmatpush.bf16.xpose.msra.mxu0 0
  %462 = vmatpush.bf16.xpose.msra.mxu0 0
  %463 = vmatpush.bf16.xpose.msra.mxu0 0
  %464 = vmatpush.bf16.xpose.msra.mxu0 0
  %465 = vmatpush.bf16.xpose.msra.mxu0 0
  %466 = vmatpush.bf16.xpose.msra.mxu0 0
  %467 = vmatpush.bf16.xpose.msra.mxu0 %v458
  %468 = vmatmul.bf16.gmra.mxu0 %v455
  %v469 = vpop.f32.mrf.mxu0
  %v470 = vadd.f32 0.0, %v469
  %v471 = vpop.f32.mrf.mxu0
  %472 = vdwg.mxu0
  %v473 = vmul.f32 %v470, 0.35355338
  %v474 = vsel %vm213, %v473, -inf
  %475 = vmax.xlane.f32.xlu0 %v474
  %v476 = vpop.xlane.xlu0 %475
  %v477 = vsub.f32 %v473, %v476
  %v478 = vmul.f32 %v477, 1.442695
  %v479 = vpow.pop %v478
  %v480 = vsel %vm213, %v479, 0.0
  %481 = vadd.xlane.f32.xlu0 %v480
  %v482 = vpop.xlane.xlu0 %481
  %v483 = vrcp.pop %v482
  %v484 = vmul.f32 %v479, %v483
  %v485 = vpack.c.bf16 %v484, %v484
  %486 = vrot.lane.b32.xlu0 %v451, 64
  %v487 = vpop.permute.xlu0 %486
  %v489 = vsel %vm228, %v485, 0
  %v492 = vand.u32 %v487, %v235
  %494 = vmatpush.bf16.msra.mxu0 0
  %495 = vmatpush.bf16.msra.mxu0 0
  %496 = vmatpush.bf16.msra.mxu0 0
  %497 = vmatpush.bf16.msra.mxu0 0
  %498 = vmatpush.bf16.msra.mxu0 0
  %499 = vmatpush.bf16.msra.mxu0 0
  %500 = vmatpush.bf16.msra.mxu0 0
  %501 = vmatpush.bf16.msra.mxu0 %v492
  %502 = vmatmul.bf16.gmra.mxu0 %v489
  %v503 = vpop.f32.mrf.mxu0
  %v504 = vadd.f32 0.0, %v503
  %v505 = vpop.f32.mrf.mxu0
  %506 = vdwg.mxu0
  %507 = vrot.lane.b32.xlu0 %v451, 120
  %v508 = vpop.permute.xlu0 %507
  %509 = vrot.lane.b32.xlu0 %v451, 88
  %v510 = vpop.permute.xlu0 %509
  %v512 = vsel %vm192, %v508, 0
  %v515 = vsel %vm192, %v510, 0
  %517 = vmatpush.bf16.xpose.msra.mxu0 0
  %518 = vmatpush.bf16.xpose.msra.mxu0 0
  %519 = vmatpush.bf16.xpose.msra.mxu0 0
  %520 = vmatpush.bf16.xpose.msra.mxu0 0
  %521 = vmatpush.bf16.xpose.msra.mxu0 0
  %522 = vmatpush.bf16.xpose.msra.mxu0 0
  %523 = vmatpush.bf16.xpose.msra.mxu0 0
  %524 = vmatpush.bf16.xpose.msra.mxu0 %v515
  %525 = vmatmul.bf16.gmra.mxu0 %v512
  %v526 = vpop.f32.mrf.mxu0
  %v527 = vadd.f32 0.0, %v526
  %v528 = vpop.f32.mrf.mxu0
  %529 = vdwg.mxu0
  %v530 = vmul.f32 %v527, 0.35355338
  %v531 = vsel %vm213, %v530, -inf
  %532 = vmax.xlane.f32.xlu0 %v531
  %v533 = vpop.xlane.xlu0 %532
  %v534 = vsub.f32 %v530, %v533
  %v535 = vmul.f32 %v534, 1.442695
  %v536 = vpow.pop %v535
  %v537 = vsel %vm213, %v536, 0.0
  %538 = vadd.xlane.f32.xlu0 %v537
  %v539 = vpop.xlane.xlu0 %538
  %v540 = vrcp.pop %v539
  %v541 = vmul.f32 %v536, %v540
  %v542 = vpack.c.bf16 %v541, %v541
  %543 = vrot.lane.b32.xlu0 %v451, 56
  %v544 = vpop.permute.xlu0 %543
  %v546 = vsel %vm228, %v542, 0
  %v549 = vand.u32 %v544, %v235
  %551 = vmatpush.bf16.msra.mxu0 0
  %552 = vmatpush.bf16.msra.mxu0 0
  %553 = vmatpush.bf16.msra.mxu0 0
  %554 = vmatpush.bf16.msra.mxu0 0
  %555 = vmatpush.bf16.msra.mxu0 0
  %556 = vmatpush.bf16.msra.mxu0 0
  %557 = vmatpush.bf16.msra.mxu0 0
  %558 = vmatpush.bf16.msra.mxu0 %v549
  %559 = vmatmul.bf16.gmra.mxu0 %v546
  %v560 = vpop.f32.mrf.mxu0
  %v561 = vadd.f32 0.0, %v560
  %v562 = vpop.f32.mrf.mxu0
  %563 = vdwg.mxu0
  %564 = vrot.lane.b32.xlu0 %v451, 112
  %v565 = vpop.permute.xlu0 %564
  %566 = vrot.lane.b32.xlu0 %v451, 80
  %v567 = vpop.permute.xlu0 %566
  %v569 = vsel %vm192, %v565, 0
  %v572 = vsel %vm192, %v567, 0
  %574 = vmatpush.bf16.xpose.msra.mxu0 0
  %575 = vmatpush.bf16.xpose.msra.mxu0 0
  %576 = vmatpush.bf16.xpose.msra.mxu0 0
  %577 = vmatpush.bf16.xpose.msra.mxu0 0
  %578 = vmatpush.bf16.xpose.msra.mxu0 0
  %579 = vmatpush.bf16.xpose.msra.mxu0 0
  %580 = vmatpush.bf16.xpose.msra.mxu0 0
  %581 = vmatpush.bf16.xpose.msra.mxu0 %v572
  %582 = vmatmul.bf16.gmra.mxu0 %v569
  %v583 = vpop.f32.mrf.mxu0
  %v584 = vadd.f32 0.0, %v583
  %v585 = vpop.f32.mrf.mxu0
  %586 = vdwg.mxu0
  %v587 = vmul.f32 %v584, 0.35355338
  %v588 = vsel %vm213, %v587, -inf
  %589 = vmax.xlane.f32.xlu0 %v588
  %v590 = vpop.xlane.xlu0 %589
  %v591 = vsub.f32 %v587, %v590
  %v592 = vmul.f32 %v591, 1.442695
  %v593 = vpow.pop %v592
  %v594 = vsel %vm213, %v593, 0.0
  %595 = vadd.xlane.f32.xlu0 %v594
  %v596 = vpop.xlane.xlu0 %595
  %v597 = vrcp.pop %v596
  %v598 = vmul.f32 %v593, %v597
  %v599 = vpack.c.bf16 %v598, %v598
  %600 = vrot.lane.b32.xlu0 %v451, 48
  %v601 = vpop.permute.xlu0 %600
  %v603 = vsel %vm228, %v599, 0
  %v606 = vand.u32 %v601, %v235
  %608 = vmatpush.bf16.msra.mxu0 0
  %609 = vmatpush.bf16.msra.mxu0 0
  %610 = vmatpush.bf16.msra.mxu0 0
  %611 = vmatpush.bf16.msra.mxu0 0
  %612 = vmatpush.bf16.msra.mxu0 0
  %613 = vmatpush.bf16.msra.mxu0 0
  %614 = vmatpush.bf16.msra.mxu0 0
  %615 = vmatpush.bf16.msra.mxu0 %v606
  %616 = vmatmul.bf16.gmra.mxu0 %v603
  %v617 = vpop.f32.mrf.mxu0
  %v618 = vadd.f32 0.0, %v617
  %v619 = vpop.f32.mrf.mxu0
  %620 = vdwg.mxu0
  %621 = vrot.lane.b32.xlu0 %v451, 104
  %v622 = vpop.permute.xlu0 %621
  %623 = vrot.lane.b32.xlu0 %v451, 72
  %v624 = vpop.permute.xlu0 %623
  %v626 = vsel %vm192, %v622, 0
  %v629 = vsel %vm192, %v624, 0
  %631 = vmatpush.bf16.xpose.msra.mxu0 0
  %632 = vmatpush.bf16.xpose.msra.mxu0 0
  %633 = vmatpush.bf16.xpose.msra.mxu0 0
  %634 = vmatpush.bf16.xpose.msra.mxu0 0
  %635 = vmatpush.bf16.xpose.msra.mxu0 0
  %636 = vmatpush.bf16.xpose.msra.mxu0 0
  %637 = vmatpush.bf16.xpose.msra.mxu0 0
  %638 = vmatpush.bf16.xpose.msra.mxu0 %v629
  %639 = vmatmul.bf16.gmra.mxu0 %v626
  %v640 = vpop.f32.mrf.mxu0
  %v641 = vadd.f32 0.0, %v640
  %v642 = vpop.f32.mrf.mxu0
  %643 = vdwg.mxu0
  %v644 = vmul.f32 %v641, 0.35355338
  %v645 = vsel %vm213, %v644, -inf
  %646 = vmax.xlane.f32.xlu0 %v645
  %v647 = vpop.xlane.xlu0 %646
  %v648 = vsub.f32 %v644, %v647
  %v649 = vmul.f32 %v648, 1.442695
  %v650 = vpow.pop %v649
  %v651 = vsel %vm213, %v650, 0.0
  %652 = vadd.xlane.f32.xlu0 %v651
  %v653 = vpop.xlane.xlu0 %652
  %v654 = vrcp.pop %v653
  %v655 = vmul.f32 %v650, %v654
  %v656 = vpack.c.bf16 %v655, %v655
  %657 = vrot.lane.b32.xlu0 %v451, 40
  %v658 = vpop.permute.xlu0 %657
  %v660 = vsel %vm228, %v656, 0
  %v663 = vand.u32 %v658, %v235
  %665 = vmatpush.bf16.msra.mxu0 0
  %666 = vmatpush.bf16.msra.mxu0 0
  %667 = vmatpush.bf16.msra.mxu0 0
  %668 = vmatpush.bf16.msra.mxu0 0
  %669 = vmatpush.bf16.msra.mxu0 0
  %670 = vmatpush.bf16.msra.mxu0 0
  %671 = vmatpush.bf16.msra.mxu0 0
  %672 = vmatpush.bf16.msra.mxu0 %v663
  %673 = vmatmul.bf16.gmra.mxu0 %v660
  %v674 = vpop.f32.mrf.mxu0
  %v675 = vadd.f32 0.0, %v674
  %v676 = vpop.f32.mrf.mxu0
  %677 = vdwg.mxu0
  %679 = vrot.lane.b32.xlu0 %v561, 8
  %v680 = vpop.permute.xlu0 %679
  %683 = vrot.lane.b32.xlu0 %v618, 16
  %v684 = vpop.permute.xlu0 %683
  %687 = vrot.lane.b32.xlu0 %v675, 24
  %v688 = vpop.permute.xlu0 %687
  %v690 = vsel %vm192, %v504, %v680
  %v691 = vsel %vm436, %v690, %v684
  %v692 = vsel %vm438, %v691, %v688
  %v693 = vpack.c.b16 %v442, %v442
  %v694 = vrot.slane %v693, 1
  %695 = vrot.lane.b32.xlu0 %v694, 96
  %v696 = vpop.permute.xlu0 %695
  %v698 = vsel %vm192, %v694, 0
  %v701 = vsel %vm192, %v696, 0
  %703 = vmatpush.bf16.xpose.msra.mxu0 0
  %704 = vmatpush.bf16.xpose.msra.mxu0 0
  %705 = vmatpush.bf16.xpose.msra.mxu0 0
  %706 = vmatpush.bf16.xpose.msra.mxu0 0
  %707 = vmatpush.bf16.xpose.msra.mxu0 0
  %708 = vmatpush.bf16.xpose.msra.mxu0 0
  %709 = vmatpush.bf16.xpose.msra.mxu0 0
  %710 = vmatpush.bf16.xpose.msra.mxu0 %v701
  %711 = vmatmul.bf16.gmra.mxu0 %v698
  %v712 = vpop.f32.mrf.mxu0
  %v713 = vadd.f32 0.0, %v712
  %v714 = vpop.f32.mrf.mxu0
  %715 = vdwg.mxu0
  %v716 = vmul.f32 %v713, 0.35355338
  %v717 = vsel %vm213, %v716, -inf
  %718 = vmax.xlane.f32.xlu0 %v717
  %v719 = vpop.xlane.xlu0 %718
  %v720 = vsub.f32 %v716, %v719
  %v721 = vmul.f32 %v720, 1.442695
  %v722 = vpow.pop %v721
  %v723 = vsel %vm213, %v722, 0.0
  %724 = vadd.xlane.f32.xlu0 %v723
  %v725 = vpop.xlane.xlu0 %724
  %v726 = vrcp.pop %v725
  %v727 = vmul.f32 %v722, %v726
  %v728 = vpack.c.bf16 %v727, %v727
  %729 = vrot.lane.b32.xlu0 %v694, 64
  %v730 = vpop.permute.xlu0 %729
  %v732 = vsel %vm228, %v728, 0
  %v735 = vand.u32 %v730, %v235
  %737 = vmatpush.bf16.msra.mxu0 0
  %738 = vmatpush.bf16.msra.mxu0 0
  %739 = vmatpush.bf16.msra.mxu0 0
  %740 = vmatpush.bf16.msra.mxu0 0
  %741 = vmatpush.bf16.msra.mxu0 0
  %742 = vmatpush.bf16.msra.mxu0 0
  %743 = vmatpush.bf16.msra.mxu0 0
  %744 = vmatpush.bf16.msra.mxu0 %v735
  %745 = vmatmul.bf16.gmra.mxu0 %v732
  %v746 = vpop.f32.mrf.mxu0
  %v747 = vadd.f32 0.0, %v746
  %v748 = vpop.f32.mrf.mxu0
  %749 = vdwg.mxu0
  %750 = vrot.lane.b32.xlu0 %v694, 120
  %v751 = vpop.permute.xlu0 %750
  %752 = vrot.lane.b32.xlu0 %v694, 88
  %v753 = vpop.permute.xlu0 %752
  %v755 = vsel %vm192, %v751, 0
  %v758 = vsel %vm192, %v753, 0
  %760 = vmatpush.bf16.xpose.msra.mxu0 0
  %761 = vmatpush.bf16.xpose.msra.mxu0 0
  %762 = vmatpush.bf16.xpose.msra.mxu0 0
  %763 = vmatpush.bf16.xpose.msra.mxu0 0
  %764 = vmatpush.bf16.xpose.msra.mxu0 0
  %765 = vmatpush.bf16.xpose.msra.mxu0 0
  %766 = vmatpush.bf16.xpose.msra.mxu0 0
  %767 = vmatpush.bf16.xpose.msra.mxu0 %v758
  %768 = vmatmul.bf16.gmra.mxu0 %v755
  %v769 = vpop.f32.mrf.mxu0
  %v770 = vadd.f32 0.0, %v769
  %v771 = vpop.f32.mrf.mxu0
  %772 = vdwg.mxu0
  %v773 = vmul.f32 %v770, 0.35355338
  %v774 = vsel %vm213, %v773, -inf
  %775 = vmax.xlane.f32.xlu0 %v774
  %v776 = vpop.xlane.xlu0 %775
  %v777 = vsub.f32 %v773, %v776
  %v778 = vmul.f32 %v777, 1.442695
  %v779 = vpow.pop %v778
  %v780 = vsel %vm213, %v779, 0.0
  %781 = vadd.xlane.f32.xlu0 %v780
  %v782 = vpop.xlane.xlu0 %781
  %v783 = vrcp.pop %v782
  %v784 = vmul.f32 %v779, %v783
  %v785 = vpack.c.bf16 %v784, %v784
  %786 = vrot.lane.b32.xlu0 %v694, 56
  %v787 = vpop.permute.xlu0 %786
  %v789 = vsel %vm228, %v785, 0
  %v792 = vand.u32 %v787, %v235
  %794 = vmatpush.bf16.msra.mxu0 0
  %795 = vmatpush.bf16.msra.mxu0 0
  %796 = vmatpush.bf16.msra.mxu0 0
  %797 = vmatpush.bf16.msra.mxu0 0
  %798 = vmatpush.bf16.msra.mxu0 0
  %799 = vmatpush.bf16.msra.mxu0 0
  %800 = vmatpush.bf16.msra.mxu0 0
  %801 = vmatpush.bf16.msra.mxu0 %v792
  %802 = vmatmul.bf16.gmra.mxu0 %v789
  %v803 = vpop.f32.mrf.mxu0
  %v804 = vadd.f32 0.0, %v803
  %v805 = vpop.f32.mrf.mxu0
  %806 = vdwg.mxu0
  %807 = vrot.lane.b32.xlu0 %v694, 112
  %v808 = vpop.permute.xlu0 %807
  %809 = vrot.lane.b32.xlu0 %v694, 80
  %v810 = vpop.permute.xlu0 %809
  %v812 = vsel %vm192, %v808, 0
  %v815 = vsel %vm192, %v810, 0
  %817 = vmatpush.bf16.xpose.msra.mxu0 0
  %818 = vmatpush.bf16.xpose.msra.mxu0 0
  %819 = vmatpush.bf16.xpose.msra.mxu0 0
  %820 = vmatpush.bf16.xpose.msra.mxu0 0
  %821 = vmatpush.bf16.xpose.msra.mxu0 0
  %822 = vmatpush.bf16.xpose.msra.mxu0 0
  %823 = vmatpush.bf16.xpose.msra.mxu0 0
  %824 = vmatpush.bf16.xpose.msra.mxu0 %v815
  %825 = vmatmul.bf16.gmra.mxu0 %v812
  %v826 = vpop.f32.mrf.mxu0
  %v827 = vadd.f32 0.0, %v826
  %v828 = vpop.f32.mrf.mxu0
  %829 = vdwg.mxu0
  %v830 = vmul.f32 %v827, 0.35355338
  %v831 = vsel %vm213, %v830, -inf
  %832 = vmax.xlane.f32.xlu0 %v831
  %v833 = vpop.xlane.xlu0 %832
  %v834 = vsub.f32 %v830, %v833
  %v835 = vmul.f32 %v834, 1.442695
  %v836 = vpow.pop %v835
  %v837 = vsel %vm213, %v836, 0.0
  %838 = vadd.xlane.f32.xlu0 %v837
  %v839 = vpop.xlane.xlu0 %838
  %v840 = vrcp.pop %v839
  %v841 = vmul.f32 %v836, %v840
  %v842 = vpack.c.bf16 %v841, %v841
  %843 = vrot.lane.b32.xlu0 %v694, 48
  %v844 = vpop.permute.xlu0 %843
  %v846 = vsel %vm228, %v842, 0
  %v849 = vand.u32 %v844, %v235
  %851 = vmatpush.bf16.msra.mxu0 0
  %852 = vmatpush.bf16.msra.mxu0 0
  %853 = vmatpush.bf16.msra.mxu0 0
  %854 = vmatpush.bf16.msra.mxu0 0
  %855 = vmatpush.bf16.msra.mxu0 0
  %856 = vmatpush.bf16.msra.mxu0 0
  %857 = vmatpush.bf16.msra.mxu0 0
  %858 = vmatpush.bf16.msra.mxu0 %v849
  %859 = vmatmul.bf16.gmra.mxu0 %v846
  %v860 = vpop.f32.mrf.mxu0
  %v861 = vadd.f32 0.0, %v860
  %v862 = vpop.f32.mrf.mxu0
  %863 = vdwg.mxu0
  %864 = vrot.lane.b32.xlu0 %v694, 104
  %v865 = vpop.permute.xlu0 %864
  %866 = vrot.lane.b32.xlu0 %v694, 72
  %v867 = vpop.permute.xlu0 %866
  %v869 = vsel %vm192, %v865, 0
  %v872 = vsel %vm192, %v867, 0
  %874 = vmatpush.bf16.xpose.msra.mxu0 0
  %875 = vmatpush.bf16.xpose.msra.mxu0 0
  %876 = vmatpush.bf16.xpose.msra.mxu0 0
  %877 = vmatpush.bf16.xpose.msra.mxu0 0
  %878 = vmatpush.bf16.xpose.msra.mxu0 0
  %879 = vmatpush.bf16.xpose.msra.mxu0 0
  %880 = vmatpush.bf16.xpose.msra.mxu0 0
  %881 = vmatpush.bf16.xpose.msra.mxu0 %v872
  %882 = vmatmul.bf16.gmra.mxu0 %v869
  %v883 = vpop.f32.mrf.mxu0
  %v884 = vadd.f32 0.0, %v883
  %v885 = vpop.f32.mrf.mxu0
  %886 = vdwg.mxu0
  %v887 = vmul.f32 %v884, 0.35355338
  %v888 = vsel %vm213, %v887, -inf
  %889 = vmax.xlane.f32.xlu0 %v888
  %v890 = vpop.xlane.xlu0 %889
  %v891 = vsub.f32 %v887, %v890
  %v892 = vmul.f32 %v891, 1.442695
  %v893 = vpow.pop %v892
  %v894 = vsel %vm213, %v893, 0.0
  %895 = vadd.xlane.f32.xlu0 %v894
  %v896 = vpop.xlane.xlu0 %895
  %v897 = vrcp.pop %v896
  %v898 = vmul.f32 %v893, %v897
  %v899 = vpack.c.bf16 %v898, %v898
  %900 = vrot.lane.b32.xlu0 %v694, 40
  %v901 = vpop.permute.xlu0 %900
  %v903 = vsel %vm228, %v899, 0
  %v906 = vand.u32 %v901, %v235
  %908 = vmatpush.bf16.msra.mxu0 0
  %909 = vmatpush.bf16.msra.mxu0 0
  %910 = vmatpush.bf16.msra.mxu0 0
  %911 = vmatpush.bf16.msra.mxu0 0
  %912 = vmatpush.bf16.msra.mxu0 0
  %913 = vmatpush.bf16.msra.mxu0 0
  %914 = vmatpush.bf16.msra.mxu0 0
  %915 = vmatpush.bf16.msra.mxu0 %v906
  %916 = vmatmul.bf16.gmra.mxu0 %v903
  %v917 = vpop.f32.mrf.mxu0
  %v918 = vadd.f32 0.0, %v917
  %v919 = vpop.f32.mrf.mxu0
  %920 = vdwg.mxu0
  %922 = vrot.lane.b32.xlu0 %v804, 8
  %v923 = vpop.permute.xlu0 %922
  %926 = vrot.lane.b32.xlu0 %v861, 16
  %v927 = vpop.permute.xlu0 %926
  %930 = vrot.lane.b32.xlu0 %v918, 24
  %v931 = vpop.permute.xlu0 %930
  %v933 = vsel %vm192, %v747, %v923
  %v934 = vsel %vm436, %v933, %v927
  %v935 = vsel %vm438, %v934, %v931
  %v936 = vpack.c.bf16 %v183, %v183
  %v938 = vunpack.c.l.b16 %v936
  %v939 = vpack.c.b16 %v938, %v442
  %v941 = vshrl.u32 %v939, 16
  %v943 = vrot.slane %v941, 3
  %v944 = vshll.u32 %v939, 16
  %v946 = vrot.slane %v944, 4
  %v947 = vor.u32 %v943, %v946
  %948 = vrot.lane.b32.xlu0 %v947, 96
  %v949 = vpop.permute.xlu0 %948
  %v951 = vsel %vm192, %v947, 0
  %v954 = vsel %vm192, %v949, 0
  %956 = vmatpush.bf16.xpose.msra.mxu0 0
  %957 = vmatpush.bf16.xpose.msra.mxu0 0
  %958 = vmatpush.bf16.xpose.msra.mxu0 0
  %959 = vmatpush.bf16.xpose.msra.mxu0 0
  %960 = vmatpush.bf16.xpose.msra.mxu0 0
  %961 = vmatpush.bf16.xpose.msra.mxu0 0
  %962 = vmatpush.bf16.xpose.msra.mxu0 0
  %963 = vmatpush.bf16.xpose.msra.mxu0 %v954
  %964 = vmatmul.bf16.gmra.mxu0 %v951
  %v965 = vpop.f32.mrf.mxu0
  %v966 = vadd.f32 0.0, %v965
  %v967 = vpop.f32.mrf.mxu0
  %968 = vdwg.mxu0
  %v969 = vmul.f32 %v966, 0.35355338
  %v970 = vsel %vm213, %v969, -inf
  %971 = vmax.xlane.f32.xlu0 %v970
  %v972 = vpop.xlane.xlu0 %971
  %v973 = vsub.f32 %v969, %v972
  %v974 = vmul.f32 %v973, 1.442695
  %v975 = vpow.pop %v974
  %v976 = vsel %vm213, %v975, 0.0
  %977 = vadd.xlane.f32.xlu0 %v976
  %v978 = vpop.xlane.xlu0 %977
  %v979 = vrcp.pop %v978
  %v980 = vmul.f32 %v975, %v979
  %v981 = vpack.c.bf16 %v980, %v980
  %982 = vrot.lane.b32.xlu0 %v947, 64
  %v983 = vpop.permute.xlu0 %982
  %v985 = vsel %vm228, %v981, 0
  %v988 = vand.u32 %v983, %v235
  %990 = vmatpush.bf16.msra.mxu0 0
  %991 = vmatpush.bf16.msra.mxu0 0
  %992 = vmatpush.bf16.msra.mxu0 0
  %993 = vmatpush.bf16.msra.mxu0 0
  %994 = vmatpush.bf16.msra.mxu0 0
  %995 = vmatpush.bf16.msra.mxu0 0
  %996 = vmatpush.bf16.msra.mxu0 0
  %997 = vmatpush.bf16.msra.mxu0 %v988
  %998 = vmatmul.bf16.gmra.mxu0 %v985
  %v999 = vpop.f32.mrf.mxu0
  %v1000 = vadd.f32 0.0, %v999
  %v1001 = vpop.f32.mrf.mxu0
  %1002 = vdwg.mxu0
  %1003 = vrot.lane.b32.xlu0 %v947, 120
  %v1004 = vpop.permute.xlu0 %1003
  %1005 = vrot.lane.b32.xlu0 %v947, 88
  %v1006 = vpop.permute.xlu0 %1005
  %v1008 = vsel %vm192, %v1004, 0
  %v1011 = vsel %vm192, %v1006, 0
  %1013 = vmatpush.bf16.xpose.msra.mxu0 0
  %1014 = vmatpush.bf16.xpose.msra.mxu0 0
  %1015 = vmatpush.bf16.xpose.msra.mxu0 0
  %1016 = vmatpush.bf16.xpose.msra.mxu0 0
  %1017 = vmatpush.bf16.xpose.msra.mxu0 0
  %1018 = vmatpush.bf16.xpose.msra.mxu0 0
  %1019 = vmatpush.bf16.xpose.msra.mxu0 0
  %1020 = vmatpush.bf16.xpose.msra.mxu0 %v1011
  %1021 = vmatmul.bf16.gmra.mxu0 %v1008
  %v1022 = vpop.f32.mrf.mxu0
  %v1023 = vadd.f32 0.0, %v1022
  %v1024 = vpop.f32.mrf.mxu0
  %1025 = vdwg.mxu0
  %v1026 = vmul.f32 %v1023, 0.35355338
  %v1027 = vsel %vm213, %v1026, -inf
  %1028 = vmax.xlane.f32.xlu0 %v1027
  %v1029 = vpop.xlane.xlu0 %1028
  %v1030 = vsub.f32 %v1026, %v1029
  %v1031 = vmul.f32 %v1030, 1.442695
  %v1032 = vpow.pop %v1031
  %v1033 = vsel %vm213, %v1032, 0.0
  %1034 = vadd.xlane.f32.xlu0 %v1033
  %v1035 = vpop.xlane.xlu0 %1034
  %v1036 = vrcp.pop %v1035
  %v1037 = vmul.f32 %v1032, %v1036
  %v1038 = vpack.c.bf16 %v1037, %v1037
  %1039 = vrot.lane.b32.xlu0 %v947, 56
  %v1040 = vpop.permute.xlu0 %1039
  %v1042 = vsel %vm228, %v1038, 0
  %v1045 = vand.u32 %v1040, %v235
  %1047 = vmatpush.bf16.msra.mxu0 0
  %1048 = vmatpush.bf16.msra.mxu0 0
  %1049 = vmatpush.bf16.msra.mxu0 0
  %1050 = vmatpush.bf16.msra.mxu0 0
  %1051 = vmatpush.bf16.msra.mxu0 0
  %1052 = vmatpush.bf16.msra.mxu0 0
  %1053 = vmatpush.bf16.msra.mxu0 0
  %1054 = vmatpush.bf16.msra.mxu0 %v1045
  %1055 = vmatmul.bf16.gmra.mxu0 %v1042
  %v1056 = vpop.f32.mrf.mxu0
  %v1057 = vadd.f32 0.0, %v1056
  %v1058 = vpop.f32.mrf.mxu0
  %1059 = vdwg.mxu0
  %1060 = vrot.lane.b32.xlu0 %v947, 112
  %v1061 = vpop.permute.xlu0 %1060
  %1062 = vrot.lane.b32.xlu0 %v947, 80
  %v1063 = vpop.permute.xlu0 %1062
  %v1065 = vsel %vm192, %v1061, 0
  %v1068 = vsel %vm192, %v1063, 0
  %1070 = vmatpush.bf16.xpose.msra.mxu0 0
  %1071 = vmatpush.bf16.xpose.msra.mxu0 0
  %1072 = vmatpush.bf16.xpose.msra.mxu0 0
  %1073 = vmatpush.bf16.xpose.msra.mxu0 0
  %1074 = vmatpush.bf16.xpose.msra.mxu0 0
  %1075 = vmatpush.bf16.xpose.msra.mxu0 0
  %1076 = vmatpush.bf16.xpose.msra.mxu0 0
  %1077 = vmatpush.bf16.xpose.msra.mxu0 %v1068
  %1078 = vmatmul.bf16.gmra.mxu0 %v1065
  %v1079 = vpop.f32.mrf.mxu0
  %v1080 = vadd.f32 0.0, %v1079
  %v1081 = vpop.f32.mrf.mxu0
  %1082 = vdwg.mxu0
  %v1083 = vmul.f32 %v1080, 0.35355338
  %v1084 = vsel %vm213, %v1083, -inf
  %1085 = vmax.xlane.f32.xlu0 %v1084
  %v1086 = vpop.xlane.xlu0 %1085
  %v1087 = vsub.f32 %v1083, %v1086
  %v1088 = vmul.f32 %v1087, 1.442695
  %v1089 = vpow.pop %v1088
  %v1090 = vsel %vm213, %v1089, 0.0
  %1091 = vadd.xlane.f32.xlu0 %v1090
  %v1092 = vpop.xlane.xlu0 %1091
  %v1093 = vrcp.pop %v1092
  %v1094 = vmul.f32 %v1089, %v1093
  %v1095 = vpack.c.bf16 %v1094, %v1094
  %1096 = vrot.lane.b32.xlu0 %v947, 48
  %v1097 = vpop.permute.xlu0 %1096
  %v1099 = vsel %vm228, %v1095, 0
  %v1102 = vand.u32 %v1097, %v235
  %1104 = vmatpush.bf16.msra.mxu0 0
  %1105 = vmatpush.bf16.msra.mxu0 0
  %1106 = vmatpush.bf16.msra.mxu0 0
  %1107 = vmatpush.bf16.msra.mxu0 0
  %1108 = vmatpush.bf16.msra.mxu0 0
  %1109 = vmatpush.bf16.msra.mxu0 0
  %1110 = vmatpush.bf16.msra.mxu0 0
  %1111 = vmatpush.bf16.msra.mxu0 %v1102
  %1112 = vmatmul.bf16.gmra.mxu0 %v1099
  %v1113 = vpop.f32.mrf.mxu0
  %v1114 = vadd.f32 0.0, %v1113
  %v1115 = vpop.f32.mrf.mxu0
  %1116 = vdwg.mxu0
  %1117 = vrot.lane.b32.xlu0 %v947, 104
  %v1118 = vpop.permute.xlu0 %1117
  %1119 = vrot.lane.b32.xlu0 %v947, 72
  %v1120 = vpop.permute.xlu0 %1119
  %v1122 = vsel %vm192, %v1118, 0
  %v1125 = vsel %vm192, %v1120, 0
  %1127 = vmatpush.bf16.xpose.msra.mxu0 0
  %1128 = vmatpush.bf16.xpose.msra.mxu0 0
  %1129 = vmatpush.bf16.xpose.msra.mxu0 0
  %1130 = vmatpush.bf16.xpose.msra.mxu0 0
  %1131 = vmatpush.bf16.xpose.msra.mxu0 0
  %1132 = vmatpush.bf16.xpose.msra.mxu0 0
  %1133 = vmatpush.bf16.xpose.msra.mxu0 0
  %1134 = vmatpush.bf16.xpose.msra.mxu0 %v1125
  %1135 = vmatmul.bf16.gmra.mxu0 %v1122
  %v1136 = vpop.f32.mrf.mxu0
  %v1137 = vadd.f32 0.0, %v1136
  %v1138 = vpop.f32.mrf.mxu0
  %1139 = vdwg.mxu0
  %v1140 = vmul.f32 %v1137, 0.35355338
  %v1141 = vsel %vm213, %v1140, -inf
  %1142 = vmax.xlane.f32.xlu0 %v1141
  %v1143 = vpop.xlane.xlu0 %1142
  %v1144 = vsub.f32 %v1140, %v1143
  %v1145 = vmul.f32 %v1144, 1.442695
  %v1146 = vpow.pop %v1145
  %v1147 = vsel %vm213, %v1146, 0.0
  %1148 = vadd.xlane.f32.xlu0 %v1147
  %v1149 = vpop.xlane.xlu0 %1148
  %v1150 = vrcp.pop %v1149
  %v1151 = vmul.f32 %v1146, %v1150
  %v1152 = vpack.c.bf16 %v1151, %v1151
  %1153 = vrot.lane.b32.xlu0 %v947, 40
  %v1154 = vpop.permute.xlu0 %1153
  %v1156 = vsel %vm228, %v1152, 0
  %v1159 = vand.u32 %v1154, %v235
  %1161 = vmatpush.bf16.msra.mxu0 0
  %1162 = vmatpush.bf16.msra.mxu0 0
  %1163 = vmatpush.bf16.msra.mxu0 0
  %1164 = vmatpush.bf16.msra.mxu0 0
  %1165 = vmatpush.bf16.msra.mxu0 0
  %1166 = vmatpush.bf16.msra.mxu0 0
  %1167 = vmatpush.bf16.msra.mxu0 0
  %1168 = vmatpush.bf16.msra.mxu0 %v1159
  %1169 = vmatmul.bf16.gmra.mxu0 %v1156
  %v1170 = vpop.f32.mrf.mxu0
  %v1171 = vadd.f32 0.0, %v1170
  %v1172 = vpop.f32.mrf.mxu0
  %1173 = vdwg.mxu0
  %1175 = vrot.lane.b32.xlu0 %v1057, 8
  %v1176 = vpop.permute.xlu0 %1175
  %1179 = vrot.lane.b32.xlu0 %v1114, 16
  %v1180 = vpop.permute.xlu0 %1179
  %1183 = vrot.lane.b32.xlu0 %v1171, 24
  %v1184 = vpop.permute.xlu0 %1183
  %v1186 = vsel %vm192, %v1000, %v1176
  %v1187 = vsel %vm436, %v1186, %v1180
  %v1188 = vsel %vm438, %v1187, %v1184
  %v1190 = vrot.slane %v692, 3
  %v1193 = vrot.slane %v935, 6
  %v1196 = vrot.slane %v1188, 1
  %vm1198 = vcmask 1044480
  %v1199 = vsel %vm1198, %v439, %v1190
  %v1200 = vsel %vm232, %v1190, %v1193
  %vm1201 = vcmask 1046528
  %v1202 = vsel %vm1201, %v1200, %v1196
  %v1203 = vpack.c.bf16 %v1202, %v1199
  %v1204 = vpack.c.bf16 %v1196, %v1196
  %v1205 = vld [vmem:[%s5] sm:$0xf]
  %v1206 = vld [vmem:[%s5 + $0x4] sm:$0xf]
  %v1207 = vld [vmem:[%s5 + $0x8] sm:$0xf]
  %v1208 = vld [vmem:[%s5 + $0xc] sm:$0xf]
  %v1209 = vld [vmem:[%s6] sm:$0x1]
  %v1211 = vperm.slane %v1209, 0
  %v1217 = vunpack.c.l.b16 %v1205
  %v1218 = vunpack.c.l.b16 %v1206
  %v1219 = vunpack.c.l.b16 %v1207
  %v1220 = vunpack.c.l.b16 %v1208
  %v1221 = vpack.c.b16 %v1218, %v1217
  %v1222 = vpack.c.b16 %v1220, %v1219
  %v1226 = vsel %vm53, %v1203, 0
  %v1229 = vsel %vm53, %v1204, 0
  %1231 = vmatpush.bf16.msra.mxu0 0
  %1232 = vmatpush.bf16.msra.mxu0 0
  %1233 = vmatpush.bf16.msra.mxu0 0
  %1234 = vmatpush.bf16.msra.mxu0 0
  %1235 = vmatpush.bf16.msra.mxu0 0
  %1236 = vmatpush.bf16.msra.mxu0 0
  %1237 = vmatpush.bf16.msra.mxu0 %v1222
  %1238 = vmatpush.bf16.msra.mxu0 %v1221
  %1239 = vmatmul.bf16.gmra.mxu0 %v1226
  %v1240 = vpop.f32.mrf.mxu0
  %v1241 = vadd.f32 %v1211, %v1240
  %v1242 = vpop.f32.mrf.mxu0
  %v1243 = vadd.f32 %v1211, %v1242
  %1244 = vmatmul.bf16.gmra.mxu0 %v1229
  %v1245 = vpop.f32.mrf.mxu0
  %v1246 = vadd.f32 %v1211, %v1245
  %v1247 = vpop.f32.mrf.mxu0
  %1248 = vdwg.mxu0
  %v1249 = vadd.f32 %v48, %v1241
  %v1250 = vadd.f32 %v49, %v1243
  %v1251 = vadd.f32 %v50, %v1246
  %v1252 = vld [vmem:[%s7] sm:$0x1]
  %v1253 = vld [vmem:[%s8] sm:$0x1]
  %v1254 = vsel %vm53, %v1249, 0.0
  %1255 = vadd.xlane.f32.xlu0 %v1254
  %v1256 = vpop.xlane.xlu0 %1255
  %v1257 = vsel %vm53, %v1250, 0.0
  %1258 = vadd.xlane.f32.xlu0 %v1257
  %v1259 = vpop.xlane.xlu0 %1258
  %v1260 = vsel %vm60, %v1251, 0.0
  %1261 = vadd.xlane.f32.xlu0 %v1260
  %v1262 = vpop.xlane.xlu0 %1261
  %v1263 = vmul.f32 %v1256, %v70
  %v1264 = vmul.f32 %v1259, %v70
  %v1265 = vmul.f32 %v1262, %v70
  %v1266 = vsub.f32 %v1249, %v1263
  %v1267 = vsub.f32 %v1250, %v1264
  %v1268 = vsub.f32 %v1251, %v1265
  %v1269 = vmul.f32 %v1266, %v1266
  %v1270 = vmul.f32 %v1267, %v1267
  %v1271 = vmul.f32 %v1268, %v1268
  %v1272 = vsel %vm53, %v1269, 0.0
  %1273 = vadd.xlane.f32.xlu0 %v1272
  %v1274 = vpop.xlane.xlu0 %1273
  %v1275 = vsel %vm53, %v1270, 0.0
  %1276 = vadd.xlane.f32.xlu0 %v1275
  %v1277 = vpop.xlane.xlu0 %1276
  %v1278 = vsel %vm60, %v1271, 0.0
  %1279 = vadd.xlane.f32.xlu0 %v1278
  %v1280 = vpop.xlane.xlu0 %1279
  %v1281 = vmul.f32 %v1274, %v70
  %v1282 = vmul.f32 %v1277, %v70
  %v1283 = vmul.f32 %v1280, %v70
  %v1284 = vadd.f32 %v1281, 1e-05
  %v1285 = vadd.f32 %v1282, 1e-05
  %v1286 = vadd.f32 %v1283, 1e-05
  %v1287 = vrsqrt.pop %v1284
  %v1288 = vmul.f32 %v1287, %v1284
  %v1289 = vmul.f32 %v1288, %v1287
  %v1290 = vmul.f32 0.5, %v1289
  %v1291 = vsub.f32 1.5, %v1290
  %v1292 = vmul.f32 %v1287, %v1291
  %vm1293 = vweird.f32 %v1284
  %vm1294 = vweird.f32 %v1287
  %vm1295 = vmor %vm1293, %vm1294
  %v1296 = vsel %vm1295, %v1287, %v1292
  %v1297 = vrsqrt.pop %v1285
  %v1298 = vmul.f32 %v1297, %v1285
  %v1299 = vmul.f32 %v1298, %v1297
  %v1300 = vmul.f32 0.5, %v1299
  %v1301 = vsub.f32 1.5, %v1300
  %v1302 = vmul.f32 %v1297, %v1301
  %vm1303 = vweird.f32 %v1285
  %vm1304 = vweird.f32 %v1297
  %vm1305 = vmor %vm1303, %vm1304
  %v1306 = vsel %vm1305, %v1297, %v1302
  %v1307 = vrsqrt.pop %v1286
  %v1308 = vmul.f32 %v1307, %v1286
  %v1309 = vmul.f32 %v1308, %v1307
  %v1310 = vmul.f32 0.5, %v1309
  %v1311 = vsub.f32 1.5, %v1310
  %v1312 = vmul.f32 %v1307, %v1311
  %vm1313 = vweird.f32 %v1286
  %vm1314 = vweird.f32 %v1307
  %vm1315 = vmor %vm1313, %vm1314
  %v1316 = vsel %vm1315, %v1307, %v1312
  %v1317 = vmul.f32 %v1266, %v1296
  %v1318 = vmul.f32 %v1267, %v1306
  %v1319 = vmul.f32 %v1268, %v1316
  %v1321 = vperm.slane %v1252, 0
  %v1323 = vmul.f32 %v1317, %v1321
  %v1324 = vmul.f32 %v1318, %v1321
  %v1325 = vmul.f32 %v1319, %v1321
  %v1327 = vperm.slane %v1253, 0
  %v1329 = vadd.f32 %v1323, %v1327
  %v1330 = vadd.f32 %v1324, %v1327
  %v1331 = vadd.f32 %v1325, %v1327
  %v1332 = vpack.c.bf16 %v1330, %v1329
  %v1333 = vpack.c.bf16 %v1331, %v1331
  %v1334 = vld [vmem:[%s9] sm:$0xf]
  %v1335 = vld [vmem:[%s9 + $0x4] sm:$0xf]
  %v1336 = vld [vmem:[%s9 + $0x8] sm:$0xf]
  %v1337 = vld [vmem:[%s9 + $0xc] sm:$0xf]
  %v1338 = vld [vmem:[%s10] sm:$0x1]
  %v1340 = vperm.slane %v1338, 0
  %v1346 = vunpack.c.l.b16 %v1334
  %v1347 = vunpack.c.l.b16 %v1335
  %v1348 = vunpack.c.l.b16 %v1336
  %v1349 = vunpack.c.l.b16 %v1337
  %v1350 = vpack.c.b16 %v1347, %v1346
  %v1351 = vpack.c.b16 %v1349, %v1348
  %v1355 = vsel %vm53, %v1332, 0
  %v1358 = vsel %vm53, %v1333, 0
  %1360 = vmatpush.bf16.msra.mxu0 0
  %1361 = vmatpush.bf16.msra.mxu0 0
  %1362 = vmatpush.bf16.msra.mxu0 0
  %1363 = vmatpush.bf16.msra.mxu0 0
  %1364 = vmatpush.bf16.msra.mxu0 0
  %1365 = vmatpush.bf16.msra.mxu0 0
  %1366 = vmatpush.bf16.msra.mxu0 %v1351
  %1367 = vmatpush.bf16.msra.mxu0 %v1350
  %1368 = vmatmul.bf16.gmra.mxu0 %v1355
  %v1369 = vpop.f32.mrf.mxu0
  %v1370 = vadd.f32 %v1340, %v1369
  %v1371 = vpop.f32.mrf.mxu0
  %v1372 = vadd.f32 %v1340, %v1371
  %1373 = vmatmul.bf16.gmra.mxu0 %v1358
  %v1374 = vpop.f32.mrf.mxu0
  %v1375 = vadd.f32 %v1340, %v1374
  %v1376 = vpop.f32.mrf.mxu0
  %1377 = vdwg.mxu0
  %v1378 = vmul.f32 %v1370, -1.702
  %v1379 = vmul.f32 %v1372, -1.702
  %v1380 = vmul.f32 %v1375, -1.702
  %v1381 = vmul.f32 %v1378, 1.442695
  %v1382 = vpow.pop %v1381
  %v1383 = vmul.f32 %v1379, 1.442695
  %v1384 = vpow.pop %v1383
  %v1385 = vmul.f32 %v1380, 1.442695
  %v1386 = vpow.pop %v1385
  %v1387 = vadd.f32 %v1382, 1.0
  %v1388 = vadd.f32 %v1384, 1.0
  %v1389 = vadd.f32 %v1386, 1.0
  %v1390 = vrcp.pop %v1387
  %v1391 = vmul.f32 %v1387, %v1390
  %v1392 = vsub.f32 1.0, %v1391
  %v1393 = vmul.f32 %v1390, %v1392
  %v1394 = vadd.f32 %v1390, %v1393
  %vm1395 = vweird.f32 %v1387
  %vm1396 = vweird.f32 %v1390
  %vm1397 = vmor %vm1395, %vm1396
  %v1398 = vsel %vm1397, %v1390, %v1394
  %v1399 = vand.u32 2147483647, %v1387
  %vm1400 = vcmp.eq.f32.partialorder %v1399, 8.507059e+37
  %v1401 = vand.u32 %v1387, 2147483648
  %v1402 = vor.u32 1.1754944e-38, %v1401
  %v1403 = vsel %vm1400, %v1402, %v1398
  %v1404 = vmul.f32 1.0, %v1403
  %v1405 = vrcp.pop %v1388
  %v1406 = vmul.f32 %v1388, %v1405
  %v1407 = vsub.f32 1.0, %v1406
  %v1408 = vmul.f32 %v1405, %v1407
  %v1409 = vadd.f32 %v1405, %v1408
  %vm1410 = vweird.f32 %v1388
  %vm1411 = vweird.f32 %v1405
  %vm1412 = vmor %vm1410, %vm1411
  %v1413 = vsel %vm1412, %v1405, %v1409
  %v1414 = vand.u32 2147483647, %v1388
  %vm1415 = vcmp.eq.f32.partialorder %v1414, 8.507059e+37
  %v1416 = vand.u32 %v1388, 2147483648
  %v1417 = vor.u32 1.1754944e-38, %v1416
  %v1418 = vsel %vm1415, %v1417, %v1413
  %v1419 = vmul.f32 1.0, %v1418
  %v1420 = vrcp.pop %v1389
  %v1421 = vmul.f32 %v1389, %v1420
  %v1422 = vsub.f32 1.0, %v1421
  %v1423 = vmul.f32 %v1420, %v1422
  %v1424 = vadd.f32 %v1420, %v1423
  %vm1425 = vweird.f32 %v1389
  %vm1426 = vweird.f32 %v1420
  %vm1427 = vmor %vm1425, %vm1426
  %v1428 = vsel %vm1427, %v1420, %v1424
  %v1429 = vand.u32 2147483647, %v1389
  %vm1430 = vcmp.eq.f32.partialorder %v1429, 8.507059e+37
  %v1431 = vand.u32 %v1389, 2147483648
  %v1432 = vor.u32 1.1754944e-38, %v1431
  %v1433 = vsel %vm1430, %v1432, %v1428
  %v1434 = vmul.f32 1.0, %v1433
  %v1435 = vmul.f32 %v1370, %v1404
  %v1436 = vmul.f32 %v1372, %v1419
  %v1437 = vmul.f32 %v1375, %v1434
  %v1438 = vpack.c.bf16 %v1436, %v1435
  %v1439 = vpack.c.bf16 %v1437, %v1437
  %v1440 = vld [vmem:[%s11] sm:$0xf]
  %v1441 = vld [vmem:[%s11 + $0x4] sm:$0xf]
  %v1442 = vld [vmem:[%s11 + $0x8] sm:$0xf]
  %v1443 = vld [vmem:[%s11 + $0xc] sm:$0xf]
  %v1444 = vld [vmem:[%s11 + $0x10] sm:$0xf]
  %v1445 = vld [vmem:[%s11 + $0x14] sm:$0xf]
  %v1446 = vld [vmem:[%s11 + $0x18] sm:$0xf]
  %v1447 = vld [vmem:[%s11 + $0x1c] sm:$0xf]
  %v1448 = vld [vmem:[%s11 + $0x20] sm:$0xf]
  %v1449 = vld [vmem:[%s11 + $0x24] sm:$0xf]
  %v1450 = vld [vmem:[%s11 + $0x28] sm:$0xf]
  %v1451 = vld [vmem:[%s11 + $0x2c] sm:$0xf]
  %v1452 = vld [vmem:[%s11 + $0x30] sm:$0xf]
  %v1453 = vld [vmem:[%s11 + $0x34] sm:$0xf]
  %v1454 = vld [vmem:[%s11 + $0x38] sm:$0xf]
  %v1455 = vld [vmem:[%s11 + $0x3c] sm:$0xf]
  %v1456 = vld [vmem:[%s12] sm:$0x1]
  %v1458 = vperm.slane %v1456, 0
  %v1476 = vunpack.c.l.b16 %v1440
  %v1477 = vunpack.c.l.b16 %v1441
  %v1478 = vunpack.c.l.b16 %v1442
  %v1479 = vunpack.c.l.b16 %v1443
  %v1480 = vunpack.c.l.b16 %v1444
  %v1481 = vunpack.c.l.b16 %v1445
  %v1482 = vunpack.c.l.b16 %v1446
  %v1483 = vunpack.c.l.b16 %v1447
  %v1484 = vunpack.c.l.b16 %v1448
  %v1485 = vunpack.c.l.b16 %v1449
  %v1486 = vunpack.c.l.b16 %v1450
  %v1487 = vunpack.c.l.b16 %v1451
  %v1488 = vunpack.c.l.b16 %v1452
  %v1489 = vunpack.c.l.b16 %v1453
  %v1490 = vunpack.c.l.b16 %v1454
  %v1491 = vunpack.c.l.b16 %v1455
  %v1492 = vpack.c.b16 %v1477, %v1476
  %v1493 = vpack.c.b16 %v1479, %v1478
  %v1494 = vpack.c.b16 %v1481, %v1480
  %v1495 = vpack.c.b16 %v1483, %v1482
  %v1496 = vpack.c.b16 %v1485, %v1484
  %v1497 = vpack.c.b16 %v1487, %v1486
  %v1498 = vpack.c.b16 %v1489, %v1488
  %v1499 = vpack.c.b16 %v1491, %v1490
  %1508 = vmatpush.bf16.msra.mxu0 %v1499
  %1509 = vmatpush.bf16.msra.mxu0 %v1498
  %1510 = vmatpush.bf16.msra.mxu0 %v1497
  %1511 = vmatpush.bf16.msra.mxu0 %v1496
  %1512 = vmatpush.bf16.msra.mxu0 %v1495
  %1513 = vmatpush.bf16.msra.mxu0 %v1494
  %1514 = vmatpush.bf16.msra.mxu0 %v1493
  %1515 = vmatpush.bf16.msra.mxu0 %v1492
  %1516 = vmatmul.bf16.gmra.mxu0 %v1438
  %v1517 = vpop.f32.mrf.mxu0
  %v1518 = vadd.f32 %v1458, %v1517
  %v1519 = vpop.f32.mrf.mxu0
  %v1520 = vadd.f32 %v1458, %v1519
  %1521 = vmatmul.bf16.gmra.mxu0 %v1439
  %v1522 = vpop.f32.mrf.mxu0
  %v1523 = vadd.f32 %v1458, %v1522
  %v1524 = vpop.f32.mrf.mxu0
  %1525 = vdwg.mxu0
  %v1526 = vadd.f32 %v1249, %v1518
  %v1527 = vadd.f32 %v1250, %v1520
  %v1528 = vadd.f32 %v1251, %v1523
  %v1529 = vpack.c.bf16 %v1526, %v1526
  %v1530 = vpack.c.bf16 %v1527, %v1527
  %v1531 = vpack.c.bf16 %v1528, %v1528
  %1532 = vst.msk [vmem:[%s13] sm:$0xf] %vm60, %v1529
  %1533 = vst.msk [vmem:[%s13 + $0x4] sm:$0xf] %vm60, %v1530
  %vm1534 = vcmask 254976
  %1535 = vst.msk [vmem:[%s13 + $0x8] sm:$0x3] %vm1534, %v1531
  // Predicated region
  $region54: #{vision_transformer_forward.6} parent=0 // pred_check
    _
  $region55: #{vision_transformer_forward.6} parent=0 // pred_check_branch
    %1537 = sbr.rel (0) target = $region57
  $region56: #{vision_transformer_forward.6} parent=0 // pred_region
    _
  $region57: #{vision_transformer_forward.6} parent=0 // pred_fallthru
    _
  // Predicated region
  $region58: #{vision_transformer_forward.6} parent=0 // pred_check
    _
  $region59: #{vision_transformer_forward.6} parent=0 // pred_check_branch
    %1539 = sbr.rel (0) target = $region61
  $region60: #{vision_transformer_forward.6} parent=0 // pred_region
    _
  $region61: #{vision_transformer_forward.6} parent=0 // pred_fallthru
    _

// kernel: vision_transformer_forward.7
$region0: #{vision_transformer_forward.7}
  #allocation0 [shape = 'u32[]', space=smem, size = 0x4, offset = 0x4, fixed_abs, tag = 'smem constant byte address 0x4 - core index']
  #allocation1 [shape = 'u32[72,128]{1,0:T(1,128)}', space=vmem, size = 0x9000, scoped, tag = 'internal scratch']
  %s0 = inlined_call_operand.vmem [shape: bf16[20,32], index: 0, kind: input, shape index: {}]
  %s1 = inlined_call_operand.vmem [shape: f32[2,32], index: 1, kind: input, shape index: {}]
  %s2 = inlined_call_operand.vmem [shape: f32[27,32], index: 2, kind: input, shape index: {}]
  %s3 = inlined_call_operand.vmem [shape: f32[1,32], index: 3, kind: input, shape index: {}]
  %s4 = inlined_call_operand.vmem [shape: f32[1,32], index: 4, kind: input, shape index: {}]
  %s5 = inlined_call_operand.vmem [shape: f32[1,32], index: 5, kind: input, shape index: {}]
  %s6 = inlined_call_operand.hbm [shape: f32[1,32], index: 6, kind: input, shape index: {}]
  %s7 = inlined_call_operand.hbm [shape: f32[1,32], index: 7, kind: input, shape index: {}]
  %s8 = inlined_call_operand.vmem [shape: bf16[32,32], index: 8, kind: input, shape index: {}]
  %s9 = inlined_call_operand.hbm [shape: f32[1,32], index: 9, kind: input, shape index: {}]
  %s10 = inlined_call_operand.vmem [shape: bf16[32,64], index: 10, kind: input, shape index: {}]
  %s11 = inlined_call_operand.hbm [shape: f32[1,64], index: 11, kind: input, shape index: {}]
  %s12 = inlined_call_operand.vmem [shape: bf16[32,32], index: 12, kind: input, shape index: {}]
  %s13 = inlined_call_operand.hbm [shape: f32[1,32], index: 13, kind: input, shape index: {}]
  %s14 = inlined_call_operand.hbm [shape: f32[1,32], index: 14, kind: input, shape index: {}]
  %s15 = inlined_call_operand.hbm [shape: f32[1,32], index: 15, kind: input, shape index: {}]
  %s16 = inlined_call_operand.vmem [shape: bf16[32,128], index: 16, kind: input, shape index: {}]
  %s17 = inlined_call_operand.hbm [shape: f32[1,128], index: 17, kind: input, shape index: {}]
  %s18 = inlined_call_operand.vmem [shape: bf16[128,32], index: 18, kind: input, shape index: {}]
  %s19 = inlined_call_operand.hbm [shape: f32[1,32], index: 19, kind: input, shape index: {}]
  %s20 = inlined_call_operand.vmem [shape: f32[2,32], index: 20, kind: output, shape index: {}]
  %s21 = sld [smem:[#allocation0]]
  $region126: #{vision_transformer_forward.7} parent=0
    _
  %s23 = ssub.s32 1, %s21
  %s24 = scalar_select 0, %s23, %s21
  $region1: #{vision_transformer_forward.7} parent=0
    #allocation2 [shape = 'u8[512]{0}', space=vmem, size = 0x400, scoped, tag = 'input window, operand 6, single buffered']
    #allocation3 [shape = 's32[1]{0}', space=sflag, size = 0x4, scoped, tag = 'scoped memory for vision_transformer_forward.7']
    #allocation4 [shape = 'u8[512]{0}', space=vmem, size = 0x400, scoped, tag = 'input window, operand 7, single buffered']
    #allocation5 [shape = 's32[1]{0}', space=sflag, size = 0x4, scoped, tag = 'scoped memory for vision_transformer_forward.7']
    #allocation6 [shape = 'u8[512]{0}', space=vmem, size = 0x400, scoped, tag = 'input window, operand 9, single buffered']
    #allocation7 [shape = 'u8[512]{0}', space=vmem, size = 0x400, scoped, tag = 'input window, operand 11, single buffered']
    #allocation8 [shape = 's32[1]{0}', space=sflag, size = 0x4, scoped, tag = 'scoped memory for vision_transformer_forward.7']
    #allocation9 [shape = 'u8[512]{0}', space=vmem, size = 0x400, scoped, tag = 'input window, operand 13, single buffered']
    #allocation10 [shape = 'u8[512]{0}', space=vmem, size = 0x400, scoped, tag = 'input window, operand 14, single buffered']
    #allocation11 [shape = 's32[1]{0}', space=sflag, size = 0x4, scoped, tag = 'scoped memory for vision_transformer_forward.7']
    #allocation12 [shape = 'u8[512]{0}', space=vmem, size = 0x400, scoped, tag = 'input window, operand 15, single buffered']
    #allocation13 [shape = 'u8[512]{0}', space=vmem, size = 0x400, scoped, tag = 'input window, operand 17, single buffered']
    #allocation14 [shape = 's32[1]{0}', space=sflag, size = 0x4, scoped, tag = 'scoped memory for vision_transformer_forward.7']
    #allocation15 [shape = 'u8[512]{0}', space=vmem, size = 0x400, scoped, tag = 'input window, operand 19, single buffered']
    %25 = vsyncpa [#allocation3], 0
    %26 = vsyncpa [#allocation5], 0
    %27 = vsyncpa [#allocation8], 0
    %28 = vsyncpa [#allocation11], 0
    %29 = vsyncpa [#allocation14], 0
    // Predicated region
    $region2: #{vision_transformer_forward.7} parent=1 // pred_check
      _
    $region3: #{vision_transformer_forward.7} parent=1 // pred_check_branch
      %31 = sbr.rel (0) target = $region5
    $region4: #{vision_transformer_forward.7} parent=1 // pred_region
      _
    $region5: #{vision_transformer_forward.7} parent=1 // pred_fallthru
      _
    // Predicated region
    $region6: #{vision_transformer_forward.7} parent=1 // pred_check
      _
    $region7: #{vision_transformer_forward.7} parent=1 // pred_check_branch
      %33 = sbr.rel (0) target = $region9
    $region8: #{vision_transformer_forward.7} parent=1 // pred_region
      _
    $region9: #{vision_transformer_forward.7} parent=1 // pred_fallthru
      _
    // Predicated region
    $region10: #{vision_transformer_forward.7} parent=1 // pred_check
      _
    $region11: #{vision_transformer_forward.7} parent=1 // pred_check_branch
      %35 = sbr.rel (0) target = $region13
    $region12: #{vision_transformer_forward.7} parent=1 // pred_region
      _
    $region13: #{vision_transformer_forward.7} parent=1 // pred_fallthru
      _
    // Predicated region
    $region14: #{vision_transformer_forward.7} parent=1 // pred_check
      _
    $region15: #{vision_transformer_forward.7} parent=1 // pred_check_branch
      %37 = sbr.rel (0) target = $region17
    $region16: #{vision_transformer_forward.7} parent=1 // pred_region
      _
    $region17: #{vision_transformer_forward.7} parent=1 // pred_fallthru
      _
    // Predicated region
    $region18: #{vision_transformer_forward.7} parent=1 // pred_check
      _
    $region19: #{vision_transformer_forward.7} parent=1 // pred_check_branch
      %39 = sbr.rel (0) target = $region21
    $region20: #{vision_transformer_forward.7} parent=1 // pred_region
      _
    $region21: #{vision_transformer_forward.7} parent=1 // pred_fallthru
      _
    // Predicated region
    $region22: #{vision_transformer_forward.7} parent=1 // pred_check
      _
    $region23: #{vision_transformer_forward.7} parent=1 // pred_check_branch
      %41 = sbr.rel (0) target = $region25
    $region24: #{vision_transformer_forward.7} parent=1 // pred_region
      _
    $region25: #{vision_transformer_forward.7} parent=1 // pred_fallthru
      _
    // Predicated region
    $region26: #{vision_transformer_forward.7} parent=1 // pred_check
      _
    $region27: #{vision_transformer_forward.7} parent=1 // pred_check_branch
      %43 = sbr.rel (0) target = $region29
    $region28: #{vision_transformer_forward.7} parent=1 // pred_region
      %45 = vsyncadd [#allocation3], 0
      %s47 = sshll.u32 %s6, 4
      %s48 = int_to_ptr.hbm [resolvable:$true] %s47
      %s49 = sshll.u32 [#allocation2], 4
      %s50 = int_to_ptr.vmem [resolvable:$true] %s49
      %52 = dma.hbm_to_vmem [thread:$0]  %s48, 16, %s50, [#allocation3]
    $region29: #{vision_transformer_forward.7} parent=1 // pred_fallthru
      _
    // Predicated region
    $region30: #{vision_transformer_forward.7} parent=1 // pred_check
      _
    $region31: #{vision_transformer_forward.7} parent=1 // pred_check_branch
      %54 = sbr.rel (0) target = $region33
    $region32: #{vision_transformer_forward.7} parent=1 // pred_region
      %56 = vsyncadd [#allocation5], 0
      %s58 = sshll.u32 %s7, 4
      %s59 = int_to_ptr.hbm [resolvable:$true] %s58
      %s60 = sshll.u32 [#allocation4], 4
      %s61 = int_to_ptr.vmem [resolvable:$true] %s60
      %63 = dma.hbm_to_vmem [thread:$0]  %s59, 16, %s61, [#allocation5]
    $region33: #{vision_transformer_forward.7} parent=1 // pred_fallthru
      _
    // Predicated region
    $region34: #{vision_transformer_forward.7} parent=1 // pred_check
      _
    $region35: #{vision_transformer_forward.7} parent=1 // pred_check_branch
      %65 = sbr.rel (0) target = $region37
    $region36: #{vision_transformer_forward.7} parent=1 // pred_region
      _
    $region37: #{vision_transformer_forward.7} parent=1 // pred_fallthru
      _
    // Predicated region
    $region38: #{vision_transformer_forward.7} parent=1 // pred_check
      _
    $region39: #{vision_transformer_forward.7} parent=1 // pred_check_branch
      %67 = sbr.rel (0) target = $region41
    $region40: #{vision_transformer_forward.7} parent=1 // pred_region
      %69 = vsyncadd [#allocation5], 0
      %s71 = sshll.u32 %s9, 4
      %s72 = int_to_ptr.hbm [resolvable:$true] %s71
      %s73 = sshll.u32 [#allocation6], 4
      %s74 = int_to_ptr.vmem [resolvable:$true] %s73
      %76 = dma.hbm_to_vmem [thread:$0]  %s72, 16, %s74, [#allocation5]
    $region41: #{vision_transformer_forward.7} parent=1 // pred_fallthru
      _
    // Predicated region
    $region42: #{vision_transformer_forward.7} parent=1 // pred_check
      _
    $region43: #{vision_transformer_forward.7} parent=1 // pred_check_branch
      %78 = sbr.rel (0) target = $region45
    $region44: #{vision_transformer_forward.7} parent=1 // pred_region
      _
    $region45: #{vision_transformer_forward.7} parent=1 // pred_fallthru
      _
    // Predicated region
    $region46: #{vision_transformer_forward.7} parent=1 // pred_check
      _
    $region47: #{vision_transformer_forward.7} parent=1 // pred_check_branch
      %80 = sbr.rel (0) target = $region49
    $region48: #{vision_transformer_forward.7} parent=1 // pred_region
      %82 = vsyncadd [#allocation8], 0
      %s84 = sshll.u32 %s11, 4
      %s85 = int_to_ptr.hbm [resolvable:$true] %s84
      %s86 = sshll.u32 [#allocation7], 4
      %s87 = int_to_ptr.vmem [resolvable:$true] %s86
      %89 = dma.hbm_to_vmem [thread:$0]  %s85, 16, %s87, [#allocation8]
    $region49: #{vision_transformer_forward.7} parent=1 // pred_fallthru
      _
    // Predicated region
    $region50: #{vision_transformer_forward.7} parent=1 // pred_check
      _
    $region51: #{vision_transformer_forward.7} parent=1 // pred_check_branch
      %91 = sbr.rel (0) target = $region53
    $region52: #{vision_transformer_forward.7} parent=1 // pred_region
      _
    $region53: #{vision_transformer_forward.7} parent=1 // pred_fallthru
      _
    // Predicated region
    $region54: #{vision_transformer_forward.7} parent=1 // pred_check
      _
    $region55: #{vision_transformer_forward.7} parent=1 // pred_check_branch
      %93 = sbr.rel (0) target = $region57
    $region56: #{vision_transformer_forward.7} parent=1 // pred_region
      %95 = vsyncadd [#allocation8], 0
      %s97 = sshll.u32 %s13, 4
      %s98 = int_to_ptr.hbm [resolvable:$true] %s97
      %s99 = sshll.u32 [#allocation9], 4
      %s100 = int_to_ptr.vmem [resolvable:$true] %s99
      %102 = dma.hbm_to_vmem [thread:$0]  %s98, 16, %s100, [#allocation8]
    $region57: #{vision_transformer_forward.7} parent=1 // pred_fallthru
      _
    // Predicated region
    $region58: #{vision_transformer_forward.7} parent=1 // pred_check
      _
    $region59: #{vision_transformer_forward.7} parent=1 // pred_check_branch
      %104 = sbr.rel (0) target = $region61
    $region60: #{vision_transformer_forward.7} parent=1 // pred_region
      %106 = vsyncadd [#allocation11], 0
      %s108 = sshll.u32 %s14, 4
      %s109 = int_to_ptr.hbm [resolvable:$true] %s108
      %s110 = sshll.u32 [#allocation10], 4
      %s111 = int_to_ptr.vmem [resolvable:$true] %s110
      %113 = dma.hbm_to_vmem [thread:$0]  %s109, 16, %s111, [#allocation11]
    $region61: #{vision_transformer_forward.7} parent=1 // pred_fallthru
      _
    // Predicated region
    $region62: #{vision_transformer_forward.7} parent=1 // pred_check
      _
    $region63: #{vision_transformer_forward.7} parent=1 // pred_check_branch
      %115 = sbr.rel (0) target = $region65
    $region64: #{vision_transformer_forward.7} parent=1 // pred_region
      %117 = vsyncadd [#allocation11], 0
      %s119 = sshll.u32 %s15, 4
      %s120 = int_to_ptr.hbm [resolvable:$true] %s119
      %s121 = sshll.u32 [#allocation12], 4
      %s122 = int_to_ptr.vmem [resolvable:$true] %s121
      %124 = dma.hbm_to_vmem [thread:$0]  %s120, 16, %s122, [#allocation11]
    $region65: #{vision_transformer_forward.7} parent=1 // pred_fallthru
      _
    // Predicated region
    $region66: #{vision_transformer_forward.7} parent=1 // pred_check
      _
    $region67: #{vision_transformer_forward.7} parent=1 // pred_check_branch
      %126 = sbr.rel (0) target = $region69
    $region68: #{vision_transformer_forward.7} parent=1 // pred_region
      _
    $region69: #{vision_transformer_forward.7} parent=1 // pred_fallthru
      _
    // Predicated region
    $region70: #{vision_transformer_forward.7} parent=1 // pred_check
      _
    $region71: #{vision_transformer_forward.7} parent=1 // pred_check_branch
      %128 = sbr.rel (0) target = $region73
    $region72: #{vision_transformer_forward.7} parent=1 // pred_region
      %130 = vsyncadd [#allocation14], 0
      %s132 = sshll.u32 %s17, 4
      %s133 = int_to_ptr.hbm [resolvable:$true] %s132
      %s134 = sshll.u32 [#allocation13], 4
      %s135 = int_to_ptr.vmem [resolvable:$true] %s134
      %137 = dma.hbm_to_vmem [thread:$0]  %s133, 16, %s135, [#allocation14]
    $region73: #{vision_transformer_forward.7} parent=1 // pred_fallthru
      _
    // Predicated region
    $region74: #{vision_transformer_forward.7} parent=1 // pred_check
      _
    $region75: #{vision_transformer_forward.7} parent=1 // pred_check_branch
      %139 = sbr.rel (0) target = $region77
    $region76: #{vision_transformer_forward.7} parent=1 // pred_region
      _
    $region77: #{vision_transformer_forward.7} parent=1 // pred_fallthru
      _
    // Predicated region
    $region78: #{vision_transformer_forward.7} parent=1 // pred_check
      _
    $region79: #{vision_transformer_forward.7} parent=1 // pred_check_branch
      %141 = sbr.rel (0) target = $region81
    $region80: #{vision_transformer_forward.7} parent=1 // pred_region
      %143 = vsyncadd [#allocation14], 0
      %s145 = sshll.u32 %s19, 4
      %s146 = int_to_ptr.hbm [resolvable:$true] %s145
      %s147 = sshll.u32 [#allocation15], 4
      %s148 = int_to_ptr.vmem [resolvable:$true] %s147
      %150 = dma.hbm_to_vmem [thread:$0]  %s146, 16, %s148, [#allocation14]
    $region81: #{vision_transformer_forward.7} parent=1 // pred_fallthru
      _
    // Predicated region
    $region82: #{vision_transformer_forward.7} parent=1 // pred_check
      _
    $region83: #{vision_transformer_forward.7} parent=1 // pred_check_branch
      %152 = sbr.rel (0) target = $region85
    $region84: #{vision_transformer_forward.7} parent=1 // pred_region
      %154 = dma.done [#allocation3], 16
    $region85: #{vision_transformer_forward.7} parent=1 // pred_fallthru
      _
    // Predicated region
    $region86: #{vision_transformer_forward.7} parent=1 // pred_check
      _
    $region87: #{vision_transformer_forward.7} parent=1 // pred_check_branch
      %156 = sbr.rel (0) target = $region89
    $region88: #{vision_transformer_forward.7} parent=1 // pred_region
      %158 = dma.done [#allocation5], 16
    $region89: #{vision_transformer_forward.7} parent=1 // pred_fallthru
      _
    // Predicated region
    $region90: #{vision_transformer_forward.7} parent=1 // pred_check
      _
    $region91: #{vision_transformer_forward.7} parent=1 // pred_check_branch
      %160 = sbr.rel (0) target = $region93
    $region92: #{vision_transformer_forward.7} parent=1 // pred_region
      %162 = dma.done [#allocation5], 16
    $region93: #{vision_transformer_forward.7} parent=1 // pred_fallthru
      _
    // Predicated region
    $region94: #{vision_transformer_forward.7} parent=1 // pred_check
      _
    $region95: #{vision_transformer_forward.7} parent=1 // pred_check_branch
      %164 = sbr.rel (0) target = $region97
    $region96: #{vision_transformer_forward.7} parent=1 // pred_region
      %166 = dma.done [#allocation8], 16
    $region97: #{vision_transformer_forward.7} parent=1 // pred_fallthru
      _
    // Predicated region
    $region98: #{vision_transformer_forward.7} parent=1 // pred_check
      _
    $region99: #{vision_transformer_forward.7} parent=1 // pred_check_branch
      %168 = sbr.rel (0) target = $region101
    $region100: #{vision_transformer_forward.7} parent=1 // pred_region
      %170 = dma.done [#allocation8], 16
    $region101: #{vision_transformer_forward.7} parent=1 // pred_fallthru
      _
    // Predicated region
    $region102: #{vision_transformer_forward.7} parent=1 // pred_check
      _
    $region103: #{vision_transformer_forward.7} parent=1 // pred_check_branch
      %172 = sbr.rel (0) target = $region105
    $region104: #{vision_transformer_forward.7} parent=1 // pred_region
      %174 = dma.done [#allocation11], 16
    $region105: #{vision_transformer_forward.7} parent=1 // pred_fallthru
      _
    // Predicated region
    $region106: #{vision_transformer_forward.7} parent=1 // pred_check
      _
    $region107: #{vision_transformer_forward.7} parent=1 // pred_check_branch
      %176 = sbr.rel (0) target = $region109
    $region108: #{vision_transformer_forward.7} parent=1 // pred_region
      %178 = dma.done [#allocation11], 16
    $region109: #{vision_transformer_forward.7} parent=1 // pred_fallthru
      _
    // Predicated region
    $region110: #{vision_transformer_forward.7} parent=1 // pred_check
      _
    $region111: #{vision_transformer_forward.7} parent=1 // pred_check_branch
      %180 = sbr.rel (0) target = $region113
    $region112: #{vision_transformer_forward.7} parent=1 // pred_region
      %182 = dma.done [#allocation14], 16
    $region113: #{vision_transformer_forward.7} parent=1 // pred_fallthru
      _
    // Predicated region
    $region114: #{vision_transformer_forward.7} parent=1 // pred_check
      _
    $region115: #{vision_transformer_forward.7} parent=1 // pred_check_branch
      %184 = sbr.rel (0) target = $region117
    $region116: #{vision_transformer_forward.7} parent=1 // pred_region
      %186 = dma.done [#allocation14], 16
    $region117: #{vision_transformer_forward.7} parent=1 // pred_fallthru
      _
    %v188 = vld [vmem:[%s0] sm:$0xf]
    %v189 = vld [vmem:[%s0 + $0x4] sm:$0xf]
    %v190 = vld [vmem:[%s0 + $0x8] sm:$0x3]
    %v191 = vunpack.c.l.bf16 %v188
    %v192 = vunpack.c.l.bf16 %v189
    %v193 = vunpack.c.l.bf16 %v190
    %v194 = vld [vmem:[%s2] sm:$0xff]
    %v195 = vld [vmem:[%s2 + $0x8] sm:$0xff]
    %v196 = vld [vmem:[%s2 + $0x10] sm:$0xff]
    %v197 = vld [vmem:[%s2 + $0x18] sm:$0x7]
    %v198 = vld [vmem:[%s3] sm:$0x1]
    %v200 = vrot.slane %v191, 4
    %v202 = vmul.f32 %v195, %v200
    %204 = vst [vmem:[#allocation1] sm:$0xff] %v202
    %s205 = scalar_lea.vmem [#allocation1], 5
    %v206 = vld [vmem:[%s205] ss:$9 sm:$0xff]
    %v208 = vadd.f32 %v198, %v206
    %209 = vst [vmem:[#allocation1] sm:$0xff] %v202
    %s210 = scalar_lea.vmem [#allocation1], 6
    %v211 = vld [vmem:[%s210] ss:$9 sm:$0xff]
    %v213 = vadd.f32 %v208, %v211
    %v214 = vrot.slane %v191, 3
    %v216 = vmul.f32 %v196, %v214
    %v217 = vadd.f32 %v213, %v216
    %219 = vst [vmem:[#allocation1] sm:$0xff] %v216
    %s220 = scalar_lea.vmem [#allocation1], 1
    %v221 = vld [vmem:[%s220] ss:$9 sm:$0xff]
    %v223 = vadd.f32 %v217, %v221
    %v224 = vmul.f32 %v196, %v191
    %226 = vst [vmem:[#allocation1] sm:$0xff] %v224
    %s227 = scalar_lea.vmem [#allocation1], 6
    %v228 = vld [vmem:[%s227] ss:$9 sm:$0xff]
    %v230 = vadd.f32 %v223, %v228
    %231 = vst [vmem:[#allocation1] sm:$0xff] %v224
    %s232 = scalar_lea.vmem [#allocation1], 7
    %v233 = vld [vmem:[%s232] ss:$9 sm:$0xff]
    %v235 = vadd.f32 %v230, %v233
    %v237 = vrot.slane %v192, 7
    %v239 = vmul.f32 %v197, %v237
    %241 = vst [vmem:[#allocation1] sm:$0xff] %v239
    %s242 = scalar_lea.vmem [#allocation1], 1
    %v243 = vld [vmem:[%s242] ss:$9 sm:$0xff]
    %v245 = vadd.f32 %v235, %v243
    %246 = vst [vmem:[#allocation1] sm:$0xff] %v239
    %s247 = scalar_lea.vmem [#allocation1], 2
    %v248 = vld [vmem:[%s247] ss:$9 sm:$0xff]
    %v250 = vadd.f32 %v245, %v248
    %v252 = vperm.slane %v250, 0
    %v254 = vadd.f32 %v191, %v252
    %v255 = vrot.slane %v191, 5
    %v257 = vmul.f32 %v195, %v255
    %259 = vst [vmem:[#allocation1] sm:$0xff] %v257
    %s260 = scalar_lea.vmem [#allocation1], 4
    %v261 = vld [vmem:[%s260] ss:$9 sm:$0xff]
    %v263 = vadd.f32 %v198, %v261
    %264 = vst [vmem:[#allocation1] sm:$0xff] %v257
    %s265 = scalar_lea.vmem [#allocation1], 5
    %v266 = vld [vmem:[%s265] ss:$9 sm:$0xff]
    %v268 = vadd.f32 %v263, %v266
    %269 = vst [vmem:[#allocation1] sm:$0xff] %v202
    %s270 = scalar_lea.vmem [#allocation1], 7
    %v271 = vld [vmem:[%s270] ss:$9 sm:$0xff]
    %v273 = vadd.f32 %v268, %v271
    %v274 = vmul.f32 %v196, %v200
    %v275 = vadd.f32 %v273, %v274
    %v276 = vrot.slane %v191, 1
    %v278 = vmul.f32 %v196, %v276
    %280 = vst [vmem:[#allocation1] sm:$0xff] %v278
    %s281 = scalar_lea.vmem [#allocation1], 5
    %v282 = vld [vmem:[%s281] ss:$9 sm:$0xff]
    %v284 = vadd.f32 %v275, %v282
    %285 = vst [vmem:[#allocation1] sm:$0xff] %v278
    %s286 = scalar_lea.vmem [#allocation1], 6
    %v287 = vld [vmem:[%s286] ss:$9 sm:$0xff]
    %v289 = vadd.f32 %v284, %v287
    %v290 = vmul.f32 %v197, %v192
    %v291 = vadd.f32 %v289, %v290
    %293 = vst [vmem:[#allocation1] sm:$0xff] %v290
    %s294 = scalar_lea.vmem [#allocation1], 1
    %v295 = vld [vmem:[%s294] ss:$9 sm:$0xff]
    %v297 = vadd.f32 %v291, %v295
    %v299 = vperm.slane %v297, 0
    %v301 = vadd.f32 %v191, %v299
    %v302 = vrot.slane %v191, 7
    %v304 = vmul.f32 %v195, %v302
    %306 = vst [vmem:[#allocation1] sm:$0xff] %v304
    %s307 = scalar_lea.vmem [#allocation1], 2
    %v308 = vld [vmem:[%s307] ss:$9 sm:$0xff]
    %v310 = vadd.f32 %v198, %v308
    %311 = vst [vmem:[#allocation1] sm:$0xff] %v304
    %s312 = scalar_lea.vmem [#allocation1], 3
    %v313 = vld [vmem:[%s312] ss:$9 sm:$0xff]
    %v315 = vadd.f32 %v310, %v313
    %v316 = vrot.slane %v191, 6
    %v318 = vmul.f32 %v195, %v316
    %320 = vst [vmem:[#allocation1] sm:$0xff] %v318
    %s321 = scalar_lea.vmem [#allocation1], 5
    %v322 = vld [vmem:[%s321] ss:$9 sm:$0xff]
    %v324 = vadd.f32 %v315, %v322
    %325 = vst [vmem:[#allocation1] sm:$0xff] %v318
    %s326 = scalar_lea.vmem [#allocation1], 6
    %v327 = vld [vmem:[%s326] ss:$9 sm:$0xff]
    %v329 = vadd.f32 %v324, %v327
    %330 = vst [vmem:[#allocation1] sm:$0xff] %v216
    %s331 = scalar_lea.vmem [#allocation1], 3
    %v332 = vld [vmem:[%s331] ss:$9 sm:$0xff]
    %v334 = vadd.f32 %v329, %v332
    %335 = vst [vmem:[#allocation1] sm:$0xff] %v216
    %s336 = scalar_lea.vmem [#allocation1], 4
    %v337 = vld [vmem:[%s336] ss:$9 sm:$0xff]
    %v339 = vadd.f32 %v334, %v337
    %v340 = vrot.slane %v192, 2
    %v342 = vmul.f32 %v196, %v340
    %344 = vst [vmem:[#allocation1] sm:$0xff] %v342
    %s345 = scalar_lea.vmem [#allocation1], 6
    %v346 = vld [vmem:[%s345] ss:$9 sm:$0xff]
    %v348 = vadd.f32 %v339, %v346
    %349 = vst [vmem:[#allocation1] sm:$0xff] %v342
    %s350 = scalar_lea.vmem [#allocation1], 7
    %v351 = vld [vmem:[%s350] ss:$9 sm:$0xff]
    %v353 = vadd.f32 %v348, %v351
    %v355 = vperm.slane %v353, 0
    %v357 = vadd.f32 %v191, %v355
    %v358 = vmul.f32 %v195, %v191
    %360 = vst [vmem:[#allocation1] sm:$0xff] %v358
    %s361 = scalar_lea.vmem [#allocation1], 1
    %v362 = vld [vmem:[%s361] ss:$9 sm:$0xff]
    %v364 = vadd.f32 %v198, %v362
    %365 = vst [vmem:[#allocation1] sm:$0xff] %v358
    %s366 = scalar_lea.vmem [#allocation1], 2
    %v367 = vld [vmem:[%s366] ss:$9 sm:$0xff]
    %v369 = vadd.f32 %v364, %v367
    %370 = vst [vmem:[#allocation1] sm:$0xff] %v304
    %s371 = scalar_lea.vmem [#allocation1], 4
    %v372 = vld [vmem:[%s371] ss:$9 sm:$0xff]
    %v374 = vadd.f32 %v369, %v372
    %375 = vst [vmem:[#allocation1] sm:$0xff] %v304
    %s376 = scalar_lea.vmem [#allocation1], 5
    %v377 = vld [vmem:[%s376] ss:$9 sm:$0xff]
    %v379 = vadd.f32 %v374, %v377
    %381 = vst [vmem:[#allocation1] sm:$0xff] %v274
    %s382 = scalar_lea.vmem [#allocation1], 2
    %v383 = vld [vmem:[%s382] ss:$9 sm:$0xff]
    %v385 = vadd.f32 %v379, %v383
    %386 = vst [vmem:[#allocation1] sm:$0xff] %v274
    %s387 = scalar_lea.vmem [#allocation1], 3
    %v388 = vld [vmem:[%s387] ss:$9 sm:$0xff]
    %v390 = vadd.f32 %v385, %v388
    %v391 = vrot.slane %v192, 3
    %v393 = vmul.f32 %v196, %v391
    %395 = vst [vmem:[#allocation1] sm:$0xff] %v393
    %s396 = scalar_lea.vmem [#allocation1], 5
    %v397 = vld [vmem:[%s396] ss:$9 sm:$0xff]
    %v399 = vadd.f32 %v390, %v397
    %400 = vst [vmem:[#allocation1] sm:$0xff] %v393
    %s401 = scalar_lea.vmem [#allocation1], 6
    %v402 = vld [vmem:[%s401] ss:$9 sm:$0xff]
    %v404 = vadd.f32 %v399, %v402
    %v406 = vperm.slane %v404, 0
    %v408 = vadd.f32 %v191, %v406
    %vm409 = vcmask 1040384
    %v410 = vsel %vm409, %v191, %v254
    %vm411 = vcmask 1041408
    %v412 = vsel %vm411, %v410, %v301
    %vm413 = vcmask 1042432
    %v414 = vsel %vm413, %v412, %v357
    %vm415 = vcmask 1043456
    %v416 = vsel %vm415, %v414, %v408
    %v417 = vmul.f32 %v194, %v255
    %419 = vst [vmem:[#allocation1] sm:$0xff] %v417
    %s420 = scalar_lea.vmem [#allocation1], 4
    %v421 = vld [vmem:[%s420] ss:$9 sm:$0xff]
    %v423 = vadd.f32 %v198, %v421
    %424 = vst [vmem:[#allocation1] sm:$0xff] %v417
    %s425 = scalar_lea.vmem [#allocation1], 5
    %v426 = vld [vmem:[%s425] ss:$9 sm:$0xff]
    %v428 = vadd.f32 %v423, %v426
    %v429 = vmul.f32 %v194, %v200
    %431 = vst [vmem:[#allocation1] sm:$0xff] %v429
    %s432 = scalar_lea.vmem [#allocation1], 7
    %v433 = vld [vmem:[%s432] ss:$9 sm:$0xff]
    %v435 = vadd.f32 %v428, %v433
    %v436 = vadd.f32 %v435, %v202
    %v437 = vmul.f32 %v195, %v276
    %439 = vst [vmem:[#allocation1] sm:$0xff] %v437
    %s440 = scalar_lea.vmem [#allocation1], 5
    %v441 = vld [vmem:[%s440] ss:$9 sm:$0xff]
    %v443 = vadd.f32 %v436, %v441
    %444 = vst [vmem:[#allocation1] sm:$0xff] %v437
    %s445 = scalar_lea.vmem [#allocation1], 6
    %v446 = vld [vmem:[%s445] ss:$9 sm:$0xff]
    %v448 = vadd.f32 %v443, %v446
    %v449 = vmul.f32 %v196, %v192
    %v450 = vadd.f32 %v448, %v449
    %452 = vst [vmem:[#allocation1] sm:$0xff] %v449
    %s453 = scalar_lea.vmem [#allocation1], 1
    %v454 = vld [vmem:[%s453] ss:$9 sm:$0xff]
    %v456 = vadd.f32 %v450, %v454
    %v458 = vperm.slane %v456, 0
    %v460 = vadd.f32 %v191, %v458
    %v461 = vmul.f32 %v194, %v316
    %463 = vst [vmem:[#allocation1] sm:$0xff] %v461
    %s464 = scalar_lea.vmem [#allocation1], 3
    %v465 = vld [vmem:[%s464] ss:$9 sm:$0xff]
    %v467 = vadd.f32 %v198, %v465
    %468 = vst [vmem:[#allocation1] sm:$0xff] %v461
    %s469 = scalar_lea.vmem [#allocation1], 4
    %v470 = vld [vmem:[%s469] ss:$9 sm:$0xff]
    %v472 = vadd.f32 %v467, %v470
    %473 = vst [vmem:[#allocation1] sm:$0xff] %v417
    %s474 = scalar_lea.vmem [#allocation1], 6
    %v475 = vld [vmem:[%s474] ss:$9 sm:$0xff]
    %v477 = vadd.f32 %v472, %v475
    %478 = vst [vmem:[#allocation1] sm:$0xff] %v417
    %s479 = scalar_lea.vmem [#allocation1], 7
    %v480 = vld [vmem:[%s479] ss:$9 sm:$0xff]
    %v482 = vadd.f32 %v477, %v480
    %v483 = vrot.slane %v191, 2
    %v485 = vmul.f32 %v195, %v483
    %487 = vst [vmem:[#allocation1] sm:$0xff] %v485
    %s488 = scalar_lea.vmem [#allocation1], 4
    %v489 = vld [vmem:[%s488] ss:$9 sm:$0xff]
    %v491 = vadd.f32 %v482, %v489
    %492 = vst [vmem:[#allocation1] sm:$0xff] %v485
    %s493 = scalar_lea.vmem [#allocation1], 5
    %v494 = vld [vmem:[%s493] ss:$9 sm:$0xff]
    %v496 = vadd.f32 %v491, %v494
    %v497 = vrot.slane %v192, 1
    %v499 = vmul.f32 %v195, %v497
    %501 = vst [vmem:[#allocation1] sm:$0xff] %v499
    %s502 = scalar_lea.vmem [#allocation1], 7
    %v503 = vld [vmem:[%s502] ss:$9 sm:$0xff]
    %v505 = vadd.f32 %v496, %v503
    %v506 = vmul.f32 %v196, %v497
    %v507 = vadd.f32 %v505, %v506
    %v509 = vperm.slane %v507, 0
    %v511 = vadd.f32 %v191, %v509
    %v512 = vmul.f32 %v194, %v191
    %514 = vst [vmem:[#allocation1] sm:$0xff] %v512
    %s515 = scalar_lea.vmem [#allocation1], 1
    %v516 = vld [vmem:[%s515] ss:$9 sm:$0xff]
    %v518 = vadd.f32 %v198, %v516
    %519 = vst [vmem:[#allocation1] sm:$0xff] %v512
    %s520 = scalar_lea.vmem [#allocation1], 2
    %v521 = vld [vmem:[%s520] ss:$9 sm:$0xff]
    %v523 = vadd.f32 %v518, %v521
    %v524 = vmul.f32 %v194, %v302
    %526 = vst [vmem:[#allocation1] sm:$0xff] %v524
    %s527 = scalar_lea.vmem [#allocation1], 4
    %v528 = vld [vmem:[%s527] ss:$9 sm:$0xff]
    %v530 = vadd.f32 %v523, %v528
    %531 = vst [vmem:[#allocation1] sm:$0xff] %v524
    %s532 = scalar_lea.vmem [#allocation1], 5
    %v533 = vld [vmem:[%s532] ss:$9 sm:$0xff]
    %v535 = vadd.f32 %v530, %v533
    %536 = vst [vmem:[#allocation1] sm:$0xff] %v202
    %s537 = scalar_lea.vmem [#allocation1], 2
    %v538 = vld [vmem:[%s537] ss:$9 sm:$0xff]
    %v540 = vadd.f32 %v535, %v538
    %541 = vst [vmem:[#allocation1] sm:$0xff] %v202
    %s542 = scalar_lea.vmem [#allocation1], 3
    %v543 = vld [vmem:[%s542] ss:$9 sm:$0xff]
    %v545 = vadd.f32 %v540, %v543
    %v546 = vmul.f32 %v195, %v391
    %548 = vst [vmem:[#allocation1] sm:$0xff] %v546
    %s549 = scalar_lea.vmem [#allocation1], 5
    %v550 = vld [vmem:[%s549] ss:$9 sm:$0xff]
    %v552 = vadd.f32 %v545, %v550
    %553 = vst [vmem:[#allocation1] sm:$0xff] %v546
    %s554 = scalar_lea.vmem [#allocation1], 6
    %v555 = vld [vmem:[%s554] ss:$9 sm:$0xff]
    %v557 = vadd.f32 %v552, %v555
    %v558 = vadd.f32 %v192, %v557
    %v559 = vmul.f32 %v194, %v276
    %v560 = vadd.f32 %v198, %v559
    %562 = vst [vmem:[#allocation1] sm:$0xff] %v559
    %s563 = scalar_lea.vmem [#allocation1], 1
    %v564 = vld [vmem:[%s563] ss:$9 sm:$0xff]
    %v566 = vadd.f32 %v560, %v564
    %567 = vst [vmem:[#allocation1] sm:$0xff] %v512
    %s568 = scalar_lea.vmem [#allocation1], 3
    %v569 = vld [vmem:[%s568] ss:$9 sm:$0xff]
    %v571 = vadd.f32 %v566, %v569
    %572 = vst [vmem:[#allocation1] sm:$0xff] %v512
    %s573 = scalar_lea.vmem [#allocation1], 4
    %v574 = vld [vmem:[%s573] ss:$9 sm:$0xff]
    %v576 = vadd.f32 %v571, %v574
    %577 = vst [vmem:[#allocation1] sm:$0xff] %v257
    %s578 = scalar_lea.vmem [#allocation1], 1
    %v579 = vld [vmem:[%s578] ss:$9 sm:$0xff]
    %v581 = vadd.f32 %v576, %v579
    %582 = vst [vmem:[#allocation1] sm:$0xff] %v257
    %s583 = scalar_lea.vmem [#allocation1], 2
    %v584 = vld [vmem:[%s583] ss:$9 sm:$0xff]
    %v586 = vadd.f32 %v581, %v584
    %v587 = vrot.slane %v192, 4
    %v589 = vmul.f32 %v195, %v587
    %591 = vst [vmem:[#allocation1] sm:$0xff] %v589
    %s592 = scalar_lea.vmem [#allocation1], 4
    %v593 = vld [vmem:[%s592] ss:$9 sm:$0xff]
    %v595 = vadd.f32 %v586, %v593
    %596 = vst [vmem:[#allocation1] sm:$0xff] %v589
    %s597 = scalar_lea.vmem [#allocation1], 5
    %v598 = vld [vmem:[%s597] ss:$9 sm:$0xff]
    %v600 = vadd.f32 %v595, %v598
    %v602 = vperm.slane %v600, 0
    %v604 = vadd.f32 %v192, %v602
    %v606 = vrot.slane %v460, 5
    %v609 = vrot.slane %v511, 5
    %v612 = vrot.slane %v558, 5
    %v615 = vrot.slane %v604, 5
    %v617 = vsel %vm409, %v255, %v606
    %v618 = vsel %vm411, %v617, %v609
    %v619 = vsel %vm413, %v618, %v612
    %v620 = vsel %vm415, %v619, %v615
    %v621 = vrot.slane %v192, 6
    %v623 = vmul.f32 %v195, %v621
    %625 = vst [vmem:[#allocation1] sm:$0xff] %v623
    %s626 = scalar_lea.vmem [#allocation1], 5
    %v627 = vld [vmem:[%s626] ss:$9 sm:$0xff]
    %v629 = vadd.f32 %v198, %v627
    %630 = vst [vmem:[#allocation1] sm:$0xff] %v623
    %s631 = scalar_lea.vmem [#allocation1], 6
    %v632 = vld [vmem:[%s631] ss:$9 sm:$0xff]
    %v634 = vadd.f32 %v629, %v632
    %v635 = vrot.slane %v192, 5
    %v637 = vmul.f32 %v196, %v635
    %v638 = vadd.f32 %v634, %v637
    %640 = vst [vmem:[#allocation1] sm:$0xff] %v637
    %s641 = scalar_lea.vmem [#allocation1], 1
    %v642 = vld [vmem:[%s641] ss:$9 sm:$0xff]
    %v644 = vadd.f32 %v638, %v642
    %v646 = vrot.slane %v193, 2
    %v648 = vmul.f32 %v196, %v646
    %650 = vst [vmem:[#allocation1] sm:$0xff] %v648
    %s651 = scalar_lea.vmem [#allocation1], 6
    %v652 = vld [vmem:[%s651] ss:$9 sm:$0xff]
    %v654 = vadd.f32 %v644, %v652
    %655 = vst [vmem:[#allocation1] sm:$0xff] %v648
    %s656 = scalar_lea.vmem [#allocation1], 7
    %v657 = vld [vmem:[%s656] ss:$9 sm:$0xff]
    %v659 = vadd.f32 %v654, %v657
    %v660 = vrot.slane %v193, 1
    %v662 = vmul.f32 %v197, %v660
    %664 = vst [vmem:[#allocation1] sm:$0xff] %v662
    %s665 = scalar_lea.vmem [#allocation1], 1
    %v666 = vld [vmem:[%s665] ss:$9 sm:$0xff]
    %v668 = vadd.f32 %v659, %v666
    %669 = vst [vmem:[#allocation1] sm:$0xff] %v662
    %s670 = scalar_lea.vmem [#allocation1], 2
    %v671 = vld [vmem:[%s670] ss:$9 sm:$0xff]
    %v673 = vadd.f32 %v668, %v671
    %v675 = vperm.slane %v673, 0
    %v677 = vadd.f32 %v192, %v675
    %v678 = vmul.f32 %v195, %v237
    %680 = vst [vmem:[#allocation1] sm:$0xff] %v678
    %s681 = scalar_lea.vmem [#allocation1], 4
    %v682 = vld [vmem:[%s681] ss:$9 sm:$0xff]
    %v684 = vadd.f32 %v198, %v682
    %685 = vst [vmem:[#allocation1] sm:$0xff] %v678
    %s686 = scalar_lea.vmem [#allocation1], 5
    %v687 = vld [vmem:[%s686] ss:$9 sm:$0xff]
    %v689 = vadd.f32 %v684, %v687
    %690 = vst [vmem:[#allocation1] sm:$0xff] %v623
    %s691 = scalar_lea.vmem [#allocation1], 7
    %v692 = vld [vmem:[%s691] ss:$9 sm:$0xff]
    %v694 = vadd.f32 %v689, %v692
    %v695 = vmul.f32 %v196, %v621
    %v696 = vadd.f32 %v694, %v695
    %v697 = vrot.slane %v193, 3
    %v699 = vmul.f32 %v196, %v697
    %701 = vst [vmem:[#allocation1] sm:$0xff] %v699
    %s702 = scalar_lea.vmem [#allocation1], 5
    %v703 = vld [vmem:[%s702] ss:$9 sm:$0xff]
    %v705 = vadd.f32 %v696, %v703
    %706 = vst [vmem:[#allocation1] sm:$0xff] %v699
    %s707 = scalar_lea.vmem [#allocation1], 6
    %v708 = vld [vmem:[%s707] ss:$9 sm:$0xff]
    %v710 = vadd.f32 %v705, %v708
    %v711 = vmul.f32 %v197, %v646
    %v712 = vadd.f32 %v710, %v711
    %714 = vst [vmem:[#allocation1] sm:$0xff] %v711
    %s715 = scalar_lea.vmem [#allocation1], 1
    %v716 = vld [vmem:[%s715] ss:$9 sm:$0xff]
    %v718 = vadd.f32 %v712, %v716
    %v720 = vperm.slane %v718, 0
    %v722 = vadd.f32 %v192, %v720
    %723 = vst [vmem:[#allocation1] sm:$0xff] %v499
    %s724 = scalar_lea.vmem [#allocation1], 2
    %v725 = vld [vmem:[%s724] ss:$9 sm:$0xff]
    %v727 = vadd.f32 %v198, %v725
    %728 = vst [vmem:[#allocation1] sm:$0xff] %v499
    %s729 = scalar_lea.vmem [#allocation1], 3
    %v730 = vld [vmem:[%s729] ss:$9 sm:$0xff]
    %v732 = vadd.f32 %v727, %v730
    %v733 = vmul.f32 %v195, %v192
    %735 = vst [vmem:[#allocation1] sm:$0xff] %v733
    %s736 = scalar_lea.vmem [#allocation1], 5
    %v737 = vld [vmem:[%s736] ss:$9 sm:$0xff]
    %v739 = vadd.f32 %v732, %v737
    %740 = vst [vmem:[#allocation1] sm:$0xff] %v733
    %s741 = scalar_lea.vmem [#allocation1], 6
    %v742 = vld [vmem:[%s741] ss:$9 sm:$0xff]
    %v744 = vadd.f32 %v739, %v742
    %v745 = vrot.slane %v193, 5
    %v747 = vmul.f32 %v196, %v745
    %749 = vst [vmem:[#allocation1] sm:$0xff] %v747
    %s750 = scalar_lea.vmem [#allocation1], 3
    %v751 = vld [vmem:[%s750] ss:$9 sm:$0xff]
    %v753 = vadd.f32 %v744, %v751
    %754 = vst [vmem:[#allocation1] sm:$0xff] %v747
    %s755 = scalar_lea.vmem [#allocation1], 4
    %v756 = vld [vmem:[%s755] ss:$9 sm:$0xff]
    %v758 = vadd.f32 %v753, %v756
    %v759 = vrot.slane %v193, 4
    %v761 = vmul.f32 %v196, %v759
    %763 = vst [vmem:[#allocation1] sm:$0xff] %v761
    %s764 = scalar_lea.vmem [#allocation1], 6
    %v765 = vld [vmem:[%s764] ss:$9 sm:$0xff]
    %v767 = vadd.f32 %v758, %v765
    %768 = vst [vmem:[#allocation1] sm:$0xff] %v761
    %s769 = scalar_lea.vmem [#allocation1], 7
    %v770 = vld [vmem:[%s769] ss:$9 sm:$0xff]
    %v772 = vadd.f32 %v767, %v770
    %v774 = vperm.slane %v772, 0
    %v776 = vadd.f32 %v192, %v774
    %v777 = vmul.f32 %v195, %v340
    %779 = vst [vmem:[#allocation1] sm:$0xff] %v777
    %s780 = scalar_lea.vmem [#allocation1], 1
    %v781 = vld [vmem:[%s780] ss:$9 sm:$0xff]
    %v783 = vadd.f32 %v198, %v781
    %784 = vst [vmem:[#allocation1] sm:$0xff] %v777
    %s785 = scalar_lea.vmem [#allocation1], 2
    %v786 = vld [vmem:[%s785] ss:$9 sm:$0xff]
    %v788 = vadd.f32 %v783, %v786
    %789 = vst [vmem:[#allocation1] sm:$0xff] %v499
    %s790 = scalar_lea.vmem [#allocation1], 4
    %v791 = vld [vmem:[%s790] ss:$9 sm:$0xff]
    %v793 = vadd.f32 %v788, %v791
    %794 = vst [vmem:[#allocation1] sm:$0xff] %v499
    %s795 = scalar_lea.vmem [#allocation1], 5
    %v796 = vld [vmem:[%s795] ss:$9 sm:$0xff]
    %v798 = vadd.f32 %v793, %v796
    %v799 = vrot.slane %v193, 6
    %v801 = vmul.f32 %v196, %v799
    %803 = vst [vmem:[#allocation1] sm:$0xff] %v801
    %s804 = scalar_lea.vmem [#allocation1], 2
    %v805 = vld [vmem:[%s804] ss:$9 sm:$0xff]
    %v807 = vadd.f32 %v798, %v805
    %808 = vst [vmem:[#allocation1] sm:$0xff] %v801
    %s809 = scalar_lea.vmem [#allocation1], 3
    %v810 = vld [vmem:[%s809] ss:$9 sm:$0xff]
    %v812 = vadd.f32 %v807, %v810
    %813 = vst [vmem:[#allocation1] sm:$0xff] %v747
    %s814 = scalar_lea.vmem [#allocation1], 5
    %v815 = vld [vmem:[%s814] ss:$9 sm:$0xff]
    %v817 = vadd.f32 %v812, %v815
    %818 = vst [vmem:[#allocation1] sm:$0xff] %v747
    %s819 = scalar_lea.vmem [#allocation1], 6
    %v820 = vld [vmem:[%s819] ss:$9 sm:$0xff]
    %v822 = vadd.f32 %v817, %v820
    %v824 = vperm.slane %v822, 0
    %v826 = vadd.f32 %v192, %v824
    %v828 = vrot.slane %v677, 2
    %v831 = vrot.slane %v722, 2
    %v834 = vrot.slane %v776, 2
    %v837 = vrot.slane %v826, 2
    %v839 = vsel %vm409, %v340, %v828
    %v840 = vsel %vm411, %v839, %v831
    %v841 = vsel %vm413, %v840, %v834
    %v842 = vsel %vm415, %v841, %v837
    %v843 = vmul.f32 %v194, %v237
    %845 = vst [vmem:[#allocation1] sm:$0xff] %v843
    %s846 = scalar_lea.vmem [#allocation1], 4
    %v847 = vld [vmem:[%s846] ss:$9 sm:$0xff]
    %v849 = vadd.f32 %v198, %v847
    %850 = vst [vmem:[#allocation1] sm:$0xff] %v843
    %s851 = scalar_lea.vmem [#allocation1], 5
    %v852 = vld [vmem:[%s851] ss:$9 sm:$0xff]
    %v854 = vadd.f32 %v849, %v852
    %v855 = vmul.f32 %v194, %v621
    %857 = vst [vmem:[#allocation1] sm:$0xff] %v855
    %s858 = scalar_lea.vmem [#allocation1], 7
    %v859 = vld [vmem:[%s858] ss:$9 sm:$0xff]
    %v861 = vadd.f32 %v854, %v859
    %v862 = vadd.f32 %v861, %v623
    %v863 = vmul.f32 %v195, %v697
    %865 = vst [vmem:[#allocation1] sm:$0xff] %v863
    %s866 = scalar_lea.vmem [#allocation1], 5
    %v867 = vld [vmem:[%s866] ss:$9 sm:$0xff]
    %v869 = vadd.f32 %v862, %v867
    %870 = vst [vmem:[#allocation1] sm:$0xff] %v863
    %s871 = scalar_lea.vmem [#allocation1], 6
    %v872 = vld [vmem:[%s871] ss:$9 sm:$0xff]
    %v874 = vadd.f32 %v869, %v872
    %v875 = vadd.f32 %v874, %v648
    %876 = vst [vmem:[#allocation1] sm:$0xff] %v648
    %s877 = scalar_lea.vmem [#allocation1], 1
    %v878 = vld [vmem:[%s877] ss:$9 sm:$0xff]
    %v880 = vadd.f32 %v875, %v878
    %v881 = vadd.f32 %v193, %v880
    %v882 = vmul.f32 %v194, %v192
    %884 = vst [vmem:[#allocation1] sm:$0xff] %v882
    %s885 = scalar_lea.vmem [#allocation1], 3
    %v886 = vld [vmem:[%s885] ss:$9 sm:$0xff]
    %v888 = vadd.f32 %v198, %v886
    %889 = vst [vmem:[#allocation1] sm:$0xff] %v882
    %s890 = scalar_lea.vmem [#allocation1], 4
    %v891 = vld [vmem:[%s890] ss:$9 sm:$0xff]
    %v893 = vadd.f32 %v888, %v891
    %894 = vst [vmem:[#allocation1] sm:$0xff] %v843
    %s895 = scalar_lea.vmem [#allocation1], 6
    %v896 = vld [vmem:[%s895] ss:$9 sm:$0xff]
    %v898 = vadd.f32 %v893, %v896
    %899 = vst [vmem:[#allocation1] sm:$0xff] %v843
    %s900 = scalar_lea.vmem [#allocation1], 7
    %v901 = vld [vmem:[%s900] ss:$9 sm:$0xff]
    %v903 = vadd.f32 %v898, %v901
    %v904 = vmul.f32 %v195, %v759
    %906 = vst [vmem:[#allocation1] sm:$0xff] %v904
    %s907 = scalar_lea.vmem [#allocation1], 4
    %v908 = vld [vmem:[%s907] ss:$9 sm:$0xff]
    %v910 = vadd.f32 %v903, %v908
    %911 = vst [vmem:[#allocation1] sm:$0xff] %v904
    %s912 = scalar_lea.vmem [#allocation1], 5
    %v913 = vld [vmem:[%s912] ss:$9 sm:$0xff]
    %v915 = vadd.f32 %v910, %v913
    %916 = vst [vmem:[#allocation1] sm:$0xff] %v863
    %s917 = scalar_lea.vmem [#allocation1], 7
    %v918 = vld [vmem:[%s917] ss:$9 sm:$0xff]
    %v920 = vadd.f32 %v915, %v918
    %v921 = vadd.f32 %v920, %v699
    %v923 = vperm.slane %v921, 0
    %v925 = vadd.f32 %v193, %v923
    %v926 = vmul.f32 %v194, %v340
    %928 = vst [vmem:[#allocation1] sm:$0xff] %v926
    %s929 = scalar_lea.vmem [#allocation1], 1
    %v930 = vld [vmem:[%s929] ss:$9 sm:$0xff]
    %v932 = vadd.f32 %v198, %v930
    %933 = vst [vmem:[#allocation1] sm:$0xff] %v926
    %s934 = scalar_lea.vmem [#allocation1], 2
    %v935 = vld [vmem:[%s934] ss:$9 sm:$0xff]
    %v937 = vadd.f32 %v932, %v935
    %v938 = vmul.f32 %v194, %v497
    %940 = vst [vmem:[#allocation1] sm:$0xff] %v938
    %s941 = scalar_lea.vmem [#allocation1], 4
    %v942 = vld [vmem:[%s941] ss:$9 sm:$0xff]
    %v944 = vadd.f32 %v937, %v942
    %945 = vst [vmem:[#allocation1] sm:$0xff] %v938
    %s946 = scalar_lea.vmem [#allocation1], 5
    %v947 = vld [vmem:[%s946] ss:$9 sm:$0xff]
    %v949 = vadd.f32 %v944, %v947
    %v950 = vmul.f32 %v195, %v799
    %952 = vst [vmem:[#allocation1] sm:$0xff] %v950
    %s953 = scalar_lea.vmem [#allocation1], 2
    %v954 = vld [vmem:[%s953] ss:$9 sm:$0xff]
    %v956 = vadd.f32 %v949, %v954
    %957 = vst [vmem:[#allocation1] sm:$0xff] %v950
    %s958 = scalar_lea.vmem [#allocation1], 3
    %v959 = vld [vmem:[%s958] ss:$9 sm:$0xff]
    %v961 = vadd.f32 %v956, %v959
    %v962 = vmul.f32 %v195, %v745
    %964 = vst [vmem:[#allocation1] sm:$0xff] %v962
    %s965 = scalar_lea.vmem [#allocation1], 5
    %v966 = vld [vmem:[%s965] ss:$9 sm:$0xff]
    %v968 = vadd.f32 %v961, %v966
    %969 = vst [vmem:[#allocation1] sm:$0xff] %v962
    %s970 = scalar_lea.vmem [#allocation1], 6
    %v971 = vld [vmem:[%s970] ss:$9 sm:$0xff]
    %v973 = vadd.f32 %v968, %v971
    %v975 = vperm.slane %v973, 0
    %v977 = vadd.f32 %v193, %v975
    %v978 = vmul.f32 %v194, %v391
    %v979 = vadd.f32 %v198, %v978
    %981 = vst [vmem:[#allocation1] sm:$0xff] %v978
    %s982 = scalar_lea.vmem [#allocation1], 1
    %v983 = vld [vmem:[%s982] ss:$9 sm:$0xff]
    %v985 = vadd.f32 %v979, %v983
    %986 = vst [vmem:[#allocation1] sm:$0xff] %v926
    %s987 = scalar_lea.vmem [#allocation1], 3
    %v988 = vld [vmem:[%s987] ss:$9 sm:$0xff]
    %v990 = vadd.f32 %v985, %v988
    %991 = vst [vmem:[#allocation1] sm:$0xff] %v926
    %s992 = scalar_lea.vmem [#allocation1], 4
    %v993 = vld [vmem:[%s992] ss:$9 sm:$0xff]
    %v995 = vadd.f32 %v990, %v993
    %v996 = vrot.slane %v193, 7
    %v998 = vmul.f32 %v195, %v996
    %1000 = vst [vmem:[#allocation1] sm:$0xff] %v998
    %s1001 = scalar_lea.vmem [#allocation1], 1
    %v1002 = vld [vmem:[%s1001] ss:$9 sm:$0xff]
    %v1004 = vadd.f32 %v995, %v1002
    %1005 = vst [vmem:[#allocation1] sm:$0xff] %v998
    %s1006 = scalar_lea.vmem [#allocation1], 2
    %v1007 = vld [vmem:[%s1006] ss:$9 sm:$0xff]
    %v1009 = vadd.f32 %v1004, %v1007
    %1010 = vst [vmem:[#allocation1] sm:$0xff] %v950
    %s1011 = scalar_lea.vmem [#allocation1], 4
    %v1012 = vld [vmem:[%s1011] ss:$9 sm:$0xff]
    %v1014 = vadd.f32 %v1009, %v1012
    %1015 = vst [vmem:[#allocation1] sm:$0xff] %v950
    %s1016 = scalar_lea.vmem [#allocation1], 5
    %v1017 = vld [vmem:[%s1016] ss:$9 sm:$0xff]
    %v1019 = vadd.f32 %v1014, %v1017
    %v1021 = vperm.slane %v1019, 0
    %v1023 = vadd.f32 %v193, %v1021
    %v1025 = vrot.slane %v881, 7
    %v1028 = vrot.slane %v925, 7
    %v1031 = vrot.slane %v977, 7
    %v1034 = vrot.slane %v1023, 7
    %v1036 = vsel %vm409, %v237, %v1025
    %v1037 = vsel %vm411, %v1036, %v1028
    %v1038 = vsel %vm413, %v1037, %v1031
    %v1039 = vsel %vm415, %v1038, %v1034
    %v1041 = vrot.slane %v620, 3
    %v1044 = vrot.slane %v842, 6
    %v1047 = vrot.slane %v1039, 1
    %vm1049 = vcmask 1044480
    %v1050 = vsel %vm1049, %v416, %v1041
    %v1051 = vsel %vm411, %v1041, %v1044
    %vm1052 = vcmask 1046528
    %v1053 = vsel %vm1052, %v1051, %v1047
    %v1054 = vld [vmem:[#allocation2] sm:$0x1]
    %v1055 = vld [vmem:[#allocation4] sm:$0x1]
    %vm1056 = vcmask 261120
    %v1057 = vsel %vm1056, %v1050, 0.0
    %1058 = vadd.xlane.f32.xlu0 %v1057
    %v1059 = vpop.xlane.xlu0 %1058
    %v1060 = vsel %vm1056, %v1053, 0.0
    %1061 = vadd.xlane.f32.xlu0 %v1060
    %v1062 = vpop.xlane.xlu0 %1061
    %vm1063 = vcmask 257024
    %v1064 = vsel %vm1063, %v1047, 0.0
    %1065 = vadd.xlane.f32.xlu0 %v1064
    %v1066 = vpop.xlane.xlu0 %1065
    %v1067 = vrcp.pop 32.0
    %v1068 = vmul.f32 32.0, %v1067
    %v1069 = vsub.f32 1.0, %v1068
    %v1070 = vmul.f32 %v1067, %v1069
    %v1071 = vadd.f32 %v1067, %v1070
    %vm1072 = vweird.f32 %v1067
    %v1073 = vsel %vm1072, %v1067, %v1071
    %v1074 = vmul.f32 %v1059, %v1073
    %v1075 = vmul.f32 %v1062, %v1073
    %v1076 = vmul.f32 %v1066, %v1073
    %v1077 = vsub.f32 %v1050, %v1074
    %v1078 = vsub.f32 %v1053, %v1075
    %v1079 = vsub.f32 %v1047, %v1076
    %v1080 = vmul.f32 %v1077, %v1077
    %v1081 = vmul.f32 %v1078, %v1078
    %v1082 = vmul.f32 %v1079, %v1079
    %v1083 = vsel %vm1056, %v1080, 0.0
    %1084 = vadd.xlane.f32.xlu0 %v1083
    %v1085 = vpop.xlane.xlu0 %1084
    %v1086 = vsel %vm1056, %v1081, 0.0
    %1087 = vadd.xlane.f32.xlu0 %v1086
    %v1088 = vpop.xlane.xlu0 %1087
    %v1089 = vsel %vm1063, %v1082, 0.0
    %1090 = vadd.xlane.f32.xlu0 %v1089
    %v1091 = vpop.xlane.xlu0 %1090
    %v1092 = vmul.f32 %v1085, %v1073
    %v1093 = vmul.f32 %v1088, %v1073
    %v1094 = vmul.f32 %v1091, %v1073
    %v1095 = vadd.f32 %v1092, 1e-05
    %v1096 = vadd.f32 %v1093, 1e-05
    %v1097 = vadd.f32 %v1094, 1e-05
    %v1098 = vrsqrt.pop %v1095
    %v1099 = vmul.f32 %v1098, %v1095
    %v1100 = vmul.f32 %v1099, %v1098
    %v1101 = vmul.f32 0.5, %v1100
    %v1102 = vsub.f32 1.5, %v1101
    %v1103 = vmul.f32 %v1098, %v1102
    %vm1104 = vweird.f32 %v1095
    %vm1105 = vweird.f32 %v1098
    %vm1106 = vmor %vm1104, %vm1105
    %v1107 = vsel %vm1106, %v1098, %v1103
    %v1108 = vrsqrt.pop %v1096
    %v1109 = vmul.f32 %v1108, %v1096
    %v1110 = vmul.f32 %v1109, %v1108
    %v1111 = vmul.f32 0.5, %v1110
    %v1112 = vsub.f32 1.5, %v1111
    %v1113 = vmul.f32 %v1108, %v1112
    %vm1114 = vweird.f32 %v1096
    %vm1115 = vweird.f32 %v1108
    %vm1116 = vmor %vm1114, %vm1115
    %v1117 = vsel %vm1116, %v1108, %v1113
    %v1118 = vrsqrt.pop %v1097
    %v1119 = vmul.f32 %v1118, %v1097
    %v1120 = vmul.f32 %v1119, %v1118
    %v1121 = vmul.f32 0.5, %v1120
    %v1122 = vsub.f32 1.5, %v1121
    %v1123 = vmul.f32 %v1118, %v1122
    %vm1124 = vweird.f32 %v1097
    %vm1125 = vweird.f32 %v1118
    %vm1126 = vmor %vm1124, %vm1125
    %v1127 = vsel %vm1126, %v1118, %v1123
    %v1128 = vmul.f32 %v1077, %v1107
    %v1129 = vmul.f32 %v1078, %v1117
    %v1130 = vmul.f32 %v1079, %v1127
    %v1132 = vperm.slane %v1054, 0
    %v1134 = vmul.f32 %v1128, %v1132
    %v1135 = vmul.f32 %v1129, %v1132
    %v1136 = vmul.f32 %v1130, %v1132
    %v1138 = vperm.slane %v1055, 0
    %v1140 = vadd.f32 %v1134, %v1138
    %v1141 = vadd.f32 %v1135, %v1138
    %v1142 = vadd.f32 %v1136, %v1138
    %v1143 = vpack.c.bf16 %v1141, %v1140
    %v1144 = vpack.c.bf16 %v1142, %v1142
    %v1145 = vld [vmem:[%s10] sm:$0xf]
    %v1146 = vld [vmem:[%s10 + $0x4] sm:$0xf]
    %v1147 = vld [vmem:[%s10 + $0x8] sm:$0xf]
    %v1148 = vld [vmem:[%s10 + $0xc] sm:$0xf]
    %v1149 = vld [vmem:[#allocation7] sm:$0x1]
    %v1151 = vperm.slane %v1149, 0
    %v1157 = vunpack.c.l.b16 %v1145
    %v1158 = vunpack.c.l.b16 %v1146
    %v1159 = vunpack.c.l.b16 %v1147
    %v1160 = vunpack.c.l.b16 %v1148
    %v1161 = vpack.c.b16 %v1158, %v1157
    %v1162 = vpack.c.b16 %v1160, %v1159
    %v1166 = vsel %vm1056, %v1143, 0
    %v1169 = vsel %vm1056, %v1144, 0
    %1171 = vmatpush.bf16.msra.mxu0 0
    %1172 = vmatpush.bf16.msra.mxu0 0
    %1173 = vmatpush.bf16.msra.mxu0 0
    %1174 = vmatpush.bf16.msra.mxu0 0
    %1175 = vmatpush.bf16.msra.mxu0 0
    %1176 = vmatpush.bf16.msra.mxu0 0
    %1177 = vmatpush.bf16.msra.mxu0 %v1162
    %1178 = vmatpush.bf16.msra.mxu0 %v1161
    %1179 = vmatmul.bf16.gmra.mxu0 %v1166
    %v1180 = vpop.f32.mrf.mxu0
    %v1181 = vadd.f32 %v1151, %v1180
    %v1182 = vpop.f32.mrf.mxu0
    %v1183 = vadd.f32 %v1151, %v1182
    %1184 = vmatmul.bf16.gmra.mxu0 %v1169
    %v1185 = vpop.f32.mrf.mxu0
    %v1186 = vadd.f32 %v1151, %v1185
    %v1187 = vpop.f32.mrf.mxu0
    %1188 = vdwg.mxu0
    %v1189 = vld [vmem:[%s1] sm:$0x3]
    %v1190 = vld [vmem:[%s4] sm:$0x1]
    %v1191 = vld [vmem:[%s5] sm:$0x1]
    %vm1192 = vcmask 254976
    %v1193 = vsel %vm1192, %v1189, 0.0
    %1194 = vadd.xlane.f32.xlu0 %v1193
    %v1195 = vpop.xlane.xlu0 %1194
    %v1196 = vmul.f32 %v1195, %v1073
    %v1197 = vsub.f32 %v1189, %v1196
    %v1198 = vmul.f32 %v1197, %v1197
    %v1199 = vsel %vm1192, %v1198, 0.0
    %1200 = vadd.xlane.f32.xlu0 %v1199
    %v1201 = vpop.xlane.xlu0 %1200
    %v1202 = vmul.f32 %v1201, %v1073
    %v1203 = vadd.f32 %v1202, 1e-05
    %v1204 = vrsqrt.pop %v1203
    %v1205 = vmul.f32 %v1204, %v1203
    %v1206 = vmul.f32 %v1205, %v1204
    %v1207 = vmul.f32 0.5, %v1206
    %v1208 = vsub.f32 1.5, %v1207
    %v1209 = vmul.f32 %v1204, %v1208
    %vm1210 = vweird.f32 %v1203
    %vm1211 = vweird.f32 %v1204
    %vm1212 = vmor %vm1210, %vm1211
    %v1213 = vsel %vm1212, %v1204, %v1209
    %v1214 = vmul.f32 %v1197, %v1213
    %v1216 = vperm.slane %v1190, 0
    %v1218 = vmul.f32 %v1214, %v1216
    %v1220 = vperm.slane %v1191, 0
    %v1222 = vadd.f32 %v1218, %v1220
    %v1223 = vpack.c.bf16 %v1222, %v1222
    %v1224 = vld [vmem:[%s8] sm:$0xf]
    %v1225 = vld [vmem:[%s8 + $0x4] sm:$0xf]
    %v1226 = vld [vmem:[%s8 + $0x8] sm:$0xf]
    %v1227 = vld [vmem:[%s8 + $0xc] sm:$0xf]
    %v1228 = vld [vmem:[#allocation6] sm:$0x1]
    %v1230 = vperm.slane %v1228, 0
    %v1236 = vunpack.c.l.b16 %v1224
    %v1237 = vunpack.c.l.b16 %v1225
    %v1238 = vunpack.c.l.b16 %v1226
    %v1239 = vunpack.c.l.b16 %v1227
    %v1240 = vpack.c.b16 %v1237, %v1236
    %v1241 = vpack.c.b16 %v1239, %v1238
    %v1245 = vsel %vm1056, %v1223, 0
    %1247 = vmatpush.bf16.msra.mxu0 0
    %1248 = vmatpush.bf16.msra.mxu0 0
    %1249 = vmatpush.bf16.msra.mxu0 0
    %1250 = vmatpush.bf16.msra.mxu0 0
    %1251 = vmatpush.bf16.msra.mxu0 0
    %1252 = vmatpush.bf16.msra.mxu0 0
    %1253 = vmatpush.bf16.msra.mxu0 %v1241
    %1254 = vmatpush.bf16.msra.mxu0 %v1240
    %1255 = vmatmul.bf16.gmra.mxu0 %v1245
    %v1256 = vpop.f32.mrf.mxu0
    %v1257 = vadd.f32 %v1230, %v1256
    %v1258 = vpop.f32.mrf.mxu0
    %1259 = vdwg.mxu0
    %v1260 = vperm.slane %v1257, 0
    %v1261 = vmul.f32 %v1260, %v1181
    %v1262 = vmul.f32 %v1260, %v1183
    %vm1263 = vcmask 64512
    %v1264 = vsel %vm1263, %v1261, 0.0
    %1265 = vadd.xlane.f32.xlu0 %v1264
    %v1266 = vpop.xlane.xlu0 %1265
    %vm1267 = vcmask 58368
    %v1268 = vsel %vm1267, %v1262, 0.0
    %1269 = vadd.xlane.f32.xlu0 %v1268
    %v1270 = vpop.xlane.xlu0 %1269
    %v1271 = vmul.f32 %v1266, 0.35355338
    %v1272 = vmul.f32 %v1270, 0.35355338
    %v1273 = vsel %vm411, %v1272, -inf
    %v1274 = vmax.f32 %v1271, %v1273
    %v1275 = vrot.slane %v1274, 4
    %v1276 = vmax.f32 %v1274, %v1275
    %v1277 = vrot.slane %v1276, 2
    %v1278 = vmax.f32 %v1276, %v1277
    %v1279 = vrot.slane %v1278, 1
    %v1280 = vmax.f32 %v1278, %v1279
    %v1281 = vsub.f32 %v1271, %v1280
    %v1282 = vsub.f32 %v1272, %v1280
    %v1283 = vmul.f32 %v1281, 1.442695
    %v1284 = vpow.pop %v1283
    %v1285 = vmul.f32 %v1282, 1.442695
    %v1286 = vpow.pop %v1285
    %v1287 = vsel %vm411, %v1286, 0.0
    %v1288 = vadd.f32 %v1284, %v1287
    %v1289 = vrot.slane %v1288, 4
    %v1290 = vadd.f32 %v1288, %v1289
    %v1291 = vrot.slane %v1290, 2
    %v1292 = vadd.f32 %v1290, %v1291
    %v1293 = vrot.slane %v1292, 1
    %v1294 = vadd.f32 %v1292, %v1293
    %v1295 = vrcp.pop %v1294
    %v1296 = vmul.f32 %v1284, %v1295
    %v1297 = vmul.f32 %v1286, %v1295
    %v1298 = vmul.f32 %v1296, %v1181
    %v1299 = vmul.f32 %v1297, %v1183
    %vm1300 = vcmask 326912
    %v1301 = vsel %vm1300, %v1298, 0.0
    %vm1302 = vcmask 320768
    %v1303 = vsel %vm1302, %v1299, 0.0
    %v1304 = vadd.f32 %v1301, %v1303
    %v1305 = vrot.slane %v1304, 4
    %v1306 = vadd.f32 %v1304, %v1305
    %v1307 = vrot.slane %v1306, 2
    %v1308 = vadd.f32 %v1306, %v1307
    %v1309 = vrot.slane %v1308, 1
    %v1310 = vadd.f32 %v1308, %v1309
    %1313 = vrot.lane.b32.xlu0 %v1261, 120
    %v1314 = vpop.permute.xlu0 %1313
    %1315 = vrot.lane.b32.xlu0 %v1262, 120
    %v1316 = vpop.permute.xlu0 %1315
    %v1319 = vsel %vm1263, %v1314, 0.0
    %1320 = vadd.xlane.f32.xlu0 %v1319
    %v1321 = vpop.xlane.xlu0 %1320
    %v1322 = vsel %vm1267, %v1316, 0.0
    %1323 = vadd.xlane.f32.xlu0 %v1322
    %v1324 = vpop.xlane.xlu0 %1323
    %v1325 = vmul.f32 %v1321, 0.35355338
    %v1326 = vmul.f32 %v1324, 0.35355338
    %v1327 = vsel %vm411, %v1326, -inf
    %v1328 = vmax.f32 %v1325, %v1327
    %v1329 = vrot.slane %v1328, 4
    %v1330 = vmax.f32 %v1328, %v1329
    %v1331 = vrot.slane %v1330, 2
    %v1332 = vmax.f32 %v1330, %v1331
    %v1333 = vrot.slane %v1332, 1
    %v1334 = vmax.f32 %v1332, %v1333
    %v1335 = vsub.f32 %v1325, %v1334
    %v1336 = vsub.f32 %v1326, %v1334
    %v1337 = vmul.f32 %v1335, 1.442695
    %v1338 = vpow.pop %v1337
    %v1339 = vmul.f32 %v1336, 1.442695
    %v1340 = vpow.pop %v1339
    %v1341 = vsel %vm411, %v1340, 0.0
    %v1342 = vadd.f32 %v1338, %v1341
    %v1343 = vrot.slane %v1342, 4
    %v1344 = vadd.f32 %v1342, %v1343
    %v1345 = vrot.slane %v1344, 2
    %v1346 = vadd.f32 %v1344, %v1345
    %v1347 = vrot.slane %v1346, 1
    %v1348 = vadd.f32 %v1346, %v1347
    %v1349 = vrcp.pop %v1348
    %v1350 = vmul.f32 %v1338, %v1349
    %v1351 = vmul.f32 %v1340, %v1349
    %v1352 = vmul.f32 %v1350, %v1181
    %v1353 = vmul.f32 %v1351, %v1183
    %vm1354 = vcmask 392512
    %v1355 = vsel %vm1354, %v1352, 0.0
    %vm1356 = vcmask 386368
    %v1357 = vsel %vm1356, %v1353, 0.0
    %v1358 = vadd.f32 %v1355, %v1357
    %v1359 = vrot.slane %v1358, 4
    %v1360 = vadd.f32 %v1358, %v1359
    %v1361 = vrot.slane %v1360, 2
    %v1362 = vadd.f32 %v1360, %v1361
    %v1363 = vrot.slane %v1362, 1
    %v1364 = vadd.f32 %v1362, %v1363
    %1365 = vrot.lane.b32.xlu0 %v1261, 112
    %v1366 = vpop.permute.xlu0 %1365
    %1367 = vrot.lane.b32.xlu0 %v1262, 112
    %v1368 = vpop.permute.xlu0 %1367
    %v1371 = vsel %vm1263, %v1366, 0.0
    %1372 = vadd.xlane.f32.xlu0 %v1371
    %v1373 = vpop.xlane.xlu0 %1372
    %v1374 = vsel %vm1267, %v1368, 0.0
    %1375 = vadd.xlane.f32.xlu0 %v1374
    %v1376 = vpop.xlane.xlu0 %1375
    %v1377 = vmul.f32 %v1373, 0.35355338
    %v1378 = vmul.f32 %v1376, 0.35355338
    %v1379 = vsel %vm411, %v1378, -inf
    %v1380 = vmax.f32 %v1377, %v1379
    %v1381 = vrot.slane %v1380, 4
    %v1382 = vmax.f32 %v1380, %v1381
    %v1383 = vrot.slane %v1382, 2
    %v1384 = vmax.f32 %v1382, %v1383
    %v1385 = vrot.slane %v1384, 1
    %v1386 = vmax.f32 %v1384, %v1385
    %v1387 = vsub.f32 %v1377, %v1386
    %v1388 = vsub.f32 %v1378, %v1386
    %v1389 = vmul.f32 %v1387, 1.442695
    %v1390 = vpow.pop %v1389
    %v1391 = vmul.f32 %v1388, 1.442695
    %v1392 = vpow.pop %v1391
    %v1393 = vsel %vm411, %v1392, 0.0
    %v1394 = vadd.f32 %v1390, %v1393
    %v1395 = vrot.slane %v1394, 4
    %v1396 = vadd.f32 %v1394, %v1395
    %v1397 = vrot.slane %v1396, 2
    %v1398 = vadd.f32 %v1396, %v1397
    %v1399 = vrot.slane %v1398, 1
    %v1400 = vadd.f32 %v1398, %v1399
    %v1401 = vrcp.pop %v1400
    %v1402 = vmul.f32 %v1390, %v1401
    %v1403 = vmul.f32 %v1392, %v1401
    %v1404 = vmul.f32 %v1402, %v1181
    %v1405 = vmul.f32 %v1403, %v1183
    %vm1406 = vcmask 458112
    %v1407 = vsel %vm1406, %v1404, 0.0
    %vm1408 = vcmask 451968
    %v1409 = vsel %vm1408, %v1405, 0.0
    %v1410 = vadd.f32 %v1407, %v1409
    %v1411 = vrot.slane %v1410, 4
    %v1412 = vadd.f32 %v1410, %v1411
    %v1413 = vrot.slane %v1412, 2
    %v1414 = vadd.f32 %v1412, %v1413
    %v1415 = vrot.slane %v1414, 1
    %v1416 = vadd.f32 %v1414, %v1415
    %1417 = vrot.lane.b32.xlu0 %v1261, 104
    %v1418 = vpop.permute.xlu0 %1417
    %1419 = vrot.lane.b32.xlu0 %v1262, 104
    %v1420 = vpop.permute.xlu0 %1419
    %v1423 = vsel %vm1263, %v1418, 0.0
    %1424 = vadd.xlane.f32.xlu0 %v1423
    %v1425 = vpop.xlane.xlu0 %1424
    %v1426 = vsel %vm1267, %v1420, 0.0
    %1427 = vadd.xlane.f32.xlu0 %v1426
    %v1428 = vpop.xlane.xlu0 %1427
    %v1429 = vmul.f32 %v1425, 0.35355338
    %v1430 = vmul.f32 %v1428, 0.35355338
    %v1431 = vsel %vm411, %v1430, -inf
    %v1432 = vmax.f32 %v1429, %v1431
    %v1433 = vrot.slane %v1432, 4
    %v1434 = vmax.f32 %v1432, %v1433
    %v1435 = vrot.slane %v1434, 2
    %v1436 = vmax.f32 %v1434, %v1435
    %v1437 = vrot.slane %v1436, 1
    %v1438 = vmax.f32 %v1436, %v1437
    %v1439 = vsub.f32 %v1429, %v1438
    %v1440 = vsub.f32 %v1430, %v1438
    %v1441 = vmul.f32 %v1439, 1.442695
    %v1442 = vpow.pop %v1441
    %v1443 = vmul.f32 %v1440, 1.442695
    %v1444 = vpow.pop %v1443
    %v1445 = vsel %vm411, %v1444, 0.0
    %v1446 = vadd.f32 %v1442, %v1445
    %v1447 = vrot.slane %v1446, 4
    %v1448 = vadd.f32 %v1446, %v1447
    %v1449 = vrot.slane %v1448, 2
    %v1450 = vadd.f32 %v1448, %v1449
    %v1451 = vrot.slane %v1450, 1
    %v1452 = vadd.f32 %v1450, %v1451
    %v1453 = vrcp.pop %v1452
    %v1454 = vmul.f32 %v1442, %v1453
    %v1455 = vmul.f32 %v1444, %v1453
    %v1456 = vmul.f32 %v1454, %v1181
    %v1457 = vmul.f32 %v1455, %v1183
    %vm1458 = vcmask 523712
    %v1459 = vsel %vm1458, %v1456, 0.0
    %vm1460 = vcmask 517568
    %v1461 = vsel %vm1460, %v1457, 0.0
    %v1462 = vadd.f32 %v1459, %v1461
    %v1463 = vrot.slane %v1462, 4
    %v1464 = vadd.f32 %v1462, %v1463
    %v1465 = vrot.slane %v1464, 2
    %v1466 = vadd.f32 %v1464, %v1465
    %v1467 = vrot.slane %v1466, 1
    %v1468 = vadd.f32 %v1466, %v1467
    %1470 = vrot.lane.b32.xlu0 %v1310, 96
    %v1471 = vpop.permute.xlu0 %1470
    %1474 = vrot.lane.b32.xlu0 %v1364, 96
    %v1475 = vpop.permute.xlu0 %1474
    %1478 = vrot.lane.b32.xlu0 %v1416, 96
    %v1479 = vpop.permute.xlu0 %1478
    %1482 = vrot.lane.b32.xlu0 %v1468, 96
    %v1483 = vpop.permute.xlu0 %1482
    %v1485 = vsel %vm1263, %v1471, %v1475
    %vm1486 = vcmask 130048
    %v1487 = vsel %vm1486, %v1485, %v1479
    %vm1488 = vcmask 195584
    %v1489 = vsel %vm1488, %v1487, %v1483
    %v1490 = vperm.slane %v1257, 1
    %v1491 = vmul.f32 %v1490, %v1183
    %v1492 = vmul.f32 %v1490, %v1186
    %vm1493 = vcmask 64514
    %v1494 = vsel %vm1493, %v1491, 0.0
    %1495 = vadd.xlane.f32.xlu0 %v1494
    %v1496 = vpop.xlane.xlu0 %1495
    %vm1497 = vcmask 60416
    %v1498 = vsel %vm1497, %v1492, 0.0
    %1499 = vadd.xlane.f32.xlu0 %v1498
    %v1500 = vpop.xlane.xlu0 %1499
    %v1501 = vmul.f32 %v1496, 0.35355338
    %v1502 = vmul.f32 %v1500, 0.35355338
    %vm1503 = vcmask 1047554
    %v1504 = vsel %vm1503, %v1501, -inf
    %v1505 = vsel %vm415, %v1502, -inf
    %v1506 = vmax.f32 %v1504, %v1505
    %v1507 = vrot.slane %v1506, 4
    %v1508 = vmax.f32 %v1506, %v1507
    %v1509 = vrot.slane %v1508, 2
    %v1510 = vmax.f32 %v1508, %v1509
    %v1511 = vrot.slane %v1510, 1
    %v1512 = vmax.f32 %v1510, %v1511
    %v1513 = vsub.f32 %v1501, %v1512
    %v1514 = vsub.f32 %v1502, %v1512
    %v1515 = vmul.f32 %v1513, 1.442695
    %v1516 = vpow.pop %v1515
    %v1517 = vmul.f32 %v1514, 1.442695
    %v1518 = vpow.pop %v1517
    %vm1521 = vcmask 1045504
    %v1522 = vrot.slane %v1516, 2
    %v1523 = vrot.slane %v1518, 2
    %v1524 = vsel %vm1521, %v1522, %v1523
    %v1527 = vsel %vm411, %v1523, 0.0
    %v1528 = vadd.f32 %v1524, %v1527
    %v1529 = vrot.slane %v1528, 4
    %v1530 = vadd.f32 %v1528, %v1529
    %v1531 = vrot.slane %v1530, 2
    %v1532 = vadd.f32 %v1530, %v1531
    %v1533 = vrot.slane %v1532, 1
    %v1534 = vadd.f32 %v1532, %v1533
    %v1535 = vrcp.pop %v1534
    %v1536 = vmul.f32 %v1516, %v1535
    %v1537 = vmul.f32 %v1518, %v1535
    %v1538 = vmul.f32 %v1536, %v1183
    %v1539 = vmul.f32 %v1537, %v1186
    %v1542 = vrot.slane %v1538, 2
    %v1543 = vrot.slane %v1539, 2
    %v1544 = vsel %vm1521, %v1542, %v1543
    %v1547 = vsel %vm1300, %v1544, 0.0
    %v1548 = vsel %vm1302, %v1543, 0.0
    %v1549 = vadd.f32 %v1547, %v1548
    %v1550 = vrot.slane %v1549, 4
    %v1551 = vadd.f32 %v1549, %v1550
    %v1552 = vrot.slane %v1551, 2
    %v1553 = vadd.f32 %v1551, %v1552
    %v1554 = vrot.slane %v1553, 1
    %v1555 = vadd.f32 %v1553, %v1554
    %1558 = vrot.lane.b32.xlu0 %v1491, 120
    %v1559 = vpop.permute.xlu0 %1558
    %1560 = vrot.lane.b32.xlu0 %v1492, 120
    %v1561 = vpop.permute.xlu0 %1560
    %v1564 = vsel %vm1493, %v1559, 0.0
    %1565 = vadd.xlane.f32.xlu0 %v1564
    %v1566 = vpop.xlane.xlu0 %1565
    %v1567 = vsel %vm1497, %v1561, 0.0
    %1568 = vadd.xlane.f32.xlu0 %v1567
    %v1569 = vpop.xlane.xlu0 %1568
    %v1570 = vmul.f32 %v1566, 0.35355338
    %v1571 = vmul.f32 %v1569, 0.35355338
    %v1572 = vsel %vm1503, %v1570, -inf
    %v1573 = vsel %vm415, %v1571, -inf
    %v1574 = vmax.f32 %v1572, %v1573
    %v1575 = vrot.slane %v1574, 4
    %v1576 = vmax.f32 %v1574, %v1575
    %v1577 = vrot.slane %v1576, 2
    %v1578 = vmax.f32 %v1576, %v1577
    %v1579 = vrot.slane %v1578, 1
    %v1580 = vmax.f32 %v1578, %v1579
    %v1581 = vsub.f32 %v1570, %v1580
    %v1582 = vsub.f32 %v1571, %v1580
    %v1583 = vmul.f32 %v1581, 1.442695
    %v1584 = vpow.pop %v1583
    %v1585 = vmul.f32 %v1582, 1.442695
    %v1586 = vpow.pop %v1585
    %v1589 = vrot.slane %v1584, 2
    %v1590 = vrot.slane %v1586, 2
    %v1591 = vsel %vm1521, %v1589, %v1590
    %v1594 = vsel %vm411, %v1590, 0.0
    %v1595 = vadd.f32 %v1591, %v1594
    %v1596 = vrot.slane %v1595, 4
    %v1597 = vadd.f32 %v1595, %v1596
    %v1598 = vrot.slane %v1597, 2
    %v1599 = vadd.f32 %v1597, %v1598
    %v1600 = vrot.slane %v1599, 1
    %v1601 = vadd.f32 %v1599, %v1600
    %v1602 = vrcp.pop %v1601
    %v1603 = vmul.f32 %v1584, %v1602
    %v1604 = vmul.f32 %v1586, %v1602
    %v1605 = vmul.f32 %v1603, %v1183
    %v1606 = vmul.f32 %v1604, %v1186
    %v1609 = vrot.slane %v1605, 2
    %v1610 = vrot.slane %v1606, 2
    %v1611 = vsel %vm1521, %v1609, %v1610
    %v1614 = vsel %vm1354, %v1611, 0.0
    %v1615 = vsel %vm1356, %v1610, 0.0
    %v1616 = vadd.f32 %v1614, %v1615
    %v1617 = vrot.slane %v1616, 4
    %v1618 = vadd.f32 %v1616, %v1617
    %v1619 = vrot.slane %v1618, 2
    %v1620 = vadd.f32 %v1618, %v1619
    %v1621 = vrot.slane %v1620, 1
    %v1622 = vadd.f32 %v1620, %v1621
    %1623 = vrot.lane.b32.xlu0 %v1491, 112
    %v1624 = vpop.permute.xlu0 %1623
    %1625 = vrot.lane.b32.xlu0 %v1492, 112
    %v1626 = vpop.permute.xlu0 %1625
    %v1629 = vsel %vm1493, %v1624, 0.0
    %1630 = vadd.xlane.f32.xlu0 %v1629
    %v1631 = vpop.xlane.xlu0 %1630
    %v1632 = vsel %vm1497, %v1626, 0.0
    %1633 = vadd.xlane.f32.xlu0 %v1632
    %v1634 = vpop.xlane.xlu0 %1633
    %v1635 = vmul.f32 %v1631, 0.35355338
    %v1636 = vmul.f32 %v1634, 0.35355338
    %v1637 = vsel %vm1503, %v1635, -inf
    %v1638 = vsel %vm415, %v1636, -inf
    %v1639 = vmax.f32 %v1637, %v1638
    %v1640 = vrot.slane %v1639, 4
    %v1641 = vmax.f32 %v1639, %v1640
    %v1642 = vrot.slane %v1641, 2
    %v1643 = vmax.f32 %v1641, %v1642
    %v1644 = vrot.slane %v1643, 1
    %v1645 = vmax.f32 %v1643, %v1644
    %v1646 = vsub.f32 %v1635, %v1645
    %v1647 = vsub.f32 %v1636, %v1645
    %v1648 = vmul.f32 %v1646, 1.442695
    %v1649 = vpow.pop %v1648
    %v1650 = vmul.f32 %v1647, 1.442695
    %v1651 = vpow.pop %v1650
    %v1654 = vrot.slane %v1649, 2
    %v1655 = vrot.slane %v1651, 2
    %v1656 = vsel %vm1521, %v1654, %v1655
    %v1659 = vsel %vm411, %v1655, 0.0
    %v1660 = vadd.f32 %v1656, %v1659
    %v1661 = vrot.slane %v1660, 4
    %v1662 = vadd.f32 %v1660, %v1661
    %v1663 = vrot.slane %v1662, 2
    %v1664 = vadd.f32 %v1662, %v1663
    %v1665 = vrot.slane %v1664, 1
    %v1666 = vadd.f32 %v1664, %v1665
    %v1667 = vrcp.pop %v1666
    %v1668 = vmul.f32 %v1649, %v1667
    %v1669 = vmul.f32 %v1651, %v1667
    %v1670 = vmul.f32 %v1668, %v1183
    %v1671 = vmul.f32 %v1669, %v1186
    %v1674 = vrot.slane %v1670, 2
    %v1675 = vrot.slane %v1671, 2
    %v1676 = vsel %vm1521, %v1674, %v1675
    %v1679 = vsel %vm1406, %v1676, 0.0
    %v1680 = vsel %vm1408, %v1675, 0.0
    %v1681 = vadd.f32 %v1679, %v1680
    %v1682 = vrot.slane %v1681, 4
    %v1683 = vadd.f32 %v1681, %v1682
    %v1684 = vrot.slane %v1683, 2
    %v1685 = vadd.f32 %v1683, %v1684
    %v1686 = vrot.slane %v1685, 1
    %v1687 = vadd.f32 %v1685, %v1686
    %1688 = vrot.lane.b32.xlu0 %v1491, 104
    %v1689 = vpop.permute.xlu0 %1688
    %1690 = vrot.lane.b32.xlu0 %v1492, 104
    %v1691 = vpop.permute.xlu0 %1690
    %v1694 = vsel %vm1493, %v1689, 0.0
    %1695 = vadd.xlane.f32.xlu0 %v1694
    %v1696 = vpop.xlane.xlu0 %1695
    %v1697 = vsel %vm1497, %v1691, 0.0
    %1698 = vadd.xlane.f32.xlu0 %v1697
    %v1699 = vpop.xlane.xlu0 %1698
    %v1700 = vmul.f32 %v1696, 0.35355338
    %v1701 = vmul.f32 %v1699, 0.35355338
    %v1702 = vsel %vm1503, %v1700, -inf
    %v1703 = vsel %vm415, %v1701, -inf
    %v1704 = vmax.f32 %v1702, %v1703
    %v1705 = vrot.slane %v1704, 4
    %v1706 = vmax.f32 %v1704, %v1705
    %v1707 = vrot.slane %v1706, 2
    %v1708 = vmax.f32 %v1706, %v1707
    %v1709 = vrot.slane %v1708, 1
    %v1710 = vmax.f32 %v1708, %v1709
    %v1711 = vsub.f32 %v1700, %v1710
    %v1712 = vsub.f32 %v1701, %v1710
    %v1713 = vmul.f32 %v1711, 1.442695
    %v1714 = vpow.pop %v1713
    %v1715 = vmul.f32 %v1712, 1.442695
    %v1716 = vpow.pop %v1715
    %v1719 = vrot.slane %v1714, 2
    %v1720 = vrot.slane %v1716, 2
    %v1721 = vsel %vm1521, %v1719, %v1720
    %v1724 = vsel %vm411, %v1720, 0.0
    %v1725 = vadd.f32 %v1721, %v1724
    %v1726 = vrot.slane %v1725, 4
    %v1727 = vadd.f32 %v1725, %v1726
    %v1728 = vrot.slane %v1727, 2
    %v1729 = vadd.f32 %v1727, %v1728
    %v1730 = vrot.slane %v1729, 1
    %v1731 = vadd.f32 %v1729, %v1730
    %v1732 = vrcp.pop %v1731
    %v1733 = vmul.f32 %v1714, %v1732
    %v1734 = vmul.f32 %v1716, %v1732
    %v1735 = vmul.f32 %v1733, %v1183
    %v1736 = vmul.f32 %v1734, %v1186
    %v1739 = vrot.slane %v1735, 2
    %v1740 = vrot.slane %v1736, 2
    %v1741 = vsel %vm1521, %v1739, %v1740
    %v1744 = vsel %vm1458, %v1741, 0.0
    %v1745 = vsel %vm1460, %v1740, 0.0
    %v1746 = vadd.f32 %v1744, %v1745
    %v1747 = vrot.slane %v1746, 4
    %v1748 = vadd.f32 %v1746, %v1747
    %v1749 = vrot.slane %v1748, 2
    %v1750 = vadd.f32 %v1748, %v1749
    %v1751 = vrot.slane %v1750, 1
    %v1752 = vadd.f32 %v1750, %v1751
    %1754 = vrot.lane.b32.xlu0 %v1555, 96
    %v1755 = vpop.permute.xlu0 %1754
    %1758 = vrot.lane.b32.xlu0 %v1622, 96
    %v1759 = vpop.permute.xlu0 %1758
    %1762 = vrot.lane.b32.xlu0 %v1687, 96
    %v1763 = vpop.permute.xlu0 %1762
    %1766 = vrot.lane.b32.xlu0 %v1752, 96
    %v1767 = vpop.permute.xlu0 %1766
    %v1769 = vsel %vm1263, %v1755, %v1759
    %v1770 = vsel %vm1486, %v1769, %v1763
    %v1771 = vsel %vm1488, %v1770, %v1767
    %v1773 = vrot.slane %v1771, 7
    %v1775 = vsel %vm409, %v1489, %v1773
    %v1776 = vpack.c.bf16 %v1775, %v1775
    %v1777 = vld [vmem:[%s12] sm:$0xf]
    %v1778 = vld [vmem:[%s12 + $0x4] sm:$0xf]
    %v1779 = vld [vmem:[%s12 + $0x8] sm:$0xf]
    %v1780 = vld [vmem:[%s12 + $0xc] sm:$0xf]
    %v1781 = vld [vmem:[#allocation9] sm:$0x1]
    %v1783 = vperm.slane %v1781, 0
    %v1789 = vunpack.c.l.b16 %v1777
    %v1790 = vunpack.c.l.b16 %v1778
    %v1791 = vunpack.c.l.b16 %v1779
    %v1792 = vunpack.c.l.b16 %v1780
    %v1793 = vpack.c.b16 %v1790, %v1789
    %v1794 = vpack.c.b16 %v1792, %v1791
    %v1798 = vsel %vm1056, %v1776, 0
    %1800 = vmatpush.bf16.msra.mxu0 0
    %1801 = vmatpush.bf16.msra.mxu0 0
    %1802 = vmatpush.bf16.msra.mxu0 0
    %1803 = vmatpush.bf16.msra.mxu0 0
    %1804 = vmatpush.bf16.msra.mxu0 0
    %1805 = vmatpush.bf16.msra.mxu0 0
    %1806 = vmatpush.bf16.msra.mxu0 %v1794
    %1807 = vmatpush.bf16.msra.mxu0 %v1793
    %1808 = vmatmul.bf16.gmra.mxu0 %v1798
    %v1809 = vpop.f32.mrf.mxu0
    %v1810 = vadd.f32 %v1783, %v1809
    %v1811 = vpop.f32.mrf.mxu0
    %1812 = vdwg.mxu0
    %v1813 = vadd.f32 %v1189, %v1810
    %v1814 = vld [vmem:[#allocation10] sm:$0x1]
    %v1815 = vld [vmem:[#allocation12] sm:$0x1]
    %v1816 = vsel %vm1192, %v1813, 0.0
    %1817 = vadd.xlane.f32.xlu0 %v1816
    %v1818 = vpop.xlane.xlu0 %1817
    %v1819 = vmul.f32 %v1818, %v1073
    %v1820 = vsub.f32 %v1813, %v1819
    %v1821 = vmul.f32 %v1820, %v1820
    %v1822 = vsel %vm1192, %v1821, 0.0
    %1823 = vadd.xlane.f32.xlu0 %v1822
    %v1824 = vpop.xlane.xlu0 %1823
    %v1825 = vmul.f32 %v1824, %v1073
    %v1826 = vadd.f32 %v1825, 1e-05
    %v1827 = vrsqrt.pop %v1826
    %v1828 = vmul.f32 %v1827, %v1826
    %v1829 = vmul.f32 %v1828, %v1827
    %v1830 = vmul.f32 0.5, %v1829
    %v1831 = vsub.f32 1.5, %v1830
    %v1832 = vmul.f32 %v1827, %v1831
    %vm1833 = vweird.f32 %v1826
    %vm1834 = vweird.f32 %v1827
    %vm1835 = vmor %vm1833, %vm1834
    %v1836 = vsel %vm1835, %v1827, %v1832
    %v1837 = vmul.f32 %v1820, %v1836
    %v1839 = vperm.slane %v1814, 0
    %v1841 = vmul.f32 %v1837, %v1839
    %v1843 = vperm.slane %v1815, 0
    %v1845 = vadd.f32 %v1841, %v1843
    %v1846 = vpack.c.bf16 %v1845, %v1845
    %v1847 = vld [vmem:[%s16] sm:$0xf]
    %v1848 = vld [vmem:[%s16 + $0x4] sm:$0xf]
    %v1849 = vld [vmem:[%s16 + $0x8] sm:$0xf]
    %v1850 = vld [vmem:[%s16 + $0xc] sm:$0xf]
    %v1851 = vld [vmem:[#allocation13] sm:$0x1]
    %v1853 = vperm.slane %v1851, 0
    %v1859 = vunpack.c.l.b16 %v1847
    %v1860 = vunpack.c.l.b16 %v1848
    %v1861 = vunpack.c.l.b16 %v1849
    %v1862 = vunpack.c.l.b16 %v1850
    %v1863 = vpack.c.b16 %v1860, %v1859
    %v1864 = vpack.c.b16 %v1862, %v1861
    %v1868 = vsel %vm1056, %v1846, 0
    %1870 = vmatpush.bf16.msra.mxu0 0
    %1871 = vmatpush.bf16.msra.mxu0 0
    %1872 = vmatpush.bf16.msra.mxu0 0
    %1873 = vmatpush.bf16.msra.mxu0 0
    %1874 = vmatpush.bf16.msra.mxu0 0
    %1875 = vmatpush.bf16.msra.mxu0 0
    %1876 = vmatpush.bf16.msra.mxu0 %v1864
    %1877 = vmatpush.bf16.msra.mxu0 %v1863
    %1878 = vmatmul.bf16.gmra.mxu0 %v1868
    %v1879 = vpop.f32.mrf.mxu0
    %v1880 = vadd.f32 %v1853, %v1879
    %v1881 = vpop.f32.mrf.mxu0
    %1882 = vdwg.mxu0
    %v1883 = vmul.f32 %v1880, -1.702
    %v1884 = vmul.f32 %v1883, 1.442695
    %v1885 = vpow.pop %v1884
    %v1886 = vadd.f32 %v1885, 1.0
    %v1887 = vrcp.pop %v1886
    %v1888 = vmul.f32 %v1886, %v1887
    %v1889 = vsub.f32 1.0, %v1888
    %v1890 = vmul.f32 %v1887, %v1889
    %v1891 = vadd.f32 %v1887, %v1890
    %vm1892 = vweird.f32 %v1886
    %vm1893 = vweird.f32 %v1887
    %vm1894 = vmor %vm1892, %vm1893
    %v1895 = vsel %vm1894, %v1887, %v1891
    %v1896 = vand.u32 2147483647, %v1886
    %vm1897 = vcmp.eq.f32.partialorder %v1896, 8.507059e+37
    %v1898 = vand.u32 %v1886, 2147483648
    %v1899 = vor.u32 1.1754944e-38, %v1898
    %v1900 = vsel %vm1897, %v1899, %v1895
    %v1901 = vmul.f32 1.0, %v1900
    %v1902 = vmul.f32 %v1880, %v1901
    %v1903 = vpack.c.bf16 %v1902, %v1902
    %v1904 = vld [vmem:[%s18] sm:$0xf]
    %v1905 = vld [vmem:[%s18 + $0x4] sm:$0xf]
    %v1906 = vld [vmem:[%s18 + $0x8] sm:$0xf]
    %v1907 = vld [vmem:[%s18 + $0xc] sm:$0xf]
    %v1908 = vld [vmem:[%s18 + $0x10] sm:$0xf]
    %v1909 = vld [vmem:[%s18 + $0x14] sm:$0xf]
    %v1910 = vld [vmem:[%s18 + $0x18] sm:$0xf]
    %v1911 = vld [vmem:[%s18 + $0x1c] sm:$0xf]
    %v1912 = vld [vmem:[%s18 + $0x20] sm:$0xf]
    %v1913 = vld [vmem:[%s18 + $0x24] sm:$0xf]
    %v1914 = vld [vmem:[%s18 + $0x28] sm:$0xf]
    %v1915 = vld [vmem:[%s18 + $0x2c] sm:$0xf]
    %v1916 = vld [vmem:[%s18 + $0x30] sm:$0xf]
    %v1917 = vld [vmem:[%s18 + $0x34] sm:$0xf]
    %v1918 = vld [vmem:[%s18 + $0x38] sm:$0xf]
    %v1919 = vld [vmem:[%s18 + $0x3c] sm:$0xf]
    %v1920 = vld [vmem:[#allocation15] sm:$0x1]
    %v1922 = vperm.slane %v1920, 0
    %v1940 = vunpack.c.l.b16 %v1904
    %v1941 = vunpack.c.l.b16 %v1905
    %v1942 = vunpack.c.l.b16 %v1906
    %v1943 = vunpack.c.l.b16 %v1907
    %v1944 = vunpack.c.l.b16 %v1908
    %v1945 = vunpack.c.l.b16 %v1909
    %v1946 = vunpack.c.l.b16 %v1910
    %v1947 = vunpack.c.l.b16 %v1911
    %v1948 = vunpack.c.l.b16 %v1912
    %v1949 = vunpack.c.l.b16 %v1913
    %v1950 = vunpack.c.l.b16 %v1914
    %v1951 = vunpack.c.l.b16 %v1915
    %v1952 = vunpack.c.l.b16 %v1916
    %v1953 = vunpack.c.l.b16 %v1917
    %v1954 = vunpack.c.l.b16 %v1918
    %v1955 = vunpack.c.l.b16 %v1919
    %v1956 = vpack.c.b16 %v1941, %v1940
    %v1957 = vpack.c.b16 %v1943, %v1942
    %v1958 = vpack.c.b16 %v1945, %v1944
    %v1959 = vpack.c.b16 %v1947, %v1946
    %v1960 = vpack.c.b16 %v1949, %v1948
    %v1961 = vpack.c.b16 %v1951, %v1950
    %v1962 = vpack.c.b16 %v1953, %v1952
    %v1963 = vpack.c.b16 %v1955, %v1954
    %1972 = vmatpush.bf16.msra.mxu0 %v1963
    %1973 = vmatpush.bf16.msra.mxu0 %v1962
    %1974 = vmatpush.bf16.msra.mxu0 %v1961
    %1975 = vmatpush.bf16.msra.mxu0 %v1960
    %1976 = vmatpush.bf16.msra.mxu0 %v1959
    %1977 = vmatpush.bf16.msra.mxu0 %v1958
    %1978 = vmatpush.bf16.msra.mxu0 %v1957
    %1979 = vmatpush.bf16.msra.mxu0 %v1956
    %1980 = vmatmul.bf16.gmra.mxu0 %v1903
    %v1981 = vpop.f32.mrf.mxu0
    %v1982 = vadd.f32 %v1922, %v1981
    %v1983 = vpop.f32.mrf.mxu0
    %1984 = vdwg.mxu0
    %v1985 = vadd.f32 %v1813, %v1982
    %1986 = vst.msk [vmem:[%s20] sm:$0x3] %vm1192, %v1985
    // Predicated region
    $region118: #{vision_transformer_forward.7} parent=1 // pred_check
      _
    $region119: #{vision_transformer_forward.7} parent=1 // pred_check_branch
      %1988 = sbr.rel (0) target = $region121
    $region120: #{vision_transformer_forward.7} parent=1 // pred_region
      _
    $region121: #{vision_transformer_forward.7} parent=1 // pred_fallthru
      _
    // Predicated region
    $region122: #{vision_transformer_forward.7} parent=1 // pred_check
      _
    $region123: #{vision_transformer_forward.7} parent=1 // pred_check_branch
      %1990 = sbr.rel (0) target = $region125
    $region124: #{vision_transformer_forward.7} parent=1 // pred_region
      _
    $region125: #{vision_transformer_forward.7} parent=1 // pred_fallthru
      _
    %1991 = vsyncpa [#allocation3], 1
    %1992 = vsyncpa [#allocation5], 1
    %1993 = vsyncpa [#allocation8], 1
    %1994 = vsyncpa [#allocation11], 1
    %1995 = vsyncpa [#allocation14], 1

// kernel: vision_transformer_forward.9
$region0: #{vision_transformer_forward.9}
  #allocation0 [shape = 'u32[]', space=smem, size = 0x4, offset = 0x4, fixed_abs, tag = 'smem constant byte address 0x4 - core index']
  #allocation1 [shape = 'u32[72,128]{1,0:T(1,128)}', space=vmem, size = 0x9000, scoped, tag = 'internal scratch']
  %s0 = inlined_call_operand.vmem [shape: bf16[20,32], index: 0, kind: input, shape index: {}]
  %s1 = inlined_call_operand.vmem [shape: f32[2,32], index: 1, kind: input, shape index: {}]
  %s2 = inlined_call_operand.vmem [shape: f32[27,32], index: 2, kind: input, shape index: {}]
  %s3 = inlined_call_operand.vmem [shape: f32[1,32], index: 3, kind: input, shape index: {}]
  %s4 = inlined_call_operand.hbm [shape: f32[1,32], index: 4, kind: input, shape index: {}]
  %s5 = inlined_call_operand.hbm [shape: f32[1,32], index: 5, kind: input, shape index: {}]
  %s6 = inlined_call_operand.hbm [shape: f32[1,32], index: 6, kind: input, shape index: {}]
  %s7 = inlined_call_operand.hbm [shape: f32[1,32], index: 7, kind: input, shape index: {}]
  %s8 = inlined_call_operand.vmem [shape: bf16[32,32], index: 8, kind: input, shape index: {}]
  %s9 = inlined_call_operand.hbm [shape: f32[1,32], index: 9, kind: input, shape index: {}]
  %s10 = inlined_call_operand.vmem [shape: bf16[32,64], index: 10, kind: input, shape index: {}]
  %s11 = inlined_call_operand.hbm [shape: f32[1,64], index: 11, kind: input, shape index: {}]
  %s12 = inlined_call_operand.vmem [shape: bf16[32,32], index: 12, kind: input, shape index: {}]
  %s13 = inlined_call_operand.hbm [shape: f32[1,32], index: 13, kind: input, shape index: {}]
  %s14 = inlined_call_operand.hbm [shape: f32[1,32], index: 14, kind: input, shape index: {}]
  %s15 = inlined_call_operand.hbm [shape: f32[1,32], index: 15, kind: input, shape index: {}]
  %s16 = inlined_call_operand.vmem [shape: bf16[32,128], index: 16, kind: input, shape index: {}]
  %s17 = inlined_call_operand.hbm [shape: f32[1,128], index: 17, kind: input, shape index: {}]
  %s18 = inlined_call_operand.vmem [shape: bf16[128,32], index: 18, kind: input, shape index: {}]
  %s19 = inlined_call_operand.hbm [shape: f32[1,32], index: 19, kind: input, shape index: {}]
  %s20 = inlined_call_operand.vmem [shape: f32[2,32], index: 20, kind: output, shape index: {}]
  %s21 = sld [smem:[#allocation0]]
  $region134: #{vision_transformer_forward.9} parent=0
    _
  %s23 = ssub.s32 1, %s21
  %s24 = scalar_select 0, %s23, %s21
  $region1: #{vision_transformer_forward.9} parent=0
    #allocation2 [shape = 'u8[512]{0}', space=vmem, size = 0x400, scoped, tag = 'input window, operand 4, single buffered']
    #allocation3 [shape = 's32[1]{0}', space=sflag, size = 0x4, scoped, tag = 'scoped memory for vision_transformer_forward.9']
    #allocation4 [shape = 'u8[512]{0}', space=vmem, size = 0x400, scoped, tag = 'input window, operand 5, single buffered']
    #allocation5 [shape = 's32[1]{0}', space=sflag, size = 0x4, scoped, tag = 'scoped memory for vision_transformer_forward.9']
    #allocation6 [shape = 'u8[512]{0}', space=vmem, size = 0x400, scoped, tag = 'input window, operand 6, single buffered']
    #allocation7 [shape = 'u8[512]{0}', space=vmem, size = 0x400, scoped, tag = 'input window, operand 7, single buffered']
    #allocation8 [shape = 's32[1]{0}', space=sflag, size = 0x4, scoped, tag = 'scoped memory for vision_transformer_forward.9']
    #allocation9 [shape = 'u8[512]{0}', space=vmem, size = 0x400, scoped, tag = 'input window, operand 9, single buffered']
    #allocation10 [shape = 'u8[512]{0}', space=vmem, size = 0x400, scoped, tag = 'input window, operand 11, single buffered']
    #allocation11 [shape = 's32[1]{0}', space=sflag, size = 0x4, scoped, tag = 'scoped memory for vision_transformer_forward.9']
    #allocation12 [shape = 'u8[512]{0}', space=vmem, size = 0x400, scoped, tag = 'input window, operand 13, single buffered']
    #allocation13 [shape = 'u8[512]{0}', space=vmem, size = 0x400, scoped, tag = 'input window, operand 14, single buffered']
    #allocation14 [shape = 's32[1]{0}', space=sflag, size = 0x4, scoped, tag = 'scoped memory for vision_transformer_forward.9']
    #allocation15 [shape = 'u8[512]{0}', space=vmem, size = 0x400, scoped, tag = 'input window, operand 15, single buffered']
    #allocation16 [shape = 'u8[512]{0}', space=vmem, size = 0x400, scoped, tag = 'input window, operand 17, single buffered']
    #allocation17 [shape = 's32[1]{0}', space=sflag, size = 0x4, scoped, tag = 'scoped memory for vision_transformer_forward.9']
    #allocation18 [shape = 'u8[512]{0}', space=vmem, size = 0x400, scoped, tag = 'input window, operand 19, single buffered']
    %25 = vsyncpa [#allocation3], 0
    %26 = vsyncpa [#allocation5], 0
    %27 = vsyncpa [#allocation8], 0
    %28 = vsyncpa [#allocation11], 0
    %29 = vsyncpa [#allocation14], 0
    %30 = vsyncpa [#allocation17], 0
    // Predicated region
    $region2: #{vision_transformer_forward.9} parent=1 // pred_check
      _
    $region3: #{vision_transformer_forward.9} parent=1 // pred_check_branch
      %32 = sbr.rel (0) target = $region5
    $region4: #{vision_transformer_forward.9} parent=1 // pred_region
      _
    $region5: #{vision_transformer_forward.9} parent=1 // pred_fallthru
      _
    // Predicated region
    $region6: #{vision_transformer_forward.9} parent=1 // pred_check
      _
    $region7: #{vision_transformer_forward.9} parent=1 // pred_check_branch
      %34 = sbr.rel (0) target = $region9
    $region8: #{vision_transformer_forward.9} parent=1 // pred_region
      _
    $region9: #{vision_transformer_forward.9} parent=1 // pred_fallthru
      _
    // Predicated region
    $region10: #{vision_transformer_forward.9} parent=1 // pred_check
      _
    $region11: #{vision_transformer_forward.9} parent=1 // pred_check_branch
      %36 = sbr.rel (0) target = $region13
    $region12: #{vision_transformer_forward.9} parent=1 // pred_region
      _
    $region13: #{vision_transformer_forward.9} parent=1 // pred_fallthru
      _
    // Predicated region
    $region14: #{vision_transformer_forward.9} parent=1 // pred_check
      _
    $region15: #{vision_transformer_forward.9} parent=1 // pred_check_branch
      %38 = sbr.rel (0) target = $region17
    $region16: #{vision_transformer_forward.9} parent=1 // pred_region
      _
    $region17: #{vision_transformer_forward.9} parent=1 // pred_fallthru
      _
    // Predicated region
    $region18: #{vision_transformer_forward.9} parent=1 // pred_check
      _
    $region19: #{vision_transformer_forward.9} parent=1 // pred_check_branch
      %40 = sbr.rel (0) target = $region21
    $region20: #{vision_transformer_forward.9} parent=1 // pred_region
      %42 = vsyncadd [#allocation3], 0
      %s44 = sshll.u32 %s4, 4
      %s45 = int_to_ptr.hbm [resolvable:$true] %s44
      %s46 = sshll.u32 [#allocation2], 4
      %s47 = int_to_ptr.vmem [resolvable:$true] %s46
      %49 = dma.hbm_to_vmem [thread:$0]  %s45, 16, %s47, [#allocation3]
    $region21: #{vision_transformer_forward.9} parent=1 // pred_fallthru
      _
    // Predicated region
    $region22: #{vision_transformer_forward.9} parent=1 // pred_check
      _
    $region23: #{vision_transformer_forward.9} parent=1 // pred_check_branch
      %51 = sbr.rel (0) target = $region25
    $region24: #{vision_transformer_forward.9} parent=1 // pred_region
      %53 = vsyncadd [#allocation5], 0
      %s55 = sshll.u32 %s5, 4
      %s56 = int_to_ptr.hbm [resolvable:$true] %s55
      %s57 = sshll.u32 [#allocation4], 4
      %s58 = int_to_ptr.vmem [resolvable:$true] %s57
      %60 = dma.hbm_to_vmem [thread:$0]  %s56, 16, %s58, [#allocation5]
    $region25: #{vision_transformer_forward.9} parent=1 // pred_fallthru
      _
    // Predicated region
    $region26: #{vision_transformer_forward.9} parent=1 // pred_check
      _
    $region27: #{vision_transformer_forward.9} parent=1 // pred_check_branch
      %62 = sbr.rel (0) target = $region29
    $region28: #{vision_transformer_forward.9} parent=1 // pred_region
      %64 = vsyncadd [#allocation5], 0
      %s66 = sshll.u32 %s6, 4
      %s67 = int_to_ptr.hbm [resolvable:$true] %s66
      %s68 = sshll.u32 [#allocation6], 4
      %s69 = int_to_ptr.vmem [resolvable:$true] %s68
      %71 = dma.hbm_to_vmem [thread:$0]  %s67, 16, %s69, [#allocation5]
    $region29: #{vision_transformer_forward.9} parent=1 // pred_fallthru
      _
    // Predicated region
    $region30: #{vision_transformer_forward.9} parent=1 // pred_check
      _
    $region31: #{vision_transformer_forward.9} parent=1 // pred_check_branch
      %73 = sbr.rel (0) target = $region33
    $region32: #{vision_transformer_forward.9} parent=1 // pred_region
      %75 = vsyncadd [#allocation8], 0
      %s77 = sshll.u32 %s7, 4
      %s78 = int_to_ptr.hbm [resolvable:$true] %s77
      %s79 = sshll.u32 [#allocation7], 4
      %s80 = int_to_ptr.vmem [resolvable:$true] %s79
      %82 = dma.hbm_to_vmem [thread:$0]  %s78, 16, %s80, [#allocation8]
    $region33: #{vision_transformer_forward.9} parent=1 // pred_fallthru
      _
    // Predicated region
    $region34: #{vision_transformer_forward.9} parent=1 // pred_check
      _
    $region35: #{vision_transformer_forward.9} parent=1 // pred_check_branch
      %84 = sbr.rel (0) target = $region37
    $region36: #{vision_transformer_forward.9} parent=1 // pred_region
      _
    $region37: #{vision_transformer_forward.9} parent=1 // pred_fallthru
      _
    // Predicated region
    $region38: #{vision_transformer_forward.9} parent=1 // pred_check
      _
    $region39: #{vision_transformer_forward.9} parent=1 // pred_check_branch
      %86 = sbr.rel (0) target = $region41
    $region40: #{vision_transformer_forward.9} parent=1 // pred_region
      %88 = vsyncadd [#allocation8], 0
      %s90 = sshll.u32 %s9, 4
      %s91 = int_to_ptr.hbm [resolvable:$true] %s90
      %s92 = sshll.u32 [#allocation9], 4
      %s93 = int_to_ptr.vmem [resolvable:$true] %s92
      %95 = dma.hbm_to_vmem [thread:$0]  %s91, 16, %s93, [#allocation8]
    $region41: #{vision_transformer_forward.9} parent=1 // pred_fallthru
      _
    // Predicated region
    $region42: #{vision_transformer_forward.9} parent=1 // pred_check
      _
    $region43: #{vision_transformer_forward.9} parent=1 // pred_check_branch
      %97 = sbr.rel (0) target = $region45
    $region44: #{vision_transformer_forward.9} parent=1 // pred_region
      _
    $region45: #{vision_transformer_forward.9} parent=1 // pred_fallthru
      _
    // Predicated region
    $region46: #{vision_transformer_forward.9} parent=1 // pred_check
      _
    $region47: #{vision_transformer_forward.9} parent=1 // pred_check_branch
      %99 = sbr.rel (0) target = $region49
    $region48: #{vision_transformer_forward.9} parent=1 // pred_region
      %101 = vsyncadd [#allocation11], 0
      %s103 = sshll.u32 %s11, 4
      %s104 = int_to_ptr.hbm [resolvable:$true] %s103
      %s105 = sshll.u32 [#allocation10], 4
      %s106 = int_to_ptr.vmem [resolvable:$true] %s105
      %108 = dma.hbm_to_vmem [thread:$0]  %s104, 16, %s106, [#allocation11]
    $region49: #{vision_transformer_forward.9} parent=1 // pred_fallthru
      _
    // Predicated region
    $region50: #{vision_transformer_forward.9} parent=1 // pred_check
      _
    $region51: #{vision_transformer_forward.9} parent=1 // pred_check_branch
      %110 = sbr.rel (0) target = $region53
    $region52: #{vision_transformer_forward.9} parent=1 // pred_region
      _
    $region53: #{vision_transformer_forward.9} parent=1 // pred_fallthru
      _
    // Predicated region
    $region54: #{vision_transformer_forward.9} parent=1 // pred_check
      _
    $region55: #{vision_transformer_forward.9} parent=1 // pred_check_branch
      %112 = sbr.rel (0) target = $region57
    $region56: #{vision_transformer_forward.9} parent=1 // pred_region
      %114 = vsyncadd [#allocation11], 0
      %s116 = sshll.u32 %s13, 4
      %s117 = int_to_ptr.hbm [resolvable:$true] %s116
      %s118 = sshll.u32 [#allocation12], 4
      %s119 = int_to_ptr.vmem [resolvable:$true] %s118
      %121 = dma.hbm_to_vmem [thread:$0]  %s117, 16, %s119, [#allocation11]
    $region57: #{vision_transformer_forward.9} parent=1 // pred_fallthru
      _
    // Predicated region
    $region58: #{vision_transformer_forward.9} parent=1 // pred_check
      _
    $region59: #{vision_transformer_forward.9} parent=1 // pred_check_branch
      %123 = sbr.rel (0) target = $region61
    $region60: #{vision_transformer_forward.9} parent=1 // pred_region
      %125 = vsyncadd [#allocation14], 0
      %s127 = sshll.u32 %s14, 4
      %s128 = int_to_ptr.hbm [resolvable:$true] %s127
      %s129 = sshll.u32 [#allocation13], 4
      %s130 = int_to_ptr.vmem [resolvable:$true] %s129
      %132 = dma.hbm_to_vmem [thread:$0]  %s128, 16, %s130, [#allocation14]
    $region61: #{vision_transformer_forward.9} parent=1 // pred_fallthru
      _
    // Predicated region
    $region62: #{vision_transformer_forward.9} parent=1 // pred_check
      _
    $region63: #{vision_transformer_forward.9} parent=1 // pred_check_branch
      %134 = sbr.rel (0) target = $region65
    $region64: #{vision_transformer_forward.9} parent=1 // pred_region
      %136 = vsyncadd [#allocation14], 0
      %s138 = sshll.u32 %s15, 4
      %s139 = int_to_ptr.hbm [resolvable:$true] %s138
      %s140 = sshll.u32 [#allocation15], 4
      %s141 = int_to_ptr.vmem [resolvable:$true] %s140
      %143 = dma.hbm_to_vmem [thread:$0]  %s139, 16, %s141, [#allocation14]
    $region65: #{vision_transformer_forward.9} parent=1 // pred_fallthru
      _
    // Predicated region
    $region66: #{vision_transformer_forward.9} parent=1 // pred_check
      _
    $region67: #{vision_transformer_forward.9} parent=1 // pred_check_branch
      %145 = sbr.rel (0) target = $region69
    $region68: #{vision_transformer_forward.9} parent=1 // pred_region
      _
    $region69: #{vision_transformer_forward.9} parent=1 // pred_fallthru
      _
    // Predicated region
    $region70: #{vision_transformer_forward.9} parent=1 // pred_check
      _
    $region71: #{vision_transformer_forward.9} parent=1 // pred_check_branch
      %147 = sbr.rel (0) target = $region73
    $region72: #{vision_transformer_forward.9} parent=1 // pred_region
      %149 = vsyncadd [#allocation17], 0
      %s151 = sshll.u32 %s17, 4
      %s152 = int_to_ptr.hbm [resolvable:$true] %s151
      %s153 = sshll.u32 [#allocation16], 4
      %s154 = int_to_ptr.vmem [resolvable:$true] %s153
      %156 = dma.hbm_to_vmem [thread:$0]  %s152, 16, %s154, [#allocation17]
    $region73: #{vision_transformer_forward.9} parent=1 // pred_fallthru
      _
    // Predicated region
    $region74: #{vision_transformer_forward.9} parent=1 // pred_check
      _
    $region75: #{vision_transformer_forward.9} parent=1 // pred_check_branch
      %158 = sbr.rel (0) target = $region77
    $region76: #{vision_transformer_forward.9} parent=1 // pred_region
      _
    $region77: #{vision_transformer_forward.9} parent=1 // pred_fallthru
      _
    // Predicated region
    $region78: #{vision_transformer_forward.9} parent=1 // pred_check
      _
    $region79: #{vision_transformer_forward.9} parent=1 // pred_check_branch
      %160 = sbr.rel (0) target = $region81
    $region80: #{vision_transformer_forward.9} parent=1 // pred_region
      %162 = vsyncadd [#allocation17], 0
      %s164 = sshll.u32 %s19, 4
      %s165 = int_to_ptr.hbm [resolvable:$true] %s164
      %s166 = sshll.u32 [#allocation18], 4
      %s167 = int_to_ptr.vmem [resolvable:$true] %s166
      %169 = dma.hbm_to_vmem [thread:$0]  %s165, 16, %s167, [#allocation17]
    $region81: #{vision_transformer_forward.9} parent=1 // pred_fallthru
      _
    // Predicated region
    $region82: #{vision_transformer_forward.9} parent=1 // pred_check
      _
    $region83: #{vision_transformer_forward.9} parent=1 // pred_check_branch
      %171 = sbr.rel (0) target = $region85
    $region84: #{vision_transformer_forward.9} parent=1 // pred_region
      %173 = dma.done [#allocation3], 16
    $region85: #{vision_transformer_forward.9} parent=1 // pred_fallthru
      _
    // Predicated region
    $region86: #{vision_transformer_forward.9} parent=1 // pred_check
      _
    $region87: #{vision_transformer_forward.9} parent=1 // pred_check_branch
      %175 = sbr.rel (0) target = $region89
    $region88: #{vision_transformer_forward.9} parent=1 // pred_region
      %177 = dma.done [#allocation5], 16
    $region89: #{vision_transformer_forward.9} parent=1 // pred_fallthru
      _
    // Predicated region
    $region90: #{vision_transformer_forward.9} parent=1 // pred_check
      _
    $region91: #{vision_transformer_forward.9} parent=1 // pred_check_branch
      %179 = sbr.rel (0) target = $region93
    $region92: #{vision_transformer_forward.9} parent=1 // pred_region
      %181 = dma.done [#allocation5], 16
    $region93: #{vision_transformer_forward.9} parent=1 // pred_fallthru
      _
    // Predicated region
    $region94: #{vision_transformer_forward.9} parent=1 // pred_check
      _
    $region95: #{vision_transformer_forward.9} parent=1 // pred_check_branch
      %183 = sbr.rel (0) target = $region97
    $region96: #{vision_transformer_forward.9} parent=1 // pred_region
      %185 = dma.done [#allocation8], 16
    $region97: #{vision_transformer_forward.9} parent=1 // pred_fallthru
      _
    // Predicated region
    $region98: #{vision_transformer_forward.9} parent=1 // pred_check
      _
    $region99: #{vision_transformer_forward.9} parent=1 // pred_check_branch
      %187 = sbr.rel (0) target = $region101
    $region100: #{vision_transformer_forward.9} parent=1 // pred_region
      %189 = dma.done [#allocation8], 16
    $region101: #{vision_transformer_forward.9} parent=1 // pred_fallthru
      _
    // Predicated region
    $region102: #{vision_transformer_forward.9} parent=1 // pred_check
      _
    $region103: #{vision_transformer_forward.9} parent=1 // pred_check_branch
      %191 = sbr.rel (0) target = $region105
    $region104: #{vision_transformer_forward.9} parent=1 // pred_region
      %193 = dma.done [#allocation11], 16
    $region105: #{vision_transformer_forward.9} parent=1 // pred_fallthru
      _
    // Predicated region
    $region106: #{vision_transformer_forward.9} parent=1 // pred_check
      _
    $region107: #{vision_transformer_forward.9} parent=1 // pred_check_branch
      %195 = sbr.rel (0) target = $region109
    $region108: #{vision_transformer_forward.9} parent=1 // pred_region
      %197 = dma.done [#allocation11], 16
    $region109: #{vision_transformer_forward.9} parent=1 // pred_fallthru
      _
    // Predicated region
    $region110: #{vision_transformer_forward.9} parent=1 // pred_check
      _
    $region111: #{vision_transformer_forward.9} parent=1 // pred_check_branch
      %199 = sbr.rel (0) target = $region113
    $region112: #{vision_transformer_forward.9} parent=1 // pred_region
      %201 = dma.done [#allocation14], 16
    $region113: #{vision_transformer_forward.9} parent=1 // pred_fallthru
      _
    // Predicated region
    $region114: #{vision_transformer_forward.9} parent=1 // pred_check
      _
    $region115: #{vision_transformer_forward.9} parent=1 // pred_check_branch
      %203 = sbr.rel (0) target = $region117
    $region116: #{vision_transformer_forward.9} parent=1 // pred_region
      %205 = dma.done [#allocation14], 16
    $region117: #{vision_transformer_forward.9} parent=1 // pred_fallthru
      _
    // Predicated region
    $region118: #{vision_transformer_forward.9} parent=1 // pred_check
      _
    $region119: #{vision_transformer_forward.9} parent=1 // pred_check_branch
      %207 = sbr.rel (0) target = $region121
    $region120: #{vision_transformer_forward.9} parent=1 // pred_region
      %209 = dma.done [#allocation17], 16
    $region121: #{vision_transformer_forward.9} parent=1 // pred_fallthru
      _
    // Predicated region
    $region122: #{vision_transformer_forward.9} parent=1 // pred_check
      _
    $region123: #{vision_transformer_forward.9} parent=1 // pred_check_branch
      %211 = sbr.rel (0) target = $region125
    $region124: #{vision_transformer_forward.9} parent=1 // pred_region
      %213 = dma.done [#allocation17], 16
    $region125: #{vision_transformer_forward.9} parent=1 // pred_fallthru
      _
    %v215 = vld [vmem:[%s0] sm:$0xf]
    %v216 = vld [vmem:[%s0 + $0x4] sm:$0xf]
    %v217 = vld [vmem:[%s0 + $0x8] sm:$0x3]
    %v218 = vunpack.c.l.bf16 %v215
    %v219 = vunpack.c.l.bf16 %v216
    %v220 = vunpack.c.l.bf16 %v217
    %v221 = vld [vmem:[%s2] sm:$0xff]
    %v222 = vld [vmem:[%s2 + $0x8] sm:$0xff]
    %v223 = vld [vmem:[%s2 + $0x10] sm:$0xff]
    %v224 = vld [vmem:[%s2 + $0x18] sm:$0x7]
    %v225 = vld [vmem:[%s3] sm:$0x1]
    %v227 = vrot.slane %v218, 4
    %v229 = vmul.f32 %v222, %v227
    %231 = vst [vmem:[#allocation1] sm:$0xff] %v229
    %s232 = scalar_lea.vmem [#allocation1], 5
    %v233 = vld [vmem:[%s232] ss:$9 sm:$0xff]
    %v235 = vadd.f32 %v225, %v233
    %236 = vst [vmem:[#allocation1] sm:$0xff] %v229
    %s237 = scalar_lea.vmem [#allocation1], 6
    %v238 = vld [vmem:[%s237] ss:$9 sm:$0xff]
    %v240 = vadd.f32 %v235, %v238
    %v241 = vrot.slane %v218, 3
    %v243 = vmul.f32 %v223, %v241
    %v244 = vadd.f32 %v240, %v243
    %246 = vst [vmem:[#allocation1] sm:$0xff] %v243
    %s247 = scalar_lea.vmem [#allocation1], 1
    %v248 = vld [vmem:[%s247] ss:$9 sm:$0xff]
    %v250 = vadd.f32 %v244, %v248
    %v251 = vmul.f32 %v223, %v218
    %253 = vst [vmem:[#allocation1] sm:$0xff] %v251
    %s254 = scalar_lea.vmem [#allocation1], 6
    %v255 = vld [vmem:[%s254] ss:$9 sm:$0xff]
    %v257 = vadd.f32 %v250, %v255
    %258 = vst [vmem:[#allocation1] sm:$0xff] %v251
    %s259 = scalar_lea.vmem [#allocation1], 7
    %v260 = vld [vmem:[%s259] ss:$9 sm:$0xff]
    %v262 = vadd.f32 %v257, %v260
    %v264 = vrot.slane %v219, 7
    %v266 = vmul.f32 %v224, %v264
    %268 = vst [vmem:[#allocation1] sm:$0xff] %v266
    %s269 = scalar_lea.vmem [#allocation1], 1
    %v270 = vld [vmem:[%s269] ss:$9 sm:$0xff]
    %v272 = vadd.f32 %v262, %v270
    %273 = vst [vmem:[#allocation1] sm:$0xff] %v266
    %s274 = scalar_lea.vmem [#allocation1], 2
    %v275 = vld [vmem:[%s274] ss:$9 sm:$0xff]
    %v277 = vadd.f32 %v272, %v275
    %v279 = vperm.slane %v277, 0
    %v281 = vadd.f32 %v218, %v279
    %v282 = vrot.slane %v218, 5
    %v284 = vmul.f32 %v222, %v282
    %286 = vst [vmem:[#allocation1] sm:$0xff] %v284
    %s287 = scalar_lea.vmem [#allocation1], 4
    %v288 = vld [vmem:[%s287] ss:$9 sm:$0xff]
    %v290 = vadd.f32 %v225, %v288
    %291 = vst [vmem:[#allocation1] sm:$0xff] %v284
    %s292 = scalar_lea.vmem [#allocation1], 5
    %v293 = vld [vmem:[%s292] ss:$9 sm:$0xff]
    %v295 = vadd.f32 %v290, %v293
    %296 = vst [vmem:[#allocation1] sm:$0xff] %v229
    %s297 = scalar_lea.vmem [#allocation1], 7
    %v298 = vld [vmem:[%s297] ss:$9 sm:$0xff]
    %v300 = vadd.f32 %v295, %v298
    %v301 = vmul.f32 %v223, %v227
    %v302 = vadd.f32 %v300, %v301
    %v303 = vrot.slane %v218, 1
    %v305 = vmul.f32 %v223, %v303
    %307 = vst [vmem:[#allocation1] sm:$0xff] %v305
    %s308 = scalar_lea.vmem [#allocation1], 5
    %v309 = vld [vmem:[%s308] ss:$9 sm:$0xff]
    %v311 = vadd.f32 %v302, %v309
    %312 = vst [vmem:[#allocation1] sm:$0xff] %v305
    %s313 = scalar_lea.vmem [#allocation1], 6
    %v314 = vld [vmem:[%s313] ss:$9 sm:$0xff]
    %v316 = vadd.f32 %v311, %v314
    %v317 = vmul.f32 %v224, %v219
    %v318 = vadd.f32 %v316, %v317
    %320 = vst [vmem:[#allocation1] sm:$0xff] %v317
    %s321 = scalar_lea.vmem [#allocation1], 1
    %v322 = vld [vmem:[%s321] ss:$9 sm:$0xff]
    %v324 = vadd.f32 %v318, %v322
    %v326 = vperm.slane %v324, 0
    %v328 = vadd.f32 %v218, %v326
    %v329 = vrot.slane %v218, 7
    %v331 = vmul.f32 %v222, %v329
    %333 = vst [vmem:[#allocation1] sm:$0xff] %v331
    %s334 = scalar_lea.vmem [#allocation1], 2
    %v335 = vld [vmem:[%s334] ss:$9 sm:$0xff]
    %v337 = vadd.f32 %v225, %v335
    %338 = vst [vmem:[#allocation1] sm:$0xff] %v331
    %s339 = scalar_lea.vmem [#allocation1], 3
    %v340 = vld [vmem:[%s339] ss:$9 sm:$0xff]
    %v342 = vadd.f32 %v337, %v340
    %v343 = vrot.slane %v218, 6
    %v345 = vmul.f32 %v222, %v343
    %347 = vst [vmem:[#allocation1] sm:$0xff] %v345
    %s348 = scalar_lea.vmem [#allocation1], 5
    %v349 = vld [vmem:[%s348] ss:$9 sm:$0xff]
    %v351 = vadd.f32 %v342, %v349
    %352 = vst [vmem:[#allocation1] sm:$0xff] %v345
    %s353 = scalar_lea.vmem [#allocation1], 6
    %v354 = vld [vmem:[%s353] ss:$9 sm:$0xff]
    %v356 = vadd.f32 %v351, %v354
    %357 = vst [vmem:[#allocation1] sm:$0xff] %v243
    %s358 = scalar_lea.vmem [#allocation1], 3
    %v359 = vld [vmem:[%s358] ss:$9 sm:$0xff]
    %v361 = vadd.f32 %v356, %v359
    %362 = vst [vmem:[#allocation1] sm:$0xff] %v243
    %s363 = scalar_lea.vmem [#allocation1], 4
    %v364 = vld [vmem:[%s363] ss:$9 sm:$0xff]
    %v366 = vadd.f32 %v361, %v364
    %v367 = vrot.slane %v219, 2
    %v369 = vmul.f32 %v223, %v367
    %371 = vst [vmem:[#allocation1] sm:$0xff] %v369
    %s372 = scalar_lea.vmem [#allocation1], 6
    %v373 = vld [vmem:[%s372] ss:$9 sm:$0xff]
    %v375 = vadd.f32 %v366, %v373
    %376 = vst [vmem:[#allocation1] sm:$0xff] %v369
    %s377 = scalar_lea.vmem [#allocation1], 7
    %v378 = vld [vmem:[%s377] ss:$9 sm:$0xff]
    %v380 = vadd.f32 %v375, %v378
    %v382 = vperm.slane %v380, 0
    %v384 = vadd.f32 %v218, %v382
    %v385 = vmul.f32 %v222, %v218
    %387 = vst [vmem:[#allocation1] sm:$0xff] %v385
    %s388 = scalar_lea.vmem [#allocation1], 1
    %v389 = vld [vmem:[%s388] ss:$9 sm:$0xff]
    %v391 = vadd.f32 %v225, %v389
    %392 = vst [vmem:[#allocation1] sm:$0xff] %v385
    %s393 = scalar_lea.vmem [#allocation1], 2
    %v394 = vld [vmem:[%s393] ss:$9 sm:$0xff]
    %v396 = vadd.f32 %v391, %v394
    %397 = vst [vmem:[#allocation1] sm:$0xff] %v331
    %s398 = scalar_lea.vmem [#allocation1], 4
    %v399 = vld [vmem:[%s398] ss:$9 sm:$0xff]
    %v401 = vadd.f32 %v396, %v399
    %402 = vst [vmem:[#allocation1] sm:$0xff] %v331
    %s403 = scalar_lea.vmem [#allocation1], 5
    %v404 = vld [vmem:[%s403] ss:$9 sm:$0xff]
    %v406 = vadd.f32 %v401, %v404
    %408 = vst [vmem:[#allocation1] sm:$0xff] %v301
    %s409 = scalar_lea.vmem [#allocation1], 2
    %v410 = vld [vmem:[%s409] ss:$9 sm:$0xff]
    %v412 = vadd.f32 %v406, %v410
    %413 = vst [vmem:[#allocation1] sm:$0xff] %v301
    %s414 = scalar_lea.vmem [#allocation1], 3
    %v415 = vld [vmem:[%s414] ss:$9 sm:$0xff]
    %v417 = vadd.f32 %v412, %v415
    %v418 = vrot.slane %v219, 3
    %v420 = vmul.f32 %v223, %v418
    %422 = vst [vmem:[#allocation1] sm:$0xff] %v420
    %s423 = scalar_lea.vmem [#allocation1], 5
    %v424 = vld [vmem:[%s423] ss:$9 sm:$0xff]
    %v426 = vadd.f32 %v417, %v424
    %427 = vst [vmem:[#allocation1] sm:$0xff] %v420
    %s428 = scalar_lea.vmem [#allocation1], 6
    %v429 = vld [vmem:[%s428] ss:$9 sm:$0xff]
    %v431 = vadd.f32 %v426, %v429
    %v433 = vperm.slane %v431, 0
    %v435 = vadd.f32 %v218, %v433
    %vm436 = vcmask 1040384
    %v437 = vsel %vm436, %v218, %v281
    %vm438 = vcmask 1041408
    %v439 = vsel %vm438, %v437, %v328
    %vm440 = vcmask 1042432
    %v441 = vsel %vm440, %v439, %v384
    %vm442 = vcmask 1043456
    %v443 = vsel %vm442, %v441, %v435
    %v444 = vmul.f32 %v221, %v282
    %446 = vst [vmem:[#allocation1] sm:$0xff] %v444
    %s447 = scalar_lea.vmem [#allocation1], 4
    %v448 = vld [vmem:[%s447] ss:$9 sm:$0xff]
    %v450 = vadd.f32 %v225, %v448
    %451 = vst [vmem:[#allocation1] sm:$0xff] %v444
    %s452 = scalar_lea.vmem [#allocation1], 5
    %v453 = vld [vmem:[%s452] ss:$9 sm:$0xff]
    %v455 = vadd.f32 %v450, %v453
    %v456 = vmul.f32 %v221, %v227
    %458 = vst [vmem:[#allocation1] sm:$0xff] %v456
    %s459 = scalar_lea.vmem [#allocation1], 7
    %v460 = vld [vmem:[%s459] ss:$9 sm:$0xff]
    %v462 = vadd.f32 %v455, %v460
    %v463 = vadd.f32 %v462, %v229
    %v464 = vmul.f32 %v222, %v303
    %466 = vst [vmem:[#allocation1] sm:$0xff] %v464
    %s467 = scalar_lea.vmem [#allocation1], 5
    %v468 = vld [vmem:[%s467] ss:$9 sm:$0xff]
    %v470 = vadd.f32 %v463, %v468
    %471 = vst [vmem:[#allocation1] sm:$0xff] %v464
    %s472 = scalar_lea.vmem [#allocation1], 6
    %v473 = vld [vmem:[%s472] ss:$9 sm:$0xff]
    %v475 = vadd.f32 %v470, %v473
    %v476 = vmul.f32 %v223, %v219
    %v477 = vadd.f32 %v475, %v476
    %479 = vst [vmem:[#allocation1] sm:$0xff] %v476
    %s480 = scalar_lea.vmem [#allocation1], 1
    %v481 = vld [vmem:[%s480] ss:$9 sm:$0xff]
    %v483 = vadd.f32 %v477, %v481
    %v485 = vperm.slane %v483, 0
    %v487 = vadd.f32 %v218, %v485
    %v488 = vmul.f32 %v221, %v343
    %490 = vst [vmem:[#allocation1] sm:$0xff] %v488
    %s491 = scalar_lea.vmem [#allocation1], 3
    %v492 = vld [vmem:[%s491] ss:$9 sm:$0xff]
    %v494 = vadd.f32 %v225, %v492
    %495 = vst [vmem:[#allocation1] sm:$0xff] %v488
    %s496 = scalar_lea.vmem [#allocation1], 4
    %v497 = vld [vmem:[%s496] ss:$9 sm:$0xff]
    %v499 = vadd.f32 %v494, %v497
    %500 = vst [vmem:[#allocation1] sm:$0xff] %v444
    %s501 = scalar_lea.vmem [#allocation1], 6
    %v502 = vld [vmem:[%s501] ss:$9 sm:$0xff]
    %v504 = vadd.f32 %v499, %v502
    %505 = vst [vmem:[#allocation1] sm:$0xff] %v444
    %s506 = scalar_lea.vmem [#allocation1], 7
    %v507 = vld [vmem:[%s506] ss:$9 sm:$0xff]
    %v509 = vadd.f32 %v504, %v507
    %v510 = vrot.slane %v218, 2
    %v512 = vmul.f32 %v222, %v510
    %514 = vst [vmem:[#allocation1] sm:$0xff] %v512
    %s515 = scalar_lea.vmem [#allocation1], 4
    %v516 = vld [vmem:[%s515] ss:$9 sm:$0xff]
    %v518 = vadd.f32 %v509, %v516
    %519 = vst [vmem:[#allocation1] sm:$0xff] %v512
    %s520 = scalar_lea.vmem [#allocation1], 5
    %v521 = vld [vmem:[%s520] ss:$9 sm:$0xff]
    %v523 = vadd.f32 %v518, %v521
    %v524 = vrot.slane %v219, 1
    %v526 = vmul.f32 %v222, %v524
    %528 = vst [vmem:[#allocation1] sm:$0xff] %v526
    %s529 = scalar_lea.vmem [#allocation1], 7
    %v530 = vld [vmem:[%s529] ss:$9 sm:$0xff]
    %v532 = vadd.f32 %v523, %v530
    %v533 = vmul.f32 %v223, %v524
    %v534 = vadd.f32 %v532, %v533
    %v536 = vperm.slane %v534, 0
    %v538 = vadd.f32 %v218, %v536
    %v539 = vmul.f32 %v221, %v218
    %541 = vst [vmem:[#allocation1] sm:$0xff] %v539
    %s542 = scalar_lea.vmem [#allocation1], 1
    %v543 = vld [vmem:[%s542] ss:$9 sm:$0xff]
    %v545 = vadd.f32 %v225, %v543
    %546 = vst [vmem:[#allocation1] sm:$0xff] %v539
    %s547 = scalar_lea.vmem [#allocation1], 2
    %v548 = vld [vmem:[%s547] ss:$9 sm:$0xff]
    %v550 = vadd.f32 %v545, %v548
    %v551 = vmul.f32 %v221, %v329
    %553 = vst [vmem:[#allocation1] sm:$0xff] %v551
    %s554 = scalar_lea.vmem [#allocation1], 4
    %v555 = vld [vmem:[%s554] ss:$9 sm:$0xff]
    %v557 = vadd.f32 %v550, %v555
    %558 = vst [vmem:[#allocation1] sm:$0xff] %v551
    %s559 = scalar_lea.vmem [#allocation1], 5
    %v560 = vld [vmem:[%s559] ss:$9 sm:$0xff]
    %v562 = vadd.f32 %v557, %v560
    %563 = vst [vmem:[#allocation1] sm:$0xff] %v229
    %s564 = scalar_lea.vmem [#allocation1], 2
    %v565 = vld [vmem:[%s564] ss:$9 sm:$0xff]
    %v567 = vadd.f32 %v562, %v565
    %568 = vst [vmem:[#allocation1] sm:$0xff] %v229
    %s569 = scalar_lea.vmem [#allocation1], 3
    %v570 = vld [vmem:[%s569] ss:$9 sm:$0xff]
    %v572 = vadd.f32 %v567, %v570
    %v573 = vmul.f32 %v222, %v418
    %575 = vst [vmem:[#allocation1] sm:$0xff] %v573
    %s576 = scalar_lea.vmem [#allocation1], 5
    %v577 = vld [vmem:[%s576] ss:$9 sm:$0xff]
    %v579 = vadd.f32 %v572, %v577
    %580 = vst [vmem:[#allocation1] sm:$0xff] %v573
    %s581 = scalar_lea.vmem [#allocation1], 6
    %v582 = vld [vmem:[%s581] ss:$9 sm:$0xff]
    %v584 = vadd.f32 %v579, %v582
    %v585 = vadd.f32 %v219, %v584
    %v586 = vmul.f32 %v221, %v303
    %v587 = vadd.f32 %v225, %v586
    %589 = vst [vmem:[#allocation1] sm:$0xff] %v586
    %s590 = scalar_lea.vmem [#allocation1], 1
    %v591 = vld [vmem:[%s590] ss:$9 sm:$0xff]
    %v593 = vadd.f32 %v587, %v591
    %594 = vst [vmem:[#allocation1] sm:$0xff] %v539
    %s595 = scalar_lea.vmem [#allocation1], 3
    %v596 = vld [vmem:[%s595] ss:$9 sm:$0xff]
    %v598 = vadd.f32 %v593, %v596
    %599 = vst [vmem:[#allocation1] sm:$0xff] %v539
    %s600 = scalar_lea.vmem [#allocation1], 4
    %v601 = vld [vmem:[%s600] ss:$9 sm:$0xff]
    %v603 = vadd.f32 %v598, %v601
    %604 = vst [vmem:[#allocation1] sm:$0xff] %v284
    %s605 = scalar_lea.vmem [#allocation1], 1
    %v606 = vld [vmem:[%s605] ss:$9 sm:$0xff]
    %v608 = vadd.f32 %v603, %v606
    %609 = vst [vmem:[#allocation1] sm:$0xff] %v284
    %s610 = scalar_lea.vmem [#allocation1], 2
    %v611 = vld [vmem:[%s610] ss:$9 sm:$0xff]
    %v613 = vadd.f32 %v608, %v611
    %v614 = vrot.slane %v219, 4
    %v616 = vmul.f32 %v222, %v614
    %618 = vst [vmem:[#allocation1] sm:$0xff] %v616
    %s619 = scalar_lea.vmem [#allocation1], 4
    %v620 = vld [vmem:[%s619] ss:$9 sm:$0xff]
    %v622 = vadd.f32 %v613, %v620
    %623 = vst [vmem:[#allocation1] sm:$0xff] %v616
    %s624 = scalar_lea.vmem [#allocation1], 5
    %v625 = vld [vmem:[%s624] ss:$9 sm:$0xff]
    %v627 = vadd.f32 %v622, %v625
    %v629 = vperm.slane %v627, 0
    %v631 = vadd.f32 %v219, %v629
    %v633 = vrot.slane %v487, 5
    %v636 = vrot.slane %v538, 5
    %v639 = vrot.slane %v585, 5
    %v642 = vrot.slane %v631, 5
    %v644 = vsel %vm436, %v282, %v633
    %v645 = vsel %vm438, %v644, %v636
    %v646 = vsel %vm440, %v645, %v639
    %v647 = vsel %vm442, %v646, %v642
    %v648 = vrot.slane %v219, 6
    %v650 = vmul.f32 %v222, %v648
    %652 = vst [vmem:[#allocation1] sm:$0xff] %v650
    %s653 = scalar_lea.vmem [#allocation1], 5
    %v654 = vld [vmem:[%s653] ss:$9 sm:$0xff]
    %v656 = vadd.f32 %v225, %v654
    %657 = vst [vmem:[#allocation1] sm:$0xff] %v650
    %s658 = scalar_lea.vmem [#allocation1], 6
    %v659 = vld [vmem:[%s658] ss:$9 sm:$0xff]
    %v661 = vadd.f32 %v656, %v659
    %v662 = vrot.slane %v219, 5
    %v664 = vmul.f32 %v223, %v662
    %v665 = vadd.f32 %v661, %v664
    %667 = vst [vmem:[#allocation1] sm:$0xff] %v664
    %s668 = scalar_lea.vmem [#allocation1], 1
    %v669 = vld [vmem:[%s668] ss:$9 sm:$0xff]
    %v671 = vadd.f32 %v665, %v669
    %v673 = vrot.slane %v220, 2
    %v675 = vmul.f32 %v223, %v673
    %677 = vst [vmem:[#allocation1] sm:$0xff] %v675
    %s678 = scalar_lea.vmem [#allocation1], 6
    %v679 = vld [vmem:[%s678] ss:$9 sm:$0xff]
    %v681 = vadd.f32 %v671, %v679
    %682 = vst [vmem:[#allocation1] sm:$0xff] %v675
    %s683 = scalar_lea.vmem [#allocation1], 7
    %v684 = vld [vmem:[%s683] ss:$9 sm:$0xff]
    %v686 = vadd.f32 %v681, %v684
    %v687 = vrot.slane %v220, 1
    %v689 = vmul.f32 %v224, %v687
    %691 = vst [vmem:[#allocation1] sm:$0xff] %v689
    %s692 = scalar_lea.vmem [#allocation1], 1
    %v693 = vld [vmem:[%s692] ss:$9 sm:$0xff]
    %v695 = vadd.f32 %v686, %v693
    %696 = vst [vmem:[#allocation1] sm:$0xff] %v689
    %s697 = scalar_lea.vmem [#allocation1], 2
    %v698 = vld [vmem:[%s697] ss:$9 sm:$0xff]
    %v700 = vadd.f32 %v695, %v698
    %v702 = vperm.slane %v700, 0
    %v704 = vadd.f32 %v219, %v702
    %v705 = vmul.f32 %v222, %v264
    %707 = vst [vmem:[#allocation1] sm:$0xff] %v705
    %s708 = scalar_lea.vmem [#allocation1], 4
    %v709 = vld [vmem:[%s708] ss:$9 sm:$0xff]
    %v711 = vadd.f32 %v225, %v709
    %712 = vst [vmem:[#allocation1] sm:$0xff] %v705
    %s713 = scalar_lea.vmem [#allocation1], 5
    %v714 = vld [vmem:[%s713] ss:$9 sm:$0xff]
    %v716 = vadd.f32 %v711, %v714
    %717 = vst [vmem:[#allocation1] sm:$0xff] %v650
    %s718 = scalar_lea.vmem [#allocation1], 7
    %v719 = vld [vmem:[%s718] ss:$9 sm:$0xff]
    %v721 = vadd.f32 %v716, %v719
    %v722 = vmul.f32 %v223, %v648
    %v723 = vadd.f32 %v721, %v722
    %v724 = vrot.slane %v220, 3
    %v726 = vmul.f32 %v223, %v724
    %728 = vst [vmem:[#allocation1] sm:$0xff] %v726
    %s729 = scalar_lea.vmem [#allocation1], 5
    %v730 = vld [vmem:[%s729] ss:$9 sm:$0xff]
    %v732 = vadd.f32 %v723, %v730
    %733 = vst [vmem:[#allocation1] sm:$0xff] %v726
    %s734 = scalar_lea.vmem [#allocation1], 6
    %v735 = vld [vmem:[%s734] ss:$9 sm:$0xff]
    %v737 = vadd.f32 %v732, %v735
    %v738 = vmul.f32 %v224, %v673
    %v739 = vadd.f32 %v737, %v738
    %741 = vst [vmem:[#allocation1] sm:$0xff] %v738
    %s742 = scalar_lea.vmem [#allocation1], 1
    %v743 = vld [vmem:[%s742] ss:$9 sm:$0xff]
    %v745 = vadd.f32 %v739, %v743
    %v747 = vperm.slane %v745, 0
    %v749 = vadd.f32 %v219, %v747
    %750 = vst [vmem:[#allocation1] sm:$0xff] %v526
    %s751 = scalar_lea.vmem [#allocation1], 2
    %v752 = vld [vmem:[%s751] ss:$9 sm:$0xff]
    %v754 = vadd.f32 %v225, %v752
    %755 = vst [vmem:[#allocation1] sm:$0xff] %v526
    %s756 = scalar_lea.vmem [#allocation1], 3
    %v757 = vld [vmem:[%s756] ss:$9 sm:$0xff]
    %v759 = vadd.f32 %v754, %v757
    %v760 = vmul.f32 %v222, %v219
    %762 = vst [vmem:[#allocation1] sm:$0xff] %v760
    %s763 = scalar_lea.vmem [#allocation1], 5
    %v764 = vld [vmem:[%s763] ss:$9 sm:$0xff]
    %v766 = vadd.f32 %v759, %v764
    %767 = vst [vmem:[#allocation1] sm:$0xff] %v760
    %s768 = scalar_lea.vmem [#allocation1], 6
    %v769 = vld [vmem:[%s768] ss:$9 sm:$0xff]
    %v771 = vadd.f32 %v766, %v769
    %v772 = vrot.slane %v220, 5
    %v774 = vmul.f32 %v223, %v772
    %776 = vst [vmem:[#allocation1] sm:$0xff] %v774
    %s777 = scalar_lea.vmem [#allocation1], 3
    %v778 = vld [vmem:[%s777] ss:$9 sm:$0xff]
    %v780 = vadd.f32 %v771, %v778
    %781 = vst [vmem:[#allocation1] sm:$0xff] %v774
    %s782 = scalar_lea.vmem [#allocation1], 4
    %v783 = vld [vmem:[%s782] ss:$9 sm:$0xff]
    %v785 = vadd.f32 %v780, %v783
    %v786 = vrot.slane %v220, 4
    %v788 = vmul.f32 %v223, %v786
    %790 = vst [vmem:[#allocation1] sm:$0xff] %v788
    %s791 = scalar_lea.vmem [#allocation1], 6
    %v792 = vld [vmem:[%s791] ss:$9 sm:$0xff]
    %v794 = vadd.f32 %v785, %v792
    %795 = vst [vmem:[#allocation1] sm:$0xff] %v788
    %s796 = scalar_lea.vmem [#allocation1], 7
    %v797 = vld [vmem:[%s796] ss:$9 sm:$0xff]
    %v799 = vadd.f32 %v794, %v797
    %v801 = vperm.slane %v799, 0
    %v803 = vadd.f32 %v219, %v801
    %v804 = vmul.f32 %v222, %v367
    %806 = vst [vmem:[#allocation1] sm:$0xff] %v804
    %s807 = scalar_lea.vmem [#allocation1], 1
    %v808 = vld [vmem:[%s807] ss:$9 sm:$0xff]
    %v810 = vadd.f32 %v225, %v808
    %811 = vst [vmem:[#allocation1] sm:$0xff] %v804
    %s812 = scalar_lea.vmem [#allocation1], 2
    %v813 = vld [vmem:[%s812] ss:$9 sm:$0xff]
    %v815 = vadd.f32 %v810, %v813
    %816 = vst [vmem:[#allocation1] sm:$0xff] %v526
    %s817 = scalar_lea.vmem [#allocation1], 4
    %v818 = vld [vmem:[%s817] ss:$9 sm:$0xff]
    %v820 = vadd.f32 %v815, %v818
    %821 = vst [vmem:[#allocation1] sm:$0xff] %v526
    %s822 = scalar_lea.vmem [#allocation1], 5
    %v823 = vld [vmem:[%s822] ss:$9 sm:$0xff]
    %v825 = vadd.f32 %v820, %v823
    %v826 = vrot.slane %v220, 6
    %v828 = vmul.f32 %v223, %v826
    %830 = vst [vmem:[#allocation1] sm:$0xff] %v828
    %s831 = scalar_lea.vmem [#allocation1], 2
    %v832 = vld [vmem:[%s831] ss:$9 sm:$0xff]
    %v834 = vadd.f32 %v825, %v832
    %835 = vst [vmem:[#allocation1] sm:$0xff] %v828
    %s836 = scalar_lea.vmem [#allocation1], 3
    %v837 = vld [vmem:[%s836] ss:$9 sm:$0xff]
    %v839 = vadd.f32 %v834, %v837
    %840 = vst [vmem:[#allocation1] sm:$0xff] %v774
    %s841 = scalar_lea.vmem [#allocation1], 5
    %v842 = vld [vmem:[%s841] ss:$9 sm:$0xff]
    %v844 = vadd.f32 %v839, %v842
    %845 = vst [vmem:[#allocation1] sm:$0xff] %v774
    %s846 = scalar_lea.vmem [#allocation1], 6
    %v847 = vld [vmem:[%s846] ss:$9 sm:$0xff]
    %v849 = vadd.f32 %v844, %v847
    %v851 = vperm.slane %v849, 0
    %v853 = vadd.f32 %v219, %v851
    %v855 = vrot.slane %v704, 2
    %v858 = vrot.slane %v749, 2
    %v861 = vrot.slane %v803, 2
    %v864 = vrot.slane %v853, 2
    %v866 = vsel %vm436, %v367, %v855
    %v867 = vsel %vm438, %v866, %v858
    %v868 = vsel %vm440, %v867, %v861
    %v869 = vsel %vm442, %v868, %v864
    %v870 = vmul.f32 %v221, %v264
    %872 = vst [vmem:[#allocation1] sm:$0xff] %v870
    %s873 = scalar_lea.vmem [#allocation1], 4
    %v874 = vld [vmem:[%s873] ss:$9 sm:$0xff]
    %v876 = vadd.f32 %v225, %v874
    %877 = vst [vmem:[#allocation1] sm:$0xff] %v870
    %s878 = scalar_lea.vmem [#allocation1], 5
    %v879 = vld [vmem:[%s878] ss:$9 sm:$0xff]
    %v881 = vadd.f32 %v876, %v879
    %v882 = vmul.f32 %v221, %v648
    %884 = vst [vmem:[#allocation1] sm:$0xff] %v882
    %s885 = scalar_lea.vmem [#allocation1], 7
    %v886 = vld [vmem:[%s885] ss:$9 sm:$0xff]
    %v888 = vadd.f32 %v881, %v886
    %v889 = vadd.f32 %v888, %v650
    %v890 = vmul.f32 %v222, %v724
    %892 = vst [vmem:[#allocation1] sm:$0xff] %v890
    %s893 = scalar_lea.vmem [#allocation1], 5
    %v894 = vld [vmem:[%s893] ss:$9 sm:$0xff]
    %v896 = vadd.f32 %v889, %v894
    %897 = vst [vmem:[#allocation1] sm:$0xff] %v890
    %s898 = scalar_lea.vmem [#allocation1], 6
    %v899 = vld [vmem:[%s898] ss:$9 sm:$0xff]
    %v901 = vadd.f32 %v896, %v899
    %v902 = vadd.f32 %v901, %v675
    %903 = vst [vmem:[#allocation1] sm:$0xff] %v675
    %s904 = scalar_lea.vmem [#allocation1], 1
    %v905 = vld [vmem:[%s904] ss:$9 sm:$0xff]
    %v907 = vadd.f32 %v902, %v905
    %v908 = vadd.f32 %v220, %v907
    %v909 = vmul.f32 %v221, %v219
    %911 = vst [vmem:[#allocation1] sm:$0xff] %v909
    %s912 = scalar_lea.vmem [#allocation1], 3
    %v913 = vld [vmem:[%s912] ss:$9 sm:$0xff]
    %v915 = vadd.f32 %v225, %v913
    %916 = vst [vmem:[#allocation1] sm:$0xff] %v909
    %s917 = scalar_lea.vmem [#allocation1], 4
    %v918 = vld [vmem:[%s917] ss:$9 sm:$0xff]
    %v920 = vadd.f32 %v915, %v918
    %921 = vst [vmem:[#allocation1] sm:$0xff] %v870
    %s922 = scalar_lea.vmem [#allocation1], 6
    %v923 = vld [vmem:[%s922] ss:$9 sm:$0xff]
    %v925 = vadd.f32 %v920, %v923
    %926 = vst [vmem:[#allocation1] sm:$0xff] %v870
    %s927 = scalar_lea.vmem [#allocation1], 7
    %v928 = vld [vmem:[%s927] ss:$9 sm:$0xff]
    %v930 = vadd.f32 %v925, %v928
    %v931 = vmul.f32 %v222, %v786
    %933 = vst [vmem:[#allocation1] sm:$0xff] %v931
    %s934 = scalar_lea.vmem [#allocation1], 4
    %v935 = vld [vmem:[%s934] ss:$9 sm:$0xff]
    %v937 = vadd.f32 %v930, %v935
    %938 = vst [vmem:[#allocation1] sm:$0xff] %v931
    %s939 = scalar_lea.vmem [#allocation1], 5
    %v940 = vld [vmem:[%s939] ss:$9 sm:$0xff]
    %v942 = vadd.f32 %v937, %v940
    %943 = vst [vmem:[#allocation1] sm:$0xff] %v890
    %s944 = scalar_lea.vmem [#allocation1], 7
    %v945 = vld [vmem:[%s944] ss:$9 sm:$0xff]
    %v947 = vadd.f32 %v942, %v945
    %v948 = vadd.f32 %v947, %v726
    %v950 = vperm.slane %v948, 0
    %v952 = vadd.f32 %v220, %v950
    %v953 = vmul.f32 %v221, %v367
    %955 = vst [vmem:[#allocation1] sm:$0xff] %v953
    %s956 = scalar_lea.vmem [#allocation1], 1
    %v957 = vld [vmem:[%s956] ss:$9 sm:$0xff]
    %v959 = vadd.f32 %v225, %v957
    %960 = vst [vmem:[#allocation1] sm:$0xff] %v953
    %s961 = scalar_lea.vmem [#allocation1], 2
    %v962 = vld [vmem:[%s961] ss:$9 sm:$0xff]
    %v964 = vadd.f32 %v959, %v962
    %v965 = vmul.f32 %v221, %v524
    %967 = vst [vmem:[#allocation1] sm:$0xff] %v965
    %s968 = scalar_lea.vmem [#allocation1], 4
    %v969 = vld [vmem:[%s968] ss:$9 sm:$0xff]
    %v971 = vadd.f32 %v964, %v969
    %972 = vst [vmem:[#allocation1] sm:$0xff] %v965
    %s973 = scalar_lea.vmem [#allocation1], 5
    %v974 = vld [vmem:[%s973] ss:$9 sm:$0xff]
    %v976 = vadd.f32 %v971, %v974
    %v977 = vmul.f32 %v222, %v826
    %979 = vst [vmem:[#allocation1] sm:$0xff] %v977
    %s980 = scalar_lea.vmem [#allocation1], 2
    %v981 = vld [vmem:[%s980] ss:$9 sm:$0xff]
    %v983 = vadd.f32 %v976, %v981
    %984 = vst [vmem:[#allocation1] sm:$0xff] %v977
    %s985 = scalar_lea.vmem [#allocation1], 3
    %v986 = vld [vmem:[%s985] ss:$9 sm:$0xff]
    %v988 = vadd.f32 %v983, %v986
    %v989 = vmul.f32 %v222, %v772
    %991 = vst [vmem:[#allocation1] sm:$0xff] %v989
    %s992 = scalar_lea.vmem [#allocation1], 5
    %v993 = vld [vmem:[%s992] ss:$9 sm:$0xff]
    %v995 = vadd.f32 %v988, %v993
    %996 = vst [vmem:[#allocation1] sm:$0xff] %v989
    %s997 = scalar_lea.vmem [#allocation1], 6
    %v998 = vld [vmem:[%s997] ss:$9 sm:$0xff]
    %v1000 = vadd.f32 %v995, %v998
    %v1002 = vperm.slane %v1000, 0
    %v1004 = vadd.f32 %v220, %v1002
    %v1005 = vmul.f32 %v221, %v418
    %v1006 = vadd.f32 %v225, %v1005
    %1008 = vst [vmem:[#allocation1] sm:$0xff] %v1005
    %s1009 = scalar_lea.vmem [#allocation1], 1
    %v1010 = vld [vmem:[%s1009] ss:$9 sm:$0xff]
    %v1012 = vadd.f32 %v1006, %v1010
    %1013 = vst [vmem:[#allocation1] sm:$0xff] %v953
    %s1014 = scalar_lea.vmem [#allocation1], 3
    %v1015 = vld [vmem:[%s1014] ss:$9 sm:$0xff]
    %v1017 = vadd.f32 %v1012, %v1015
    %1018 = vst [vmem:[#allocation1] sm:$0xff] %v953
    %s1019 = scalar_lea.vmem [#allocation1], 4
    %v1020 = vld [vmem:[%s1019] ss:$9 sm:$0xff]
    %v1022 = vadd.f32 %v1017, %v1020
    %v1023 = vrot.slane %v220, 7
    %v1025 = vmul.f32 %v222, %v1023
    %1027 = vst [vmem:[#allocation1] sm:$0xff] %v1025
    %s1028 = scalar_lea.vmem [#allocation1], 1
    %v1029 = vld [vmem:[%s1028] ss:$9 sm:$0xff]
    %v1031 = vadd.f32 %v1022, %v1029
    %1032 = vst [vmem:[#allocation1] sm:$0xff] %v1025
    %s1033 = scalar_lea.vmem [#allocation1], 2
    %v1034 = vld [vmem:[%s1033] ss:$9 sm:$0xff]
    %v1036 = vadd.f32 %v1031, %v1034
    %1037 = vst [vmem:[#allocation1] sm:$0xff] %v977
    %s1038 = scalar_lea.vmem [#allocation1], 4
    %v1039 = vld [vmem:[%s1038] ss:$9 sm:$0xff]
    %v1041 = vadd.f32 %v1036, %v1039
    %1042 = vst [vmem:[#allocation1] sm:$0xff] %v977
    %s1043 = scalar_lea.vmem [#allocation1], 5
    %v1044 = vld [vmem:[%s1043] ss:$9 sm:$0xff]
    %v1046 = vadd.f32 %v1041, %v1044
    %v1048 = vperm.slane %v1046, 0
    %v1050 = vadd.f32 %v220, %v1048
    %v1052 = vrot.slane %v908, 7
    %v1055 = vrot.slane %v952, 7
    %v1058 = vrot.slane %v1004, 7
    %v1061 = vrot.slane %v1050, 7
    %v1063 = vsel %vm436, %v264, %v1052
    %v1064 = vsel %vm438, %v1063, %v1055
    %v1065 = vsel %vm440, %v1064, %v1058
    %v1066 = vsel %vm442, %v1065, %v1061
    %v1068 = vrot.slane %v647, 3
    %v1071 = vrot.slane %v869, 6
    %v1074 = vrot.slane %v1066, 1
    %vm1076 = vcmask 1044480
    %v1077 = vsel %vm1076, %v443, %v1068
    %v1078 = vsel %vm438, %v1068, %v1071
    %vm1079 = vcmask 1046528
    %v1080 = vsel %vm1079, %v1078, %v1074
    %v1081 = vld [vmem:[#allocation6] sm:$0x1]
    %v1082 = vld [vmem:[#allocation7] sm:$0x1]
    %vm1083 = vcmask 261120
    %v1084 = vsel %vm1083, %v1077, 0.0
    %1085 = vadd.xlane.f32.xlu0 %v1084
    %v1086 = vpop.xlane.xlu0 %1085
    %v1087 = vsel %vm1083, %v1080, 0.0
    %1088 = vadd.xlane.f32.xlu0 %v1087
    %v1089 = vpop.xlane.xlu0 %1088
    %vm1090 = vcmask 257024
    %v1091 = vsel %vm1090, %v1074, 0.0
    %1092 = vadd.xlane.f32.xlu0 %v1091
    %v1093 = vpop.xlane.xlu0 %1092
    %v1094 = vrcp.pop 32.0
    %v1095 = vmul.f32 32.0, %v1094
    %v1096 = vsub.f32 1.0, %v1095
    %v1097 = vmul.f32 %v1094, %v1096
    %v1098 = vadd.f32 %v1094, %v1097
    %vm1099 = vweird.f32 %v1094
    %v1100 = vsel %vm1099, %v1094, %v1098
    %v1101 = vmul.f32 %v1086, %v1100
    %v1102 = vmul.f32 %v1089, %v1100
    %v1103 = vmul.f32 %v1093, %v1100
    %v1104 = vsub.f32 %v1077, %v1101
    %v1105 = vsub.f32 %v1080, %v1102
    %v1106 = vsub.f32 %v1074, %v1103
    %v1107 = vmul.f32 %v1104, %v1104
    %v1108 = vmul.f32 %v1105, %v1105
    %v1109 = vmul.f32 %v1106, %v1106
    %v1110 = vsel %vm1083, %v1107, 0.0
    %1111 = vadd.xlane.f32.xlu0 %v1110
    %v1112 = vpop.xlane.xlu0 %1111
    %v1113 = vsel %vm1083, %v1108, 0.0
    %1114 = vadd.xlane.f32.xlu0 %v1113
    %v1115 = vpop.xlane.xlu0 %1114
    %v1116 = vsel %vm1090, %v1109, 0.0
    %1117 = vadd.xlane.f32.xlu0 %v1116
    %v1118 = vpop.xlane.xlu0 %1117
    %v1119 = vmul.f32 %v1112, %v1100
    %v1120 = vmul.f32 %v1115, %v1100
    %v1121 = vmul.f32 %v1118, %v1100
    %v1122 = vadd.f32 %v1119, 1e-05
    %v1123 = vadd.f32 %v1120, 1e-05
    %v1124 = vadd.f32 %v1121, 1e-05
    %v1125 = vrsqrt.pop %v1122
    %v1126 = vmul.f32 %v1125, %v1122
    %v1127 = vmul.f32 %v1126, %v1125
    %v1128 = vmul.f32 0.5, %v1127
    %v1129 = vsub.f32 1.5, %v1128
    %v1130 = vmul.f32 %v1125, %v1129
    %vm1131 = vweird.f32 %v1122
    %vm1132 = vweird.f32 %v1125
    %vm1133 = vmor %vm1131, %vm1132
    %v1134 = vsel %vm1133, %v1125, %v1130
    %v1135 = vrsqrt.pop %v1123
    %v1136 = vmul.f32 %v1135, %v1123
    %v1137 = vmul.f32 %v1136, %v1135
    %v1138 = vmul.f32 0.5, %v1137
    %v1139 = vsub.f32 1.5, %v1138
    %v1140 = vmul.f32 %v1135, %v1139
    %vm1141 = vweird.f32 %v1123
    %vm1142 = vweird.f32 %v1135
    %vm1143 = vmor %vm1141, %vm1142
    %v1144 = vsel %vm1143, %v1135, %v1140
    %v1145 = vrsqrt.pop %v1124
    %v1146 = vmul.f32 %v1145, %v1124
    %v1147 = vmul.f32 %v1146, %v1145
    %v1148 = vmul.f32 0.5, %v1147
    %v1149 = vsub.f32 1.5, %v1148
    %v1150 = vmul.f32 %v1145, %v1149
    %vm1151 = vweird.f32 %v1124
    %vm1152 = vweird.f32 %v1145
    %vm1153 = vmor %vm1151, %vm1152
    %v1154 = vsel %vm1153, %v1145, %v1150
    %v1155 = vmul.f32 %v1104, %v1134
    %v1156 = vmul.f32 %v1105, %v1144
    %v1157 = vmul.f32 %v1106, %v1154
    %v1159 = vperm.slane %v1081, 0
    %v1161 = vmul.f32 %v1155, %v1159
    %v1162 = vmul.f32 %v1156, %v1159
    %v1163 = vmul.f32 %v1157, %v1159
    %v1165 = vperm.slane %v1082, 0
    %v1167 = vadd.f32 %v1161, %v1165
    %v1168 = vadd.f32 %v1162, %v1165
    %v1169 = vadd.f32 %v1163, %v1165
    %v1170 = vpack.c.bf16 %v1168, %v1167
    %v1171 = vpack.c.bf16 %v1169, %v1169
    %v1172 = vld [vmem:[%s10] sm:$0xf]
    %v1173 = vld [vmem:[%s10 + $0x4] sm:$0xf]
    %v1174 = vld [vmem:[%s10 + $0x8] sm:$0xf]
    %v1175 = vld [vmem:[%s10 + $0xc] sm:$0xf]
    %v1176 = vld [vmem:[#allocation10] sm:$0x1]
    %v1178 = vperm.slane %v1176, 0
    %v1184 = vunpack.c.l.b16 %v1172
    %v1185 = vunpack.c.l.b16 %v1173
    %v1186 = vunpack.c.l.b16 %v1174
    %v1187 = vunpack.c.l.b16 %v1175
    %v1188 = vpack.c.b16 %v1185, %v1184
    %v1189 = vpack.c.b16 %v1187, %v1186
    %v1193 = vsel %vm1083, %v1170, 0
    %v1196 = vsel %vm1083, %v1171, 0
    %1198 = vmatpush.bf16.msra.mxu0 0
    %1199 = vmatpush.bf16.msra.mxu0 0
    %1200 = vmatpush.bf16.msra.mxu0 0
    %1201 = vmatpush.bf16.msra.mxu0 0
    %1202 = vmatpush.bf16.msra.mxu0 0
    %1203 = vmatpush.bf16.msra.mxu0 0
    %1204 = vmatpush.bf16.msra.mxu0 %v1189
    %1205 = vmatpush.bf16.msra.mxu0 %v1188
    %1206 = vmatmul.bf16.gmra.mxu0 %v1193
    %v1207 = vpop.f32.mrf.mxu0
    %v1208 = vadd.f32 %v1178, %v1207
    %v1209 = vpop.f32.mrf.mxu0
    %v1210 = vadd.f32 %v1178, %v1209
    %1211 = vmatmul.bf16.gmra.mxu0 %v1196
    %v1212 = vpop.f32.mrf.mxu0
    %v1213 = vadd.f32 %v1178, %v1212
    %v1214 = vpop.f32.mrf.mxu0
    %1215 = vdwg.mxu0
    %v1216 = vld [vmem:[%s1] sm:$0x3]
    %v1217 = vld [vmem:[#allocation2] sm:$0x1]
    %v1218 = vld [vmem:[#allocation4] sm:$0x1]
    %vm1219 = vcmask 254976
    %v1220 = vsel %vm1219, %v1216, 0.0
    %1221 = vadd.xlane.f32.xlu0 %v1220
    %v1222 = vpop.xlane.xlu0 %1221
    %v1223 = vmul.f32 %v1222, %v1100
    %v1224 = vsub.f32 %v1216, %v1223
    %v1225 = vmul.f32 %v1224, %v1224
    %v1226 = vsel %vm1219, %v1225, 0.0
    %1227 = vadd.xlane.f32.xlu0 %v1226
    %v1228 = vpop.xlane.xlu0 %1227
    %v1229 = vmul.f32 %v1228, %v1100
    %v1230 = vadd.f32 %v1229, 1e-05
    %v1231 = vrsqrt.pop %v1230
    %v1232 = vmul.f32 %v1231, %v1230
    %v1233 = vmul.f32 %v1232, %v1231
    %v1234 = vmul.f32 0.5, %v1233
    %v1235 = vsub.f32 1.5, %v1234
    %v1236 = vmul.f32 %v1231, %v1235
    %vm1237 = vweird.f32 %v1230
    %vm1238 = vweird.f32 %v1231
    %vm1239 = vmor %vm1237, %vm1238
    %v1240 = vsel %vm1239, %v1231, %v1236
    %v1241 = vmul.f32 %v1224, %v1240
    %v1243 = vperm.slane %v1217, 0
    %v1245 = vmul.f32 %v1241, %v1243
    %v1247 = vperm.slane %v1218, 0
    %v1249 = vadd.f32 %v1245, %v1247
    %v1250 = vpack.c.bf16 %v1249, %v1249
    %v1251 = vld [vmem:[%s8] sm:$0xf]
    %v1252 = vld [vmem:[%s8 + $0x4] sm:$0xf]
    %v1253 = vld [vmem:[%s8 + $0x8] sm:$0xf]
    %v1254 = vld [vmem:[%s8 + $0xc] sm:$0xf]
    %v1255 = vld [vmem:[#allocation9] sm:$0x1]
    %v1257 = vperm.slane %v1255, 0
    %v1263 = vunpack.c.l.b16 %v1251
    %v1264 = vunpack.c.l.b16 %v1252
    %v1265 = vunpack.c.l.b16 %v1253
    %v1266 = vunpack.c.l.b16 %v1254
    %v1267 = vpack.c.b16 %v1264, %v1263
    %v1268 = vpack.c.b16 %v1266, %v1265
    %v1272 = vsel %vm1083, %v1250, 0
    %1274 = vmatpush.bf16.msra.mxu0 0
    %1275 = vmatpush.bf16.msra.mxu0 0
    %1276 = vmatpush.bf16.msra.mxu0 0
    %1277 = vmatpush.bf16.msra.mxu0 0
    %1278 = vmatpush.bf16.msra.mxu0 0
    %1279 = vmatpush.bf16.msra.mxu0 0
    %1280 = vmatpush.bf16.msra.mxu0 %v1268
    %1281 = vmatpush.bf16.msra.mxu0 %v1267
    %1282 = vmatmul.bf16.gmra.mxu0 %v1272
    %v1283 = vpop.f32.mrf.mxu0
    %v1284 = vadd.f32 %v1257, %v1283
    %v1285 = vpop.f32.mrf.mxu0
    %1286 = vdwg.mxu0
    %v1287 = vperm.slane %v1284, 0
    %v1288 = vmul.f32 %v1287, %v1208
    %v1289 = vmul.f32 %v1287, %v1210
    %vm1290 = vcmask 64512
    %v1291 = vsel %vm1290, %v1288, 0.0
    %1292 = vadd.xlane.f32.xlu0 %v1291
    %v1293 = vpop.xlane.xlu0 %1292
    %vm1294 = vcmask 58368
    %v1295 = vsel %vm1294, %v1289, 0.0
    %1296 = vadd.xlane.f32.xlu0 %v1295
    %v1297 = vpop.xlane.xlu0 %1296
    %v1298 = vmul.f32 %v1293, 0.35355338
    %v1299 = vmul.f32 %v1297, 0.35355338
    %v1300 = vsel %vm438, %v1299, -inf
    %v1301 = vmax.f32 %v1298, %v1300
    %v1302 = vrot.slane %v1301, 4
    %v1303 = vmax.f32 %v1301, %v1302
    %v1304 = vrot.slane %v1303, 2
    %v1305 = vmax.f32 %v1303, %v1304
    %v1306 = vrot.slane %v1305, 1
    %v1307 = vmax.f32 %v1305, %v1306
    %v1308 = vsub.f32 %v1298, %v1307
    %v1309 = vsub.f32 %v1299, %v1307
    %v1310 = vmul.f32 %v1308, 1.442695
    %v1311 = vpow.pop %v1310
    %v1312 = vmul.f32 %v1309, 1.442695
    %v1313 = vpow.pop %v1312
    %v1314 = vsel %vm438, %v1313, 0.0
    %v1315 = vadd.f32 %v1311, %v1314
    %v1316 = vrot.slane %v1315, 4
    %v1317 = vadd.f32 %v1315, %v1316
    %v1318 = vrot.slane %v1317, 2
    %v1319 = vadd.f32 %v1317, %v1318
    %v1320 = vrot.slane %v1319, 1
    %v1321 = vadd.f32 %v1319, %v1320
    %v1322 = vrcp.pop %v1321
    %v1323 = vmul.f32 %v1311, %v1322
    %v1324 = vmul.f32 %v1313, %v1322
    %v1325 = vmul.f32 %v1323, %v1208
    %v1326 = vmul.f32 %v1324, %v1210
    %vm1327 = vcmask 326912
    %v1328 = vsel %vm1327, %v1325, 0.0
    %vm1329 = vcmask 320768
    %v1330 = vsel %vm1329, %v1326, 0.0
    %v1331 = vadd.f32 %v1328, %v1330
    %v1332 = vrot.slane %v1331, 4
    %v1333 = vadd.f32 %v1331, %v1332
    %v1334 = vrot.slane %v1333, 2
    %v1335 = vadd.f32 %v1333, %v1334
    %v1336 = vrot.slane %v1335, 1
    %v1337 = vadd.f32 %v1335, %v1336
    %1340 = vrot.lane.b32.xlu0 %v1288, 120
    %v1341 = vpop.permute.xlu0 %1340
    %1342 = vrot.lane.b32.xlu0 %v1289, 120
    %v1343 = vpop.permute.xlu0 %1342
    %v1346 = vsel %vm1290, %v1341, 0.0
    %1347 = vadd.xlane.f32.xlu0 %v1346
    %v1348 = vpop.xlane.xlu0 %1347
    %v1349 = vsel %vm1294, %v1343, 0.0
    %1350 = vadd.xlane.f32.xlu0 %v1349
    %v1351 = vpop.xlane.xlu0 %1350
    %v1352 = vmul.f32 %v1348, 0.35355338
    %v1353 = vmul.f32 %v1351, 0.35355338
    %v1354 = vsel %vm438, %v1353, -inf
    %v1355 = vmax.f32 %v1352, %v1354
    %v1356 = vrot.slane %v1355, 4
    %v1357 = vmax.f32 %v1355, %v1356
    %v1358 = vrot.slane %v1357, 2
    %v1359 = vmax.f32 %v1357, %v1358
    %v1360 = vrot.slane %v1359, 1
    %v1361 = vmax.f32 %v1359, %v1360
    %v1362 = vsub.f32 %v1352, %v1361
    %v1363 = vsub.f32 %v1353, %v1361
    %v1364 = vmul.f32 %v1362, 1.442695
    %v1365 = vpow.pop %v1364
    %v1366 = vmul.f32 %v1363, 1.442695
    %v1367 = vpow.pop %v1366
    %v1368 = vsel %vm438, %v1367, 0.0
    %v1369 = vadd.f32 %v1365, %v1368
    %v1370 = vrot.slane %v1369, 4
    %v1371 = vadd.f32 %v1369, %v1370
    %v1372 = vrot.slane %v1371, 2
    %v1373 = vadd.f32 %v1371, %v1372
    %v1374 = vrot.slane %v1373, 1
    %v1375 = vadd.f32 %v1373, %v1374
    %v1376 = vrcp.pop %v1375
    %v1377 = vmul.f32 %v1365, %v1376
    %v1378 = vmul.f32 %v1367, %v1376
    %v1379 = vmul.f32 %v1377, %v1208
    %v1380 = vmul.f32 %v1378, %v1210
    %vm1381 = vcmask 392512
    %v1382 = vsel %vm1381, %v1379, 0.0
    %vm1383 = vcmask 386368
    %v1384 = vsel %vm1383, %v1380, 0.0
    %v1385 = vadd.f32 %v1382, %v1384
    %v1386 = vrot.slane %v1385, 4
    %v1387 = vadd.f32 %v1385, %v1386
    %v1388 = vrot.slane %v1387, 2
    %v1389 = vadd.f32 %v1387, %v1388
    %v1390 = vrot.slane %v1389, 1
    %v1391 = vadd.f32 %v1389, %v1390
    %1392 = vrot.lane.b32.xlu0 %v1288, 112
    %v1393 = vpop.permute.xlu0 %1392
    %1394 = vrot.lane.b32.xlu0 %v1289, 112
    %v1395 = vpop.permute.xlu0 %1394
    %v1398 = vsel %vm1290, %v1393, 0.0
    %1399 = vadd.xlane.f32.xlu0 %v1398
    %v1400 = vpop.xlane.xlu0 %1399
    %v1401 = vsel %vm1294, %v1395, 0.0
    %1402 = vadd.xlane.f32.xlu0 %v1401
    %v1403 = vpop.xlane.xlu0 %1402
    %v1404 = vmul.f32 %v1400, 0.35355338
    %v1405 = vmul.f32 %v1403, 0.35355338
    %v1406 = vsel %vm438, %v1405, -inf
    %v1407 = vmax.f32 %v1404, %v1406
    %v1408 = vrot.slane %v1407, 4
    %v1409 = vmax.f32 %v1407, %v1408
    %v1410 = vrot.slane %v1409, 2
    %v1411 = vmax.f32 %v1409, %v1410
    %v1412 = vrot.slane %v1411, 1
    %v1413 = vmax.f32 %v1411, %v1412
    %v1414 = vsub.f32 %v1404, %v1413
    %v1415 = vsub.f32 %v1405, %v1413
    %v1416 = vmul.f32 %v1414, 1.442695
    %v1417 = vpow.pop %v1416
    %v1418 = vmul.f32 %v1415, 1.442695
    %v1419 = vpow.pop %v1418
    %v1420 = vsel %vm438, %v1419, 0.0
    %v1421 = vadd.f32 %v1417, %v1420
    %v1422 = vrot.slane %v1421, 4
    %v1423 = vadd.f32 %v1421, %v1422
    %v1424 = vrot.slane %v1423, 2
    %v1425 = vadd.f32 %v1423, %v1424
    %v1426 = vrot.slane %v1425, 1
    %v1427 = vadd.f32 %v1425, %v1426
    %v1428 = vrcp.pop %v1427
    %v1429 = vmul.f32 %v1417, %v1428
    %v1430 = vmul.f32 %v1419, %v1428
    %v1431 = vmul.f32 %v1429, %v1208
    %v1432 = vmul.f32 %v1430, %v1210
    %vm1433 = vcmask 458112
    %v1434 = vsel %vm1433, %v1431, 0.0
    %vm1435 = vcmask 451968
    %v1436 = vsel %vm1435, %v1432, 0.0
    %v1437 = vadd.f32 %v1434, %v1436
    %v1438 = vrot.slane %v1437, 4
    %v1439 = vadd.f32 %v1437, %v1438
    %v1440 = vrot.slane %v1439, 2
    %v1441 = vadd.f32 %v1439, %v1440
    %v1442 = vrot.slane %v1441, 1
    %v1443 = vadd.f32 %v1441, %v1442
    %1444 = vrot.lane.b32.xlu0 %v1288, 104
    %v1445 = vpop.permute.xlu0 %1444
    %1446 = vrot.lane.b32.xlu0 %v1289, 104
    %v1447 = vpop.permute.xlu0 %1446
    %v1450 = vsel %vm1290, %v1445, 0.0
    %1451 = vadd.xlane.f32.xlu0 %v1450
    %v1452 = vpop.xlane.xlu0 %1451
    %v1453 = vsel %vm1294, %v1447, 0.0
    %1454 = vadd.xlane.f32.xlu0 %v1453
    %v1455 = vpop.xlane.xlu0 %1454
    %v1456 = vmul.f32 %v1452, 0.35355338
    %v1457 = vmul.f32 %v1455, 0.35355338
    %v1458 = vsel %vm438, %v1457, -inf
    %v1459 = vmax.f32 %v1456, %v1458
    %v1460 = vrot.slane %v1459, 4
    %v1461 = vmax.f32 %v1459, %v1460
    %v1462 = vrot.slane %v1461, 2
    %v1463 = vmax.f32 %v1461, %v1462
    %v1464 = vrot.slane %v1463, 1
    %v1465 = vmax.f32 %v1463, %v1464
    %v1466 = vsub.f32 %v1456, %v1465
    %v1467 = vsub.f32 %v1457, %v1465
    %v1468 = vmul.f32 %v1466, 1.442695
    %v1469 = vpow.pop %v1468
    %v1470 = vmul.f32 %v1467, 1.442695
    %v1471 = vpow.pop %v1470
    %v1472 = vsel %vm438, %v1471, 0.0
    %v1473 = vadd.f32 %v1469, %v1472
    %v1474 = vrot.slane %v1473, 4
    %v1475 = vadd.f32 %v1473, %v1474
    %v1476 = vrot.slane %v1475, 2
    %v1477 = vadd.f32 %v1475, %v1476
    %v1478 = vrot.slane %v1477, 1
    %v1479 = vadd.f32 %v1477, %v1478
    %v1480 = vrcp.pop %v1479
    %v1481 = vmul.f32 %v1469, %v1480
    %v1482 = vmul.f32 %v1471, %v1480
    %v1483 = vmul.f32 %v1481, %v1208
    %v1484 = vmul.f32 %v1482, %v1210
    %vm1485 = vcmask 523712
    %v1486 = vsel %vm1485, %v1483, 0.0
    %vm1487 = vcmask 517568
    %v1488 = vsel %vm1487, %v1484, 0.0
    %v1489 = vadd.f32 %v1486, %v1488
    %v1490 = vrot.slane %v1489, 4
    %v1491 = vadd.f32 %v1489, %v1490
    %v1492 = vrot.slane %v1491, 2
    %v1493 = vadd.f32 %v1491, %v1492
    %v1494 = vrot.slane %v1493, 1
    %v1495 = vadd.f32 %v1493, %v1494
    %1497 = vrot.lane.b32.xlu0 %v1337, 96
    %v1498 = vpop.permute.xlu0 %1497
    %1501 = vrot.lane.b32.xlu0 %v1391, 96
    %v1502 = vpop.permute.xlu0 %1501
    %1505 = vrot.lane.b32.xlu0 %v1443, 96
    %v1506 = vpop.permute.xlu0 %1505
    %1509 = vrot.lane.b32.xlu0 %v1495, 96
    %v1510 = vpop.permute.xlu0 %1509
    %v1512 = vsel %vm1290, %v1498, %v1502
    %vm1513 = vcmask 130048
    %v1514 = vsel %vm1513, %v1512, %v1506
    %vm1515 = vcmask 195584
    %v1516 = vsel %vm1515, %v1514, %v1510
    %v1517 = vperm.slane %v1284, 1
    %v1518 = vmul.f32 %v1517, %v1210
    %v1519 = vmul.f32 %v1517, %v1213
    %vm1520 = vcmask 64514
    %v1521 = vsel %vm1520, %v1518, 0.0
    %1522 = vadd.xlane.f32.xlu0 %v1521
    %v1523 = vpop.xlane.xlu0 %1522
    %vm1524 = vcmask 60416
    %v1525 = vsel %vm1524, %v1519, 0.0
    %1526 = vadd.xlane.f32.xlu0 %v1525
    %v1527 = vpop.xlane.xlu0 %1526
    %v1528 = vmul.f32 %v1523, 0.35355338
    %v1529 = vmul.f32 %v1527, 0.35355338
    %vm1530 = vcmask 1047554
    %v1531 = vsel %vm1530, %v1528, -inf
    %v1532 = vsel %vm442, %v1529, -inf
    %v1533 = vmax.f32 %v1531, %v1532
    %v1534 = vrot.slane %v1533, 4
    %v1535 = vmax.f32 %v1533, %v1534
    %v1536 = vrot.slane %v1535, 2
    %v1537 = vmax.f32 %v1535, %v1536
    %v1538 = vrot.slane %v1537, 1
    %v1539 = vmax.f32 %v1537, %v1538
    %v1540 = vsub.f32 %v1528, %v1539
    %v1541 = vsub.f32 %v1529, %v1539
    %v1542 = vmul.f32 %v1540, 1.442695
    %v1543 = vpow.pop %v1542
    %v1544 = vmul.f32 %v1541, 1.442695
    %v1545 = vpow.pop %v1544
    %vm1548 = vcmask 1045504
    %v1549 = vrot.slane %v1543, 2
    %v1550 = vrot.slane %v1545, 2
    %v1551 = vsel %vm1548, %v1549, %v1550
    %v1554 = vsel %vm438, %v1550, 0.0
    %v1555 = vadd.f32 %v1551, %v1554
    %v1556 = vrot.slane %v1555, 4
    %v1557 = vadd.f32 %v1555, %v1556
    %v1558 = vrot.slane %v1557, 2
    %v1559 = vadd.f32 %v1557, %v1558
    %v1560 = vrot.slane %v1559, 1
    %v1561 = vadd.f32 %v1559, %v1560
    %v1562 = vrcp.pop %v1561
    %v1563 = vmul.f32 %v1543, %v1562
    %v1564 = vmul.f32 %v1545, %v1562
    %v1565 = vmul.f32 %v1563, %v1210
    %v1566 = vmul.f32 %v1564, %v1213
    %v1569 = vrot.slane %v1565, 2
    %v1570 = vrot.slane %v1566, 2
    %v1571 = vsel %vm1548, %v1569, %v1570
    %v1574 = vsel %vm1327, %v1571, 0.0
    %v1575 = vsel %vm1329, %v1570, 0.0
    %v1576 = vadd.f32 %v1574, %v1575
    %v1577 = vrot.slane %v1576, 4
    %v1578 = vadd.f32 %v1576, %v1577
    %v1579 = vrot.slane %v1578, 2
    %v1580 = vadd.f32 %v1578, %v1579
    %v1581 = vrot.slane %v1580, 1
    %v1582 = vadd.f32 %v1580, %v1581
    %1585 = vrot.lane.b32.xlu0 %v1518, 120
    %v1586 = vpop.permute.xlu0 %1585
    %1587 = vrot.lane.b32.xlu0 %v1519, 120
    %v1588 = vpop.permute.xlu0 %1587
    %v1591 = vsel %vm1520, %v1586, 0.0
    %1592 = vadd.xlane.f32.xlu0 %v1591
    %v1593 = vpop.xlane.xlu0 %1592
    %v1594 = vsel %vm1524, %v1588, 0.0
    %1595 = vadd.xlane.f32.xlu0 %v1594
    %v1596 = vpop.xlane.xlu0 %1595
    %v1597 = vmul.f32 %v1593, 0.35355338
    %v1598 = vmul.f32 %v1596, 0.35355338
    %v1599 = vsel %vm1530, %v1597, -inf
    %v1600 = vsel %vm442, %v1598, -inf
    %v1601 = vmax.f32 %v1599, %v1600
    %v1602 = vrot.slane %v1601, 4
    %v1603 = vmax.f32 %v1601, %v1602
    %v1604 = vrot.slane %v1603, 2
    %v1605 = vmax.f32 %v1603, %v1604
    %v1606 = vrot.slane %v1605, 1
    %v1607 = vmax.f32 %v1605, %v1606
    %v1608 = vsub.f32 %v1597, %v1607
    %v1609 = vsub.f32 %v1598, %v1607
    %v1610 = vmul.f32 %v1608, 1.442695
    %v1611 = vpow.pop %v1610
    %v1612 = vmul.f32 %v1609, 1.442695
    %v1613 = vpow.pop %v1612
    %v1616 = vrot.slane %v1611, 2
    %v1617 = vrot.slane %v1613, 2
    %v1618 = vsel %vm1548, %v1616, %v1617
    %v1621 = vsel %vm438, %v1617, 0.0
    %v1622 = vadd.f32 %v1618, %v1621
    %v1623 = vrot.slane %v1622, 4
    %v1624 = vadd.f32 %v1622, %v1623
    %v1625 = vrot.slane %v1624, 2
    %v1626 = vadd.f32 %v1624, %v1625
    %v1627 = vrot.slane %v1626, 1
    %v1628 = vadd.f32 %v1626, %v1627
    %v1629 = vrcp.pop %v1628
    %v1630 = vmul.f32 %v1611, %v1629
    %v1631 = vmul.f32 %v1613, %v1629
    %v1632 = vmul.f32 %v1630, %v1210
    %v1633 = vmul.f32 %v1631, %v1213
    %v1636 = vrot.slane %v1632, 2
    %v1637 = vrot.slane %v1633, 2
    %v1638 = vsel %vm1548, %v1636, %v1637
    %v1641 = vsel %vm1381, %v1638, 0.0
    %v1642 = vsel %vm1383, %v1637, 0.0
    %v1643 = vadd.f32 %v1641, %v1642
    %v1644 = vrot.slane %v1643, 4
    %v1645 = vadd.f32 %v1643, %v1644
    %v1646 = vrot.slane %v1645, 2
    %v1647 = vadd.f32 %v1645, %v1646
    %v1648 = vrot.slane %v1647, 1
    %v1649 = vadd.f32 %v1647, %v1648
    %1650 = vrot.lane.b32.xlu0 %v1518, 112
    %v1651 = vpop.permute.xlu0 %1650
    %1652 = vrot.lane.b32.xlu0 %v1519, 112
    %v1653 = vpop.permute.xlu0 %1652
    %v1656 = vsel %vm1520, %v1651, 0.0
    %1657 = vadd.xlane.f32.xlu0 %v1656
    %v1658 = vpop.xlane.xlu0 %1657
    %v1659 = vsel %vm1524, %v1653, 0.0
    %1660 = vadd.xlane.f32.xlu0 %v1659
    %v1661 = vpop.xlane.xlu0 %1660
    %v1662 = vmul.f32 %v1658, 0.35355338
    %v1663 = vmul.f32 %v1661, 0.35355338
    %v1664 = vsel %vm1530, %v1662, -inf
    %v1665 = vsel %vm442, %v1663, -inf
    %v1666 = vmax.f32 %v1664, %v1665
    %v1667 = vrot.slane %v1666, 4
    %v1668 = vmax.f32 %v1666, %v1667
    %v1669 = vrot.slane %v1668, 2
    %v1670 = vmax.f32 %v1668, %v1669
    %v1671 = vrot.slane %v1670, 1
    %v1672 = vmax.f32 %v1670, %v1671
    %v1673 = vsub.f32 %v1662, %v1672
    %v1674 = vsub.f32 %v1663, %v1672
    %v1675 = vmul.f32 %v1673, 1.442695
    %v1676 = vpow.pop %v1675
    %v1677 = vmul.f32 %v1674, 1.442695
    %v1678 = vpow.pop %v1677
    %v1681 = vrot.slane %v1676, 2
    %v1682 = vrot.slane %v1678, 2
    %v1683 = vsel %vm1548, %v1681, %v1682
    %v1686 = vsel %vm438, %v1682, 0.0
    %v1687 = vadd.f32 %v1683, %v1686
    %v1688 = vrot.slane %v1687, 4
    %v1689 = vadd.f32 %v1687, %v1688
    %v1690 = vrot.slane %v1689, 2
    %v1691 = vadd.f32 %v1689, %v1690
    %v1692 = vrot.slane %v1691, 1
    %v1693 = vadd.f32 %v1691, %v1692
    %v1694 = vrcp.pop %v1693
    %v1695 = vmul.f32 %v1676, %v1694
    %v1696 = vmul.f32 %v1678, %v1694
    %v1697 = vmul.f32 %v1695, %v1210
    %v1698 = vmul.f32 %v1696, %v1213
    %v1701 = vrot.slane %v1697, 2
    %v1702 = vrot.slane %v1698, 2
    %v1703 = vsel %vm1548, %v1701, %v1702
    %v1706 = vsel %vm1433, %v1703, 0.0
    %v1707 = vsel %vm1435, %v1702, 0.0
    %v1708 = vadd.f32 %v1706, %v1707
    %v1709 = vrot.slane %v1708, 4
    %v1710 = vadd.f32 %v1708, %v1709
    %v1711 = vrot.slane %v1710, 2
    %v1712 = vadd.f32 %v1710, %v1711
    %v1713 = vrot.slane %v1712, 1
    %v1714 = vadd.f32 %v1712, %v1713
    %1715 = vrot.lane.b32.xlu0 %v1518, 104
    %v1716 = vpop.permute.xlu0 %1715
    %1717 = vrot.lane.b32.xlu0 %v1519, 104
    %v1718 = vpop.permute.xlu0 %1717
    %v1721 = vsel %vm1520, %v1716, 0.0
    %1722 = vadd.xlane.f32.xlu0 %v1721
    %v1723 = vpop.xlane.xlu0 %1722
    %v1724 = vsel %vm1524, %v1718, 0.0
    %1725 = vadd.xlane.f32.xlu0 %v1724
    %v1726 = vpop.xlane.xlu0 %1725
    %v1727 = vmul.f32 %v1723, 0.35355338
    %v1728 = vmul.f32 %v1726, 0.35355338
    %v1729 = vsel %vm1530, %v1727, -inf
    %v1730 = vsel %vm442, %v1728, -inf
    %v1731 = vmax.f32 %v1729, %v1730
    %v1732 = vrot.slane %v1731, 4
    %v1733 = vmax.f32 %v1731, %v1732
    %v1734 = vrot.slane %v1733, 2
    %v1735 = vmax.f32 %v1733, %v1734
    %v1736 = vrot.slane %v1735, 1
    %v1737 = vmax.f32 %v1735, %v1736
    %v1738 = vsub.f32 %v1727, %v1737
    %v1739 = vsub.f32 %v1728, %v1737
    %v1740 = vmul.f32 %v1738, 1.442695
    %v1741 = vpow.pop %v1740
    %v1742 = vmul.f32 %v1739, 1.442695
    %v1743 = vpow.pop %v1742
    %v1746 = vrot.slane %v1741, 2
    %v1747 = vrot.slane %v1743, 2
    %v1748 = vsel %vm1548, %v1746, %v1747
    %v1751 = vsel %vm438, %v1747, 0.0
    %v1752 = vadd.f32 %v1748, %v1751
    %v1753 = vrot.slane %v1752, 4
    %v1754 = vadd.f32 %v1752, %v1753
    %v1755 = vrot.slane %v1754, 2
    %v1756 = vadd.f32 %v1754, %v1755
    %v1757 = vrot.slane %v1756, 1
    %v1758 = vadd.f32 %v1756, %v1757
    %v1759 = vrcp.pop %v1758
    %v1760 = vmul.f32 %v1741, %v1759
    %v1761 = vmul.f32 %v1743, %v1759
    %v1762 = vmul.f32 %v1760, %v1210
    %v1763 = vmul.f32 %v1761, %v1213
    %v1766 = vrot.slane %v1762, 2
    %v1767 = vrot.slane %v1763, 2
    %v1768 = vsel %vm1548, %v1766, %v1767
    %v1771 = vsel %vm1485, %v1768, 0.0
    %v1772 = vsel %vm1487, %v1767, 0.0
    %v1773 = vadd.f32 %v1771, %v1772
    %v1774 = vrot.slane %v1773, 4
    %v1775 = vadd.f32 %v1773, %v1774
    %v1776 = vrot.slane %v1775, 2
    %v1777 = vadd.f32 %v1775, %v1776
    %v1778 = vrot.slane %v1777, 1
    %v1779 = vadd.f32 %v1777, %v1778
    %1781 = vrot.lane.b32.xlu0 %v1582, 96
    %v1782 = vpop.permute.xlu0 %1781
    %1785 = vrot.lane.b32.xlu0 %v1649, 96
    %v1786 = vpop.permute.xlu0 %1785
    %1789 = vrot.lane.b32.xlu0 %v1714, 96
    %v1790 = vpop.permute.xlu0 %1789
    %1793 = vrot.lane.b32.xlu0 %v1779, 96
    %v1794 = vpop.permute.xlu0 %1793
    %v1796 = vsel %vm1290, %v1782, %v1786
    %v1797 = vsel %vm1513, %v1796, %v1790
    %v1798 = vsel %vm1515, %v1797, %v1794
    %v1800 = vrot.slane %v1798, 7
    %v1802 = vsel %vm436, %v1516, %v1800
    %v1803 = vpack.c.bf16 %v1802, %v1802
    %v1804 = vld [vmem:[%s12] sm:$0xf]
    %v1805 = vld [vmem:[%s12 + $0x4] sm:$0xf]
    %v1806 = vld [vmem:[%s12 + $0x8] sm:$0xf]
    %v1807 = vld [vmem:[%s12 + $0xc] sm:$0xf]
    %v1808 = vld [vmem:[#allocation12] sm:$0x1]
    %v1810 = vperm.slane %v1808, 0
    %v1816 = vunpack.c.l.b16 %v1804
    %v1817 = vunpack.c.l.b16 %v1805
    %v1818 = vunpack.c.l.b16 %v1806
    %v1819 = vunpack.c.l.b16 %v1807
    %v1820 = vpack.c.b16 %v1817, %v1816
    %v1821 = vpack.c.b16 %v1819, %v1818
    %v1825 = vsel %vm1083, %v1803, 0
    %1827 = vmatpush.bf16.msra.mxu0 0
    %1828 = vmatpush.bf16.msra.mxu0 0
    %1829 = vmatpush.bf16.msra.mxu0 0
    %1830 = vmatpush.bf16.msra.mxu0 0
    %1831 = vmatpush.bf16.msra.mxu0 0
    %1832 = vmatpush.bf16.msra.mxu0 0
    %1833 = vmatpush.bf16.msra.mxu0 %v1821
    %1834 = vmatpush.bf16.msra.mxu0 %v1820
    %1835 = vmatmul.bf16.gmra.mxu0 %v1825
    %v1836 = vpop.f32.mrf.mxu0
    %v1837 = vadd.f32 %v1810, %v1836
    %v1838 = vpop.f32.mrf.mxu0
    %1839 = vdwg.mxu0
    %v1840 = vadd.f32 %v1216, %v1837
    %v1841 = vld [vmem:[#allocation13] sm:$0x1]
    %v1842 = vld [vmem:[#allocation15] sm:$0x1]
    %v1843 = vsel %vm1219, %v1840, 0.0
    %1844 = vadd.xlane.f32.xlu0 %v1843
    %v1845 = vpop.xlane.xlu0 %1844
    %v1846 = vmul.f32 %v1845, %v1100
    %v1847 = vsub.f32 %v1840, %v1846
    %v1848 = vmul.f32 %v1847, %v1847
    %v1849 = vsel %vm1219, %v1848, 0.0
    %1850 = vadd.xlane.f32.xlu0 %v1849
    %v1851 = vpop.xlane.xlu0 %1850
    %v1852 = vmul.f32 %v1851, %v1100
    %v1853 = vadd.f32 %v1852, 1e-05
    %v1854 = vrsqrt.pop %v1853
    %v1855 = vmul.f32 %v1854, %v1853
    %v1856 = vmul.f32 %v1855, %v1854
    %v1857 = vmul.f32 0.5, %v1856
    %v1858 = vsub.f32 1.5, %v1857
    %v1859 = vmul.f32 %v1854, %v1858
    %vm1860 = vweird.f32 %v1853
    %vm1861 = vweird.f32 %v1854
    %vm1862 = vmor %vm1860, %vm1861
    %v1863 = vsel %vm1862, %v1854, %v1859
    %v1864 = vmul.f32 %v1847, %v1863
    %v1866 = vperm.slane %v1841, 0
    %v1868 = vmul.f32 %v1864, %v1866
    %v1870 = vperm.slane %v1842, 0
    %v1872 = vadd.f32 %v1868, %v1870
    %v1873 = vpack.c.bf16 %v1872, %v1872
    %v1874 = vld [vmem:[%s16] sm:$0xf]
    %v1875 = vld [vmem:[%s16 + $0x4] sm:$0xf]
    %v1876 = vld [vmem:[%s16 + $0x8] sm:$0xf]
    %v1877 = vld [vmem:[%s16 + $0xc] sm:$0xf]
    %v1878 = vld [vmem:[#allocation16] sm:$0x1]
    %v1880 = vperm.slane %v1878, 0
    %v1886 = vunpack.c.l.b16 %v1874
    %v1887 = vunpack.c.l.b16 %v1875
    %v1888 = vunpack.c.l.b16 %v1876
    %v1889 = vunpack.c.l.b16 %v1877
    %v1890 = vpack.c.b16 %v1887, %v1886
    %v1891 = vpack.c.b16 %v1889, %v1888
    %v1895 = vsel %vm1083, %v1873, 0
    %1897 = vmatpush.bf16.msra.mxu0 0
    %1898 = vmatpush.bf16.msra.mxu0 0
    %1899 = vmatpush.bf16.msra.mxu0 0
    %1900 = vmatpush.bf16.msra.mxu0 0
    %1901 = vmatpush.bf16.msra.mxu0 0
    %1902 = vmatpush.bf16.msra.mxu0 0
    %1903 = vmatpush.bf16.msra.mxu0 %v1891
    %1904 = vmatpush.bf16.msra.mxu0 %v1890
    %1905 = vmatmul.bf16.gmra.mxu0 %v1895
    %v1906 = vpop.f32.mrf.mxu0
    %v1907 = vadd.f32 %v1880, %v1906
    %v1908 = vpop.f32.mrf.mxu0
    %1909 = vdwg.mxu0
    %v1910 = vmul.f32 %v1907, -1.702
    %v1911 = vmul.f32 %v1910, 1.442695
    %v1912 = vpow.pop %v1911
    %v1913 = vadd.f32 %v1912, 1.0
    %v1914 = vrcp.pop %v1913
    %v1915 = vmul.f32 %v1913, %v1914
    %v1916 = vsub.f32 1.0, %v1915
    %v1917 = vmul.f32 %v1914, %v1916
    %v1918 = vadd.f32 %v1914, %v1917
    %vm1919 = vweird.f32 %v1913
    %vm1920 = vweird.f32 %v1914
    %vm1921 = vmor %vm1919, %vm1920
    %v1922 = vsel %vm1921, %v1914, %v1918
    %v1923 = vand.u32 2147483647, %v1913
    %vm1924 = vcmp.eq.f32.partialorder %v1923, 8.507059e+37
    %v1925 = vand.u32 %v1913, 2147483648
    %v1926 = vor.u32 1.1754944e-38, %v1925
    %v1927 = vsel %vm1924, %v1926, %v1922
    %v1928 = vmul.f32 1.0, %v1927
    %v1929 = vmul.f32 %v1907, %v1928
    %v1930 = vpack.c.bf16 %v1929, %v1929
    %v1931 = vld [vmem:[%s18] sm:$0xf]
    %v1932 = vld [vmem:[%s18 + $0x4] sm:$0xf]
    %v1933 = vld [vmem:[%s18 + $0x8] sm:$0xf]
    %v1934 = vld [vmem:[%s18 + $0xc] sm:$0xf]
    %v1935 = vld [vmem:[%s18 + $0x10] sm:$0xf]
    %v1936 = vld [vmem:[%s18 + $0x14] sm:$0xf]
    %v1937 = vld [vmem:[%s18 + $0x18] sm:$0xf]
    %v1938 = vld [vmem:[%s18 + $0x1c] sm:$0xf]
    %v1939 = vld [vmem:[%s18 + $0x20] sm:$0xf]
    %v1940 = vld [vmem:[%s18 + $0x24] sm:$0xf]
    %v1941 = vld [vmem:[%s18 + $0x28] sm:$0xf]
    %v1942 = vld [vmem:[%s18 + $0x2c] sm:$0xf]
    %v1943 = vld [vmem:[%s18 + $0x30] sm:$0xf]
    %v1944 = vld [vmem:[%s18 + $0x34] sm:$0xf]
    %v1945 = vld [vmem:[%s18 + $0x38] sm:$0xf]
    %v1946 = vld [vmem:[%s18 + $0x3c] sm:$0xf]
    %v1947 = vld [vmem:[#allocation18] sm:$0x1]
    %v1949 = vperm.slane %v1947, 0
    %v1967 = vunpack.c.l.b16 %v1931
    %v1968 = vunpack.c.l.b16 %v1932
    %v1969 = vunpack.c.l.b16 %v1933
    %v1970 = vunpack.c.l.b16 %v1934
    %v1971 = vunpack.c.l.b16 %v1935
    %v1972 = vunpack.c.l.b16 %v1936
    %v1973 = vunpack.c.l.b16 %v1937
    %v1974 = vunpack.c.l.b16 %v1938
    %v1975 = vunpack.c.l.b16 %v1939
    %v1976 = vunpack.c.l.b16 %v1940
    %v1977 = vunpack.c.l.b16 %v1941
    %v1978 = vunpack.c.l.b16 %v1942
    %v1979 = vunpack.c.l.b16 %v1943
    %v1980 = vunpack.c.l.b16 %v1944
    %v1981 = vunpack.c.l.b16 %v1945
    %v1982 = vunpack.c.l.b16 %v1946
    %v1983 = vpack.c.b16 %v1968, %v1967
    %v1984 = vpack.c.b16 %v1970, %v1969
    %v1985 = vpack.c.b16 %v1972, %v1971
    %v1986 = vpack.c.b16 %v1974, %v1973
    %v1987 = vpack.c.b16 %v1976, %v1975
    %v1988 = vpack.c.b16 %v1978, %v1977
    %v1989 = vpack.c.b16 %v1980, %v1979
    %v1990 = vpack.c.b16 %v1982, %v1981
    %1999 = vmatpush.bf16.msra.mxu0 %v1990
    %2000 = vmatpush.bf16.msra.mxu0 %v1989
    %2001 = vmatpush.bf16.msra.mxu0 %v1988
    %2002 = vmatpush.bf16.msra.mxu0 %v1987
    %2003 = vmatpush.bf16.msra.mxu0 %v1986
    %2004 = vmatpush.bf16.msra.mxu0 %v1985
    %2005 = vmatpush.bf16.msra.mxu0 %v1984
    %2006 = vmatpush.bf16.msra.mxu0 %v1983
    %2007 = vmatmul.bf16.gmra.mxu0 %v1930
    %v2008 = vpop.f32.mrf.mxu0
    %v2009 = vadd.f32 %v1949, %v2008
    %v2010 = vpop.f32.mrf.mxu0
    %2011 = vdwg.mxu0
    %v2012 = vadd.f32 %v1840, %v2009
    %2013 = vst.msk [vmem:[%s20] sm:$0x3] %vm1219, %v2012
    // Predicated region
    $region126: #{vision_transformer_forward.9} parent=1 // pred_check
      _
    $region127: #{vision_transformer_forward.9} parent=1 // pred_check_branch
      %2015 = sbr.rel (0) target = $region129
    $region128: #{vision_transformer_forward.9} parent=1 // pred_region
      _
    $region129: #{vision_transformer_forward.9} parent=1 // pred_fallthru
      _
    // Predicated region
    $region130: #{vision_transformer_forward.9} parent=1 // pred_check
      _
    $region131: #{vision_transformer_forward.9} parent=1 // pred_check_branch
      %2017 = sbr.rel (0) target = $region133
    $region132: #{vision_transformer_forward.9} parent=1 // pred_region
      _
    $region133: #{vision_transformer_forward.9} parent=1 // pred_fallthru
      _
    %2018 = vsyncpa [#allocation3], 1
    %2019 = vsyncpa [#allocation5], 1
    %2020 = vsyncpa [#allocation8], 1
    %2021 = vsyncpa [#allocation11], 1
    %2022 = vsyncpa [#allocation14], 1
    %2023 = vsyncpa [#allocation17], 1

</llo_original>
